<compile_context>
chip_gen: v7x
topology: tpu7x:2x2x1
jax: 0.10.0
libtpu: 0.0.40
codegen_flags: <defaults>
</compile_context>

<pallas_src>
import functools

import numpy as np

import jax
import jax.numpy as jnp
from jax.experimental import pallas as pl
from jax.experimental.pallas import tpu as pltpu


# --------------------------------------------------------------------------
# Fused LeNet5 kernel: one grid step == IM images.
# Row convention inside the kernel: sublane index = spatial_row * IM + image.
# --------------------------------------------------------------------------
def _lenet5_kernel(x_ref, t1_ref, b1_ref, t2_ref, b2_ref,
                   w1h_ref, b1f_ref, w2f_ref, b2f_ref, w3f_ref, b3f_ref,
                   o_ref):
    f32 = jnp.float32
    bf16 = jnp.bfloat16
    im = x_ref.shape[3] // 8              # images per block (static)

    # Hoisted bias loads (avoid 8x / 4x re-loads in the unrolled loops below).
    b1 = b1_ref[...]                      # (1, 128), lanes >= 84 are 0
    b2 = b2_ref[...]                      # (1, 128), lanes >= 80 are 0

    # ---- conv1 + ReLU ------------------------------------------------------
    # x_ref[0, t, m] : (8*IM, 96) bf16, row r*IM + b = image row 4*(r+m)+t,
    # lanes w*3+c.  Output row u = 4*r + s, col v = 2*j + pw.
    # a1[(s, pw)][r*IM + b, o*14 + j] = relu(conv1)[b, o, u, v]   (r=7 garbage)
    a1 = {}
    for s in range(4):
        for pw in range(2):
            acc = None
            for ki in range(5):
                t = (s + ki) % 4          # input row phase
                m = (s + ki) // 4         # input row shift (host pre-shifted)
                d = jnp.dot(x_ref[0, t, m], t1_ref[pw, ki],
                            preferred_element_type=f32)
                acc = d if acc is None else acc + d
            a1[(s, pw)] = jnp.maximum(acc + b1, 0.0)        # (8*IM, 128) f32

    # ---- pool1 (2x2): pure elementwise max of phase tensors ----------------
    # p1[p][q*IM + b, o*14 + j] = maxpool(conv1)[b, o, 2*q + p, j]  (q=7 garbage)
    p1 = []
    for p in range(2):
        p1.append(jnp.maximum(
            jnp.maximum(a1[(2 * p, 0)], a1[(2 * p, 1)]),
            jnp.maximum(a1[(2 * p + 1, 0)], a1[(2 * p + 1, 1)])).astype(bf16))

    # ---- conv2 + ReLU ------------------------------------------------------
    # Output row u2 = 2*i2 + qh, col v2 = 2*j2 + qw.
    # Tap ki needs pooled phase p = (qh+ki)%2 at q = i2 + d, d = (qh+ki)//2,
    # which is the contiguous, 16-aligned slice [d*IM : (d+5)*IM).
    # a2[(qh, qw)][i2*IM + b, o2*5 + j2] = relu(conv2)[b, o2, u2, v2]
    a2 = {}
    for qh in range(2):
        for qw in range(2):
            acc = None
            for ki in range(5):
                p = (qh + ki) % 2
                d0 = (qh + ki) // 2
                lhs = p1[p][d0 * im:(d0 + 5) * im, :]       # (5*IM, 128) bf16
                d = jnp.dot(lhs, t2_ref[qw, ki], preferred_element_type=f32)
                acc = d if acc is None else acc + d
            a2[(qh, qw)] = jnp.maximum(acc + b2, 0.0)       # (5*IM, 128) f32

    # ---- pool2 (2x2) -> (5*IM, 128): row h*IM + b, lanes o2*5 + w -----------
    p2 = jnp.maximum(jnp.maximum(a2[(0, 0)], a2[(0, 1)]),
                     jnp.maximum(a2[(1, 0)], a2[(1, 1)])).astype(bf16)

    # ---- fc1 (accumulate over the 5 spatial rows), fc2, fc3 -----------------
    # Each h-slice [h*IM : (h+1)*IM) is one IM-row, 16-aligned block.
    acc = None
    for h in range(5):
        d = jnp.dot(p2[h * im:(h + 1) * im, :], w1h_ref[h],
                    preferred_element_type=f32)
        acc = d if acc is None else acc + d
    f1 = jnp.maximum(acc + b1f_ref[...], 0.0)               # (IM, 128)

    f2 = jnp.maximum(
        jnp.dot(f1.astype(bf16), w2f_ref[...],
                preferred_element_type=f32) + b2f_ref[...], 0.0)

    f3 = jnp.dot(f2.astype(bf16), w3f_ref[...],
                 preferred_element_type=f32) + b3f_ref[...]

    o_ref[...] = f3.astype(o_ref.dtype)                     # (IM, 128) lane-dense


# --------------------------------------------------------------------------
# Weight preparation: pure numpy, run ONCE outside jit, result reused forever.
# --------------------------------------------------------------------------
def prepare_lenet5_params(params):
    """Repack PyTorch-layout params into lane-packed, 128-padded MXU weights."""
    f32 = np.float32
    w1 = np.asarray(params["conv1_w"], f32)   # (6, 3, 5, 5)
    b1 = np.asarray(params["conv1_b"], f32)
    w2 = np.asarray(params["conv2_w"], f32)   # (16, 6, 5, 5)
    b2 = np.asarray(params["conv2_b"], f32)
    l1w = np.asarray(params["l1_w"], f32)     # (120, 400)
    l1b = np.asarray(params["l1_b"], f32)
    l2w = np.asarray(params["l2_w"], f32)     # (84, 120)
    l2b = np.asarray(params["l2_b"], f32)
    l3w = np.asarray(params["l3_w"], f32)     # (100, 84)
    l3b = np.asarray(params["l3_b"], f32)

    # conv1 Toeplitz: T1[pw, ki, (2j+pw+kj)*3 + c, o*14 + j] = w1[o, c, ki, kj]
    t1 = np.zeros((2, 5, 96, 128), f32)
    pw, ki, o, j, kj, c = np.meshgrid(
        np.arange(2), np.arange(5), np.arange(6),
        np.arange(14), np.arange(5), np.arange(3), indexing="ij")
    t1[pw, ki, (2 * j + pw + kj) * 3 + c, o * 14 + j] = w1[o, c, ki, kj]

    # conv2 Toeplitz: T2[qw, ki, c1*14 + 2j2+qw+kj, o2*5 + j2] = w2[o2, c1, ki, kj]
    t2 = np.zeros((2, 5, 128, 128), f32)
    qw, ki2, o2, j2, kj2, c1 = np.meshgrid(
        np.arange(2), np.arange(5), np.arange(16),
        np.arange(5), np.arange(5), np.arange(6), indexing="ij")
    t2[qw, ki2, c1 * 14 + 2 * j2 + qw + kj2, o2 * 5 + j2] = w2[o2, c1, ki2, kj2]

    # fc1 split per spatial row h: W1h[h, o2*5 + w, n] = l1_w[n, o2*25 + h*5 + w]
    w1h = np.zeros((5, 128, 128), f32)
    h, o2f, wf, n = np.meshgrid(
        np.arange(5), np.arange(16), np.arange(5), np.arange(120), indexing="ij")
    w1h[h, o2f * 5 + wf, n] = l1w[n, o2f * 25 + h * 5 + wf]

    w2f = np.zeros((128, 128), f32); w2f[:120, :84] = l2w.T
    w3f = np.zeros((128, 128), f32); w3f[:84, :100] = l3w.T

    b1p = np.zeros((1, 128), f32); b1p[0, :84] = np.repeat(b1, 14)
    b2p = np.zeros((1, 128), f32); b2p[0, :80] = np.repeat(b2, 5)
    b1f = np.zeros((1, 128), f32); b1f[0, :120] = l1b
    b2f = np.zeros((1, 128), f32); b2f[0, :84] = l2b
    b3f = np.zeros((1, 128), f32); b3f[0, :100] = l3b

    bf16 = jnp.bfloat16
    return {
        "t1": jnp.asarray(t1, bf16), "b1": jnp.asarray(b1p),
        "t2": jnp.asarray(t2, bf16), "b2": jnp.asarray(b2p),
        "w1h": jnp.asarray(w1h, bf16), "b1f": jnp.asarray(b1f),
        "w2f": jnp.asarray(w2f, bf16), "b2f": jnp.asarray(b2f),
        "w3f": jnp.asarray(w3f, bf16), "b3f": jnp.asarray(b3f),
    }


# --------------------------------------------------------------------------
# Input preparation (layout plumbing, runs under jit with the pallas_call).
# --------------------------------------------------------------------------
def _prep_input_blocks(x, im):
    """(B, 3, 32, 32) f32 -> (nblk, 4, 2, 8*im, 96) bf16.

    out[blk, t, m, r*im + b, w*3 + c] = image[blk*im + b, c, 4*(r+m) + t, w]
    (zero where 4*(r+m)+t >= 32, i.e. the single garbage row per image).
    """
    B = x.shape[0]
    bpad = ((B + im - 1) // im) * im
    if bpad != B:
        x = jnp.concatenate(
            [x, jnp.zeros((bpad - B,) + x.shape[1:], x.dtype)], axis=0)
    nblk = bpad // im

    x_wc = jnp.transpose(x, (0, 2, 3, 1)).reshape(bpad, 32, 96)       # rows=h, lanes=w*3+c
    xp = x_wc.reshape(bpad, 8, 4, 96).transpose(0, 2, 1, 3)           # [b,t,r,:] = row 4r+t
    xp1 = jnp.concatenate(                                            # shifted by one phase-row
        [xp[:, :, 1:, :], jnp.zeros((bpad, 4, 1, 96), xp.dtype)], axis=2)
    xps = jnp.stack([xp, xp1], axis=2)                                # (B, 4, 2, 8, 96)
    # Pack blocks with row-major / image-minor sublane order: r*im + b.
    xps = xps.reshape(nblk, im, 4, 2, 8, 96).transpose(0, 2, 3, 4, 1, 5)
    xps = xps.reshape(nblk, 4, 2, 8 * im, 96).astype(jnp.bfloat16)
    return xps, bpad, nblk


# --------------------------------------------------------------------------
# Fused forward
# --------------------------------------------------------------------------
def lenet5_forward(prep, x, *, images_per_block=32):
    """x: (B, 3, 32, 32) NCHW float32 -> logits (B, 100).

    `prep` must come from prepare_lenet5_params (computed once, outside jit).
    images_per_block (multiple of 16): 32 fills the 256-wide MXU on v6e/v7x;
    on v7x choose it <= B/2 so the "parallel" grid feeds both TensorCores.
    """
    assert x.shape[1:] == (3, 32, 32), x.shape
    im = images_per_block
    assert im % 16 == 0, "images_per_block must be a multiple of 16"
    B = x.shape[0]

    xps, bpad, nblk = _prep_input_blocks(x.astype(jnp.float32), im)

    flops = 2 * nblk * (40 * (8 * im) * 96 * 128     # conv1 (Toeplitz, padded)
                        + 20 * (5 * im) * 128 * 128  # conv2
                        + 7 * im * 128 * 128)        # fc1 (x5) + fc2 + fc3
    weight_bytes = sum(int(v.size) * v.dtype.itemsize for v in prep.values())
    cost = pl.CostEstimate(
        flops=flops, transcendentals=0,
        bytes_accessed=int(xps.size) * 2 + weight_bytes + bpad * 128 * 4)

    out = pl.pallas_call(
        _lenet5_kernel,
        out_shape=jax.ShapeDtypeStruct((bpad, 128), jnp.float32),
        grid=(nblk,),
        in_specs=[
            pl.BlockSpec((1, 4, 2, 8 * im, 96), lambda i: (i, 0, 0, 0, 0)),  # images
            # Grid-invariant weights/biases (index_map constant -> DMA'd once).
            pl.BlockSpec((2, 5, 96, 128), lambda i: (0, 0, 0, 0)),           # T1
            pl.BlockSpec((1, 128), lambda i: (0, 0)),                        # b1
            pl.BlockSpec((2, 5, 128, 128), lambda i: (0, 0, 0, 0)),          # T2
            pl.BlockSpec((1, 128), lambda i: (0, 0)),                        # b2
            pl.BlockSpec((5, 128, 128), lambda i: (0, 0, 0)),                # W1h
            pl.BlockSpec((1, 128), lambda i: (0, 0)),                        # b1f
            pl.BlockSpec((128, 128), lambda i: (0, 0)),                      # W2f
            pl.BlockSpec((1, 128), lambda i: (0, 0)),                        # b2f
            pl.BlockSpec((128, 128), lambda i: (0, 0)),                      # W3f
            pl.BlockSpec((1, 128), lambda i: (0, 0)),                        # b3f
        ],
        out_specs=pl.BlockSpec((im, 128), lambda i: (i, 0)),
        compiler_params=pltpu.CompilerParams(
            dimension_semantics=("parallel",)),
        cost_estimate=cost,
    )(xps, prep["t1"], prep["b1"], prep["t2"], prep["b2"],
      prep["w1h"], prep["b1f"], prep["w2f"], prep["b2f"],
      prep["w3f"], prep["b3f"])

    return out[:B, :100]


# --------------------------------------------------------------------------
# Parameters + pure-JAX reference (numerical sanity check)
# --------------------------------------------------------------------------
def init_lenet5_params(key):
    """Deterministic PyTorch-default-style uniform(-1/sqrt(fan_in)) init."""
    ks = jax.random.split(key, 10)

    def u(k, shape, fan_in):
        bound = 1.0 / jnp.sqrt(jnp.float32(fan_in))
        return jax.random.uniform(k, shape, jnp.float32, -bound, bound)

    return {
        "conv1_w": u(ks[0], (6, 3, 5, 5), 3 * 5 * 5),
        "conv1_b": u(ks[1], (6,), 3 * 5 * 5),
        "conv2_w": u(ks[2], (16, 6, 5, 5), 6 * 5 * 5),
        "conv2_b": u(ks[3], (16,), 6 * 5 * 5),
        "l1_w": u(ks[4], (120, 400), 400),
        "l1_b": u(ks[5], (120,), 400),
        "l2_w": u(ks[6], (84, 120), 120),
        "l2_b": u(ks[7], (84,), 120),
        "l3_w": u(ks[8], (100, 84), 84),
        "l3_b": u(ks[9], (100,), 84),
    }


def lenet5_reference(params, x):
    dn = ("NCHW", "OIHW", "NCHW")
    out = jax.lax.conv_general_dilated(x, params["conv1_w"], (1, 1), "VALID",
                                       dimension_numbers=dn)
    out = jax.nn.relu(out + params["conv1_b"][None, :, None, None])
    out = jax.lax.reduce_window(out, -jnp.inf, jax.lax.max,
                                (1, 1, 2, 2), (1, 1, 2, 2), "VALID")
    out = jax.lax.conv_general_dilated(out, params["conv2_w"], (1, 1), "VALID",
                                       dimension_numbers=dn)
    out = jax.nn.relu(out + params["conv2_b"][None, :, None, None])
    out = jax.lax.reduce_window(out, -jnp.inf, jax.lax.max,
                                (1, 1, 2, 2), (1, 1, 2, 2), "VALID")
    out = out.reshape(out.shape[0], -1)
    out = jax.nn.relu(out @ params["l1_w"].T + params["l1_b"])
    out = jax.nn.relu(out @ params["l2_w"].T + params["l2_b"])
    return out @ params["l3_w"].T + params["l3_b"]


if __name__ == "__main__":
    key = jax.random.PRNGKey(0)
    k_params, k_input = jax.random.split(key)

    params = init_lenet5_params(k_params)
    prep = prepare_lenet5_params(params)     # hoisted: runs once, on the host

    # LeNet5 here expects 3x32x32 (CIFAR-100 style) so that flatten = 16*5*5.
    B, IM = 24, 16                           # B padded to 32 -> grid of 2 blocks
    x = jax.random.normal(k_input, (B, 3, 32, 32), jnp.float32)

    fwd = jax.jit(functools.partial(lenet5_forward, images_per_block=IM))
    logits = jax.block_until_ready(fwd(prep, x))

    assert logits.shape == (B, 100), logits.shape
    assert logits.dtype == jnp.float32

    ref = jax.block_until_ready(lenet5_reference(params, x))
    np.testing.assert_allclose(np.asarray(logits), np.asarray(ref),
                               rtol=4e-2, atol=4e-2)
    print("KERNEL_OK")
</pallas_src>

<mosaic_0001>
module attributes {stable_mosaic.version = 11 : i64} {
  func.func @_lenet5_kernel(%arg0: i32, %arg1: memref<1x4x2x128x96xbf16, #tpu.memory_space<vmem>>, %arg2: memref<2x5x96x128xbf16, #tpu.memory_space<vmem>>, %arg3: memref<1x128xf32, #tpu.memory_space<vmem>>, %arg4: memref<2x5x128x128xbf16, #tpu.memory_space<vmem>>, %arg5: memref<1x128xf32, #tpu.memory_space<vmem>>, %arg6: memref<5x128x128xbf16, #tpu.memory_space<vmem>>, %arg7: memref<1x128xf32, #tpu.memory_space<vmem>>, %arg8: memref<128x128xbf16, #tpu.memory_space<vmem>>, %arg9: memref<1x128xf32, #tpu.memory_space<vmem>>, %arg10: memref<128x128xbf16, #tpu.memory_space<vmem>>, %arg11: memref<1x128xf32, #tpu.memory_space<vmem>>, %arg12: memref<16x128xf32, #tpu.memory_space<vmem>>) attributes {dimension_semantics = [#tpu.dimension_semantics<parallel>], iteration_bounds = array<i64: 2>, scalar_prefetch = 0 : i64, scratch_operands = 0 : i64, tpu.core_type = #tpu.core_type<tc>, window_params = [{transform_indices = @transform_0, window_bounds = array<i64: 1, 4, 2, 128, 96>}, {pipeline_mode = #tpu.pipeline_mode<synchronous>, transform_indices = @transform_1, window_bounds = array<i64: 2, 5, 96, 128>}, {pipeline_mode = #tpu.pipeline_mode<synchronous>, transform_indices = @transform_2, window_bounds = array<i64: 1, 128>}, {pipeline_mode = #tpu.pipeline_mode<synchronous>, transform_indices = @transform_3, window_bounds = array<i64: 2, 5, 128, 128>}, {pipeline_mode = #tpu.pipeline_mode<synchronous>, transform_indices = @transform_4, window_bounds = array<i64: 1, 128>}, {pipeline_mode = #tpu.pipeline_mode<synchronous>, transform_indices = @transform_5, window_bounds = array<i64: 5, 128, 128>}, {pipeline_mode = #tpu.pipeline_mode<synchronous>, transform_indices = @transform_6, window_bounds = array<i64: 1, 128>}, {pipeline_mode = #tpu.pipeline_mode<synchronous>, transform_indices = @transform_7, window_bounds = array<i64: 128, 128>}, {pipeline_mode = #tpu.pipeline_mode<synchronous>, transform_indices = @transform_8, window_bounds = array<i64: 1, 128>}, {pipeline_mode = #tpu.pipeline_mode<synchronous>, transform_indices = @transform_9, window_bounds = array<i64: 128, 128>}, {pipeline_mode = #tpu.pipeline_mode<synchronous>, transform_indices = @transform_10, window_bounds = array<i64: 1, 128>}, {transform_indices = @transform_11, window_bounds = array<i64: 16, 128>}]} {
    %c0 = arith.constant 0 : index
    %c0_0 = arith.constant 0 : index
    %0 = vector.load %arg3[%c0, %c0_0] : memref<1x128xf32, #tpu.memory_space<vmem>>, vector<1x128xf32>
    %c0_1 = arith.constant 0 : index
    %c0_2 = arith.constant 0 : index
    %1 = vector.load %arg5[%c0_1, %c0_2] : memref<1x128xf32, #tpu.memory_space<vmem>>, vector<1x128xf32>
    %c0_3 = arith.constant 0 : index
    %c0_4 = arith.constant 0 : index
    %c0_5 = arith.constant 0 : index
    %c0_6 = arith.constant 0 : index
    %c0_7 = arith.constant 0 : index
    %2 = vector.load %arg1[%c0_3, %c0_4, %c0_5, %c0_6, %c0_7] : memref<1x4x2x128x96xbf16, #tpu.memory_space<vmem>>, vector<1x1x1x128x96xbf16>
    %3 = vector.shape_cast %2 : vector<1x1x1x128x96xbf16> to vector<128x96xbf16>
    %c0_8 = arith.constant 0 : index
    %c0_9 = arith.constant 0 : index
    %c0_10 = arith.constant 0 : index
    %c0_11 = arith.constant 0 : index
    %4 = vector.load %arg2[%c0_8, %c0_9, %c0_10, %c0_11] : memref<2x5x96x128xbf16, #tpu.memory_space<vmem>>, vector<1x1x96x128xbf16>
    %5 = vector.shape_cast %4 : vector<1x1x96x128xbf16> to vector<96x128xbf16>
    %cst = arith.constant dense<0.000000e+00> : vector<128x128xf32>
    %6 = tpu.matmul %3, %5, %cst {dimension_numbers = #tpu.dot_dimension_numbers<[1], [0], [0], [1], [0, 0, 1, 1], [], []>} : vector<128x96xbf16>, vector<96x128xbf16>, vector<128x128xf32> -> vector<128x128xf32>
    %c0_12 = arith.constant 0 : index
    %c1 = arith.constant 1 : index
    %c0_13 = arith.constant 0 : index
    %c0_14 = arith.constant 0 : index
    %c0_15 = arith.constant 0 : index
    %7 = vector.load %arg1[%c0_12, %c1, %c0_13, %c0_14, %c0_15] : memref<1x4x2x128x96xbf16, #tpu.memory_space<vmem>>, vector<1x1x1x128x96xbf16>
    %8 = vector.shape_cast %7 : vector<1x1x1x128x96xbf16> to vector<128x96xbf16>
    %c0_16 = arith.constant 0 : index
    %c1_17 = arith.constant 1 : index
    %c0_18 = arith.constant 0 : index
    %c0_19 = arith.constant 0 : index
    %9 = vector.load %arg2[%c0_16, %c1_17, %c0_18, %c0_19] : memref<2x5x96x128xbf16, #tpu.memory_space<vmem>>, vector<1x1x96x128xbf16>
    %10 = vector.shape_cast %9 : vector<1x1x96x128xbf16> to vector<96x128xbf16>
    %cst_20 = arith.constant dense<0.000000e+00> : vector<128x128xf32>
    %11 = tpu.matmul %8, %10, %cst_20 {dimension_numbers = #tpu.dot_dimension_numbers<[1], [0], [0], [1], [0, 0, 1, 1], [], []>} : vector<128x96xbf16>, vector<96x128xbf16>, vector<128x128xf32> -> vector<128x128xf32>
    %12 = arith.addf %6, %11 : vector<128x128xf32>
    %c0_21 = arith.constant 0 : index
    %c2 = arith.constant 2 : index
    %c0_22 = arith.constant 0 : index
    %c0_23 = arith.constant 0 : index
    %c0_24 = arith.constant 0 : index
    %13 = vector.load %arg1[%c0_21, %c2, %c0_22, %c0_23, %c0_24] : memref<1x4x2x128x96xbf16, #tpu.memory_space<vmem>>, vector<1x1x1x128x96xbf16>
    %14 = vector.shape_cast %13 : vector<1x1x1x128x96xbf16> to vector<128x96xbf16>
    %c0_25 = arith.constant 0 : index
    %c2_26 = arith.constant 2 : index
    %c0_27 = arith.constant 0 : index
    %c0_28 = arith.constant 0 : index
    %15 = vector.load %arg2[%c0_25, %c2_26, %c0_27, %c0_28] : memref<2x5x96x128xbf16, #tpu.memory_space<vmem>>, vector<1x1x96x128xbf16>
    %16 = vector.shape_cast %15 : vector<1x1x96x128xbf16> to vector<96x128xbf16>
    %cst_29 = arith.constant dense<0.000000e+00> : vector<128x128xf32>
    %17 = tpu.matmul %14, %16, %cst_29 {dimension_numbers = #tpu.dot_dimension_numbers<[1], [0], [0], [1], [0, 0, 1, 1], [], []>} : vector<128x96xbf16>, vector<96x128xbf16>, vector<128x128xf32> -> vector<128x128xf32>
    %18 = arith.addf %12, %17 : vector<128x128xf32>
    %c0_30 = arith.constant 0 : index
    %c3 = arith.constant 3 : index
    %c0_31 = arith.constant 0 : index
    %c0_32 = arith.constant 0 : index
    %c0_33 = arith.constant 0 : index
    %19 = vector.load %arg1[%c0_30, %c3, %c0_31, %c0_32, %c0_33] : memref<1x4x2x128x96xbf16, #tpu.memory_space<vmem>>, vector<1x1x1x128x96xbf16>
    %20 = vector.shape_cast %19 : vector<1x1x1x128x96xbf16> to vector<128x96xbf16>
    %c0_34 = arith.constant 0 : index
    %c3_35 = arith.constant 3 : index
    %c0_36 = arith.constant 0 : index
    %c0_37 = arith.constant 0 : index
    %21 = vector.load %arg2[%c0_34, %c3_35, %c0_36, %c0_37] : memref<2x5x96x128xbf16, #tpu.memory_space<vmem>>, vector<1x1x96x128xbf16>
    %22 = vector.shape_cast %21 : vector<1x1x96x128xbf16> to vector<96x128xbf16>
    %cst_38 = arith.constant dense<0.000000e+00> : vector<128x128xf32>
    %23 = tpu.matmul %20, %22, %cst_38 {dimension_numbers = #tpu.dot_dimension_numbers<[1], [0], [0], [1], [0, 0, 1, 1], [], []>} : vector<128x96xbf16>, vector<96x128xbf16>, vector<128x128xf32> -> vector<128x128xf32>
    %24 = arith.addf %18, %23 : vector<128x128xf32>
    %c0_39 = arith.constant 0 : index
    %c0_40 = arith.constant 0 : index
    %c1_41 = arith.constant 1 : index
    %c0_42 = arith.constant 0 : index
    %c0_43 = arith.constant 0 : index
    %25 = vector.load %arg1[%c0_39, %c0_40, %c1_41, %c0_42, %c0_43] : memref<1x4x2x128x96xbf16, #tpu.memory_space<vmem>>, vector<1x1x1x128x96xbf16>
    %26 = vector.shape_cast %25 : vector<1x1x1x128x96xbf16> to vector<128x96xbf16>
    %c0_44 = arith.constant 0 : index
    %c4 = arith.constant 4 : index
    %c0_45 = arith.constant 0 : index
    %c0_46 = arith.constant 0 : index
    %27 = vector.load %arg2[%c0_44, %c4, %c0_45, %c0_46] : memref<2x5x96x128xbf16, #tpu.memory_space<vmem>>, vector<1x1x96x128xbf16>
    %28 = vector.shape_cast %27 : vector<1x1x96x128xbf16> to vector<96x128xbf16>
    %cst_47 = arith.constant dense<0.000000e+00> : vector<128x128xf32>
    %29 = tpu.matmul %26, %28, %cst_47 {dimension_numbers = #tpu.dot_dimension_numbers<[1], [0], [0], [1], [0, 0, 1, 1], [], []>} : vector<128x96xbf16>, vector<96x128xbf16>, vector<128x128xf32> -> vector<128x128xf32>
    %30 = arith.addf %24, %29 : vector<128x128xf32>
    %31 = vector.broadcast %0 : vector<1x128xf32> to vector<128x128xf32>
    %32 = arith.addf %30, %31 : vector<128x128xf32>
    %cst_48 = arith.constant 0.000000e+00 : f32
    %33 = vector.broadcast %cst_48 : f32 to vector<128x128xf32>
    %34 = arith.maximumf %32, %33 : vector<128x128xf32>
    %c0_49 = arith.constant 0 : index
    %c0_50 = arith.constant 0 : index
    %c0_51 = arith.constant 0 : index
    %c0_52 = arith.constant 0 : index
    %c0_53 = arith.constant 0 : index
    %35 = vector.load %arg1[%c0_49, %c0_50, %c0_51, %c0_52, %c0_53] : memref<1x4x2x128x96xbf16, #tpu.memory_space<vmem>>, vector<1x1x1x128x96xbf16>
    %36 = vector.shape_cast %35 : vector<1x1x1x128x96xbf16> to vector<128x96xbf16>
    %c1_54 = arith.constant 1 : index
    %c0_55 = arith.constant 0 : index
    %c0_56 = arith.constant 0 : index
    %c0_57 = arith.constant 0 : index
    %37 = vector.load %arg2[%c1_54, %c0_55, %c0_56, %c0_57] : memref<2x5x96x128xbf16, #tpu.memory_space<vmem>>, vector<1x1x96x128xbf16>
    %38 = vector.shape_cast %37 : vector<1x1x96x128xbf16> to vector<96x128xbf16>
    %cst_58 = arith.constant dense<0.000000e+00> : vector<128x128xf32>
    %39 = tpu.matmul %36, %38, %cst_58 {dimension_numbers = #tpu.dot_dimension_numbers<[1], [0], [0], [1], [0, 0, 1, 1], [], []>} : vector<128x96xbf16>, vector<96x128xbf16>, vector<128x128xf32> -> vector<128x128xf32>
    %c0_59 = arith.constant 0 : index
    %c1_60 = arith.constant 1 : index
    %c0_61 = arith.constant 0 : index
    %c0_62 = arith.constant 0 : index
    %c0_63 = arith.constant 0 : index
    %40 = vector.load %arg1[%c0_59, %c1_60, %c0_61, %c0_62, %c0_63] : memref<1x4x2x128x96xbf16, #tpu.memory_space<vmem>>, vector<1x1x1x128x96xbf16>
    %41 = vector.shape_cast %40 : vector<1x1x1x128x96xbf16> to vector<128x96xbf16>
    %c1_64 = arith.constant 1 : index
    %c1_65 = arith.constant 1 : index
    %c0_66 = arith.constant 0 : index
    %c0_67 = arith.constant 0 : index
    %42 = vector.load %arg2[%c1_64, %c1_65, %c0_66, %c0_67] : memref<2x5x96x128xbf16, #tpu.memory_space<vmem>>, vector<1x1x96x128xbf16>
    %43 = vector.shape_cast %42 : vector<1x1x96x128xbf16> to vector<96x128xbf16>
    %cst_68 = arith.constant dense<0.000000e+00> : vector<128x128xf32>
    %44 = tpu.matmul %41, %43, %cst_68 {dimension_numbers = #tpu.dot_dimension_numbers<[1], [0], [0], [1], [0, 0, 1, 1], [], []>} : vector<128x96xbf16>, vector<96x128xbf16>, vector<128x128xf32> -> vector<128x128xf32>
    %45 = arith.addf %39, %44 : vector<128x128xf32>
    %c0_69 = arith.constant 0 : index
    %c2_70 = arith.constant 2 : index
    %c0_71 = arith.constant 0 : index
    %c0_72 = arith.constant 0 : index
    %c0_73 = arith.constant 0 : index
    %46 = vector.load %arg1[%c0_69, %c2_70, %c0_71, %c0_72, %c0_73] : memref<1x4x2x128x96xbf16, #tpu.memory_space<vmem>>, vector<1x1x1x128x96xbf16>
    %47 = vector.shape_cast %46 : vector<1x1x1x128x96xbf16> to vector<128x96xbf16>
    %c1_74 = arith.constant 1 : index
    %c2_75 = arith.constant 2 : index
    %c0_76 = arith.constant 0 : index
    %c0_77 = arith.constant 0 : index
    %48 = vector.load %arg2[%c1_74, %c2_75, %c0_76, %c0_77] : memref<2x5x96x128xbf16, #tpu.memory_space<vmem>>, vector<1x1x96x128xbf16>
    %49 = vector.shape_cast %48 : vector<1x1x96x128xbf16> to vector<96x128xbf16>
    %cst_78 = arith.constant dense<0.000000e+00> : vector<128x128xf32>
    %50 = tpu.matmul %47, %49, %cst_78 {dimension_numbers = #tpu.dot_dimension_numbers<[1], [0], [0], [1], [0, 0, 1, 1], [], []>} : vector<128x96xbf16>, vector<96x128xbf16>, vector<128x128xf32> -> vector<128x128xf32>
    %51 = arith.addf %45, %50 : vector<128x128xf32>
    %c0_79 = arith.constant 0 : index
    %c3_80 = arith.constant 3 : index
    %c0_81 = arith.constant 0 : index
    %c0_82 = arith.constant 0 : index
    %c0_83 = arith.constant 0 : index
    %52 = vector.load %arg1[%c0_79, %c3_80, %c0_81, %c0_82, %c0_83] : memref<1x4x2x128x96xbf16, #tpu.memory_space<vmem>>, vector<1x1x1x128x96xbf16>
    %53 = vector.shape_cast %52 : vector<1x1x1x128x96xbf16> to vector<128x96xbf16>
    %c1_84 = arith.constant 1 : index
    %c3_85 = arith.constant 3 : index
    %c0_86 = arith.constant 0 : index
    %c0_87 = arith.constant 0 : index
    %54 = vector.load %arg2[%c1_84, %c3_85, %c0_86, %c0_87] : memref<2x5x96x128xbf16, #tpu.memory_space<vmem>>, vector<1x1x96x128xbf16>
    %55 = vector.shape_cast %54 : vector<1x1x96x128xbf16> to vector<96x128xbf16>
    %cst_88 = arith.constant dense<0.000000e+00> : vector<128x128xf32>
    %56 = tpu.matmul %53, %55, %cst_88 {dimension_numbers = #tpu.dot_dimension_numbers<[1], [0], [0], [1], [0, 0, 1, 1], [], []>} : vector<128x96xbf16>, vector<96x128xbf16>, vector<128x128xf32> -> vector<128x128xf32>
    %57 = arith.addf %51, %56 : vector<128x128xf32>
    %c0_89 = arith.constant 0 : index
    %c0_90 = arith.constant 0 : index
    %c1_91 = arith.constant 1 : index
    %c0_92 = arith.constant 0 : index
    %c0_93 = arith.constant 0 : index
    %58 = vector.load %arg1[%c0_89, %c0_90, %c1_91, %c0_92, %c0_93] : memref<1x4x2x128x96xbf16, #tpu.memory_space<vmem>>, vector<1x1x1x128x96xbf16>
    %59 = vector.shape_cast %58 : vector<1x1x1x128x96xbf16> to vector<128x96xbf16>
    %c1_94 = arith.constant 1 : index
    %c4_95 = arith.constant 4 : index
    %c0_96 = arith.constant 0 : index
    %c0_97 = arith.constant 0 : index
    %60 = vector.load %arg2[%c1_94, %c4_95, %c0_96, %c0_97] : memref<2x5x96x128xbf16, #tpu.memory_space<vmem>>, vector<1x1x96x128xbf16>
    %61 = vector.shape_cast %60 : vector<1x1x96x128xbf16> to vector<96x128xbf16>
    %cst_98 = arith.constant dense<0.000000e+00> : vector<128x128xf32>
    %62 = tpu.matmul %59, %61, %cst_98 {dimension_numbers = #tpu.dot_dimension_numbers<[1], [0], [0], [1], [0, 0, 1, 1], [], []>} : vector<128x96xbf16>, vector<96x128xbf16>, vector<128x128xf32> -> vector<128x128xf32>
    %63 = arith.addf %57, %62 : vector<128x128xf32>
    %64 = vector.broadcast %0 : vector<1x128xf32> to vector<128x128xf32>
    %65 = arith.addf %63, %64 : vector<128x128xf32>
    %cst_99 = arith.constant 0.000000e+00 : f32
    %66 = vector.broadcast %cst_99 : f32 to vector<128x128xf32>
    %67 = arith.maximumf %65, %66 : vector<128x128xf32>
    %c0_100 = arith.constant 0 : index
    %c1_101 = arith.constant 1 : index
    %c0_102 = arith.constant 0 : index
    %c0_103 = arith.constant 0 : index
    %c0_104 = arith.constant 0 : index
    %68 = vector.load %arg1[%c0_100, %c1_101, %c0_102, %c0_103, %c0_104] : memref<1x4x2x128x96xbf16, #tpu.memory_space<vmem>>, vector<1x1x1x128x96xbf16>
    %69 = vector.shape_cast %68 : vector<1x1x1x128x96xbf16> to vector<128x96xbf16>
    %c0_105 = arith.constant 0 : index
    %c0_106 = arith.constant 0 : index
    %c0_107 = arith.constant 0 : index
    %c0_108 = arith.constant 0 : index
    %70 = vector.load %arg2[%c0_105, %c0_106, %c0_107, %c0_108] : memref<2x5x96x128xbf16, #tpu.memory_space<vmem>>, vector<1x1x96x128xbf16>
    %71 = vector.shape_cast %70 : vector<1x1x96x128xbf16> to vector<96x128xbf16>
    %cst_109 = arith.constant dense<0.000000e+00> : vector<128x128xf32>
    %72 = tpu.matmul %69, %71, %cst_109 {dimension_numbers = #tpu.dot_dimension_numbers<[1], [0], [0], [1], [0, 0, 1, 1], [], []>} : vector<128x96xbf16>, vector<96x128xbf16>, vector<128x128xf32> -> vector<128x128xf32>
    %c0_110 = arith.constant 0 : index
    %c2_111 = arith.constant 2 : index
    %c0_112 = arith.constant 0 : index
    %c0_113 = arith.constant 0 : index
    %c0_114 = arith.constant 0 : index
    %73 = vector.load %arg1[%c0_110, %c2_111, %c0_112, %c0_113, %c0_114] : memref<1x4x2x128x96xbf16, #tpu.memory_space<vmem>>, vector<1x1x1x128x96xbf16>
    %74 = vector.shape_cast %73 : vector<1x1x1x128x96xbf16> to vector<128x96xbf16>
    %c0_115 = arith.constant 0 : index
    %c1_116 = arith.constant 1 : index
    %c0_117 = arith.constant 0 : index
    %c0_118 = arith.constant 0 : index
    %75 = vector.load %arg2[%c0_115, %c1_116, %c0_117, %c0_118] : memref<2x5x96x128xbf16, #tpu.memory_space<vmem>>, vector<1x1x96x128xbf16>
    %76 = vector.shape_cast %75 : vector<1x1x96x128xbf16> to vector<96x128xbf16>
    %cst_119 = arith.constant dense<0.000000e+00> : vector<128x128xf32>
    %77 = tpu.matmul %74, %76, %cst_119 {dimension_numbers = #tpu.dot_dimension_numbers<[1], [0], [0], [1], [0, 0, 1, 1], [], []>} : vector<128x96xbf16>, vector<96x128xbf16>, vector<128x128xf32> -> vector<128x128xf32>
    %78 = arith.addf %72, %77 : vector<128x128xf32>
    %c0_120 = arith.constant 0 : index
    %c3_121 = arith.constant 3 : index
    %c0_122 = arith.constant 0 : index
    %c0_123 = arith.constant 0 : index
    %c0_124 = arith.constant 0 : index
    %79 = vector.load %arg1[%c0_120, %c3_121, %c0_122, %c0_123, %c0_124] : memref<1x4x2x128x96xbf16, #tpu.memory_space<vmem>>, vector<1x1x1x128x96xbf16>
    %80 = vector.shape_cast %79 : vector<1x1x1x128x96xbf16> to vector<128x96xbf16>
    %c0_125 = arith.constant 0 : index
    %c2_126 = arith.constant 2 : index
    %c0_127 = arith.constant 0 : index
    %c0_128 = arith.constant 0 : index
    %81 = vector.load %arg2[%c0_125, %c2_126, %c0_127, %c0_128] : memref<2x5x96x128xbf16, #tpu.memory_space<vmem>>, vector<1x1x96x128xbf16>
    %82 = vector.shape_cast %81 : vector<1x1x96x128xbf16> to vector<96x128xbf16>
    %cst_129 = arith.constant dense<0.000000e+00> : vector<128x128xf32>
    %83 = tpu.matmul %80, %82, %cst_129 {dimension_numbers = #tpu.dot_dimension_numbers<[1], [0], [0], [1], [0, 0, 1, 1], [], []>} : vector<128x96xbf16>, vector<96x128xbf16>, vector<128x128xf32> -> vector<128x128xf32>
    %84 = arith.addf %78, %83 : vector<128x128xf32>
    %c0_130 = arith.constant 0 : index
    %c0_131 = arith.constant 0 : index
    %c1_132 = arith.constant 1 : index
    %c0_133 = arith.constant 0 : index
    %c0_134 = arith.constant 0 : index
    %85 = vector.load %arg1[%c0_130, %c0_131, %c1_132, %c0_133, %c0_134] : memref<1x4x2x128x96xbf16, #tpu.memory_space<vmem>>, vector<1x1x1x128x96xbf16>
    %86 = vector.shape_cast %85 : vector<1x1x1x128x96xbf16> to vector<128x96xbf16>
    %c0_135 = arith.constant 0 : index
    %c3_136 = arith.constant 3 : index
    %c0_137 = arith.constant 0 : index
    %c0_138 = arith.constant 0 : index
    %87 = vector.load %arg2[%c0_135, %c3_136, %c0_137, %c0_138] : memref<2x5x96x128xbf16, #tpu.memory_space<vmem>>, vector<1x1x96x128xbf16>
    %88 = vector.shape_cast %87 : vector<1x1x96x128xbf16> to vector<96x128xbf16>
    %cst_139 = arith.constant dense<0.000000e+00> : vector<128x128xf32>
    %89 = tpu.matmul %86, %88, %cst_139 {dimension_numbers = #tpu.dot_dimension_numbers<[1], [0], [0], [1], [0, 0, 1, 1], [], []>} : vector<128x96xbf16>, vector<96x128xbf16>, vector<128x128xf32> -> vector<128x128xf32>
    %90 = arith.addf %84, %89 : vector<128x128xf32>
    %c0_140 = arith.constant 0 : index
    %c1_141 = arith.constant 1 : index
    %c1_142 = arith.constant 1 : index
    %c0_143 = arith.constant 0 : index
    %c0_144 = arith.constant 0 : index
    %91 = vector.load %arg1[%c0_140, %c1_141, %c1_142, %c0_143, %c0_144] : memref<1x4x2x128x96xbf16, #tpu.memory_space<vmem>>, vector<1x1x1x128x96xbf16>
    %92 = vector.shape_cast %91 : vector<1x1x1x128x96xbf16> to vector<128x96xbf16>
    %c0_145 = arith.constant 0 : index
    %c4_146 = arith.constant 4 : index
    %c0_147 = arith.constant 0 : index
    %c0_148 = arith.constant 0 : index
    %93 = vector.load %arg2[%c0_145, %c4_146, %c0_147, %c0_148] : memref<2x5x96x128xbf16, #tpu.memory_space<vmem>>, vector<1x1x96x128xbf16>
    %94 = vector.shape_cast %93 : vector<1x1x96x128xbf16> to vector<96x128xbf16>
    %cst_149 = arith.constant dense<0.000000e+00> : vector<128x128xf32>
    %95 = tpu.matmul %92, %94, %cst_149 {dimension_numbers = #tpu.dot_dimension_numbers<[1], [0], [0], [1], [0, 0, 1, 1], [], []>} : vector<128x96xbf16>, vector<96x128xbf16>, vector<128x128xf32> -> vector<128x128xf32>
    %96 = arith.addf %90, %95 : vector<128x128xf32>
    %97 = vector.broadcast %0 : vector<1x128xf32> to vector<128x128xf32>
    %98 = arith.addf %96, %97 : vector<128x128xf32>
    %cst_150 = arith.constant 0.000000e+00 : f32
    %99 = vector.broadcast %cst_150 : f32 to vector<128x128xf32>
    %100 = arith.maximumf %98, %99 : vector<128x128xf32>
    %c0_151 = arith.constant 0 : index
    %c1_152 = arith.constant 1 : index
    %c0_153 = arith.constant 0 : index
    %c0_154 = arith.constant 0 : index
    %c0_155 = arith.constant 0 : index
    %101 = vector.load %arg1[%c0_151, %c1_152, %c0_153, %c0_154, %c0_155] : memref<1x4x2x128x96xbf16, #tpu.memory_space<vmem>>, vector<1x1x1x128x96xbf16>
    %102 = vector.shape_cast %101 : vector<1x1x1x128x96xbf16> to vector<128x96xbf16>
    %c1_156 = arith.constant 1 : index
    %c0_157 = arith.constant 0 : index
    %c0_158 = arith.constant 0 : index
    %c0_159 = arith.constant 0 : index
    %103 = vector.load %arg2[%c1_156, %c0_157, %c0_158, %c0_159] : memref<2x5x96x128xbf16, #tpu.memory_space<vmem>>, vector<1x1x96x128xbf16>
    %104 = vector.shape_cast %103 : vector<1x1x96x128xbf16> to vector<96x128xbf16>
    %cst_160 = arith.constant dense<0.000000e+00> : vector<128x128xf32>
    %105 = tpu.matmul %102, %104, %cst_160 {dimension_numbers = #tpu.dot_dimension_numbers<[1], [0], [0], [1], [0, 0, 1, 1], [], []>} : vector<128x96xbf16>, vector<96x128xbf16>, vector<128x128xf32> -> vector<128x128xf32>
    %c0_161 = arith.constant 0 : index
    %c2_162 = arith.constant 2 : index
    %c0_163 = arith.constant 0 : index
    %c0_164 = arith.constant 0 : index
    %c0_165 = arith.constant 0 : index
    %106 = vector.load %arg1[%c0_161, %c2_162, %c0_163, %c0_164, %c0_165] : memref<1x4x2x128x96xbf16, #tpu.memory_space<vmem>>, vector<1x1x1x128x96xbf16>
    %107 = vector.shape_cast %106 : vector<1x1x1x128x96xbf16> to vector<128x96xbf16>
    %c1_166 = arith.constant 1 : index
    %c1_167 = arith.constant 1 : index
    %c0_168 = arith.constant 0 : index
    %c0_169 = arith.constant 0 : index
    %108 = vector.load %arg2[%c1_166, %c1_167, %c0_168, %c0_169] : memref<2x5x96x128xbf16, #tpu.memory_space<vmem>>, vector<1x1x96x128xbf16>
    %109 = vector.shape_cast %108 : vector<1x1x96x128xbf16> to vector<96x128xbf16>
    %cst_170 = arith.constant dense<0.000000e+00> : vector<128x128xf32>
    %110 = tpu.matmul %107, %109, %cst_170 {dimension_numbers = #tpu.dot_dimension_numbers<[1], [0], [0], [1], [0, 0, 1, 1], [], []>} : vector<128x96xbf16>, vector<96x128xbf16>, vector<128x128xf32> -> vector<128x128xf32>
    %111 = arith.addf %105, %110 : vector<128x128xf32>
    %c0_171 = arith.constant 0 : index
    %c3_172 = arith.constant 3 : index
    %c0_173 = arith.constant 0 : index
    %c0_174 = arith.constant 0 : index
    %c0_175 = arith.constant 0 : index
    %112 = vector.load %arg1[%c0_171, %c3_172, %c0_173, %c0_174, %c0_175] : memref<1x4x2x128x96xbf16, #tpu.memory_space<vmem>>, vector<1x1x1x128x96xbf16>
    %113 = vector.shape_cast %112 : vector<1x1x1x128x96xbf16> to vector<128x96xbf16>
    %c1_176 = arith.constant 1 : index
    %c2_177 = arith.constant 2 : index
    %c0_178 = arith.constant 0 : index
    %c0_179 = arith.constant 0 : index
    %114 = vector.load %arg2[%c1_176, %c2_177, %c0_178, %c0_179] : memref<2x5x96x128xbf16, #tpu.memory_space<vmem>>, vector<1x1x96x128xbf16>
    %115 = vector.shape_cast %114 : vector<1x1x96x128xbf16> to vector<96x128xbf16>
    %cst_180 = arith.constant dense<0.000000e+00> : vector<128x128xf32>
    %116 = tpu.matmul %113, %115, %cst_180 {dimension_numbers = #tpu.dot_dimension_numbers<[1], [0], [0], [1], [0, 0, 1, 1], [], []>} : vector<128x96xbf16>, vector<96x128xbf16>, vector<128x128xf32> -> vector<128x128xf32>
    %117 = arith.addf %111, %116 : vector<128x128xf32>
    %c0_181 = arith.constant 0 : index
    %c0_182 = arith.constant 0 : index
    %c1_183 = arith.constant 1 : index
    %c0_184 = arith.constant 0 : index
    %c0_185 = arith.constant 0 : index
    %118 = vector.load %arg1[%c0_181, %c0_182, %c1_183, %c0_184, %c0_185] : memref<1x4x2x128x96xbf16, #tpu.memory_space<vmem>>, vector<1x1x1x128x96xbf16>
    %119 = vector.shape_cast %118 : vector<1x1x1x128x96xbf16> to vector<128x96xbf16>
    %c1_186 = arith.constant 1 : index
    %c3_187 = arith.constant 3 : index
    %c0_188 = arith.constant 0 : index
    %c0_189 = arith.constant 0 : index
    %120 = vector.load %arg2[%c1_186, %c3_187, %c0_188, %c0_189] : memref<2x5x96x128xbf16, #tpu.memory_space<vmem>>, vector<1x1x96x128xbf16>
    %121 = vector.shape_cast %120 : vector<1x1x96x128xbf16> to vector<96x128xbf16>
    %cst_190 = arith.constant dense<0.000000e+00> : vector<128x128xf32>
    %122 = tpu.matmul %119, %121, %cst_190 {dimension_numbers = #tpu.dot_dimension_numbers<[1], [0], [0], [1], [0, 0, 1, 1], [], []>} : vector<128x96xbf16>, vector<96x128xbf16>, vector<128x128xf32> -> vector<128x128xf32>
    %123 = arith.addf %117, %122 : vector<128x128xf32>
    %c0_191 = arith.constant 0 : index
    %c1_192 = arith.constant 1 : index
    %c1_193 = arith.constant 1 : index
    %c0_194 = arith.constant 0 : index
    %c0_195 = arith.constant 0 : index
    %124 = vector.load %arg1[%c0_191, %c1_192, %c1_193, %c0_194, %c0_195] : memref<1x4x2x128x96xbf16, #tpu.memory_space<vmem>>, vector<1x1x1x128x96xbf16>
    %125 = vector.shape_cast %124 : vector<1x1x1x128x96xbf16> to vector<128x96xbf16>
    %c1_196 = arith.constant 1 : index
    %c4_197 = arith.constant 4 : index
    %c0_198 = arith.constant 0 : index
    %c0_199 = arith.constant 0 : index
    %126 = vector.load %arg2[%c1_196, %c4_197, %c0_198, %c0_199] : memref<2x5x96x128xbf16, #tpu.memory_space<vmem>>, vector<1x1x96x128xbf16>
    %127 = vector.shape_cast %126 : vector<1x1x96x128xbf16> to vector<96x128xbf16>
    %cst_200 = arith.constant dense<0.000000e+00> : vector<128x128xf32>
    %128 = tpu.matmul %125, %127, %cst_200 {dimension_numbers = #tpu.dot_dimension_numbers<[1], [0], [0], [1], [0, 0, 1, 1], [], []>} : vector<128x96xbf16>, vector<96x128xbf16>, vector<128x128xf32> -> vector<128x128xf32>
    %129 = arith.addf %123, %128 : vector<128x128xf32>
    %130 = vector.broadcast %0 : vector<1x128xf32> to vector<128x128xf32>
    %131 = arith.addf %129, %130 : vector<128x128xf32>
    %cst_201 = arith.constant 0.000000e+00 : f32
    %132 = vector.broadcast %cst_201 : f32 to vector<128x128xf32>
    %133 = arith.maximumf %131, %132 : vector<128x128xf32>
    %c0_202 = arith.constant 0 : index
    %c2_203 = arith.constant 2 : index
    %c0_204 = arith.constant 0 : index
    %c0_205 = arith.constant 0 : index
    %c0_206 = arith.constant 0 : index
    %134 = vector.load %arg1[%c0_202, %c2_203, %c0_204, %c0_205, %c0_206] : memref<1x4x2x128x96xbf16, #tpu.memory_space<vmem>>, vector<1x1x1x128x96xbf16>
    %135 = vector.shape_cast %134 : vector<1x1x1x128x96xbf16> to vector<128x96xbf16>
    %c0_207 = arith.constant 0 : index
    %c0_208 = arith.constant 0 : index
    %c0_209 = arith.constant 0 : index
    %c0_210 = arith.constant 0 : index
    %136 = vector.load %arg2[%c0_207, %c0_208, %c0_209, %c0_210] : memref<2x5x96x128xbf16, #tpu.memory_space<vmem>>, vector<1x1x96x128xbf16>
    %137 = vector.shape_cast %136 : vector<1x1x96x128xbf16> to vector<96x128xbf16>
    %cst_211 = arith.constant dense<0.000000e+00> : vector<128x128xf32>
    %138 = tpu.matmul %135, %137, %cst_211 {dimension_numbers = #tpu.dot_dimension_numbers<[1], [0], [0], [1], [0, 0, 1, 1], [], []>} : vector<128x96xbf16>, vector<96x128xbf16>, vector<128x128xf32> -> vector<128x128xf32>
    %c0_212 = arith.constant 0 : index
    %c3_213 = arith.constant 3 : index
    %c0_214 = arith.constant 0 : index
    %c0_215 = arith.constant 0 : index
    %c0_216 = arith.constant 0 : index
    %139 = vector.load %arg1[%c0_212, %c3_213, %c0_214, %c0_215, %c0_216] : memref<1x4x2x128x96xbf16, #tpu.memory_space<vmem>>, vector<1x1x1x128x96xbf16>
    %140 = vector.shape_cast %139 : vector<1x1x1x128x96xbf16> to vector<128x96xbf16>
    %c0_217 = arith.constant 0 : index
    %c1_218 = arith.constant 1 : index
    %c0_219 = arith.constant 0 : index
    %c0_220 = arith.constant 0 : index
    %141 = vector.load %arg2[%c0_217, %c1_218, %c0_219, %c0_220] : memref<2x5x96x128xbf16, #tpu.memory_space<vmem>>, vector<1x1x96x128xbf16>
    %142 = vector.shape_cast %141 : vector<1x1x96x128xbf16> to vector<96x128xbf16>
    %cst_221 = arith.constant dense<0.000000e+00> : vector<128x128xf32>
    %143 = tpu.matmul %140, %142, %cst_221 {dimension_numbers = #tpu.dot_dimension_numbers<[1], [0], [0], [1], [0, 0, 1, 1], [], []>} : vector<128x96xbf16>, vector<96x128xbf16>, vector<128x128xf32> -> vector<128x128xf32>
    %144 = arith.addf %138, %143 : vector<128x128xf32>
    %c0_222 = arith.constant 0 : index
    %c0_223 = arith.constant 0 : index
    %c1_224 = arith.constant 1 : index
    %c0_225 = arith.constant 0 : index
    %c0_226 = arith.constant 0 : index
    %145 = vector.load %arg1[%c0_222, %c0_223, %c1_224, %c0_225, %c0_226] : memref<1x4x2x128x96xbf16, #tpu.memory_space<vmem>>, vector<1x1x1x128x96xbf16>
    %146 = vector.shape_cast %145 : vector<1x1x1x128x96xbf16> to vector<128x96xbf16>
    %c0_227 = arith.constant 0 : index
    %c2_228 = arith.constant 2 : index
    %c0_229 = arith.constant 0 : index
    %c0_230 = arith.constant 0 : index
    %147 = vector.load %arg2[%c0_227, %c2_228, %c0_229, %c0_230] : memref<2x5x96x128xbf16, #tpu.memory_space<vmem>>, vector<1x1x96x128xbf16>
    %148 = vector.shape_cast %147 : vector<1x1x96x128xbf16> to vector<96x128xbf16>
    %cst_231 = arith.constant dense<0.000000e+00> : vector<128x128xf32>
    %149 = tpu.matmul %146, %148, %cst_231 {dimension_numbers = #tpu.dot_dimension_numbers<[1], [0], [0], [1], [0, 0, 1, 1], [], []>} : vector<128x96xbf16>, vector<96x128xbf16>, vector<128x128xf32> -> vector<128x128xf32>
    %150 = arith.addf %144, %149 : vector<128x128xf32>
    %c0_232 = arith.constant 0 : index
    %c1_233 = arith.constant 1 : index
    %c1_234 = arith.constant 1 : index
    %c0_235 = arith.constant 0 : index
    %c0_236 = arith.constant 0 : index
    %151 = vector.load %arg1[%c0_232, %c1_233, %c1_234, %c0_235, %c0_236] : memref<1x4x2x128x96xbf16, #tpu.memory_space<vmem>>, vector<1x1x1x128x96xbf16>
    %152 = vector.shape_cast %151 : vector<1x1x1x128x96xbf16> to vector<128x96xbf16>
    %c0_237 = arith.constant 0 : index
    %c3_238 = arith.constant 3 : index
    %c0_239 = arith.constant 0 : index
    %c0_240 = arith.constant 0 : index
    %153 = vector.load %arg2[%c0_237, %c3_238, %c0_239, %c0_240] : memref<2x5x96x128xbf16, #tpu.memory_space<vmem>>, vector<1x1x96x128xbf16>
    %154 = vector.shape_cast %153 : vector<1x1x96x128xbf16> to vector<96x128xbf16>
    %cst_241 = arith.constant dense<0.000000e+00> : vector<128x128xf32>
    %155 = tpu.matmul %152, %154, %cst_241 {dimension_numbers = #tpu.dot_dimension_numbers<[1], [0], [0], [1], [0, 0, 1, 1], [], []>} : vector<128x96xbf16>, vector<96x128xbf16>, vector<128x128xf32> -> vector<128x128xf32>
    %156 = arith.addf %150, %155 : vector<128x128xf32>
    %c0_242 = arith.constant 0 : index
    %c2_243 = arith.constant 2 : index
    %c1_244 = arith.constant 1 : index
    %c0_245 = arith.constant 0 : index
    %c0_246 = arith.constant 0 : index
    %157 = vector.load %arg1[%c0_242, %c2_243, %c1_244, %c0_245, %c0_246] : memref<1x4x2x128x96xbf16, #tpu.memory_space<vmem>>, vector<1x1x1x128x96xbf16>
    %158 = vector.shape_cast %157 : vector<1x1x1x128x96xbf16> to vector<128x96xbf16>
    %c0_247 = arith.constant 0 : index
    %c4_248 = arith.constant 4 : index
    %c0_249 = arith.constant 0 : index
    %c0_250 = arith.constant 0 : index
    %159 = vector.load %arg2[%c0_247, %c4_248, %c0_249, %c0_250] : memref<2x5x96x128xbf16, #tpu.memory_space<vmem>>, vector<1x1x96x128xbf16>
    %160 = vector.shape_cast %159 : vector<1x1x96x128xbf16> to vector<96x128xbf16>
    %cst_251 = arith.constant dense<0.000000e+00> : vector<128x128xf32>
    %161 = tpu.matmul %158, %160, %cst_251 {dimension_numbers = #tpu.dot_dimension_numbers<[1], [0], [0], [1], [0, 0, 1, 1], [], []>} : vector<128x96xbf16>, vector<96x128xbf16>, vector<128x128xf32> -> vector<128x128xf32>
    %162 = arith.addf %156, %161 : vector<128x128xf32>
    %163 = vector.broadcast %0 : vector<1x128xf32> to vector<128x128xf32>
    %164 = arith.addf %162, %163 : vector<128x128xf32>
    %cst_252 = arith.constant 0.000000e+00 : f32
    %165 = vector.broadcast %cst_252 : f32 to vector<128x128xf32>
    %166 = arith.maximumf %164, %165 : vector<128x128xf32>
    %c0_253 = arith.constant 0 : index
    %c2_254 = arith.constant 2 : index
    %c0_255 = arith.constant 0 : index
    %c0_256 = arith.constant 0 : index
    %c0_257 = arith.constant 0 : index
    %167 = vector.load %arg1[%c0_253, %c2_254, %c0_255, %c0_256, %c0_257] : memref<1x4x2x128x96xbf16, #tpu.memory_space<vmem>>, vector<1x1x1x128x96xbf16>
    %168 = vector.shape_cast %167 : vector<1x1x1x128x96xbf16> to vector<128x96xbf16>
    %c1_258 = arith.constant 1 : index
    %c0_259 = arith.constant 0 : index
    %c0_260 = arith.constant 0 : index
    %c0_261 = arith.constant 0 : index
    %169 = vector.load %arg2[%c1_258, %c0_259, %c0_260, %c0_261] : memref<2x5x96x128xbf16, #tpu.memory_space<vmem>>, vector<1x1x96x128xbf16>
    %170 = vector.shape_cast %169 : vector<1x1x96x128xbf16> to vector<96x128xbf16>
    %cst_262 = arith.constant dense<0.000000e+00> : vector<128x128xf32>
    %171 = tpu.matmul %168, %170, %cst_262 {dimension_numbers = #tpu.dot_dimension_numbers<[1], [0], [0], [1], [0, 0, 1, 1], [], []>} : vector<128x96xbf16>, vector<96x128xbf16>, vector<128x128xf32> -> vector<128x128xf32>
    %c0_263 = arith.constant 0 : index
    %c3_264 = arith.constant 3 : index
    %c0_265 = arith.constant 0 : index
    %c0_266 = arith.constant 0 : index
    %c0_267 = arith.constant 0 : index
    %172 = vector.load %arg1[%c0_263, %c3_264, %c0_265, %c0_266, %c0_267] : memref<1x4x2x128x96xbf16, #tpu.memory_space<vmem>>, vector<1x1x1x128x96xbf16>
    %173 = vector.shape_cast %172 : vector<1x1x1x128x96xbf16> to vector<128x96xbf16>
    %c1_268 = arith.constant 1 : index
    %c1_269 = arith.constant 1 : index
    %c0_270 = arith.constant 0 : index
    %c0_271 = arith.constant 0 : index
    %174 = vector.load %arg2[%c1_268, %c1_269, %c0_270, %c0_271] : memref<2x5x96x128xbf16, #tpu.memory_space<vmem>>, vector<1x1x96x128xbf16>
    %175 = vector.shape_cast %174 : vector<1x1x96x128xbf16> to vector<96x128xbf16>
    %cst_272 = arith.constant dense<0.000000e+00> : vector<128x128xf32>
    %176 = tpu.matmul %173, %175, %cst_272 {dimension_numbers = #tpu.dot_dimension_numbers<[1], [0], [0], [1], [0, 0, 1, 1], [], []>} : vector<128x96xbf16>, vector<96x128xbf16>, vector<128x128xf32> -> vector<128x128xf32>
    %177 = arith.addf %171, %176 : vector<128x128xf32>
    %c0_273 = arith.constant 0 : index
    %c0_274 = arith.constant 0 : index
    %c1_275 = arith.constant 1 : index
    %c0_276 = arith.constant 0 : index
    %c0_277 = arith.constant 0 : index
    %178 = vector.load %arg1[%c0_273, %c0_274, %c1_275, %c0_276, %c0_277] : memref<1x4x2x128x96xbf16, #tpu.memory_space<vmem>>, vector<1x1x1x128x96xbf16>
    %179 = vector.shape_cast %178 : vector<1x1x1x128x96xbf16> to vector<128x96xbf16>
    %c1_278 = arith.constant 1 : index
    %c2_279 = arith.constant 2 : index
    %c0_280 = arith.constant 0 : index
    %c0_281 = arith.constant 0 : index
    %180 = vector.load %arg2[%c1_278, %c2_279, %c0_280, %c0_281] : memref<2x5x96x128xbf16, #tpu.memory_space<vmem>>, vector<1x1x96x128xbf16>
    %181 = vector.shape_cast %180 : vector<1x1x96x128xbf16> to vector<96x128xbf16>
    %cst_282 = arith.constant dense<0.000000e+00> : vector<128x128xf32>
    %182 = tpu.matmul %179, %181, %cst_282 {dimension_numbers = #tpu.dot_dimension_numbers<[1], [0], [0], [1], [0, 0, 1, 1], [], []>} : vector<128x96xbf16>, vector<96x128xbf16>, vector<128x128xf32> -> vector<128x128xf32>
    %183 = arith.addf %177, %182 : vector<128x128xf32>
    %c0_283 = arith.constant 0 : index
    %c1_284 = arith.constant 1 : index
    %c1_285 = arith.constant 1 : index
    %c0_286 = arith.constant 0 : index
    %c0_287 = arith.constant 0 : index
    %184 = vector.load %arg1[%c0_283, %c1_284, %c1_285, %c0_286, %c0_287] : memref<1x4x2x128x96xbf16, #tpu.memory_space<vmem>>, vector<1x1x1x128x96xbf16>
    %185 = vector.shape_cast %184 : vector<1x1x1x128x96xbf16> to vector<128x96xbf16>
    %c1_288 = arith.constant 1 : index
    %c3_289 = arith.constant 3 : index
    %c0_290 = arith.constant 0 : index
    %c0_291 = arith.constant 0 : index
    %186 = vector.load %arg2[%c1_288, %c3_289, %c0_290, %c0_291] : memref<2x5x96x128xbf16, #tpu.memory_space<vmem>>, vector<1x1x96x128xbf16>
    %187 = vector.shape_cast %186 : vector<1x1x96x128xbf16> to vector<96x128xbf16>
    %cst_292 = arith.constant dense<0.000000e+00> : vector<128x128xf32>
    %188 = tpu.matmul %185, %187, %cst_292 {dimension_numbers = #tpu.dot_dimension_numbers<[1], [0], [0], [1], [0, 0, 1, 1], [], []>} : vector<128x96xbf16>, vector<96x128xbf16>, vector<128x128xf32> -> vector<128x128xf32>
    %189 = arith.addf %183, %188 : vector<128x128xf32>
    %c0_293 = arith.constant 0 : index
    %c2_294 = arith.constant 2 : index
    %c1_295 = arith.constant 1 : index
    %c0_296 = arith.constant 0 : index
    %c0_297 = arith.constant 0 : index
    %190 = vector.load %arg1[%c0_293, %c2_294, %c1_295, %c0_296, %c0_297] : memref<1x4x2x128x96xbf16, #tpu.memory_space<vmem>>, vector<1x1x1x128x96xbf16>
    %191 = vector.shape_cast %190 : vector<1x1x1x128x96xbf16> to vector<128x96xbf16>
    %c1_298 = arith.constant 1 : index
    %c4_299 = arith.constant 4 : index
    %c0_300 = arith.constant 0 : index
    %c0_301 = arith.constant 0 : index
    %192 = vector.load %arg2[%c1_298, %c4_299, %c0_300, %c0_301] : memref<2x5x96x128xbf16, #tpu.memory_space<vmem>>, vector<1x1x96x128xbf16>
    %193 = vector.shape_cast %192 : vector<1x1x96x128xbf16> to vector<96x128xbf16>
    %cst_302 = arith.constant dense<0.000000e+00> : vector<128x128xf32>
    %194 = tpu.matmul %191, %193, %cst_302 {dimension_numbers = #tpu.dot_dimension_numbers<[1], [0], [0], [1], [0, 0, 1, 1], [], []>} : vector<128x96xbf16>, vector<96x128xbf16>, vector<128x128xf32> -> vector<128x128xf32>
    %195 = arith.addf %189, %194 : vector<128x128xf32>
    %196 = vector.broadcast %0 : vector<1x128xf32> to vector<128x128xf32>
    %197 = arith.addf %195, %196 : vector<128x128xf32>
    %cst_303 = arith.constant 0.000000e+00 : f32
    %198 = vector.broadcast %cst_303 : f32 to vector<128x128xf32>
    %199 = arith.maximumf %197, %198 : vector<128x128xf32>
    %c0_304 = arith.constant 0 : index
    %c3_305 = arith.constant 3 : index
    %c0_306 = arith.constant 0 : index
    %c0_307 = arith.constant 0 : index
    %c0_308 = arith.constant 0 : index
    %200 = vector.load %arg1[%c0_304, %c3_305, %c0_306, %c0_307, %c0_308] : memref<1x4x2x128x96xbf16, #tpu.memory_space<vmem>>, vector<1x1x1x128x96xbf16>
    %201 = vector.shape_cast %200 : vector<1x1x1x128x96xbf16> to vector<128x96xbf16>
    %c0_309 = arith.constant 0 : index
    %c0_310 = arith.constant 0 : index
    %c0_311 = arith.constant 0 : index
    %c0_312 = arith.constant 0 : index
    %202 = vector.load %arg2[%c0_309, %c0_310, %c0_311, %c0_312] : memref<2x5x96x128xbf16, #tpu.memory_space<vmem>>, vector<1x1x96x128xbf16>
    %203 = vector.shape_cast %202 : vector<1x1x96x128xbf16> to vector<96x128xbf16>
    %cst_313 = arith.constant dense<0.000000e+00> : vector<128x128xf32>
    %204 = tpu.matmul %201, %203, %cst_313 {dimension_numbers = #tpu.dot_dimension_numbers<[1], [0], [0], [1], [0, 0, 1, 1], [], []>} : vector<128x96xbf16>, vector<96x128xbf16>, vector<128x128xf32> -> vector<128x128xf32>
    %c0_314 = arith.constant 0 : index
    %c0_315 = arith.constant 0 : index
    %c1_316 = arith.constant 1 : index
    %c0_317 = arith.constant 0 : index
    %c0_318 = arith.constant 0 : index
    %205 = vector.load %arg1[%c0_314, %c0_315, %c1_316, %c0_317, %c0_318] : memref<1x4x2x128x96xbf16, #tpu.memory_space<vmem>>, vector<1x1x1x128x96xbf16>
    %206 = vector.shape_cast %205 : vector<1x1x1x128x96xbf16> to vector<128x96xbf16>
    %c0_319 = arith.constant 0 : index
    %c1_320 = arith.constant 1 : index
    %c0_321 = arith.constant 0 : index
    %c0_322 = arith.constant 0 : index
    %207 = vector.load %arg2[%c0_319, %c1_320, %c0_321, %c0_322] : memref<2x5x96x128xbf16, #tpu.memory_space<vmem>>, vector<1x1x96x128xbf16>
    %208 = vector.shape_cast %207 : vector<1x1x96x128xbf16> to vector<96x128xbf16>
    %cst_323 = arith.constant dense<0.000000e+00> : vector<128x128xf32>
    %209 = tpu.matmul %206, %208, %cst_323 {dimension_numbers = #tpu.dot_dimension_numbers<[1], [0], [0], [1], [0, 0, 1, 1], [], []>} : vector<128x96xbf16>, vector<96x128xbf16>, vector<128x128xf32> -> vector<128x128xf32>
    %210 = arith.addf %204, %209 : vector<128x128xf32>
    %c0_324 = arith.constant 0 : index
    %c1_325 = arith.constant 1 : index
    %c1_326 = arith.constant 1 : index
    %c0_327 = arith.constant 0 : index
    %c0_328 = arith.constant 0 : index
    %211 = vector.load %arg1[%c0_324, %c1_325, %c1_326, %c0_327, %c0_328] : memref<1x4x2x128x96xbf16, #tpu.memory_space<vmem>>, vector<1x1x1x128x96xbf16>
    %212 = vector.shape_cast %211 : vector<1x1x1x128x96xbf16> to vector<128x96xbf16>
    %c0_329 = arith.constant 0 : index
    %c2_330 = arith.constant 2 : index
    %c0_331 = arith.constant 0 : index
    %c0_332 = arith.constant 0 : index
    %213 = vector.load %arg2[%c0_329, %c2_330, %c0_331, %c0_332] : memref<2x5x96x128xbf16, #tpu.memory_space<vmem>>, vector<1x1x96x128xbf16>
    %214 = vector.shape_cast %213 : vector<1x1x96x128xbf16> to vector<96x128xbf16>
    %cst_333 = arith.constant dense<0.000000e+00> : vector<128x128xf32>
    %215 = tpu.matmul %212, %214, %cst_333 {dimension_numbers = #tpu.dot_dimension_numbers<[1], [0], [0], [1], [0, 0, 1, 1], [], []>} : vector<128x96xbf16>, vector<96x128xbf16>, vector<128x128xf32> -> vector<128x128xf32>
    %216 = arith.addf %210, %215 : vector<128x128xf32>
    %c0_334 = arith.constant 0 : index
    %c2_335 = arith.constant 2 : index
    %c1_336 = arith.constant 1 : index
    %c0_337 = arith.constant 0 : index
    %c0_338 = arith.constant 0 : index
    %217 = vector.load %arg1[%c0_334, %c2_335, %c1_336, %c0_337, %c0_338] : memref<1x4x2x128x96xbf16, #tpu.memory_space<vmem>>, vector<1x1x1x128x96xbf16>
    %218 = vector.shape_cast %217 : vector<1x1x1x128x96xbf16> to vector<128x96xbf16>
    %c0_339 = arith.constant 0 : index
    %c3_340 = arith.constant 3 : index
    %c0_341 = arith.constant 0 : index
    %c0_342 = arith.constant 0 : index
    %219 = vector.load %arg2[%c0_339, %c3_340, %c0_341, %c0_342] : memref<2x5x96x128xbf16, #tpu.memory_space<vmem>>, vector<1x1x96x128xbf16>
    %220 = vector.shape_cast %219 : vector<1x1x96x128xbf16> to vector<96x128xbf16>
    %cst_343 = arith.constant dense<0.000000e+00> : vector<128x128xf32>
    %221 = tpu.matmul %218, %220, %cst_343 {dimension_numbers = #tpu.dot_dimension_numbers<[1], [0], [0], [1], [0, 0, 1, 1], [], []>} : vector<128x96xbf16>, vector<96x128xbf16>, vector<128x128xf32> -> vector<128x128xf32>
    %222 = arith.addf %216, %221 : vector<128x128xf32>
    %c0_344 = arith.constant 0 : index
    %c3_345 = arith.constant 3 : index
    %c1_346 = arith.constant 1 : index
    %c0_347 = arith.constant 0 : index
    %c0_348 = arith.constant 0 : index
    %223 = vector.load %arg1[%c0_344, %c3_345, %c1_346, %c0_347, %c0_348] : memref<1x4x2x128x96xbf16, #tpu.memory_space<vmem>>, vector<1x1x1x128x96xbf16>
    %224 = vector.shape_cast %223 : vector<1x1x1x128x96xbf16> to vector<128x96xbf16>
    %c0_349 = arith.constant 0 : index
    %c4_350 = arith.constant 4 : index
    %c0_351 = arith.constant 0 : index
    %c0_352 = arith.constant 0 : index
    %225 = vector.load %arg2[%c0_349, %c4_350, %c0_351, %c0_352] : memref<2x5x96x128xbf16, #tpu.memory_space<vmem>>, vector<1x1x96x128xbf16>
    %226 = vector.shape_cast %225 : vector<1x1x96x128xbf16> to vector<96x128xbf16>
    %cst_353 = arith.constant dense<0.000000e+00> : vector<128x128xf32>
    %227 = tpu.matmul %224, %226, %cst_353 {dimension_numbers = #tpu.dot_dimension_numbers<[1], [0], [0], [1], [0, 0, 1, 1], [], []>} : vector<128x96xbf16>, vector<96x128xbf16>, vector<128x128xf32> -> vector<128x128xf32>
    %228 = arith.addf %222, %227 : vector<128x128xf32>
    %229 = vector.broadcast %0 : vector<1x128xf32> to vector<128x128xf32>
    %230 = arith.addf %228, %229 : vector<128x128xf32>
    %cst_354 = arith.constant 0.000000e+00 : f32
    %231 = vector.broadcast %cst_354 : f32 to vector<128x128xf32>
    %232 = arith.maximumf %230, %231 : vector<128x128xf32>
    %c0_355 = arith.constant 0 : index
    %c3_356 = arith.constant 3 : index
    %c0_357 = arith.constant 0 : index
    %c0_358 = arith.constant 0 : index
    %c0_359 = arith.constant 0 : index
    %233 = vector.load %arg1[%c0_355, %c3_356, %c0_357, %c0_358, %c0_359] : memref<1x4x2x128x96xbf16, #tpu.memory_space<vmem>>, vector<1x1x1x128x96xbf16>
    %234 = vector.shape_cast %233 : vector<1x1x1x128x96xbf16> to vector<128x96xbf16>
    %c1_360 = arith.constant 1 : index
    %c0_361 = arith.constant 0 : index
    %c0_362 = arith.constant 0 : index
    %c0_363 = arith.constant 0 : index
    %235 = vector.load %arg2[%c1_360, %c0_361, %c0_362, %c0_363] : memref<2x5x96x128xbf16, #tpu.memory_space<vmem>>, vector<1x1x96x128xbf16>
    %236 = vector.shape_cast %235 : vector<1x1x96x128xbf16> to vector<96x128xbf16>
    %cst_364 = arith.constant dense<0.000000e+00> : vector<128x128xf32>
    %237 = tpu.matmul %234, %236, %cst_364 {dimension_numbers = #tpu.dot_dimension_numbers<[1], [0], [0], [1], [0, 0, 1, 1], [], []>} : vector<128x96xbf16>, vector<96x128xbf16>, vector<128x128xf32> -> vector<128x128xf32>
    %c0_365 = arith.constant 0 : index
    %c0_366 = arith.constant 0 : index
    %c1_367 = arith.constant 1 : index
    %c0_368 = arith.constant 0 : index
    %c0_369 = arith.constant 0 : index
    %238 = vector.load %arg1[%c0_365, %c0_366, %c1_367, %c0_368, %c0_369] : memref<1x4x2x128x96xbf16, #tpu.memory_space<vmem>>, vector<1x1x1x128x96xbf16>
    %239 = vector.shape_cast %238 : vector<1x1x1x128x96xbf16> to vector<128x96xbf16>
    %c1_370 = arith.constant 1 : index
    %c1_371 = arith.constant 1 : index
    %c0_372 = arith.constant 0 : index
    %c0_373 = arith.constant 0 : index
    %240 = vector.load %arg2[%c1_370, %c1_371, %c0_372, %c0_373] : memref<2x5x96x128xbf16, #tpu.memory_space<vmem>>, vector<1x1x96x128xbf16>
    %241 = vector.shape_cast %240 : vector<1x1x96x128xbf16> to vector<96x128xbf16>
    %cst_374 = arith.constant dense<0.000000e+00> : vector<128x128xf32>
    %242 = tpu.matmul %239, %241, %cst_374 {dimension_numbers = #tpu.dot_dimension_numbers<[1], [0], [0], [1], [0, 0, 1, 1], [], []>} : vector<128x96xbf16>, vector<96x128xbf16>, vector<128x128xf32> -> vector<128x128xf32>
    %243 = arith.addf %237, %242 : vector<128x128xf32>
    %c0_375 = arith.constant 0 : index
    %c1_376 = arith.constant 1 : index
    %c1_377 = arith.constant 1 : index
    %c0_378 = arith.constant 0 : index
    %c0_379 = arith.constant 0 : index
    %244 = vector.load %arg1[%c0_375, %c1_376, %c1_377, %c0_378, %c0_379] : memref<1x4x2x128x96xbf16, #tpu.memory_space<vmem>>, vector<1x1x1x128x96xbf16>
    %245 = vector.shape_cast %244 : vector<1x1x1x128x96xbf16> to vector<128x96xbf16>
    %c1_380 = arith.constant 1 : index
    %c2_381 = arith.constant 2 : index
    %c0_382 = arith.constant 0 : index
    %c0_383 = arith.constant 0 : index
    %246 = vector.load %arg2[%c1_380, %c2_381, %c0_382, %c0_383] : memref<2x5x96x128xbf16, #tpu.memory_space<vmem>>, vector<1x1x96x128xbf16>
    %247 = vector.shape_cast %246 : vector<1x1x96x128xbf16> to vector<96x128xbf16>
    %cst_384 = arith.constant dense<0.000000e+00> : vector<128x128xf32>
    %248 = tpu.matmul %245, %247, %cst_384 {dimension_numbers = #tpu.dot_dimension_numbers<[1], [0], [0], [1], [0, 0, 1, 1], [], []>} : vector<128x96xbf16>, vector<96x128xbf16>, vector<128x128xf32> -> vector<128x128xf32>
    %249 = arith.addf %243, %248 : vector<128x128xf32>
    %c0_385 = arith.constant 0 : index
    %c2_386 = arith.constant 2 : index
    %c1_387 = arith.constant 1 : index
    %c0_388 = arith.constant 0 : index
    %c0_389 = arith.constant 0 : index
    %250 = vector.load %arg1[%c0_385, %c2_386, %c1_387, %c0_388, %c0_389] : memref<1x4x2x128x96xbf16, #tpu.memory_space<vmem>>, vector<1x1x1x128x96xbf16>
    %251 = vector.shape_cast %250 : vector<1x1x1x128x96xbf16> to vector<128x96xbf16>
    %c1_390 = arith.constant 1 : index
    %c3_391 = arith.constant 3 : index
    %c0_392 = arith.constant 0 : index
    %c0_393 = arith.constant 0 : index
    %252 = vector.load %arg2[%c1_390, %c3_391, %c0_392, %c0_393] : memref<2x5x96x128xbf16, #tpu.memory_space<vmem>>, vector<1x1x96x128xbf16>
    %253 = vector.shape_cast %252 : vector<1x1x96x128xbf16> to vector<96x128xbf16>
    %cst_394 = arith.constant dense<0.000000e+00> : vector<128x128xf32>
    %254 = tpu.matmul %251, %253, %cst_394 {dimension_numbers = #tpu.dot_dimension_numbers<[1], [0], [0], [1], [0, 0, 1, 1], [], []>} : vector<128x96xbf16>, vector<96x128xbf16>, vector<128x128xf32> -> vector<128x128xf32>
    %255 = arith.addf %249, %254 : vector<128x128xf32>
    %c0_395 = arith.constant 0 : index
    %c3_396 = arith.constant 3 : index
    %c1_397 = arith.constant 1 : index
    %c0_398 = arith.constant 0 : index
    %c0_399 = arith.constant 0 : index
    %256 = vector.load %arg1[%c0_395, %c3_396, %c1_397, %c0_398, %c0_399] : memref<1x4x2x128x96xbf16, #tpu.memory_space<vmem>>, vector<1x1x1x128x96xbf16>
    %257 = vector.shape_cast %256 : vector<1x1x1x128x96xbf16> to vector<128x96xbf16>
    %c1_400 = arith.constant 1 : index
    %c4_401 = arith.constant 4 : index
    %c0_402 = arith.constant 0 : index
    %c0_403 = arith.constant 0 : index
    %258 = vector.load %arg2[%c1_400, %c4_401, %c0_402, %c0_403] : memref<2x5x96x128xbf16, #tpu.memory_space<vmem>>, vector<1x1x96x128xbf16>
    %259 = vector.shape_cast %258 : vector<1x1x96x128xbf16> to vector<96x128xbf16>
    %cst_404 = arith.constant dense<0.000000e+00> : vector<128x128xf32>
    %260 = tpu.matmul %257, %259, %cst_404 {dimension_numbers = #tpu.dot_dimension_numbers<[1], [0], [0], [1], [0, 0, 1, 1], [], []>} : vector<128x96xbf16>, vector<96x128xbf16>, vector<128x128xf32> -> vector<128x128xf32>
    %261 = arith.addf %255, %260 : vector<128x128xf32>
    %262 = vector.broadcast %0 : vector<1x128xf32> to vector<128x128xf32>
    %263 = arith.addf %261, %262 : vector<128x128xf32>
    %cst_405 = arith.constant 0.000000e+00 : f32
    %264 = vector.broadcast %cst_405 : f32 to vector<128x128xf32>
    %265 = arith.maximumf %263, %264 : vector<128x128xf32>
    %266 = arith.maximumf %34, %67 : vector<128x128xf32>
    %267 = arith.maximumf %100, %133 : vector<128x128xf32>
    %268 = arith.maximumf %266, %267 : vector<128x128xf32>
    %269 = arith.truncf %268 : vector<128x128xf32> to vector<128x128xbf16>
    %270 = arith.maximumf %166, %199 : vector<128x128xf32>
    %271 = arith.maximumf %232, %265 : vector<128x128xf32>
    %272 = arith.maximumf %270, %271 : vector<128x128xf32>
    %273 = arith.truncf %272 : vector<128x128xf32> to vector<128x128xbf16>
    %274 = vector.extract_strided_slice %269 {offsets = [0, 0], sizes = [80, 128], strides = [1, 1]} : vector<128x128xbf16> to vector<80x128xbf16>
    %c0_406 = arith.constant 0 : index
    %c0_407 = arith.constant 0 : index
    %c0_408 = arith.constant 0 : index
    %c0_409 = arith.constant 0 : index
    %275 = vector.load %arg4[%c0_406, %c0_407, %c0_408, %c0_409] : memref<2x5x128x128xbf16, #tpu.memory_space<vmem>>, vector<1x1x128x128xbf16>
    %276 = vector.shape_cast %275 : vector<1x1x128x128xbf16> to vector<128x128xbf16>
    %cst_410 = arith.constant dense<0.000000e+00> : vector<80x128xf32>
    %277 = tpu.matmul %274, %276, %cst_410 {dimension_numbers = #tpu.dot_dimension_numbers<[1], [0], [0], [1], [0, 0, 1, 1], [], []>} : vector<80x128xbf16>, vector<128x128xbf16>, vector<80x128xf32> -> vector<80x128xf32>
    %278 = vector.extract_strided_slice %273 {offsets = [0, 0], sizes = [80, 128], strides = [1, 1]} : vector<128x128xbf16> to vector<80x128xbf16>
    %c0_411 = arith.constant 0 : index
    %c1_412 = arith.constant 1 : index
    %c0_413 = arith.constant 0 : index
    %c0_414 = arith.constant 0 : index
    %279 = vector.load %arg4[%c0_411, %c1_412, %c0_413, %c0_414] : memref<2x5x128x128xbf16, #tpu.memory_space<vmem>>, vector<1x1x128x128xbf16>
    %280 = vector.shape_cast %279 : vector<1x1x128x128xbf16> to vector<128x128xbf16>
    %cst_415 = arith.constant dense<0.000000e+00> : vector<80x128xf32>
    %281 = tpu.matmul %278, %280, %cst_415 {dimension_numbers = #tpu.dot_dimension_numbers<[1], [0], [0], [1], [0, 0, 1, 1], [], []>} : vector<80x128xbf16>, vector<128x128xbf16>, vector<80x128xf32> -> vector<80x128xf32>
    %282 = arith.addf %277, %281 : vector<80x128xf32>
    %283 = vector.extract_strided_slice %269 {offsets = [16, 0], sizes = [80, 128], strides = [1, 1]} : vector<128x128xbf16> to vector<80x128xbf16>
    %c0_416 = arith.constant 0 : index
    %c2_417 = arith.constant 2 : index
    %c0_418 = arith.constant 0 : index
    %c0_419 = arith.constant 0 : index
    %284 = vector.load %arg4[%c0_416, %c2_417, %c0_418, %c0_419] : memref<2x5x128x128xbf16, #tpu.memory_space<vmem>>, vector<1x1x128x128xbf16>
    %285 = vector.shape_cast %284 : vector<1x1x128x128xbf16> to vector<128x128xbf16>
    %cst_420 = arith.constant dense<0.000000e+00> : vector<80x128xf32>
    %286 = tpu.matmul %283, %285, %cst_420 {dimension_numbers = #tpu.dot_dimension_numbers<[1], [0], [0], [1], [0, 0, 1, 1], [], []>} : vector<80x128xbf16>, vector<128x128xbf16>, vector<80x128xf32> -> vector<80x128xf32>
    %287 = arith.addf %282, %286 : vector<80x128xf32>
    %288 = vector.extract_strided_slice %273 {offsets = [16, 0], sizes = [80, 128], strides = [1, 1]} : vector<128x128xbf16> to vector<80x128xbf16>
    %c0_421 = arith.constant 0 : index
    %c3_422 = arith.constant 3 : index
    %c0_423 = arith.constant 0 : index
    %c0_424 = arith.constant 0 : index
    %289 = vector.load %arg4[%c0_421, %c3_422, %c0_423, %c0_424] : memref<2x5x128x128xbf16, #tpu.memory_space<vmem>>, vector<1x1x128x128xbf16>
    %290 = vector.shape_cast %289 : vector<1x1x128x128xbf16> to vector<128x128xbf16>
    %cst_425 = arith.constant dense<0.000000e+00> : vector<80x128xf32>
    %291 = tpu.matmul %288, %290, %cst_425 {dimension_numbers = #tpu.dot_dimension_numbers<[1], [0], [0], [1], [0, 0, 1, 1], [], []>} : vector<80x128xbf16>, vector<128x128xbf16>, vector<80x128xf32> -> vector<80x128xf32>
    %292 = arith.addf %287, %291 : vector<80x128xf32>
    %293 = vector.extract_strided_slice %269 {offsets = [32, 0], sizes = [80, 128], strides = [1, 1]} : vector<128x128xbf16> to vector<80x128xbf16>
    %c0_426 = arith.constant 0 : index
    %c4_427 = arith.constant 4 : index
    %c0_428 = arith.constant 0 : index
    %c0_429 = arith.constant 0 : index
    %294 = vector.load %arg4[%c0_426, %c4_427, %c0_428, %c0_429] : memref<2x5x128x128xbf16, #tpu.memory_space<vmem>>, vector<1x1x128x128xbf16>
    %295 = vector.shape_cast %294 : vector<1x1x128x128xbf16> to vector<128x128xbf16>
    %cst_430 = arith.constant dense<0.000000e+00> : vector<80x128xf32>
    %296 = tpu.matmul %293, %295, %cst_430 {dimension_numbers = #tpu.dot_dimension_numbers<[1], [0], [0], [1], [0, 0, 1, 1], [], []>} : vector<80x128xbf16>, vector<128x128xbf16>, vector<80x128xf32> -> vector<80x128xf32>
    %297 = arith.addf %292, %296 : vector<80x128xf32>
    %298 = vector.broadcast %1 : vector<1x128xf32> to vector<80x128xf32>
    %299 = arith.addf %297, %298 : vector<80x128xf32>
    %cst_431 = arith.constant 0.000000e+00 : f32
    %300 = vector.broadcast %cst_431 : f32 to vector<80x128xf32>
    %301 = arith.maximumf %299, %300 : vector<80x128xf32>
    %302 = vector.extract_strided_slice %269 {offsets = [0, 0], sizes = [80, 128], strides = [1, 1]} : vector<128x128xbf16> to vector<80x128xbf16>
    %c1_432 = arith.constant 1 : index
    %c0_433 = arith.constant 0 : index
    %c0_434 = arith.constant 0 : index
    %c0_435 = arith.constant 0 : index
    %303 = vector.load %arg4[%c1_432, %c0_433, %c0_434, %c0_435] : memref<2x5x128x128xbf16, #tpu.memory_space<vmem>>, vector<1x1x128x128xbf16>
    %304 = vector.shape_cast %303 : vector<1x1x128x128xbf16> to vector<128x128xbf16>
    %cst_436 = arith.constant dense<0.000000e+00> : vector<80x128xf32>
    %305 = tpu.matmul %302, %304, %cst_436 {dimension_numbers = #tpu.dot_dimension_numbers<[1], [0], [0], [1], [0, 0, 1, 1], [], []>} : vector<80x128xbf16>, vector<128x128xbf16>, vector<80x128xf32> -> vector<80x128xf32>
    %306 = vector.extract_strided_slice %273 {offsets = [0, 0], sizes = [80, 128], strides = [1, 1]} : vector<128x128xbf16> to vector<80x128xbf16>
    %c1_437 = arith.constant 1 : index
    %c1_438 = arith.constant 1 : index
    %c0_439 = arith.constant 0 : index
    %c0_440 = arith.constant 0 : index
    %307 = vector.load %arg4[%c1_437, %c1_438, %c0_439, %c0_440] : memref<2x5x128x128xbf16, #tpu.memory_space<vmem>>, vector<1x1x128x128xbf16>
    %308 = vector.shape_cast %307 : vector<1x1x128x128xbf16> to vector<128x128xbf16>
    %cst_441 = arith.constant dense<0.000000e+00> : vector<80x128xf32>
    %309 = tpu.matmul %306, %308, %cst_441 {dimension_numbers = #tpu.dot_dimension_numbers<[1], [0], [0], [1], [0, 0, 1, 1], [], []>} : vector<80x128xbf16>, vector<128x128xbf16>, vector<80x128xf32> -> vector<80x128xf32>
    %310 = arith.addf %305, %309 : vector<80x128xf32>
    %311 = vector.extract_strided_slice %269 {offsets = [16, 0], sizes = [80, 128], strides = [1, 1]} : vector<128x128xbf16> to vector<80x128xbf16>
    %c1_442 = arith.constant 1 : index
    %c2_443 = arith.constant 2 : index
    %c0_444 = arith.constant 0 : index
    %c0_445 = arith.constant 0 : index
    %312 = vector.load %arg4[%c1_442, %c2_443, %c0_444, %c0_445] : memref<2x5x128x128xbf16, #tpu.memory_space<vmem>>, vector<1x1x128x128xbf16>
    %313 = vector.shape_cast %312 : vector<1x1x128x128xbf16> to vector<128x128xbf16>
    %cst_446 = arith.constant dense<0.000000e+00> : vector<80x128xf32>
    %314 = tpu.matmul %311, %313, %cst_446 {dimension_numbers = #tpu.dot_dimension_numbers<[1], [0], [0], [1], [0, 0, 1, 1], [], []>} : vector<80x128xbf16>, vector<128x128xbf16>, vector<80x128xf32> -> vector<80x128xf32>
    %315 = arith.addf %310, %314 : vector<80x128xf32>
    %316 = vector.extract_strided_slice %273 {offsets = [16, 0], sizes = [80, 128], strides = [1, 1]} : vector<128x128xbf16> to vector<80x128xbf16>
    %c1_447 = arith.constant 1 : index
    %c3_448 = arith.constant 3 : index
    %c0_449 = arith.constant 0 : index
    %c0_450 = arith.constant 0 : index
    %317 = vector.load %arg4[%c1_447, %c3_448, %c0_449, %c0_450] : memref<2x5x128x128xbf16, #tpu.memory_space<vmem>>, vector<1x1x128x128xbf16>
    %318 = vector.shape_cast %317 : vector<1x1x128x128xbf16> to vector<128x128xbf16>
    %cst_451 = arith.constant dense<0.000000e+00> : vector<80x128xf32>
    %319 = tpu.matmul %316, %318, %cst_451 {dimension_numbers = #tpu.dot_dimension_numbers<[1], [0], [0], [1], [0, 0, 1, 1], [], []>} : vector<80x128xbf16>, vector<128x128xbf16>, vector<80x128xf32> -> vector<80x128xf32>
    %320 = arith.addf %315, %319 : vector<80x128xf32>
    %321 = vector.extract_strided_slice %269 {offsets = [32, 0], sizes = [80, 128], strides = [1, 1]} : vector<128x128xbf16> to vector<80x128xbf16>
    %c1_452 = arith.constant 1 : index
    %c4_453 = arith.constant 4 : index
    %c0_454 = arith.constant 0 : index
    %c0_455 = arith.constant 0 : index
    %322 = vector.load %arg4[%c1_452, %c4_453, %c0_454, %c0_455] : memref<2x5x128x128xbf16, #tpu.memory_space<vmem>>, vector<1x1x128x128xbf16>
    %323 = vector.shape_cast %322 : vector<1x1x128x128xbf16> to vector<128x128xbf16>
    %cst_456 = arith.constant dense<0.000000e+00> : vector<80x128xf32>
    %324 = tpu.matmul %321, %323, %cst_456 {dimension_numbers = #tpu.dot_dimension_numbers<[1], [0], [0], [1], [0, 0, 1, 1], [], []>} : vector<80x128xbf16>, vector<128x128xbf16>, vector<80x128xf32> -> vector<80x128xf32>
    %325 = arith.addf %320, %324 : vector<80x128xf32>
    %326 = vector.broadcast %1 : vector<1x128xf32> to vector<80x128xf32>
    %327 = arith.addf %325, %326 : vector<80x128xf32>
    %cst_457 = arith.constant 0.000000e+00 : f32
    %328 = vector.broadcast %cst_457 : f32 to vector<80x128xf32>
    %329 = arith.maximumf %327, %328 : vector<80x128xf32>
    %330 = vector.extract_strided_slice %273 {offsets = [0, 0], sizes = [80, 128], strides = [1, 1]} : vector<128x128xbf16> to vector<80x128xbf16>
    %c0_458 = arith.constant 0 : index
    %c0_459 = arith.constant 0 : index
    %c0_460 = arith.constant 0 : index
    %c0_461 = arith.constant 0 : index
    %331 = vector.load %arg4[%c0_458, %c0_459, %c0_460, %c0_461] : memref<2x5x128x128xbf16, #tpu.memory_space<vmem>>, vector<1x1x128x128xbf16>
    %332 = vector.shape_cast %331 : vector<1x1x128x128xbf16> to vector<128x128xbf16>
    %cst_462 = arith.constant dense<0.000000e+00> : vector<80x128xf32>
    %333 = tpu.matmul %330, %332, %cst_462 {dimension_numbers = #tpu.dot_dimension_numbers<[1], [0], [0], [1], [0, 0, 1, 1], [], []>} : vector<80x128xbf16>, vector<128x128xbf16>, vector<80x128xf32> -> vector<80x128xf32>
    %334 = vector.extract_strided_slice %269 {offsets = [16, 0], sizes = [80, 128], strides = [1, 1]} : vector<128x128xbf16> to vector<80x128xbf16>
    %c0_463 = arith.constant 0 : index
    %c1_464 = arith.constant 1 : index
    %c0_465 = arith.constant 0 : index
    %c0_466 = arith.constant 0 : index
    %335 = vector.load %arg4[%c0_463, %c1_464, %c0_465, %c0_466] : memref<2x5x128x128xbf16, #tpu.memory_space<vmem>>, vector<1x1x128x128xbf16>
    %336 = vector.shape_cast %335 : vector<1x1x128x128xbf16> to vector<128x128xbf16>
    %cst_467 = arith.constant dense<0.000000e+00> : vector<80x128xf32>
    %337 = tpu.matmul %334, %336, %cst_467 {dimension_numbers = #tpu.dot_dimension_numbers<[1], [0], [0], [1], [0, 0, 1, 1], [], []>} : vector<80x128xbf16>, vector<128x128xbf16>, vector<80x128xf32> -> vector<80x128xf32>
    %338 = arith.addf %333, %337 : vector<80x128xf32>
    %339 = vector.extract_strided_slice %273 {offsets = [16, 0], sizes = [80, 128], strides = [1, 1]} : vector<128x128xbf16> to vector<80x128xbf16>
    %c0_468 = arith.constant 0 : index
    %c2_469 = arith.constant 2 : index
    %c0_470 = arith.constant 0 : index
    %c0_471 = arith.constant 0 : index
    %340 = vector.load %arg4[%c0_468, %c2_469, %c0_470, %c0_471] : memref<2x5x128x128xbf16, #tpu.memory_space<vmem>>, vector<1x1x128x128xbf16>
    %341 = vector.shape_cast %340 : vector<1x1x128x128xbf16> to vector<128x128xbf16>
    %cst_472 = arith.constant dense<0.000000e+00> : vector<80x128xf32>
    %342 = tpu.matmul %339, %341, %cst_472 {dimension_numbers = #tpu.dot_dimension_numbers<[1], [0], [0], [1], [0, 0, 1, 1], [], []>} : vector<80x128xbf16>, vector<128x128xbf16>, vector<80x128xf32> -> vector<80x128xf32>
    %343 = arith.addf %338, %342 : vector<80x128xf32>
    %344 = vector.extract_strided_slice %269 {offsets = [32, 0], sizes = [80, 128], strides = [1, 1]} : vector<128x128xbf16> to vector<80x128xbf16>
    %c0_473 = arith.constant 0 : index
    %c3_474 = arith.constant 3 : index
    %c0_475 = arith.constant 0 : index
    %c0_476 = arith.constant 0 : index
    %345 = vector.load %arg4[%c0_473, %c3_474, %c0_475, %c0_476] : memref<2x5x128x128xbf16, #tpu.memory_space<vmem>>, vector<1x1x128x128xbf16>
    %346 = vector.shape_cast %345 : vector<1x1x128x128xbf16> to vector<128x128xbf16>
    %cst_477 = arith.constant dense<0.000000e+00> : vector<80x128xf32>
    %347 = tpu.matmul %344, %346, %cst_477 {dimension_numbers = #tpu.dot_dimension_numbers<[1], [0], [0], [1], [0, 0, 1, 1], [], []>} : vector<80x128xbf16>, vector<128x128xbf16>, vector<80x128xf32> -> vector<80x128xf32>
    %348 = arith.addf %343, %347 : vector<80x128xf32>
    %349 = vector.extract_strided_slice %273 {offsets = [32, 0], sizes = [80, 128], strides = [1, 1]} : vector<128x128xbf16> to vector<80x128xbf16>
    %c0_478 = arith.constant 0 : index
    %c4_479 = arith.constant 4 : index
    %c0_480 = arith.constant 0 : index
    %c0_481 = arith.constant 0 : index
    %350 = vector.load %arg4[%c0_478, %c4_479, %c0_480, %c0_481] : memref<2x5x128x128xbf16, #tpu.memory_space<vmem>>, vector<1x1x128x128xbf16>
    %351 = vector.shape_cast %350 : vector<1x1x128x128xbf16> to vector<128x128xbf16>
    %cst_482 = arith.constant dense<0.000000e+00> : vector<80x128xf32>
    %352 = tpu.matmul %349, %351, %cst_482 {dimension_numbers = #tpu.dot_dimension_numbers<[1], [0], [0], [1], [0, 0, 1, 1], [], []>} : vector<80x128xbf16>, vector<128x128xbf16>, vector<80x128xf32> -> vector<80x128xf32>
    %353 = arith.addf %348, %352 : vector<80x128xf32>
    %354 = vector.broadcast %1 : vector<1x128xf32> to vector<80x128xf32>
    %355 = arith.addf %353, %354 : vector<80x128xf32>
    %cst_483 = arith.constant 0.000000e+00 : f32
    %356 = vector.broadcast %cst_483 : f32 to vector<80x128xf32>
    %357 = arith.maximumf %355, %356 : vector<80x128xf32>
    %358 = vector.extract_strided_slice %273 {offsets = [0, 0], sizes = [80, 128], strides = [1, 1]} : vector<128x128xbf16> to vector<80x128xbf16>
    %c1_484 = arith.constant 1 : index
    %c0_485 = arith.constant 0 : index
    %c0_486 = arith.constant 0 : index
    %c0_487 = arith.constant 0 : index
    %359 = vector.load %arg4[%c1_484, %c0_485, %c0_486, %c0_487] : memref<2x5x128x128xbf16, #tpu.memory_space<vmem>>, vector<1x1x128x128xbf16>
    %360 = vector.shape_cast %359 : vector<1x1x128x128xbf16> to vector<128x128xbf16>
    %cst_488 = arith.constant dense<0.000000e+00> : vector<80x128xf32>
    %361 = tpu.matmul %358, %360, %cst_488 {dimension_numbers = #tpu.dot_dimension_numbers<[1], [0], [0], [1], [0, 0, 1, 1], [], []>} : vector<80x128xbf16>, vector<128x128xbf16>, vector<80x128xf32> -> vector<80x128xf32>
    %362 = vector.extract_strided_slice %269 {offsets = [16, 0], sizes = [80, 128], strides = [1, 1]} : vector<128x128xbf16> to vector<80x128xbf16>
    %c1_489 = arith.constant 1 : index
    %c1_490 = arith.constant 1 : index
    %c0_491 = arith.constant 0 : index
    %c0_492 = arith.constant 0 : index
    %363 = vector.load %arg4[%c1_489, %c1_490, %c0_491, %c0_492] : memref<2x5x128x128xbf16, #tpu.memory_space<vmem>>, vector<1x1x128x128xbf16>
    %364 = vector.shape_cast %363 : vector<1x1x128x128xbf16> to vector<128x128xbf16>
    %cst_493 = arith.constant dense<0.000000e+00> : vector<80x128xf32>
    %365 = tpu.matmul %362, %364, %cst_493 {dimension_numbers = #tpu.dot_dimension_numbers<[1], [0], [0], [1], [0, 0, 1, 1], [], []>} : vector<80x128xbf16>, vector<128x128xbf16>, vector<80x128xf32> -> vector<80x128xf32>
    %366 = arith.addf %361, %365 : vector<80x128xf32>
    %367 = vector.extract_strided_slice %273 {offsets = [16, 0], sizes = [80, 128], strides = [1, 1]} : vector<128x128xbf16> to vector<80x128xbf16>
    %c1_494 = arith.constant 1 : index
    %c2_495 = arith.constant 2 : index
    %c0_496 = arith.constant 0 : index
    %c0_497 = arith.constant 0 : index
    %368 = vector.load %arg4[%c1_494, %c2_495, %c0_496, %c0_497] : memref<2x5x128x128xbf16, #tpu.memory_space<vmem>>, vector<1x1x128x128xbf16>
    %369 = vector.shape_cast %368 : vector<1x1x128x128xbf16> to vector<128x128xbf16>
    %cst_498 = arith.constant dense<0.000000e+00> : vector<80x128xf32>
    %370 = tpu.matmul %367, %369, %cst_498 {dimension_numbers = #tpu.dot_dimension_numbers<[1], [0], [0], [1], [0, 0, 1, 1], [], []>} : vector<80x128xbf16>, vector<128x128xbf16>, vector<80x128xf32> -> vector<80x128xf32>
    %371 = arith.addf %366, %370 : vector<80x128xf32>
    %372 = vector.extract_strided_slice %269 {offsets = [32, 0], sizes = [80, 128], strides = [1, 1]} : vector<128x128xbf16> to vector<80x128xbf16>
    %c1_499 = arith.constant 1 : index
    %c3_500 = arith.constant 3 : index
    %c0_501 = arith.constant 0 : index
    %c0_502 = arith.constant 0 : index
    %373 = vector.load %arg4[%c1_499, %c3_500, %c0_501, %c0_502] : memref<2x5x128x128xbf16, #tpu.memory_space<vmem>>, vector<1x1x128x128xbf16>
    %374 = vector.shape_cast %373 : vector<1x1x128x128xbf16> to vector<128x128xbf16>
    %cst_503 = arith.constant dense<0.000000e+00> : vector<80x128xf32>
    %375 = tpu.matmul %372, %374, %cst_503 {dimension_numbers = #tpu.dot_dimension_numbers<[1], [0], [0], [1], [0, 0, 1, 1], [], []>} : vector<80x128xbf16>, vector<128x128xbf16>, vector<80x128xf32> -> vector<80x128xf32>
    %376 = arith.addf %371, %375 : vector<80x128xf32>
    %377 = vector.extract_strided_slice %273 {offsets = [32, 0], sizes = [80, 128], strides = [1, 1]} : vector<128x128xbf16> to vector<80x128xbf16>
    %c1_504 = arith.constant 1 : index
    %c4_505 = arith.constant 4 : index
    %c0_506 = arith.constant 0 : index
    %c0_507 = arith.constant 0 : index
    %378 = vector.load %arg4[%c1_504, %c4_505, %c0_506, %c0_507] : memref<2x5x128x128xbf16, #tpu.memory_space<vmem>>, vector<1x1x128x128xbf16>
    %379 = vector.shape_cast %378 : vector<1x1x128x128xbf16> to vector<128x128xbf16>
    %cst_508 = arith.constant dense<0.000000e+00> : vector<80x128xf32>
    %380 = tpu.matmul %377, %379, %cst_508 {dimension_numbers = #tpu.dot_dimension_numbers<[1], [0], [0], [1], [0, 0, 1, 1], [], []>} : vector<80x128xbf16>, vector<128x128xbf16>, vector<80x128xf32> -> vector<80x128xf32>
    %381 = arith.addf %376, %380 : vector<80x128xf32>
    %382 = vector.broadcast %1 : vector<1x128xf32> to vector<80x128xf32>
    %383 = arith.addf %381, %382 : vector<80x128xf32>
    %cst_509 = arith.constant 0.000000e+00 : f32
    %384 = vector.broadcast %cst_509 : f32 to vector<80x128xf32>
    %385 = arith.maximumf %383, %384 : vector<80x128xf32>
    %386 = arith.maximumf %301, %329 : vector<80x128xf32>
    %387 = arith.maximumf %357, %385 : vector<80x128xf32>
    %388 = arith.maximumf %386, %387 : vector<80x128xf32>
    %389 = arith.truncf %388 : vector<80x128xf32> to vector<80x128xbf16>
    %390 = vector.extract_strided_slice %389 {offsets = [0, 0], sizes = [16, 128], strides = [1, 1]} : vector<80x128xbf16> to vector<16x128xbf16>
    %c0_510 = arith.constant 0 : index
    %c0_511 = arith.constant 0 : index
    %c0_512 = arith.constant 0 : index
    %391 = vector.load %arg6[%c0_510, %c0_511, %c0_512] : memref<5x128x128xbf16, #tpu.memory_space<vmem>>, vector<1x128x128xbf16>
    %392 = vector.shape_cast %391 : vector<1x128x128xbf16> to vector<128x128xbf16>
    %cst_513 = arith.constant dense<0.000000e+00> : vector<16x128xf32>
    %393 = tpu.matmul %390, %392, %cst_513 {dimension_numbers = #tpu.dot_dimension_numbers<[1], [0], [0], [1], [0, 0, 1, 1], [], []>} : vector<16x128xbf16>, vector<128x128xbf16>, vector<16x128xf32> -> vector<16x128xf32>
    %394 = vector.extract_strided_slice %389 {offsets = [16, 0], sizes = [16, 128], strides = [1, 1]} : vector<80x128xbf16> to vector<16x128xbf16>
    %c1_514 = arith.constant 1 : index
    %c0_515 = arith.constant 0 : index
    %c0_516 = arith.constant 0 : index
    %395 = vector.load %arg6[%c1_514, %c0_515, %c0_516] : memref<5x128x128xbf16, #tpu.memory_space<vmem>>, vector<1x128x128xbf16>
    %396 = vector.shape_cast %395 : vector<1x128x128xbf16> to vector<128x128xbf16>
    %cst_517 = arith.constant dense<0.000000e+00> : vector<16x128xf32>
    %397 = tpu.matmul %394, %396, %cst_517 {dimension_numbers = #tpu.dot_dimension_numbers<[1], [0], [0], [1], [0, 0, 1, 1], [], []>} : vector<16x128xbf16>, vector<128x128xbf16>, vector<16x128xf32> -> vector<16x128xf32>
    %398 = arith.addf %393, %397 : vector<16x128xf32>
    %399 = vector.extract_strided_slice %389 {offsets = [32, 0], sizes = [16, 128], strides = [1, 1]} : vector<80x128xbf16> to vector<16x128xbf16>
    %c2_518 = arith.constant 2 : index
    %c0_519 = arith.constant 0 : index
    %c0_520 = arith.constant 0 : index
    %400 = vector.load %arg6[%c2_518, %c0_519, %c0_520] : memref<5x128x128xbf16, #tpu.memory_space<vmem>>, vector<1x128x128xbf16>
    %401 = vector.shape_cast %400 : vector<1x128x128xbf16> to vector<128x128xbf16>
    %cst_521 = arith.constant dense<0.000000e+00> : vector<16x128xf32>
    %402 = tpu.matmul %399, %401, %cst_521 {dimension_numbers = #tpu.dot_dimension_numbers<[1], [0], [0], [1], [0, 0, 1, 1], [], []>} : vector<16x128xbf16>, vector<128x128xbf16>, vector<16x128xf32> -> vector<16x128xf32>
    %403 = arith.addf %398, %402 : vector<16x128xf32>
    %404 = vector.extract_strided_slice %389 {offsets = [48, 0], sizes = [16, 128], strides = [1, 1]} : vector<80x128xbf16> to vector<16x128xbf16>
    %c3_522 = arith.constant 3 : index
    %c0_523 = arith.constant 0 : index
    %c0_524 = arith.constant 0 : index
    %405 = vector.load %arg6[%c3_522, %c0_523, %c0_524] : memref<5x128x128xbf16, #tpu.memory_space<vmem>>, vector<1x128x128xbf16>
    %406 = vector.shape_cast %405 : vector<1x128x128xbf16> to vector<128x128xbf16>
    %cst_525 = arith.constant dense<0.000000e+00> : vector<16x128xf32>
    %407 = tpu.matmul %404, %406, %cst_525 {dimension_numbers = #tpu.dot_dimension_numbers<[1], [0], [0], [1], [0, 0, 1, 1], [], []>} : vector<16x128xbf16>, vector<128x128xbf16>, vector<16x128xf32> -> vector<16x128xf32>
    %408 = arith.addf %403, %407 : vector<16x128xf32>
    %409 = vector.extract_strided_slice %389 {offsets = [64, 0], sizes = [16, 128], strides = [1, 1]} : vector<80x128xbf16> to vector<16x128xbf16>
    %c4_526 = arith.constant 4 : index
    %c0_527 = arith.constant 0 : index
    %c0_528 = arith.constant 0 : index
    %410 = vector.load %arg6[%c4_526, %c0_527, %c0_528] : memref<5x128x128xbf16, #tpu.memory_space<vmem>>, vector<1x128x128xbf16>
    %411 = vector.shape_cast %410 : vector<1x128x128xbf16> to vector<128x128xbf16>
    %cst_529 = arith.constant dense<0.000000e+00> : vector<16x128xf32>
    %412 = tpu.matmul %409, %411, %cst_529 {dimension_numbers = #tpu.dot_dimension_numbers<[1], [0], [0], [1], [0, 0, 1, 1], [], []>} : vector<16x128xbf16>, vector<128x128xbf16>, vector<16x128xf32> -> vector<16x128xf32>
    %413 = arith.addf %408, %412 : vector<16x128xf32>
    %c0_530 = arith.constant 0 : index
    %c0_531 = arith.constant 0 : index
    %414 = vector.load %arg7[%c0_530, %c0_531] : memref<1x128xf32, #tpu.memory_space<vmem>>, vector<1x128xf32>
    %415 = vector.broadcast %414 : vector<1x128xf32> to vector<16x128xf32>
    %416 = arith.addf %413, %415 : vector<16x128xf32>
    %cst_532 = arith.constant 0.000000e+00 : f32
    %417 = vector.broadcast %cst_532 : f32 to vector<16x128xf32>
    %418 = arith.maximumf %416, %417 : vector<16x128xf32>
    %419 = arith.truncf %418 : vector<16x128xf32> to vector<16x128xbf16>
    %c0_533 = arith.constant 0 : index
    %c0_534 = arith.constant 0 : index
    %420 = vector.load %arg8[%c0_533, %c0_534] : memref<128x128xbf16, #tpu.memory_space<vmem>>, vector<128x128xbf16>
    %cst_535 = arith.constant dense<0.000000e+00> : vector<16x128xf32>
    %421 = tpu.matmul %419, %420, %cst_535 {dimension_numbers = #tpu.dot_dimension_numbers<[1], [0], [0], [1], [0, 0, 1, 1], [], []>} : vector<16x128xbf16>, vector<128x128xbf16>, vector<16x128xf32> -> vector<16x128xf32>
    %c0_536 = arith.constant 0 : index
    %c0_537 = arith.constant 0 : index
    %422 = vector.load %arg9[%c0_536, %c0_537] : memref<1x128xf32, #tpu.memory_space<vmem>>, vector<1x128xf32>
    %423 = vector.broadcast %422 : vector<1x128xf32> to vector<16x128xf32>
    %424 = arith.addf %421, %423 : vector<16x128xf32>
    %cst_538 = arith.constant 0.000000e+00 : f32
    %425 = vector.broadcast %cst_538 : f32 to vector<16x128xf32>
    %426 = arith.maximumf %424, %425 : vector<16x128xf32>
    %427 = arith.truncf %426 : vector<16x128xf32> to vector<16x128xbf16>
    %c0_539 = arith.constant 0 : index
    %c0_540 = arith.constant 0 : index
    %428 = vector.load %arg10[%c0_539, %c0_540] : memref<128x128xbf16, #tpu.memory_space<vmem>>, vector<128x128xbf16>
    %cst_541 = arith.constant dense<0.000000e+00> : vector<16x128xf32>
    %429 = tpu.matmul %427, %428, %cst_541 {dimension_numbers = #tpu.dot_dimension_numbers<[1], [0], [0], [1], [0, 0, 1, 1], [], []>} : vector<16x128xbf16>, vector<128x128xbf16>, vector<16x128xf32> -> vector<16x128xf32>
    %c0_542 = arith.constant 0 : index
    %c0_543 = arith.constant 0 : index
    %430 = vector.load %arg11[%c0_542, %c0_543] : memref<1x128xf32, #tpu.memory_space<vmem>>, vector<1x128xf32>
    %431 = vector.broadcast %430 : vector<1x128xf32> to vector<16x128xf32>
    %432 = arith.addf %429, %431 : vector<16x128xf32>
    %c0_544 = arith.constant 0 : index
    %c0_545 = arith.constant 0 : index
    %433 = vector.load %arg12[%c0_544, %c0_545] : memref<16x128xf32, #tpu.memory_space<vmem>>, vector<16x128xf32>
    tpu.vector_store %arg12[%c0_544, %c0_545], %432 {strides = array<i32>} : memref<16x128xf32, #tpu.memory_space<vmem>>, vector<16x128xf32>,
    return
  }
  func.func @transform_0(%arg0: i32) -> (i32, i32, i32, i32, i32) {
    %c0_i32 = arith.constant 0 : i32
    %c0_i32_0 = arith.constant 0 : i32
    %c0_i32_1 = arith.constant 0 : i32
    %c0_i32_2 = arith.constant 0 : i32
    %c0_i32_3 = arith.constant 0 : i32
    return %arg0, %c0_i32, %c0_i32_0, %c0_i32_1, %c0_i32_2 : i32, i32, i32, i32, i32
  }
  func.func @transform_1(%arg0: i32) -> (i32, i32, i32, i32) {
    %c0_i32 = arith.constant 0 : i32
    %c0_i32_0 = arith.constant 0 : i32
    %c0_i32_1 = arith.constant 0 : i32
    %c0_i32_2 = arith.constant 0 : i32
    %c0_i32_3 = arith.constant 0 : i32
    return %c0_i32, %c0_i32_0, %c0_i32_1, %c0_i32_2 : i32, i32, i32, i32
  }
  func.func @transform_2(%arg0: i32) -> (i32, i32) {
    %c0_i32 = arith.constant 0 : i32
    %c0_i32_0 = arith.constant 0 : i32
    %c0_i32_1 = arith.constant 0 : i32
    return %c0_i32, %c0_i32_0 : i32, i32
  }
  func.func @transform_3(%arg0: i32) -> (i32, i32, i32, i32) {
    %c0_i32 = arith.constant 0 : i32
    %c0_i32_0 = arith.constant 0 : i32
    %c0_i32_1 = arith.constant 0 : i32
    %c0_i32_2 = arith.constant 0 : i32
    %c0_i32_3 = arith.constant 0 : i32
    return %c0_i32, %c0_i32_0, %c0_i32_1, %c0_i32_2 : i32, i32, i32, i32
  }
  func.func @transform_4(%arg0: i32) -> (i32, i32) {
    %c0_i32 = arith.constant 0 : i32
    %c0_i32_0 = arith.constant 0 : i32
    %c0_i32_1 = arith.constant 0 : i32
    return %c0_i32, %c0_i32_0 : i32, i32
  }
  func.func @transform_5(%arg0: i32) -> (i32, i32, i32) {
    %c0_i32 = arith.constant 0 : i32
    %c0_i32_0 = arith.constant 0 : i32
    %c0_i32_1 = arith.constant 0 : i32
    %c0_i32_2 = arith.constant 0 : i32
    return %c0_i32, %c0_i32_0, %c0_i32_1 : i32, i32, i32
  }
  func.func @transform_6(%arg0: i32) -> (i32, i32) {
    %c0_i32 = arith.constant 0 : i32
    %c0_i32_0 = arith.constant 0 : i32
    %c0_i32_1 = arith.constant 0 : i32
    return %c0_i32, %c0_i32_0 : i32, i32
  }
  func.func @transform_7(%arg0: i32) -> (i32, i32) {
    %c0_i32 = arith.constant 0 : i32
    %c0_i32_0 = arith.constant 0 : i32
    %c0_i32_1 = arith.constant 0 : i32
    return %c0_i32, %c0_i32_0 : i32, i32
  }
  func.func @transform_8(%arg0: i32) -> (i32, i32) {
    %c0_i32 = arith.constant 0 : i32
    %c0_i32_0 = arith.constant 0 : i32
    %c0_i32_1 = arith.constant 0 : i32
    return %c0_i32, %c0_i32_0 : i32, i32
  }
  func.func @transform_9(%arg0: i32) -> (i32, i32) {
    %c0_i32 = arith.constant 0 : i32
    %c0_i32_0 = arith.constant 0 : i32
    %c0_i32_1 = arith.constant 0 : i32
    return %c0_i32, %c0_i32_0 : i32, i32
  }
  func.func @transform_10(%arg0: i32) -> (i32, i32) {
    %c0_i32 = arith.constant 0 : i32
    %c0_i32_0 = arith.constant 0 : i32
    %c0_i32_1 = arith.constant 0 : i32
    return %c0_i32, %c0_i32_0 : i32, i32
  }
  func.func @transform_11(%arg0: i32) -> (i32, i32) {
    %c0_i32 = arith.constant 0 : i32
    %c0_i32_0 = arith.constant 0 : i32
    return %arg0, %c0_i32 : i32, i32
  }
}

</mosaic_0001>

<llo_original>
// kernel: lenet5_forward.1
$region0: #{lenet5_forward.1}
  #allocation0 [shape = 'u32[]', space=smem, size = 0x4, offset = 0x4, fixed_abs, tag = 'smem constant byte address 0x4 - core index']
  #allocation1 [shape = 'u32[144,128]{1,0:T(1,128)}', space=vmem, size = 0x12000, scoped, tag = 'internal scratch']
  %s0 = inlined_call_operand.vmem [shape: bf16[2,4,2,128,96], index: 0, kind: input, shape index: {}]
  %s1 = inlined_call_operand.vmem [shape: bf16[2,5,96,128], index: 1, kind: input, shape index: {}]
  %s2 = inlined_call_operand.vmem [shape: f32[1,128], index: 2, kind: input, shape index: {}]
  %s3 = inlined_call_operand.vmem [shape: bf16[2,5,128,128], index: 3, kind: input, shape index: {}]
  %s4 = inlined_call_operand.vmem [shape: f32[1,128], index: 4, kind: input, shape index: {}]
  %s5 = inlined_call_operand.vmem [shape: bf16[5,128,128], index: 5, kind: input, shape index: {}]
  %s6 = inlined_call_operand.vmem [shape: f32[1,128], index: 6, kind: input, shape index: {}]
  %s7 = inlined_call_operand.vmem [shape: bf16[128,128], index: 7, kind: input, shape index: {}]
  %s8 = inlined_call_operand.vmem [shape: f32[1,128], index: 8, kind: input, shape index: {}]
  %s9 = inlined_call_operand.vmem [shape: bf16[128,128], index: 9, kind: input, shape index: {}]
  %s10 = inlined_call_operand.vmem [shape: f32[1,128], index: 10, kind: input, shape index: {}]
  %s11 = inlined_call_operand.vmem [shape: f32[32,128], index: 11, kind: output, shape index: {}]
  %s12 = sld [smem:[#allocation0]]
  $region77: #{lenet5_forward.1} parent=0
    _
  %s14 = ssub.s32 1, %s12
  %s15 = scalar_select 0, %s14, %s12
  loop: start=0, step=1, limit=4
  $region2: #{lenet5_forward.1} parent=0 // loop_pre_header
    _
  $region3: #{lenet5_forward.1} parent=0 // loop_header
    %s17 = sphi 0, %s21
    %p18 = scmp.ge.s32.totalorder %s17, 4
    %s27 = sphi 0, %s29
    %s30 = sphi 0, %s27
    %s31 = sphi 0, %s30
    %s47 = sphi 0, %s31
    %s51 = sphi 0, %s51
    %s53 = sphi 0, %s51
    %s54 = sphi 0, %s53
    %s68 = sphi 0, %s54
    %s72 = sphi 0, %s72
    %s74 = sphi 0, %s72
    %s75 = sphi 0, %s74
    %s89 = sphi 0, %s75
    %s93 = sphi 0, %s93
    %s95 = sphi 0, %s93
    %s96 = sphi 0, %s95
    %s110 = sphi 0, %s96
    %s114 = sphi 0, %s114
    %s116 = sphi 0, %s114
    %s117 = sphi 0, %s116
    %s131 = sphi 0, %s117
    %s135 = sphi 0, %s135
    %s137 = sphi 0, %s135
    %s138 = sphi 0, %s137
    %s152 = sphi 0, %s138
    %s156 = sphi 0, %s156
    %s158 = sphi 0, %s156
    %s159 = sphi 0, %s158
    %s173 = sphi 0, %s159
    %s177 = sphi 0, %s177
    %s179 = sphi 0, %s177
    %s180 = sphi 0, %s179
    %s194 = sphi 0, %s180
    %s198 = sphi 0, %s198
    %s200 = sphi 0, %s198
    %s201 = sphi 0, %s200
    %s215 = sphi 0, %s201
    %s219 = sphi 0, %s219
    %s221 = sphi 0, %s219
    %s222 = sphi 0, %s221
    %s236 = sphi 0, %s222
    %s240 = sphi 0, %s240
    %s242 = sphi 0, %s240
    %s243 = sphi 0, %s242
    %s257 = sphi 0, %s243
    %s263 = sphi 0, %s265
    %s266 = sphi 0, %s263
    %s267 = sphi 0, %s266
    %s283 = sphi 0, %s267
  $region4: #{lenet5_forward.1} parent=0 // loop_header_branch
    %20 = sbr.rel (%p18) target = $region8
  $region5: #{lenet5_forward.1} parent=0 // loop_body
    %s22 = ssub.s32 %s17, 1
    %s23 = ssub.s32 %s17, 2
    %s24 = sadd.s32 %s17, 1
    %s25 = ssub.s32 %s17, %s24
    %p26 = scmp.eq.s32.totalorder %s25, 0
    %s28 = sadd.s32 %s27, 1
    %s29 = scalar_select %p26, %s27, %s28
    %p32 = pneg %p26
    %p33 = scmp.eq.s32.totalorder %s17, 1
    %p34 = por %p32, %p33
    %p35 = scmp.ne.s32.totalorder %s27, %s30
    %p36 = scmp.eq.s32.totalorder %s17, 0
    %p37 = por %p35, %p36
    %p38 = scmp.ne.s32.totalorder %s27, %s30
    %p39 = scmp.eq.s32.totalorder %s22, 1
    %p40 = por %p38, %p39
    %p41 = scmp.ne.s32.totalorder %s30, %s31
    %p42 = scmp.eq.s32.totalorder %s22, 0
    %p43 = por %p41, %p42
    %p44 = scmp.ne.s32.totalorder %s30, %s31
    %p45 = scmp.eq.s32.totalorder %s23, 1
    %p46 = por %p44, %p45
    %p48 = scmp.ne.s32.totalorder %s31, %s47
    %p49 = scmp.eq.s32.totalorder %s23, 0
    %p50 = por %p48, %p49
    %s52 = sadd.s32 %s51, 1
    %p55 = scmp.eq.s32.totalorder %s17, 1
    %p56 = scmp.ne.s32.totalorder %s51, %s53
    %p57 = scmp.eq.s32.totalorder %s17, 0
    %p58 = por %p56, %p57
    %p59 = scmp.ne.s32.totalorder %s51, %s53
    %p60 = scmp.eq.s32.totalorder %s22, 1
    %p61 = por %p59, %p60
    %p62 = scmp.ne.s32.totalorder %s53, %s54
    %p63 = scmp.eq.s32.totalorder %s22, 0
    %p64 = por %p62, %p63
    %p65 = scmp.ne.s32.totalorder %s53, %s54
    %p66 = scmp.eq.s32.totalorder %s23, 1
    %p67 = por %p65, %p66
    %p69 = scmp.ne.s32.totalorder %s54, %s68
    %p70 = scmp.eq.s32.totalorder %s23, 0
    %p71 = por %p69, %p70
    %s73 = sadd.s32 %s72, 1
    %p76 = scmp.eq.s32.totalorder %s17, 1
    %p77 = scmp.ne.s32.totalorder %s72, %s74
    %p78 = scmp.eq.s32.totalorder %s17, 0
    %p79 = por %p77, %p78
    %p80 = scmp.ne.s32.totalorder %s72, %s74
    %p81 = scmp.eq.s32.totalorder %s22, 1
    %p82 = por %p80, %p81
    %p83 = scmp.ne.s32.totalorder %s74, %s75
    %p84 = scmp.eq.s32.totalorder %s22, 0
    %p85 = por %p83, %p84
    %p86 = scmp.ne.s32.totalorder %s74, %s75
    %p87 = scmp.eq.s32.totalorder %s23, 1
    %p88 = por %p86, %p87
    %p90 = scmp.ne.s32.totalorder %s75, %s89
    %p91 = scmp.eq.s32.totalorder %s23, 0
    %p92 = por %p90, %p91
    %s94 = sadd.s32 %s93, 1
    %p97 = scmp.eq.s32.totalorder %s17, 1
    %p98 = scmp.ne.s32.totalorder %s93, %s95
    %p99 = scmp.eq.s32.totalorder %s17, 0
    %p100 = por %p98, %p99
    %p101 = scmp.ne.s32.totalorder %s93, %s95
    %p102 = scmp.eq.s32.totalorder %s22, 1
    %p103 = por %p101, %p102
    %p104 = scmp.ne.s32.totalorder %s95, %s96
    %p105 = scmp.eq.s32.totalorder %s22, 0
    %p106 = por %p104, %p105
    %p107 = scmp.ne.s32.totalorder %s95, %s96
    %p108 = scmp.eq.s32.totalorder %s23, 1
    %p109 = por %p107, %p108
    %p111 = scmp.ne.s32.totalorder %s96, %s110
    %p112 = scmp.eq.s32.totalorder %s23, 0
    %p113 = por %p111, %p112
    %s115 = sadd.s32 %s114, 1
    %p118 = scmp.eq.s32.totalorder %s17, 1
    %p119 = scmp.ne.s32.totalorder %s114, %s116
    %p120 = scmp.eq.s32.totalorder %s17, 0
    %p121 = por %p119, %p120
    %p122 = scmp.ne.s32.totalorder %s114, %s116
    %p123 = scmp.eq.s32.totalorder %s22, 1
    %p124 = por %p122, %p123
    %p125 = scmp.ne.s32.totalorder %s116, %s117
    %p126 = scmp.eq.s32.totalorder %s22, 0
    %p127 = por %p125, %p126
    %p128 = scmp.ne.s32.totalorder %s116, %s117
    %p129 = scmp.eq.s32.totalorder %s23, 1
    %p130 = por %p128, %p129
    %p132 = scmp.ne.s32.totalorder %s117, %s131
    %p133 = scmp.eq.s32.totalorder %s23, 0
    %p134 = por %p132, %p133
    %s136 = sadd.s32 %s135, 1
    %p139 = scmp.eq.s32.totalorder %s17, 1
    %p140 = scmp.ne.s32.totalorder %s135, %s137
    %p141 = scmp.eq.s32.totalorder %s17, 0
    %p142 = por %p140, %p141
    %p143 = scmp.ne.s32.totalorder %s135, %s137
    %p144 = scmp.eq.s32.totalorder %s22, 1
    %p145 = por %p143, %p144
    %p146 = scmp.ne.s32.totalorder %s137, %s138
    %p147 = scmp.eq.s32.totalorder %s22, 0
    %p148 = por %p146, %p147
    %p149 = scmp.ne.s32.totalorder %s137, %s138
    %p150 = scmp.eq.s32.totalorder %s23, 1
    %p151 = por %p149, %p150
    %p153 = scmp.ne.s32.totalorder %s138, %s152
    %p154 = scmp.eq.s32.totalorder %s23, 0
    %p155 = por %p153, %p154
    %s157 = sadd.s32 %s156, 1
    %p160 = scmp.eq.s32.totalorder %s17, 1
    %p161 = scmp.ne.s32.totalorder %s156, %s158
    %p162 = scmp.eq.s32.totalorder %s17, 0
    %p163 = por %p161, %p162
    %p164 = scmp.ne.s32.totalorder %s156, %s158
    %p165 = scmp.eq.s32.totalorder %s22, 1
    %p166 = por %p164, %p165
    %p167 = scmp.ne.s32.totalorder %s158, %s159
    %p168 = scmp.eq.s32.totalorder %s22, 0
    %p169 = por %p167, %p168
    %p170 = scmp.ne.s32.totalorder %s158, %s159
    %p171 = scmp.eq.s32.totalorder %s23, 1
    %p172 = por %p170, %p171
    %p174 = scmp.ne.s32.totalorder %s159, %s173
    %p175 = scmp.eq.s32.totalorder %s23, 0
    %p176 = por %p174, %p175
    %s178 = sadd.s32 %s177, 1
    %p181 = scmp.eq.s32.totalorder %s17, 1
    %p182 = scmp.ne.s32.totalorder %s177, %s179
    %p183 = scmp.eq.s32.totalorder %s17, 0
    %p184 = por %p182, %p183
    %p185 = scmp.ne.s32.totalorder %s177, %s179
    %p186 = scmp.eq.s32.totalorder %s22, 1
    %p187 = por %p185, %p186
    %p188 = scmp.ne.s32.totalorder %s179, %s180
    %p189 = scmp.eq.s32.totalorder %s22, 0
    %p190 = por %p188, %p189
    %p191 = scmp.ne.s32.totalorder %s179, %s180
    %p192 = scmp.eq.s32.totalorder %s23, 1
    %p193 = por %p191, %p192
    %p195 = scmp.ne.s32.totalorder %s180, %s194
    %p196 = scmp.eq.s32.totalorder %s23, 0
    %p197 = por %p195, %p196
    %s199 = sadd.s32 %s198, 1
    %p202 = scmp.eq.s32.totalorder %s17, 1
    %p203 = scmp.ne.s32.totalorder %s198, %s200
    %p204 = scmp.eq.s32.totalorder %s17, 0
    %p205 = por %p203, %p204
    %p206 = scmp.ne.s32.totalorder %s198, %s200
    %p207 = scmp.eq.s32.totalorder %s22, 1
    %p208 = por %p206, %p207
    %p209 = scmp.ne.s32.totalorder %s200, %s201
    %p210 = scmp.eq.s32.totalorder %s22, 0
    %p211 = por %p209, %p210
    %p212 = scmp.ne.s32.totalorder %s200, %s201
    %p213 = scmp.eq.s32.totalorder %s23, 1
    %p214 = por %p212, %p213
    %p216 = scmp.ne.s32.totalorder %s201, %s215
    %p217 = scmp.eq.s32.totalorder %s23, 0
    %p218 = por %p216, %p217
    %s220 = sadd.s32 %s219, 1
    %p223 = scmp.eq.s32.totalorder %s17, 1
    %p224 = scmp.ne.s32.totalorder %s219, %s221
    %p225 = scmp.eq.s32.totalorder %s17, 0
    %p226 = por %p224, %p225
    %p227 = scmp.ne.s32.totalorder %s219, %s221
    %p228 = scmp.eq.s32.totalorder %s22, 1
    %p229 = por %p227, %p228
    %p230 = scmp.ne.s32.totalorder %s221, %s222
    %p231 = scmp.eq.s32.totalorder %s22, 0
    %p232 = por %p230, %p231
    %p233 = scmp.ne.s32.totalorder %s221, %s222
    %p234 = scmp.eq.s32.totalorder %s23, 1
    %p235 = por %p233, %p234
    %p237 = scmp.ne.s32.totalorder %s222, %s236
    %p238 = scmp.eq.s32.totalorder %s23, 0
    %p239 = por %p237, %p238
    %s241 = sadd.s32 %s240, 1
    %p244 = scmp.eq.s32.totalorder %s17, 1
    %p245 = scmp.ne.s32.totalorder %s240, %s242
    %p246 = scmp.eq.s32.totalorder %s17, 0
    %p247 = por %p245, %p246
    %p248 = scmp.ne.s32.totalorder %s240, %s242
    %p249 = scmp.eq.s32.totalorder %s22, 1
    %p250 = por %p248, %p249
    %p251 = scmp.ne.s32.totalorder %s242, %s243
    %p252 = scmp.eq.s32.totalorder %s22, 0
    %p253 = por %p251, %p252
    %p254 = scmp.ne.s32.totalorder %s242, %s243
    %p255 = scmp.eq.s32.totalorder %s23, 1
    %p256 = por %p254, %p255
    %p258 = scmp.ne.s32.totalorder %s243, %s257
    %p259 = scmp.eq.s32.totalorder %s23, 0
    %p260 = por %p258, %p259
    %s261 = ssub.s32 %s17, %s24
    %p262 = scmp.eq.s32.totalorder %s261, 0
    %s264 = sadd.s32 %s263, 1
    %s265 = scalar_select %p262, %s263, %s264
    %p268 = pneg %p262
    %p269 = scmp.eq.s32.totalorder %s17, 1
    %p270 = por %p268, %p269
    %p271 = scmp.ne.s32.totalorder %s263, %s266
    %p272 = scmp.eq.s32.totalorder %s17, 0
    %p273 = por %p271, %p272
    %p274 = scmp.ne.s32.totalorder %s263, %s266
    %p275 = scmp.eq.s32.totalorder %s22, 1
    %p276 = por %p274, %p275
    %p277 = scmp.ne.s32.totalorder %s266, %s267
    %p278 = scmp.eq.s32.totalorder %s22, 0
    %p279 = por %p277, %p278
    %p280 = scmp.ne.s32.totalorder %s266, %s267
    %p281 = scmp.eq.s32.totalorder %s23, 1
    %p282 = por %p280, %p281
    %p284 = scmp.ne.s32.totalorder %s267, %s283
    %p285 = scmp.eq.s32.totalorder %s23, 0
    %p286 = por %p284, %p285
    %p287 = scmp.le.s32.totalorder 1, %s17
    %p288 = scmp.lt.s32.totalorder %s17, 3
    %p289 = pnand %p287, %p288
    %p290 = pneg %p289
    // Predicated region
    $region9: #{lenet5_forward.1} parent=5 // pred_check
      _
    $region10: #{lenet5_forward.1} parent=5 // pred_check_branch
      %292 = sbr.rel (%p289) target = $region12
    $region11: #{lenet5_forward.1} parent=5 // pred_region
      %s293 = ssub.s32 %s17, 1
      // Predicated region
      $region13: #{lenet5_forward.1} parent=11 // pred_check
        %p294 = pneg %p64
      $region14: #{lenet5_forward.1} parent=11 // pred_check_branch
        %296 = sbr.rel (%p294) target = $region16
      $region15: #{lenet5_forward.1} parent=11 // pred_region
        _
      $region16: #{lenet5_forward.1} parent=11 // pred_fallthru
        _
      // Predicated region
      $region17: #{lenet5_forward.1} parent=11 // pred_check
        %p297 = pneg %p85
      $region18: #{lenet5_forward.1} parent=11 // pred_check_branch
        %299 = sbr.rel (%p297) target = $region20
      $region19: #{lenet5_forward.1} parent=11 // pred_region
        _
      $region20: #{lenet5_forward.1} parent=11 // pred_fallthru
        _
      // Predicated region
      $region21: #{lenet5_forward.1} parent=11 // pred_check
        %p300 = pneg %p106
      $region22: #{lenet5_forward.1} parent=11 // pred_check_branch
        %302 = sbr.rel (%p300) target = $region24
      $region23: #{lenet5_forward.1} parent=11 // pred_region
        _
      $region24: #{lenet5_forward.1} parent=11 // pred_fallthru
        _
      // Predicated region
      $region25: #{lenet5_forward.1} parent=11 // pred_check
        %p303 = pneg %p127
      $region26: #{lenet5_forward.1} parent=11 // pred_check_branch
        %305 = sbr.rel (%p303) target = $region28
      $region27: #{lenet5_forward.1} parent=11 // pred_region
        _
      $region28: #{lenet5_forward.1} parent=11 // pred_fallthru
        _
      // Predicated region
      $region29: #{lenet5_forward.1} parent=11 // pred_check
        %p306 = pneg %p148
      $region30: #{lenet5_forward.1} parent=11 // pred_check_branch
        %308 = sbr.rel (%p306) target = $region32
      $region31: #{lenet5_forward.1} parent=11 // pred_region
        _
      $region32: #{lenet5_forward.1} parent=11 // pred_fallthru
        _
      // Predicated region
      $region33: #{lenet5_forward.1} parent=11 // pred_check
        %p309 = pneg %p169
      $region34: #{lenet5_forward.1} parent=11 // pred_check_branch
        %311 = sbr.rel (%p309) target = $region36
      $region35: #{lenet5_forward.1} parent=11 // pred_region
        _
      $region36: #{lenet5_forward.1} parent=11 // pred_fallthru
        _
      // Predicated region
      $region37: #{lenet5_forward.1} parent=11 // pred_check
        %p312 = pneg %p190
      $region38: #{lenet5_forward.1} parent=11 // pred_check_branch
        %314 = sbr.rel (%p312) target = $region40
      $region39: #{lenet5_forward.1} parent=11 // pred_region
        _
      $region40: #{lenet5_forward.1} parent=11 // pred_fallthru
        _
      // Predicated region
      $region41: #{lenet5_forward.1} parent=11 // pred_check
        %p315 = pneg %p211
      $region42: #{lenet5_forward.1} parent=11 // pred_check_branch
        %317 = sbr.rel (%p315) target = $region44
      $region43: #{lenet5_forward.1} parent=11 // pred_region
        _
      $region44: #{lenet5_forward.1} parent=11 // pred_fallthru
        _
      // Predicated region
      $region45: #{lenet5_forward.1} parent=11 // pred_check
        %p318 = pneg %p232
      $region46: #{lenet5_forward.1} parent=11 // pred_check_branch
        %320 = sbr.rel (%p318) target = $region48
      $region47: #{lenet5_forward.1} parent=11 // pred_region
        _
      $region48: #{lenet5_forward.1} parent=11 // pred_fallthru
        _
      // Predicated region
      $region49: #{lenet5_forward.1} parent=11 // pred_check
        %p321 = pneg %p253
      $region50: #{lenet5_forward.1} parent=11 // pred_check_branch
        %323 = sbr.rel (%p321) target = $region52
      $region51: #{lenet5_forward.1} parent=11 // pred_region
        _
      $region52: #{lenet5_forward.1} parent=11 // pred_fallthru
        _
    $region12: #{lenet5_forward.1} parent=5 // pred_fallthru
      _
    %p324 = scmp.lt.s32.totalorder %s17, 2
    // Predicated region
    $region53: #{lenet5_forward.1} parent=5 // pred_check
      %p325 = pneg %p324
    $region54: #{lenet5_forward.1} parent=5 // pred_check_branch
      %327 = sbr.rel (%p325) target = $region56
    $region55: #{lenet5_forward.1} parent=5 // pred_region
      // Predicated region
      $region57: #{lenet5_forward.1} parent=55 // pred_check
        %p328 = pneg %p37
      $region58: #{lenet5_forward.1} parent=55 // pred_check_branch
        %330 = sbr.rel (%p328) target = $region60
      $region59: #{lenet5_forward.1} parent=55 // pred_region
        %p331 = scmp.lt.s32.totalorder %s17, 1
        %s332 = scalar_select %p331, %s17, 1
        %s333 = smul.addr %s332, 128
        %s334 = smul.addr %s333, 4
        %s335 = scalar_lea.vmem %s0, %s334
      $region60: #{lenet5_forward.1} parent=55 // pred_fallthru
        _
    $region56: #{lenet5_forward.1} parent=5 // pred_fallthru
      _
    %p336 = scmp.le.s32.totalorder 1, %s17
    %p337 = scmp.lt.s32.totalorder %s17, 3
    %p338 = pnand %p336, %p337
    %p339 = pneg %p338
    // Predicated region
    $region61: #{lenet5_forward.1} parent=5 // pred_check
      _
    $region62: #{lenet5_forward.1} parent=5 // pred_check_branch
      %341 = sbr.rel (%p338) target = $region64
    $region63: #{lenet5_forward.1} parent=5 // pred_region
      %s342 = ssub.s32 %s17, 1
      %p343 = scmp.lt.s32.totalorder %s22, 1
      %s344 = scalar_select %p343, %s22, 1
      %s345 = smul.addr %s344, 128
      %s346 = smul.addr %s345, 4
      %s347 = scalar_lea.vmem %s0, %s346
      %p348 = pneg %p43
      %p349 = pneg %p40
      %p350 = pneg %p64
      %p351 = pneg %p61
      %p352 = pneg %p85
      %p353 = pneg %p82
      %p354 = pneg %p106
      %p355 = pneg %p103
      %p356 = pneg %p127
      %p357 = pneg %p124
      %p358 = pneg %p148
      %p359 = pneg %p145
      %p360 = pneg %p169
      %p361 = pneg %p166
      %p362 = pneg %p190
      %p363 = pneg %p187
      %p364 = pneg %p211
      %p365 = pneg %p208
      %p366 = pneg %p232
      %p367 = pneg %p229
      %p368 = pneg %p253
      %p369 = pneg %p250
      %p370 = pneg %p279
      %p371 = pneg %p276
      %s372 = smul.u32 2, %s22
      %p373 = scmp.lt.s32.totalorder %s372, 3
      %s374 = scalar_select %p373, %s372, 3
      %s375 = smul.addr %s374, 8
      %s376 = scalar_lea.vmem %s11, %s375
      %p377 = scmp.lt.s32.totalorder %s22, 1
      %s378 = scalar_select %p377, %s22, 1
      %s379 = smul.addr %s378, 128
      %s380 = smul.addr %s379, 4
      %s381 = scalar_lea.vmem %s0, %s380
      %s382 = smul.u32 2, %s22
      %p383 = scmp.lt.s32.totalorder %s382, 3
      %s384 = scalar_select %p383, %s382, 3
      %s385 = smul.addr %s384, 8
      %s386 = scalar_lea.vmem %s11, %s385
      %s387 = smul.u32 2, %s22
      %v389 = vld [vmem:[%s2] sm:$0x1]
      %v390 = vld [vmem:[%s4] sm:$0x1]
      %v391 = vld [vmem:[%s381] sm:$0xf]
      %v392 = vld [vmem:[%s381 + $0x4] sm:$0xf]
      %v393 = vld [vmem:[%s381 + $0x8] sm:$0xf]
      %v394 = vld [vmem:[%s381 + $0xc] sm:$0xf]
      %v395 = vld [vmem:[%s381 + $0x10] sm:$0xf]
      %v396 = vld [vmem:[%s381 + $0x14] sm:$0xf]
      %v397 = vld [vmem:[%s381 + $0x18] sm:$0xf]
      %v398 = vld [vmem:[%s381 + $0x1c] sm:$0xf]
      %v399 = vld [vmem:[%s381 + $0x20] sm:$0xf]
      %v400 = vld [vmem:[%s381 + $0x24] sm:$0xf]
      %v401 = vld [vmem:[%s381 + $0x28] sm:$0xf]
      %v402 = vld [vmem:[%s381 + $0x2c] sm:$0xf]
      %v403 = vld [vmem:[%s381 + $0x30] sm:$0xf]
      %v404 = vld [vmem:[%s381 + $0x34] sm:$0xf]
      %v405 = vld [vmem:[%s381 + $0x38] sm:$0xf]
      %v406 = vld [vmem:[%s381 + $0x3c] sm:$0xf]
      %v407 = vld [vmem:[%s1] sm:$0xf]
      %v408 = vld [vmem:[%s1 + $0x4] sm:$0xf]
      %v409 = vld [vmem:[%s1 + $0x8] sm:$0xf]
      %v410 = vld [vmem:[%s1 + $0xc] sm:$0xf]
      %v411 = vld [vmem:[%s1 + $0x10] sm:$0xf]
      %v412 = vld [vmem:[%s1 + $0x14] sm:$0xf]
      %v413 = vld [vmem:[%s1 + $0x18] sm:$0xf]
      %v414 = vld [vmem:[%s1 + $0x1c] sm:$0xf]
      %v415 = vld [vmem:[%s1 + $0x20] sm:$0xf]
      %v416 = vld [vmem:[%s1 + $0x24] sm:$0xf]
      %v417 = vld [vmem:[%s1 + $0x28] sm:$0xf]
      %v418 = vld [vmem:[%s1 + $0x2c] sm:$0xf]
      %s419 = scalar_lea.vmem %s381, 128
      %v420 = vld [vmem:[%s419] sm:$0xf]
      %v421 = vld [vmem:[%s419 + $0x4] sm:$0xf]
      %v422 = vld [vmem:[%s419 + $0x8] sm:$0xf]
      %v423 = vld [vmem:[%s419 + $0xc] sm:$0xf]
      %v424 = vld [vmem:[%s419 + $0x10] sm:$0xf]
      %v425 = vld [vmem:[%s419 + $0x14] sm:$0xf]
      %v426 = vld [vmem:[%s419 + $0x18] sm:$0xf]
      %v427 = vld [vmem:[%s419 + $0x1c] sm:$0xf]
      %v428 = vld [vmem:[%s419 + $0x20] sm:$0xf]
      %v429 = vld [vmem:[%s419 + $0x24] sm:$0xf]
      %v430 = vld [vmem:[%s419 + $0x28] sm:$0xf]
      %v431 = vld [vmem:[%s419 + $0x2c] sm:$0xf]
      %v432 = vld [vmem:[%s419 + $0x30] sm:$0xf]
      %v433 = vld [vmem:[%s419 + $0x34] sm:$0xf]
      %v434 = vld [vmem:[%s419 + $0x38] sm:$0xf]
      %v435 = vld [vmem:[%s419 + $0x3c] sm:$0xf]
      %s436 = scalar_lea.vmem %s1, 48
      %v437 = vld [vmem:[%s436] sm:$0xf]
      %v438 = vld [vmem:[%s436 + $0x4] sm:$0xf]
      %v439 = vld [vmem:[%s436 + $0x8] sm:$0xf]
      %v440 = vld [vmem:[%s436 + $0xc] sm:$0xf]
      %v441 = vld [vmem:[%s436 + $0x10] sm:$0xf]
      %v442 = vld [vmem:[%s436 + $0x14] sm:$0xf]
      %v443 = vld [vmem:[%s436 + $0x18] sm:$0xf]
      %v444 = vld [vmem:[%s436 + $0x1c] sm:$0xf]
      %v445 = vld [vmem:[%s436 + $0x20] sm:$0xf]
      %v446 = vld [vmem:[%s436 + $0x24] sm:$0xf]
      %v447 = vld [vmem:[%s436 + $0x28] sm:$0xf]
      %v448 = vld [vmem:[%s436 + $0x2c] sm:$0xf]
      %v465 = vunpack.c.l.b16 %v420
      %v466 = vunpack.c.l.b16 %v421
      %v467 = vunpack.c.l.b16 %v422
      %v468 = vunpack.c.l.b16 %v423
      %v469 = vunpack.c.l.b16 %v424
      %v470 = vunpack.c.l.b16 %v425
      %v471 = vunpack.c.l.b16 %v426
      %v472 = vunpack.c.l.b16 %v427
      %v473 = vunpack.c.l.b16 %v428
      %v474 = vunpack.c.l.b16 %v429
      %v475 = vunpack.c.l.b16 %v430
      %v476 = vunpack.c.l.b16 %v431
      %v477 = vunpack.c.l.b16 %v432
      %v478 = vunpack.c.l.b16 %v433
      %v479 = vunpack.c.l.b16 %v434
      %v480 = vunpack.c.l.b16 %v435
      %v481 = vpack.c.b16 %v466, %v465
      %v482 = vpack.c.b16 %v468, %v467
      %v483 = vpack.c.b16 %v470, %v469
      %v484 = vpack.c.b16 %v472, %v471
      %v485 = vpack.c.b16 %v474, %v473
      %v486 = vpack.c.b16 %v476, %v475
      %v487 = vpack.c.b16 %v478, %v477
      %v488 = vpack.c.b16 %v480, %v479
      %v501 = vunpack.c.l.b16 %v437
      %v502 = vunpack.c.l.b16 %v438
      %v503 = vunpack.c.l.b16 %v439
      %v504 = vunpack.c.l.b16 %v440
      %v505 = vunpack.c.l.b16 %v441
      %v506 = vunpack.c.l.b16 %v442
      %v507 = vunpack.c.l.b16 %v443
      %v508 = vunpack.c.l.b16 %v444
      %v509 = vunpack.c.l.b16 %v445
      %v510 = vunpack.c.l.b16 %v446
      %v511 = vunpack.c.l.b16 %v447
      %v512 = vunpack.c.l.b16 %v448
      %v513 = vpack.c.b16 %v502, %v501
      %v514 = vpack.c.b16 %v504, %v503
      %v515 = vpack.c.b16 %v506, %v505
      %v516 = vpack.c.b16 %v508, %v507
      %v517 = vpack.c.b16 %v510, %v509
      %v518 = vpack.c.b16 %v512, %v511
      %vm525 = vcmask 785408
      %v527 = vsel %vm525, %v481, 0
      %v530 = vsel %vm525, %v482, 0
      %v533 = vsel %vm525, %v483, 0
      %v536 = vsel %vm525, %v484, 0
      %v539 = vsel %vm525, %v485, 0
      %v542 = vsel %vm525, %v486, 0
      %v545 = vsel %vm525, %v487, 0
      %v548 = vsel %vm525, %v488, 0
      %550 = vmatprep.subr.bf16.mxu0 0
      %551 = vmatpush1.bf16.msra.mxu0 %v513
      %552 = vmatprep.subr.bf16.mxu0 0
      %553 = vmatpush1.bf16.msra.mxu0 %v514
      %554 = vmatprep.subr.bf16.mxu0 0
      %555 = vmatpush1.bf16.msra.mxu0 %v515
      %556 = vmatprep.subr.bf16.mxu0 0
      %557 = vmatpush1.bf16.msra.mxu0 %v516
      %558 = vmatprep.subr.bf16.mxu0 0
      %559 = vmatpush1.bf16.msra.mxu0 %v517
      %560 = vmatprep.subr.bf16.mxu0 0
      %561 = vmatpush1.bf16.msra.mxu0 %v518
      %562 = vmatprep.subr.bf16.mxu0 0
      %563 = vmatpush1.bf16.msra.mxu0 0
      %564 = vmatprep.subr.bf16.mxu0 0
      %565 = vmatpush1.bf16.msra.mxu0 0
      %566 = vmatprep.subr.bf16.mxu0 0
      %567 = vmatpush1.bf16.msra.mxu0 0
      %568 = vmatprep.subr.bf16.mxu0 0
      %569 = vmatpush1.bf16.msra.mxu0 0
      %570 = vmatprep.subr.bf16.mxu0 0
      %571 = vmatpush1.bf16.msra.mxu0 0
      %572 = vmatprep.subr.bf16.mxu0 0
      %573 = vmatpush1.bf16.msra.mxu0 0
      %574 = vmatprep.subr.bf16.mxu0 0
      %575 = vmatpush1.bf16.msra.mxu0 0
      %576 = vmatprep.subr.bf16.mxu0 0
      %577 = vmatpush1.bf16.msra.mxu0 0
      %578 = vmatprep.subr.bf16.mxu0 0
      %579 = vmatpush1.bf16.msra.mxu0 0
      %580 = vmatprep.subr.bf16.mxu0 0
      %581 = vmatpush1.bf16.msra.mxu0 0
      %582 = vmatprep.mubr.bf16.mxu0 0
      %583 = vmatmul.mubr.bf16.gmra.mrb[0].mxu0 %v527
      %v584 = vpop.f32.mrb[0].mxu0
      %v585 = vadd.f32 0.0, %v584
      %v586 = vpop.f32.mrb[0].mxu0
      %v587 = vpop.f32.mrb[0].mxu0
      %v588 = vadd.f32 0.0, %v587
      %v589 = vpop.f32.mrb[0].mxu0
      %590 = vmatprep.mubr.bf16.mxu0 0
      %591 = vmatmul.mubr.bf16.gmra.mrb[0].mxu0 %v530
      %v592 = vpop.f32.mrb[0].mxu0
      %v593 = vadd.f32 0.0, %v592
      %v594 = vpop.f32.mrb[0].mxu0
      %v595 = vpop.f32.mrb[0].mxu0
      %v596 = vadd.f32 0.0, %v595
      %v597 = vpop.f32.mrb[0].mxu0
      %598 = vmatprep.mubr.bf16.mxu0 0
      %599 = vmatmul.mubr.bf16.gmra.mrb[0].mxu0 %v533
      %v600 = vpop.f32.mrb[0].mxu0
      %v601 = vadd.f32 0.0, %v600
      %v602 = vpop.f32.mrb[0].mxu0
      %v603 = vpop.f32.mrb[0].mxu0
      %v604 = vadd.f32 0.0, %v603
      %v605 = vpop.f32.mrb[0].mxu0
      %606 = vmatprep.mubr.bf16.mxu0 0
      %607 = vmatmul.mubr.bf16.gmra.mrb[0].mxu0 %v536
      %v608 = vpop.f32.mrb[0].mxu0
      %v609 = vadd.f32 0.0, %v608
      %v610 = vpop.f32.mrb[0].mxu0
      %v611 = vpop.f32.mrb[0].mxu0
      %v612 = vadd.f32 0.0, %v611
      %v613 = vpop.f32.mrb[0].mxu0
      %614 = vmatprep.mubr.bf16.mxu0 0
      %615 = vmatmul.mubr.bf16.gmra.mrb[0].mxu0 %v539
      %v616 = vpop.f32.mrb[0].mxu0
      %v617 = vadd.f32 0.0, %v616
      %v618 = vpop.f32.mrb[0].mxu0
      %v619 = vpop.f32.mrb[0].mxu0
      %v620 = vadd.f32 0.0, %v619
      %v621 = vpop.f32.mrb[0].mxu0
      %622 = vmatprep.mubr.bf16.mxu0 0
      %623 = vmatmul.mubr.bf16.gmra.mrb[0].mxu0 %v542
      %v624 = vpop.f32.mrb[0].mxu0
      %v625 = vadd.f32 0.0, %v624
      %v626 = vpop.f32.mrb[0].mxu0
      %v627 = vpop.f32.mrb[0].mxu0
      %v628 = vadd.f32 0.0, %v627
      %v629 = vpop.f32.mrb[0].mxu0
      %630 = vmatprep.mubr.bf16.mxu0 0
      %631 = vmatmul.mubr.bf16.gmra.mrb[0].mxu0 %v545
      %v632 = vpop.f32.mrb[0].mxu0
      %v633 = vadd.f32 0.0, %v632
      %v634 = vpop.f32.mrb[0].mxu0
      %v635 = vpop.f32.mrb[0].mxu0
      %v636 = vadd.f32 0.0, %v635
      %v637 = vpop.f32.mrb[0].mxu0
      %638 = vmatprep.mubr.bf16.mxu0 0
      %639 = vmatmul.mubr.bf16.gmra.mrb[0].mxu0 %v548
      %v640 = vpop.f32.mrb[0].mxu0
      %v641 = vpop.f32.mrb[0].mxu0
      %v642 = vpop.f32.mrb[0].mxu0
      %v643 = vpop.f32.mrb[0].mxu0
      %644 = vdwg.mxu0
      %v661 = vunpack.c.l.b16 %v391
      %v662 = vunpack.c.l.b16 %v392
      %v663 = vunpack.c.l.b16 %v393
      %v664 = vunpack.c.l.b16 %v394
      %v665 = vunpack.c.l.b16 %v395
      %v666 = vunpack.c.l.b16 %v396
      %v667 = vunpack.c.l.b16 %v397
      %v668 = vunpack.c.l.b16 %v398
      %v669 = vunpack.c.l.b16 %v399
      %v670 = vunpack.c.l.b16 %v400
      %v671 = vunpack.c.l.b16 %v401
      %v672 = vunpack.c.l.b16 %v402
      %v673 = vunpack.c.l.b16 %v403
      %v674 = vunpack.c.l.b16 %v404
      %v675 = vunpack.c.l.b16 %v405
      %v676 = vunpack.c.l.b16 %v406
      %v677 = vpack.c.b16 %v662, %v661
      %v678 = vpack.c.b16 %v664, %v663
      %v679 = vpack.c.b16 %v666, %v665
      %v680 = vpack.c.b16 %v668, %v667
      %v681 = vpack.c.b16 %v670, %v669
      %v682 = vpack.c.b16 %v672, %v671
      %v683 = vpack.c.b16 %v674, %v673
      %v684 = vpack.c.b16 %v676, %v675
      %v697 = vunpack.c.l.b16 %v407
      %v698 = vunpack.c.l.b16 %v408
      %v699 = vunpack.c.l.b16 %v409
      %v700 = vunpack.c.l.b16 %v410
      %v701 = vunpack.c.l.b16 %v411
      %v702 = vunpack.c.l.b16 %v412
      %v703 = vunpack.c.l.b16 %v413
      %v704 = vunpack.c.l.b16 %v414
      %v705 = vunpack.c.l.b16 %v415
      %v706 = vunpack.c.l.b16 %v416
      %v707 = vunpack.c.l.b16 %v417
      %v708 = vunpack.c.l.b16 %v418
      %v709 = vpack.c.b16 %v698, %v697
      %v710 = vpack.c.b16 %v700, %v699
      %v711 = vpack.c.b16 %v702, %v701
      %v712 = vpack.c.b16 %v704, %v703
      %v713 = vpack.c.b16 %v706, %v705
      %v714 = vpack.c.b16 %v708, %v707
      %v722 = vsel %vm525, %v677, 0
      %v725 = vsel %vm525, %v678, 0
      %v728 = vsel %vm525, %v679, 0
      %v731 = vsel %vm525, %v680, 0
      %v734 = vsel %vm525, %v681, 0
      %v737 = vsel %vm525, %v682, 0
      %v740 = vsel %vm525, %v683, 0
      %v743 = vsel %vm525, %v684, 0
      %745 = vmatprep.subr.bf16.mxu0 0
      %746 = vmatpush1.bf16.msra.mxu0 %v709
      %747 = vmatprep.subr.bf16.mxu0 0
      %748 = vmatpush1.bf16.msra.mxu0 %v710
      %749 = vmatprep.subr.bf16.mxu0 0
      %750 = vmatpush1.bf16.msra.mxu0 %v711
      %751 = vmatprep.subr.bf16.mxu0 0
      %752 = vmatpush1.bf16.msra.mxu0 %v712
      %753 = vmatprep.subr.bf16.mxu0 0
      %754 = vmatpush1.bf16.msra.mxu0 %v713
      %755 = vmatprep.subr.bf16.mxu0 0
      %756 = vmatpush1.bf16.msra.mxu0 %v714
      %757 = vmatprep.subr.bf16.mxu0 0
      %758 = vmatpush1.bf16.msra.mxu0 0
      %759 = vmatprep.subr.bf16.mxu0 0
      %760 = vmatpush1.bf16.msra.mxu0 0
      %761 = vmatprep.subr.bf16.mxu0 0
      %762 = vmatpush1.bf16.msra.mxu0 0
      %763 = vmatprep.subr.bf16.mxu0 0
      %764 = vmatpush1.bf16.msra.mxu0 0
      %765 = vmatprep.subr.bf16.mxu0 0
      %766 = vmatpush1.bf16.msra.mxu0 0
      %767 = vmatprep.subr.bf16.mxu0 0
      %768 = vmatpush1.bf16.msra.mxu0 0
      %769 = vmatprep.subr.bf16.mxu0 0
      %770 = vmatpush1.bf16.msra.mxu0 0
      %771 = vmatprep.subr.bf16.mxu0 0
      %772 = vmatpush1.bf16.msra.mxu0 0
      %773 = vmatprep.subr.bf16.mxu0 0
      %774 = vmatpush1.bf16.msra.mxu0 0
      %775 = vmatprep.subr.bf16.mxu0 0
      %776 = vmatpush1.bf16.msra.mxu0 0
      %777 = vmatprep.mubr.bf16.mxu0 0
      %778 = vmatmul.mubr.bf16.gmra.mrb[0].mxu0 %v722
      %v779 = vpop.f32.mrb[0].mxu0
      %v780 = vadd.f32 %v585, %v779
      %v781 = vpop.f32.mrb[0].mxu0
      %v782 = vpop.f32.mrb[0].mxu0
      %v783 = vadd.f32 %v588, %v782
      %v784 = vpop.f32.mrb[0].mxu0
      %785 = vmatprep.mubr.bf16.mxu0 0
      %786 = vmatmul.mubr.bf16.gmra.mrb[0].mxu0 %v725
      %v787 = vpop.f32.mrb[0].mxu0
      %v788 = vadd.f32 %v593, %v787
      %v789 = vpop.f32.mrb[0].mxu0
      %v790 = vpop.f32.mrb[0].mxu0
      %v791 = vadd.f32 %v596, %v790
      %v792 = vpop.f32.mrb[0].mxu0
      %793 = vmatprep.mubr.bf16.mxu0 0
      %794 = vmatmul.mubr.bf16.gmra.mrb[0].mxu0 %v728
      %v795 = vpop.f32.mrb[0].mxu0
      %v796 = vadd.f32 %v601, %v795
      %v797 = vpop.f32.mrb[0].mxu0
      %v798 = vpop.f32.mrb[0].mxu0
      %v799 = vadd.f32 %v604, %v798
      %v800 = vpop.f32.mrb[0].mxu0
      %801 = vmatprep.mubr.bf16.mxu0 0
      %802 = vmatmul.mubr.bf16.gmra.mrb[0].mxu0 %v731
      %v803 = vpop.f32.mrb[0].mxu0
      %v804 = vadd.f32 %v609, %v803
      %v805 = vpop.f32.mrb[0].mxu0
      %v806 = vpop.f32.mrb[0].mxu0
      %v807 = vadd.f32 %v612, %v806
      %v808 = vpop.f32.mrb[0].mxu0
      %809 = vmatprep.mubr.bf16.mxu0 0
      %810 = vmatmul.mubr.bf16.gmra.mrb[0].mxu0 %v734
      %v811 = vpop.f32.mrb[0].mxu0
      %v812 = vadd.f32 %v617, %v811
      %v813 = vpop.f32.mrb[0].mxu0
      %v814 = vpop.f32.mrb[0].mxu0
      %v815 = vadd.f32 %v620, %v814
      %v816 = vpop.f32.mrb[0].mxu0
      %817 = vmatprep.mubr.bf16.mxu0 0
      %818 = vmatmul.mubr.bf16.gmra.mrb[0].mxu0 %v737
      %v819 = vpop.f32.mrb[0].mxu0
      %v820 = vadd.f32 %v625, %v819
      %v821 = vpop.f32.mrb[0].mxu0
      %v822 = vpop.f32.mrb[0].mxu0
      %v823 = vadd.f32 %v628, %v822
      %v824 = vpop.f32.mrb[0].mxu0
      %825 = vmatprep.mubr.bf16.mxu0 0
      %826 = vmatmul.mubr.bf16.gmra.mrb[0].mxu0 %v740
      %v827 = vpop.f32.mrb[0].mxu0
      %v828 = vadd.f32 %v633, %v827
      %v829 = vpop.f32.mrb[0].mxu0
      %v830 = vpop.f32.mrb[0].mxu0
      %v831 = vadd.f32 %v636, %v830
      %v832 = vpop.f32.mrb[0].mxu0
      %833 = vmatprep.mubr.bf16.mxu0 0
      %834 = vmatmul.mubr.bf16.gmra.mrb[0].mxu0 %v743
      %v835 = vpop.f32.mrb[0].mxu0
      %v836 = vpop.f32.mrb[0].mxu0
      %v837 = vpop.f32.mrb[0].mxu0
      %v838 = vpop.f32.mrb[0].mxu0
      %839 = vdwg.mxu0
      %s840 = scalar_lea.vmem %s381, 256
      %v841 = vld [vmem:[%s840] sm:$0xf]
      %v842 = vld [vmem:[%s840 + $0x4] sm:$0xf]
      %v843 = vld [vmem:[%s840 + $0x8] sm:$0xf]
      %v844 = vld [vmem:[%s840 + $0xc] sm:$0xf]
      %v845 = vld [vmem:[%s840 + $0x10] sm:$0xf]
      %v846 = vld [vmem:[%s840 + $0x14] sm:$0xf]
      %v847 = vld [vmem:[%s840 + $0x18] sm:$0xf]
      %v848 = vld [vmem:[%s840 + $0x1c] sm:$0xf]
      %v849 = vld [vmem:[%s840 + $0x20] sm:$0xf]
      %v850 = vld [vmem:[%s840 + $0x24] sm:$0xf]
      %v851 = vld [vmem:[%s840 + $0x28] sm:$0xf]
      %v852 = vld [vmem:[%s840 + $0x2c] sm:$0xf]
      %v853 = vld [vmem:[%s840 + $0x30] sm:$0xf]
      %v854 = vld [vmem:[%s840 + $0x34] sm:$0xf]
      %v855 = vld [vmem:[%s840 + $0x38] sm:$0xf]
      %v856 = vld [vmem:[%s840 + $0x3c] sm:$0xf]
      %s857 = scalar_lea.vmem %s1, 96
      %v858 = vld [vmem:[%s857] sm:$0xf]
      %v859 = vld [vmem:[%s857 + $0x4] sm:$0xf]
      %v860 = vld [vmem:[%s857 + $0x8] sm:$0xf]
      %v861 = vld [vmem:[%s857 + $0xc] sm:$0xf]
      %v862 = vld [vmem:[%s857 + $0x10] sm:$0xf]
      %v863 = vld [vmem:[%s857 + $0x14] sm:$0xf]
      %v864 = vld [vmem:[%s857 + $0x18] sm:$0xf]
      %v865 = vld [vmem:[%s857 + $0x1c] sm:$0xf]
      %v866 = vld [vmem:[%s857 + $0x20] sm:$0xf]
      %v867 = vld [vmem:[%s857 + $0x24] sm:$0xf]
      %v868 = vld [vmem:[%s857 + $0x28] sm:$0xf]
      %v869 = vld [vmem:[%s857 + $0x2c] sm:$0xf]
      %v886 = vunpack.c.l.b16 %v841
      %v887 = vunpack.c.l.b16 %v842
      %v888 = vunpack.c.l.b16 %v843
      %v889 = vunpack.c.l.b16 %v844
      %v890 = vunpack.c.l.b16 %v845
      %v891 = vunpack.c.l.b16 %v846
      %v892 = vunpack.c.l.b16 %v847
      %v893 = vunpack.c.l.b16 %v848
      %v894 = vunpack.c.l.b16 %v849
      %v895 = vunpack.c.l.b16 %v850
      %v896 = vunpack.c.l.b16 %v851
      %v897 = vunpack.c.l.b16 %v852
      %v898 = vunpack.c.l.b16 %v853
      %v899 = vunpack.c.l.b16 %v854
      %v900 = vunpack.c.l.b16 %v855
      %v901 = vunpack.c.l.b16 %v856
      %v902 = vpack.c.b16 %v887, %v886
      %v903 = vpack.c.b16 %v889, %v888
      %v904 = vpack.c.b16 %v891, %v890
      %v905 = vpack.c.b16 %v893, %v892
      %v906 = vpack.c.b16 %v895, %v894
      %v907 = vpack.c.b16 %v897, %v896
      %v908 = vpack.c.b16 %v899, %v898
      %v909 = vpack.c.b16 %v901, %v900
      %v922 = vunpack.c.l.b16 %v858
      %v923 = vunpack.c.l.b16 %v859
      %v924 = vunpack.c.l.b16 %v860
      %v925 = vunpack.c.l.b16 %v861
      %v926 = vunpack.c.l.b16 %v862
      %v927 = vunpack.c.l.b16 %v863
      %v928 = vunpack.c.l.b16 %v864
      %v929 = vunpack.c.l.b16 %v865
      %v930 = vunpack.c.l.b16 %v866
      %v931 = vunpack.c.l.b16 %v867
      %v932 = vunpack.c.l.b16 %v868
      %v933 = vunpack.c.l.b16 %v869
      %v934 = vpack.c.b16 %v923, %v922
      %v935 = vpack.c.b16 %v925, %v924
      %v936 = vpack.c.b16 %v927, %v926
      %v937 = vpack.c.b16 %v929, %v928
      %v938 = vpack.c.b16 %v931, %v930
      %v939 = vpack.c.b16 %v933, %v932
      %v947 = vsel %vm525, %v902, 0
      %v950 = vsel %vm525, %v903, 0
      %v953 = vsel %vm525, %v904, 0
      %v956 = vsel %vm525, %v905, 0
      %v959 = vsel %vm525, %v906, 0
      %v962 = vsel %vm525, %v907, 0
      %v965 = vsel %vm525, %v908, 0
      %v968 = vsel %vm525, %v909, 0
      %970 = vmatprep.subr.bf16.mxu0 0
      %971 = vmatpush1.bf16.msra.mxu0 %v934
      %972 = vmatprep.subr.bf16.mxu0 0
      %973 = vmatpush1.bf16.msra.mxu0 %v935
      %974 = vmatprep.subr.bf16.mxu0 0
      %975 = vmatpush1.bf16.msra.mxu0 %v936
      %976 = vmatprep.subr.bf16.mxu0 0
      %977 = vmatpush1.bf16.msra.mxu0 %v937
      %978 = vmatprep.subr.bf16.mxu0 0
      %979 = vmatpush1.bf16.msra.mxu0 %v938
      %980 = vmatprep.subr.bf16.mxu0 0
      %981 = vmatpush1.bf16.msra.mxu0 %v939
      %982 = vmatprep.subr.bf16.mxu0 0
      %983 = vmatpush1.bf16.msra.mxu0 0
      %984 = vmatprep.subr.bf16.mxu0 0
      %985 = vmatpush1.bf16.msra.mxu0 0
      %986 = vmatprep.subr.bf16.mxu0 0
      %987 = vmatpush1.bf16.msra.mxu0 0
      %988 = vmatprep.subr.bf16.mxu0 0
      %989 = vmatpush1.bf16.msra.mxu0 0
      %990 = vmatprep.subr.bf16.mxu0 0
      %991 = vmatpush1.bf16.msra.mxu0 0
      %992 = vmatprep.subr.bf16.mxu0 0
      %993 = vmatpush1.bf16.msra.mxu0 0
      %994 = vmatprep.subr.bf16.mxu0 0
      %995 = vmatpush1.bf16.msra.mxu0 0
      %996 = vmatprep.subr.bf16.mxu0 0
      %997 = vmatpush1.bf16.msra.mxu0 0
      %998 = vmatprep.subr.bf16.mxu0 0
      %999 = vmatpush1.bf16.msra.mxu0 0
      %1000 = vmatprep.subr.bf16.mxu0 0
      %1001 = vmatpush1.bf16.msra.mxu0 0
      %1002 = vmatprep.mubr.bf16.mxu0 0
      %1003 = vmatmul.mubr.bf16.gmra.mrb[0].mxu0 %v947
      %v1004 = vpop.f32.mrb[0].mxu0
      %v1005 = vadd.f32 0.0, %v1004
      %v1006 = vpop.f32.mrb[0].mxu0
      %v1007 = vpop.f32.mrb[0].mxu0
      %v1008 = vadd.f32 0.0, %v1007
      %v1009 = vpop.f32.mrb[0].mxu0
      %1010 = vmatprep.mubr.bf16.mxu0 0
      %1011 = vmatmul.mubr.bf16.gmra.mrb[0].mxu0 %v950
      %v1012 = vpop.f32.mrb[0].mxu0
      %v1013 = vadd.f32 0.0, %v1012
      %v1014 = vpop.f32.mrb[0].mxu0
      %v1015 = vpop.f32.mrb[0].mxu0
      %v1016 = vadd.f32 0.0, %v1015
      %v1017 = vpop.f32.mrb[0].mxu0
      %1018 = vmatprep.mubr.bf16.mxu0 0
      %1019 = vmatmul.mubr.bf16.gmra.mrb[0].mxu0 %v953
      %v1020 = vpop.f32.mrb[0].mxu0
      %v1021 = vadd.f32 0.0, %v1020
      %v1022 = vpop.f32.mrb[0].mxu0
      %v1023 = vpop.f32.mrb[0].mxu0
      %v1024 = vadd.f32 0.0, %v1023
      %v1025 = vpop.f32.mrb[0].mxu0
      %1026 = vmatprep.mubr.bf16.mxu0 0
      %1027 = vmatmul.mubr.bf16.gmra.mrb[0].mxu0 %v956
      %v1028 = vpop.f32.mrb[0].mxu0
      %v1029 = vadd.f32 0.0, %v1028
      %v1030 = vpop.f32.mrb[0].mxu0
      %v1031 = vpop.f32.mrb[0].mxu0
      %v1032 = vadd.f32 0.0, %v1031
      %v1033 = vpop.f32.mrb[0].mxu0
      %1034 = vmatprep.mubr.bf16.mxu0 0
      %1035 = vmatmul.mubr.bf16.gmra.mrb[0].mxu0 %v959
      %v1036 = vpop.f32.mrb[0].mxu0
      %v1037 = vadd.f32 0.0, %v1036
      %v1038 = vpop.f32.mrb[0].mxu0
      %v1039 = vpop.f32.mrb[0].mxu0
      %v1040 = vadd.f32 0.0, %v1039
      %v1041 = vpop.f32.mrb[0].mxu0
      %1042 = vmatprep.mubr.bf16.mxu0 0
      %1043 = vmatmul.mubr.bf16.gmra.mrb[0].mxu0 %v962
      %v1044 = vpop.f32.mrb[0].mxu0
      %v1045 = vadd.f32 0.0, %v1044
      %v1046 = vpop.f32.mrb[0].mxu0
      %v1047 = vpop.f32.mrb[0].mxu0
      %v1048 = vadd.f32 0.0, %v1047
      %v1049 = vpop.f32.mrb[0].mxu0
      %1050 = vmatprep.mubr.bf16.mxu0 0
      %1051 = vmatmul.mubr.bf16.gmra.mrb[0].mxu0 %v965
      %v1052 = vpop.f32.mrb[0].mxu0
      %v1053 = vadd.f32 0.0, %v1052
      %v1054 = vpop.f32.mrb[0].mxu0
      %v1055 = vpop.f32.mrb[0].mxu0
      %v1056 = vadd.f32 0.0, %v1055
      %v1057 = vpop.f32.mrb[0].mxu0
      %1058 = vmatprep.mubr.bf16.mxu0 0
      %1059 = vmatmul.mubr.bf16.gmra.mrb[0].mxu0 %v968
      %v1060 = vpop.f32.mrb[0].mxu0
      %v1061 = vpop.f32.mrb[0].mxu0
      %v1062 = vpop.f32.mrb[0].mxu0
      %v1063 = vpop.f32.mrb[0].mxu0
      %1064 = vdwg.mxu0
      %v1065 = vadd.f32 %v780, %v1005
      %v1066 = vadd.f32 %v783, %v1008
      %v1067 = vadd.f32 %v788, %v1013
      %v1068 = vadd.f32 %v791, %v1016
      %v1069 = vadd.f32 %v796, %v1021
      %v1070 = vadd.f32 %v799, %v1024
      %v1071 = vadd.f32 %v804, %v1029
      %v1072 = vadd.f32 %v807, %v1032
      %v1073 = vadd.f32 %v812, %v1037
      %v1074 = vadd.f32 %v815, %v1040
      %v1075 = vadd.f32 %v820, %v1045
      %v1076 = vadd.f32 %v823, %v1048
      %v1077 = vadd.f32 %v828, %v1053
      %v1078 = vadd.f32 %v831, %v1056
      %s1079 = scalar_lea.vmem %s381, 384
      %v1080 = vld [vmem:[%s1079] sm:$0xf]
      %v1081 = vld [vmem:[%s1079 + $0x4] sm:$0xf]
      %v1082 = vld [vmem:[%s1079 + $0x8] sm:$0xf]
      %v1083 = vld [vmem:[%s1079 + $0xc] sm:$0xf]
      %v1084 = vld [vmem:[%s1079 + $0x10] sm:$0xf]
      %v1085 = vld [vmem:[%s1079 + $0x14] sm:$0xf]
      %v1086 = vld [vmem:[%s1079 + $0x18] sm:$0xf]
      %v1087 = vld [vmem:[%s1079 + $0x1c] sm:$0xf]
      %v1088 = vld [vmem:[%s1079 + $0x20] sm:$0xf]
      %v1089 = vld [vmem:[%s1079 + $0x24] sm:$0xf]
      %v1090 = vld [vmem:[%s1079 + $0x28] sm:$0xf]
      %v1091 = vld [vmem:[%s1079 + $0x2c] sm:$0xf]
      %v1092 = vld [vmem:[%s1079 + $0x30] sm:$0xf]
      %v1093 = vld [vmem:[%s1079 + $0x34] sm:$0xf]
      %v1094 = vld [vmem:[%s1079 + $0x38] sm:$0xf]
      %v1095 = vld [vmem:[%s1079 + $0x3c] sm:$0xf]
      %s1096 = scalar_lea.vmem %s1, 144
      %v1097 = vld [vmem:[%s1096] sm:$0xf]
      %v1098 = vld [vmem:[%s1096 + $0x4] sm:$0xf]
      %v1099 = vld [vmem:[%s1096 + $0x8] sm:$0xf]
      %v1100 = vld [vmem:[%s1096 + $0xc] sm:$0xf]
      %v1101 = vld [vmem:[%s1096 + $0x10] sm:$0xf]
      %v1102 = vld [vmem:[%s1096 + $0x14] sm:$0xf]
      %v1103 = vld [vmem:[%s1096 + $0x18] sm:$0xf]
      %v1104 = vld [vmem:[%s1096 + $0x1c] sm:$0xf]
      %v1105 = vld [vmem:[%s1096 + $0x20] sm:$0xf]
      %v1106 = vld [vmem:[%s1096 + $0x24] sm:$0xf]
      %v1107 = vld [vmem:[%s1096 + $0x28] sm:$0xf]
      %v1108 = vld [vmem:[%s1096 + $0x2c] sm:$0xf]
      %v1125 = vunpack.c.l.b16 %v1080
      %v1126 = vunpack.c.l.b16 %v1081
      %v1127 = vunpack.c.l.b16 %v1082
      %v1128 = vunpack.c.l.b16 %v1083
      %v1129 = vunpack.c.l.b16 %v1084
      %v1130 = vunpack.c.l.b16 %v1085
      %v1131 = vunpack.c.l.b16 %v1086
      %v1132 = vunpack.c.l.b16 %v1087
      %v1133 = vunpack.c.l.b16 %v1088
      %v1134 = vunpack.c.l.b16 %v1089
      %v1135 = vunpack.c.l.b16 %v1090
      %v1136 = vunpack.c.l.b16 %v1091
      %v1137 = vunpack.c.l.b16 %v1092
      %v1138 = vunpack.c.l.b16 %v1093
      %v1139 = vunpack.c.l.b16 %v1094
      %v1140 = vunpack.c.l.b16 %v1095
      %v1141 = vpack.c.b16 %v1126, %v1125
      %v1142 = vpack.c.b16 %v1128, %v1127
      %v1143 = vpack.c.b16 %v1130, %v1129
      %v1144 = vpack.c.b16 %v1132, %v1131
      %v1145 = vpack.c.b16 %v1134, %v1133
      %v1146 = vpack.c.b16 %v1136, %v1135
      %v1147 = vpack.c.b16 %v1138, %v1137
      %v1148 = vpack.c.b16 %v1140, %v1139
      %v1161 = vunpack.c.l.b16 %v1097
      %v1162 = vunpack.c.l.b16 %v1098
      %v1163 = vunpack.c.l.b16 %v1099
      %v1164 = vunpack.c.l.b16 %v1100
      %v1165 = vunpack.c.l.b16 %v1101
      %v1166 = vunpack.c.l.b16 %v1102
      %v1167 = vunpack.c.l.b16 %v1103
      %v1168 = vunpack.c.l.b16 %v1104
      %v1169 = vunpack.c.l.b16 %v1105
      %v1170 = vunpack.c.l.b16 %v1106
      %v1171 = vunpack.c.l.b16 %v1107
      %v1172 = vunpack.c.l.b16 %v1108
      %v1173 = vpack.c.b16 %v1162, %v1161
      %v1174 = vpack.c.b16 %v1164, %v1163
      %v1175 = vpack.c.b16 %v1166, %v1165
      %v1176 = vpack.c.b16 %v1168, %v1167
      %v1177 = vpack.c.b16 %v1170, %v1169
      %v1178 = vpack.c.b16 %v1172, %v1171
      %v1186 = vsel %vm525, %v1141, 0
      %v1189 = vsel %vm525, %v1142, 0
      %v1192 = vsel %vm525, %v1143, 0
      %v1195 = vsel %vm525, %v1144, 0
      %v1198 = vsel %vm525, %v1145, 0
      %v1201 = vsel %vm525, %v1146, 0
      %v1204 = vsel %vm525, %v1147, 0
      %v1207 = vsel %vm525, %v1148, 0
      %1209 = vmatprep.subr.bf16.mxu0 0
      %1210 = vmatpush1.bf16.msra.mxu0 %v1173
      %1211 = vmatprep.subr.bf16.mxu0 0
      %1212 = vmatpush1.bf16.msra.mxu0 %v1174
      %1213 = vmatprep.subr.bf16.mxu0 0
      %1214 = vmatpush1.bf16.msra.mxu0 %v1175
      %1215 = vmatprep.subr.bf16.mxu0 0
      %1216 = vmatpush1.bf16.msra.mxu0 %v1176
      %1217 = vmatprep.subr.bf16.mxu0 0
      %1218 = vmatpush1.bf16.msra.mxu0 %v1177
      %1219 = vmatprep.subr.bf16.mxu0 0
      %1220 = vmatpush1.bf16.msra.mxu0 %v1178
      %1221 = vmatprep.subr.bf16.mxu0 0
      %1222 = vmatpush1.bf16.msra.mxu0 0
      %1223 = vmatprep.subr.bf16.mxu0 0
      %1224 = vmatpush1.bf16.msra.mxu0 0
      %1225 = vmatprep.subr.bf16.mxu0 0
      %1226 = vmatpush1.bf16.msra.mxu0 0
      %1227 = vmatprep.subr.bf16.mxu0 0
      %1228 = vmatpush1.bf16.msra.mxu0 0
      %1229 = vmatprep.subr.bf16.mxu0 0
      %1230 = vmatpush1.bf16.msra.mxu0 0
      %1231 = vmatprep.subr.bf16.mxu0 0
      %1232 = vmatpush1.bf16.msra.mxu0 0
      %1233 = vmatprep.subr.bf16.mxu0 0
      %1234 = vmatpush1.bf16.msra.mxu0 0
      %1235 = vmatprep.subr.bf16.mxu0 0
      %1236 = vmatpush1.bf16.msra.mxu0 0
      %1237 = vmatprep.subr.bf16.mxu0 0
      %1238 = vmatpush1.bf16.msra.mxu0 0
      %1239 = vmatprep.subr.bf16.mxu0 0
      %1240 = vmatpush1.bf16.msra.mxu0 0
      %1241 = vmatprep.mubr.bf16.mxu0 0
      %1242 = vmatmul.mubr.bf16.gmra.mrb[0].mxu0 %v1186
      %v1243 = vpop.f32.mrb[0].mxu0
      %v1244 = vadd.f32 0.0, %v1243
      %v1245 = vpop.f32.mrb[0].mxu0
      %v1246 = vpop.f32.mrb[0].mxu0
      %v1247 = vadd.f32 0.0, %v1246
      %v1248 = vpop.f32.mrb[0].mxu0
      %1249 = vmatprep.mubr.bf16.mxu0 0
      %1250 = vmatmul.mubr.bf16.gmra.mrb[0].mxu0 %v1189
      %v1251 = vpop.f32.mrb[0].mxu0
      %v1252 = vadd.f32 0.0, %v1251
      %v1253 = vpop.f32.mrb[0].mxu0
      %v1254 = vpop.f32.mrb[0].mxu0
      %v1255 = vadd.f32 0.0, %v1254
      %v1256 = vpop.f32.mrb[0].mxu0
      %1257 = vmatprep.mubr.bf16.mxu0 0
      %1258 = vmatmul.mubr.bf16.gmra.mrb[0].mxu0 %v1192
      %v1259 = vpop.f32.mrb[0].mxu0
      %v1260 = vadd.f32 0.0, %v1259
      %v1261 = vpop.f32.mrb[0].mxu0
      %v1262 = vpop.f32.mrb[0].mxu0
      %v1263 = vadd.f32 0.0, %v1262
      %v1264 = vpop.f32.mrb[0].mxu0
      %1265 = vmatprep.mubr.bf16.mxu0 0
      %1266 = vmatmul.mubr.bf16.gmra.mrb[0].mxu0 %v1195
      %v1267 = vpop.f32.mrb[0].mxu0
      %v1268 = vadd.f32 0.0, %v1267
      %v1269 = vpop.f32.mrb[0].mxu0
      %v1270 = vpop.f32.mrb[0].mxu0
      %v1271 = vadd.f32 0.0, %v1270
      %v1272 = vpop.f32.mrb[0].mxu0
      %1273 = vmatprep.mubr.bf16.mxu0 0
      %1274 = vmatmul.mubr.bf16.gmra.mrb[0].mxu0 %v1198
      %v1275 = vpop.f32.mrb[0].mxu0
      %v1276 = vadd.f32 0.0, %v1275
      %v1277 = vpop.f32.mrb[0].mxu0
      %v1278 = vpop.f32.mrb[0].mxu0
      %v1279 = vadd.f32 0.0, %v1278
      %v1280 = vpop.f32.mrb[0].mxu0
      %1281 = vmatprep.mubr.bf16.mxu0 0
      %1282 = vmatmul.mubr.bf16.gmra.mrb[0].mxu0 %v1201
      %v1283 = vpop.f32.mrb[0].mxu0
      %v1284 = vadd.f32 0.0, %v1283
      %v1285 = vpop.f32.mrb[0].mxu0
      %v1286 = vpop.f32.mrb[0].mxu0
      %v1287 = vadd.f32 0.0, %v1286
      %v1288 = vpop.f32.mrb[0].mxu0
      %1289 = vmatprep.mubr.bf16.mxu0 0
      %1290 = vmatmul.mubr.bf16.gmra.mrb[0].mxu0 %v1204
      %v1291 = vpop.f32.mrb[0].mxu0
      %v1292 = vadd.f32 0.0, %v1291
      %v1293 = vpop.f32.mrb[0].mxu0
      %v1294 = vpop.f32.mrb[0].mxu0
      %v1295 = vadd.f32 0.0, %v1294
      %v1296 = vpop.f32.mrb[0].mxu0
      %1297 = vmatprep.mubr.bf16.mxu0 0
      %1298 = vmatmul.mubr.bf16.gmra.mrb[0].mxu0 %v1207
      %v1299 = vpop.f32.mrb[0].mxu0
      %v1300 = vpop.f32.mrb[0].mxu0
      %v1301 = vpop.f32.mrb[0].mxu0
      %v1302 = vpop.f32.mrb[0].mxu0
      %1303 = vdwg.mxu0
      %v1304 = vadd.f32 %v1065, %v1244
      %v1305 = vadd.f32 %v1066, %v1247
      %v1306 = vadd.f32 %v1067, %v1252
      %v1307 = vadd.f32 %v1068, %v1255
      %v1308 = vadd.f32 %v1069, %v1260
      %v1309 = vadd.f32 %v1070, %v1263
      %v1310 = vadd.f32 %v1071, %v1268
      %v1311 = vadd.f32 %v1072, %v1271
      %v1312 = vadd.f32 %v1073, %v1276
      %v1313 = vadd.f32 %v1074, %v1279
      %v1314 = vadd.f32 %v1075, %v1284
      %v1315 = vadd.f32 %v1076, %v1287
      %v1316 = vadd.f32 %v1077, %v1292
      %v1317 = vadd.f32 %v1078, %v1295
      %s1318 = scalar_lea.vmem %s381, 64
      %v1319 = vld [vmem:[%s1318] sm:$0xf]
      %v1320 = vld [vmem:[%s1318 + $0x4] sm:$0xf]
      %v1321 = vld [vmem:[%s1318 + $0x8] sm:$0xf]
      %v1322 = vld [vmem:[%s1318 + $0xc] sm:$0xf]
      %v1323 = vld [vmem:[%s1318 + $0x10] sm:$0xf]
      %v1324 = vld [vmem:[%s1318 + $0x14] sm:$0xf]
      %v1325 = vld [vmem:[%s1318 + $0x18] sm:$0xf]
      %v1326 = vld [vmem:[%s1318 + $0x1c] sm:$0xf]
      %v1327 = vld [vmem:[%s1318 + $0x20] sm:$0xf]
      %v1328 = vld [vmem:[%s1318 + $0x24] sm:$0xf]
      %v1329 = vld [vmem:[%s1318 + $0x28] sm:$0xf]
      %v1330 = vld [vmem:[%s1318 + $0x2c] sm:$0xf]
      %v1331 = vld [vmem:[%s1318 + $0x30] sm:$0xf]
      %v1332 = vld [vmem:[%s1318 + $0x34] sm:$0xf]
      %v1333 = vld [vmem:[%s1318 + $0x38] sm:$0xf]
      %v1334 = vld [vmem:[%s1318 + $0x3c] sm:$0xf]
      %s1335 = scalar_lea.vmem %s1, 192
      %v1336 = vld [vmem:[%s1335] sm:$0xf]
      %v1337 = vld [vmem:[%s1335 + $0x4] sm:$0xf]
      %v1338 = vld [vmem:[%s1335 + $0x8] sm:$0xf]
      %v1339 = vld [vmem:[%s1335 + $0xc] sm:$0xf]
      %v1340 = vld [vmem:[%s1335 + $0x10] sm:$0xf]
      %v1341 = vld [vmem:[%s1335 + $0x14] sm:$0xf]
      %v1342 = vld [vmem:[%s1335 + $0x18] sm:$0xf]
      %v1343 = vld [vmem:[%s1335 + $0x1c] sm:$0xf]
      %v1344 = vld [vmem:[%s1335 + $0x20] sm:$0xf]
      %v1345 = vld [vmem:[%s1335 + $0x24] sm:$0xf]
      %v1346 = vld [vmem:[%s1335 + $0x28] sm:$0xf]
      %v1347 = vld [vmem:[%s1335 + $0x2c] sm:$0xf]
      %v1364 = vunpack.c.l.b16 %v1319
      %v1365 = vunpack.c.l.b16 %v1320
      %v1366 = vunpack.c.l.b16 %v1321
      %v1367 = vunpack.c.l.b16 %v1322
      %v1368 = vunpack.c.l.b16 %v1323
      %v1369 = vunpack.c.l.b16 %v1324
      %v1370 = vunpack.c.l.b16 %v1325
      %v1371 = vunpack.c.l.b16 %v1326
      %v1372 = vunpack.c.l.b16 %v1327
      %v1373 = vunpack.c.l.b16 %v1328
      %v1374 = vunpack.c.l.b16 %v1329
      %v1375 = vunpack.c.l.b16 %v1330
      %v1376 = vunpack.c.l.b16 %v1331
      %v1377 = vunpack.c.l.b16 %v1332
      %v1378 = vunpack.c.l.b16 %v1333
      %v1379 = vunpack.c.l.b16 %v1334
      %v1380 = vpack.c.b16 %v1365, %v1364
      %v1381 = vpack.c.b16 %v1367, %v1366
      %v1382 = vpack.c.b16 %v1369, %v1368
      %v1383 = vpack.c.b16 %v1371, %v1370
      %v1384 = vpack.c.b16 %v1373, %v1372
      %v1385 = vpack.c.b16 %v1375, %v1374
      %v1386 = vpack.c.b16 %v1377, %v1376
      %v1387 = vpack.c.b16 %v1379, %v1378
      %v1400 = vunpack.c.l.b16 %v1336
      %v1401 = vunpack.c.l.b16 %v1337
      %v1402 = vunpack.c.l.b16 %v1338
      %v1403 = vunpack.c.l.b16 %v1339
      %v1404 = vunpack.c.l.b16 %v1340
      %v1405 = vunpack.c.l.b16 %v1341
      %v1406 = vunpack.c.l.b16 %v1342
      %v1407 = vunpack.c.l.b16 %v1343
      %v1408 = vunpack.c.l.b16 %v1344
      %v1409 = vunpack.c.l.b16 %v1345
      %v1410 = vunpack.c.l.b16 %v1346
      %v1411 = vunpack.c.l.b16 %v1347
      %v1412 = vpack.c.b16 %v1401, %v1400
      %v1413 = vpack.c.b16 %v1403, %v1402
      %v1414 = vpack.c.b16 %v1405, %v1404
      %v1415 = vpack.c.b16 %v1407, %v1406
      %v1416 = vpack.c.b16 %v1409, %v1408
      %v1417 = vpack.c.b16 %v1411, %v1410
      %v1425 = vsel %vm525, %v1380, 0
      %v1428 = vsel %vm525, %v1381, 0
      %v1431 = vsel %vm525, %v1382, 0
      %v1434 = vsel %vm525, %v1383, 0
      %v1437 = vsel %vm525, %v1384, 0
      %v1440 = vsel %vm525, %v1385, 0
      %v1443 = vsel %vm525, %v1386, 0
      %v1446 = vsel %vm525, %v1387, 0
      %1448 = vmatprep.subr.bf16.mxu0 0
      %1449 = vmatpush1.bf16.msra.mxu0 %v1412
      %1450 = vmatprep.subr.bf16.mxu0 0
      %1451 = vmatpush1.bf16.msra.mxu0 %v1413
      %1452 = vmatprep.subr.bf16.mxu0 0
      %1453 = vmatpush1.bf16.msra.mxu0 %v1414
      %1454 = vmatprep.subr.bf16.mxu0 0
      %1455 = vmatpush1.bf16.msra.mxu0 %v1415
      %1456 = vmatprep.subr.bf16.mxu0 0
      %1457 = vmatpush1.bf16.msra.mxu0 %v1416
      %1458 = vmatprep.subr.bf16.mxu0 0
      %1459 = vmatpush1.bf16.msra.mxu0 %v1417
      %1460 = vmatprep.subr.bf16.mxu0 0
      %1461 = vmatpush1.bf16.msra.mxu0 0
      %1462 = vmatprep.subr.bf16.mxu0 0
      %1463 = vmatpush1.bf16.msra.mxu0 0
      %1464 = vmatprep.subr.bf16.mxu0 0
      %1465 = vmatpush1.bf16.msra.mxu0 0
      %1466 = vmatprep.subr.bf16.mxu0 0
      %1467 = vmatpush1.bf16.msra.mxu0 0
      %1468 = vmatprep.subr.bf16.mxu0 0
      %1469 = vmatpush1.bf16.msra.mxu0 0
      %1470 = vmatprep.subr.bf16.mxu0 0
      %1471 = vmatpush1.bf16.msra.mxu0 0
      %1472 = vmatprep.subr.bf16.mxu0 0
      %1473 = vmatpush1.bf16.msra.mxu0 0
      %1474 = vmatprep.subr.bf16.mxu0 0
      %1475 = vmatpush1.bf16.msra.mxu0 0
      %1476 = vmatprep.subr.bf16.mxu0 0
      %1477 = vmatpush1.bf16.msra.mxu0 0
      %1478 = vmatprep.subr.bf16.mxu0 0
      %1479 = vmatpush1.bf16.msra.mxu0 0
      %1480 = vmatprep.mubr.bf16.mxu0 0
      %1481 = vmatmul.mubr.bf16.gmra.mrb[0].mxu0 %v1425
      %v1482 = vpop.f32.mrb[0].mxu0
      %v1483 = vadd.f32 0.0, %v1482
      %v1484 = vpop.f32.mrb[0].mxu0
      %v1485 = vpop.f32.mrb[0].mxu0
      %v1486 = vadd.f32 0.0, %v1485
      %v1487 = vpop.f32.mrb[0].mxu0
      %1488 = vmatprep.mubr.bf16.mxu0 0
      %1489 = vmatmul.mubr.bf16.gmra.mrb[0].mxu0 %v1428
      %v1490 = vpop.f32.mrb[0].mxu0
      %v1491 = vadd.f32 0.0, %v1490
      %v1492 = vpop.f32.mrb[0].mxu0
      %v1493 = vpop.f32.mrb[0].mxu0
      %v1494 = vadd.f32 0.0, %v1493
      %v1495 = vpop.f32.mrb[0].mxu0
      %1496 = vmatprep.mubr.bf16.mxu0 0
      %1497 = vmatmul.mubr.bf16.gmra.mrb[0].mxu0 %v1431
      %v1498 = vpop.f32.mrb[0].mxu0
      %v1499 = vadd.f32 0.0, %v1498
      %v1500 = vpop.f32.mrb[0].mxu0
      %v1501 = vpop.f32.mrb[0].mxu0
      %v1502 = vadd.f32 0.0, %v1501
      %v1503 = vpop.f32.mrb[0].mxu0
      %1504 = vmatprep.mubr.bf16.mxu0 0
      %1505 = vmatmul.mubr.bf16.gmra.mrb[0].mxu0 %v1434
      %v1506 = vpop.f32.mrb[0].mxu0
      %v1507 = vadd.f32 0.0, %v1506
      %v1508 = vpop.f32.mrb[0].mxu0
      %v1509 = vpop.f32.mrb[0].mxu0
      %v1510 = vadd.f32 0.0, %v1509
      %v1511 = vpop.f32.mrb[0].mxu0
      %1512 = vmatprep.mubr.bf16.mxu0 0
      %1513 = vmatmul.mubr.bf16.gmra.mrb[0].mxu0 %v1437
      %v1514 = vpop.f32.mrb[0].mxu0
      %v1515 = vadd.f32 0.0, %v1514
      %v1516 = vpop.f32.mrb[0].mxu0
      %v1517 = vpop.f32.mrb[0].mxu0
      %v1518 = vadd.f32 0.0, %v1517
      %v1519 = vpop.f32.mrb[0].mxu0
      %1520 = vmatprep.mubr.bf16.mxu0 0
      %1521 = vmatmul.mubr.bf16.gmra.mrb[0].mxu0 %v1440
      %v1522 = vpop.f32.mrb[0].mxu0
      %v1523 = vadd.f32 0.0, %v1522
      %v1524 = vpop.f32.mrb[0].mxu0
      %v1525 = vpop.f32.mrb[0].mxu0
      %v1526 = vadd.f32 0.0, %v1525
      %v1527 = vpop.f32.mrb[0].mxu0
      %1528 = vmatprep.mubr.bf16.mxu0 0
      %1529 = vmatmul.mubr.bf16.gmra.mrb[0].mxu0 %v1443
      %v1530 = vpop.f32.mrb[0].mxu0
      %v1531 = vadd.f32 0.0, %v1530
      %v1532 = vpop.f32.mrb[0].mxu0
      %v1533 = vpop.f32.mrb[0].mxu0
      %v1534 = vadd.f32 0.0, %v1533
      %v1535 = vpop.f32.mrb[0].mxu0
      %1536 = vmatprep.mubr.bf16.mxu0 0
      %1537 = vmatmul.mubr.bf16.gmra.mrb[0].mxu0 %v1446
      %v1538 = vpop.f32.mrb[0].mxu0
      %v1539 = vpop.f32.mrb[0].mxu0
      %v1540 = vpop.f32.mrb[0].mxu0
      %v1541 = vpop.f32.mrb[0].mxu0
      %1542 = vdwg.mxu0
      %v1543 = vadd.f32 %v1304, %v1483
      %v1544 = vadd.f32 %v1305, %v1486
      %v1545 = vadd.f32 %v1306, %v1491
      %v1546 = vadd.f32 %v1307, %v1494
      %v1547 = vadd.f32 %v1308, %v1499
      %v1548 = vadd.f32 %v1309, %v1502
      %v1549 = vadd.f32 %v1310, %v1507
      %v1550 = vadd.f32 %v1311, %v1510
      %v1551 = vadd.f32 %v1312, %v1515
      %v1552 = vadd.f32 %v1313, %v1518
      %v1553 = vadd.f32 %v1314, %v1523
      %v1554 = vadd.f32 %v1315, %v1526
      %v1555 = vadd.f32 %v1316, %v1531
      %v1556 = vadd.f32 %v1317, %v1534
      %v1558 = vlaneseq
      %v1559 = vshrl.u32 %v1558, 7
      %v1560 = vsub.s32 0, %v1559
      %v1561 = vrot.slane %v389, %v1560
      %v1563 = vadd.f32 %v1543, %v1561
      %v1564 = vadd.f32 %v1544, %v1561
      %v1565 = vadd.f32 %v1545, %v1561
      %v1566 = vadd.f32 %v1546, %v1561
      %v1567 = vadd.f32 %v1547, %v1561
      %v1568 = vadd.f32 %v1548, %v1561
      %v1569 = vadd.f32 %v1549, %v1561
      %v1570 = vadd.f32 %v1550, %v1561
      %v1571 = vadd.f32 %v1551, %v1561
      %v1572 = vadd.f32 %v1552, %v1561
      %v1573 = vadd.f32 %v1553, %v1561
      %v1574 = vadd.f32 %v1554, %v1561
      %v1575 = vadd.f32 %v1555, %v1561
      %v1576 = vadd.f32 %v1556, %v1561
      %v1577 = vmax.f32 %v1563, 0.0
      %v1578 = vmax.f32 %v1564, 0.0
      %v1579 = vmax.f32 %v1565, 0.0
      %v1580 = vmax.f32 %v1566, 0.0
      %v1581 = vmax.f32 %v1567, 0.0
      %v1582 = vmax.f32 %v1568, 0.0
      %v1583 = vmax.f32 %v1569, 0.0
      %v1584 = vmax.f32 %v1570, 0.0
      %v1585 = vmax.f32 %v1571, 0.0
      %v1586 = vmax.f32 %v1572, 0.0
      %v1587 = vmax.f32 %v1573, 0.0
      %v1588 = vmax.f32 %v1574, 0.0
      %v1589 = vmax.f32 %v1575, 0.0
      %v1590 = vmax.f32 %v1576, 0.0
      %s1591 = scalar_lea.vmem %s1, 240
      %v1592 = vld [vmem:[%s1591] sm:$0xf]
      %v1593 = vld [vmem:[%s1591 + $0x4] sm:$0xf]
      %v1594 = vld [vmem:[%s1591 + $0x8] sm:$0xf]
      %v1595 = vld [vmem:[%s1591 + $0xc] sm:$0xf]
      %v1596 = vld [vmem:[%s1591 + $0x10] sm:$0xf]
      %v1597 = vld [vmem:[%s1591 + $0x14] sm:$0xf]
      %v1598 = vld [vmem:[%s1591 + $0x18] sm:$0xf]
      %v1599 = vld [vmem:[%s1591 + $0x1c] sm:$0xf]
      %v1600 = vld [vmem:[%s1591 + $0x20] sm:$0xf]
      %v1601 = vld [vmem:[%s1591 + $0x24] sm:$0xf]
      %v1602 = vld [vmem:[%s1591 + $0x28] sm:$0xf]
      %v1603 = vld [vmem:[%s1591 + $0x2c] sm:$0xf]
      %s1604 = scalar_lea.vmem %s1, 288
      %v1605 = vld [vmem:[%s1604] sm:$0xf]
      %v1606 = vld [vmem:[%s1604 + $0x4] sm:$0xf]
      %v1607 = vld [vmem:[%s1604 + $0x8] sm:$0xf]
      %v1608 = vld [vmem:[%s1604 + $0xc] sm:$0xf]
      %v1609 = vld [vmem:[%s1604 + $0x10] sm:$0xf]
      %v1610 = vld [vmem:[%s1604 + $0x14] sm:$0xf]
      %v1611 = vld [vmem:[%s1604 + $0x18] sm:$0xf]
      %v1612 = vld [vmem:[%s1604 + $0x1c] sm:$0xf]
      %v1613 = vld [vmem:[%s1604 + $0x20] sm:$0xf]
      %v1614 = vld [vmem:[%s1604 + $0x24] sm:$0xf]
      %v1615 = vld [vmem:[%s1604 + $0x28] sm:$0xf]
      %v1616 = vld [vmem:[%s1604 + $0x2c] sm:$0xf]
      %v1629 = vunpack.c.l.b16 %v1605
      %v1630 = vunpack.c.l.b16 %v1606
      %v1631 = vunpack.c.l.b16 %v1607
      %v1632 = vunpack.c.l.b16 %v1608
      %v1633 = vunpack.c.l.b16 %v1609
      %v1634 = vunpack.c.l.b16 %v1610
      %v1635 = vunpack.c.l.b16 %v1611
      %v1636 = vunpack.c.l.b16 %v1612
      %v1637 = vunpack.c.l.b16 %v1613
      %v1638 = vunpack.c.l.b16 %v1614
      %v1639 = vunpack.c.l.b16 %v1615
      %v1640 = vunpack.c.l.b16 %v1616
      %v1641 = vpack.c.b16 %v1630, %v1629
      %v1642 = vpack.c.b16 %v1632, %v1631
      %v1643 = vpack.c.b16 %v1634, %v1633
      %v1644 = vpack.c.b16 %v1636, %v1635
      %v1645 = vpack.c.b16 %v1638, %v1637
      %v1646 = vpack.c.b16 %v1640, %v1639
      %1653 = vmatprep.subr.bf16.mxu0 0
      %1654 = vmatpush1.bf16.msra.mxu0 %v1641
      %1655 = vmatprep.subr.bf16.mxu0 0
      %1656 = vmatpush1.bf16.msra.mxu0 %v1642
      %1657 = vmatprep.subr.bf16.mxu0 0
      %1658 = vmatpush1.bf16.msra.mxu0 %v1643
      %1659 = vmatprep.subr.bf16.mxu0 0
      %1660 = vmatpush1.bf16.msra.mxu0 %v1644
      %1661 = vmatprep.subr.bf16.mxu0 0
      %1662 = vmatpush1.bf16.msra.mxu0 %v1645
      %1663 = vmatprep.subr.bf16.mxu0 0
      %1664 = vmatpush1.bf16.msra.mxu0 %v1646
      %1665 = vmatprep.subr.bf16.mxu0 0
      %1666 = vmatpush1.bf16.msra.mxu0 0
      %1667 = vmatprep.subr.bf16.mxu0 0
      %1668 = vmatpush1.bf16.msra.mxu0 0
      %1669 = vmatprep.subr.bf16.mxu0 0
      %1670 = vmatpush1.bf16.msra.mxu0 0
      %1671 = vmatprep.subr.bf16.mxu0 0
      %1672 = vmatpush1.bf16.msra.mxu0 0
      %1673 = vmatprep.subr.bf16.mxu0 0
      %1674 = vmatpush1.bf16.msra.mxu0 0
      %1675 = vmatprep.subr.bf16.mxu0 0
      %1676 = vmatpush1.bf16.msra.mxu0 0
      %1677 = vmatprep.subr.bf16.mxu0 0
      %1678 = vmatpush1.bf16.msra.mxu0 0
      %1679 = vmatprep.subr.bf16.mxu0 0
      %1680 = vmatpush1.bf16.msra.mxu0 0
      %1681 = vmatprep.subr.bf16.mxu0 0
      %1682 = vmatpush1.bf16.msra.mxu0 0
      %1683 = vmatprep.subr.bf16.mxu0 0
      %1684 = vmatpush1.bf16.msra.mxu0 0
      %1685 = vmatprep.mubr.bf16.mxu0 0
      %1686 = vmatmul.mubr.bf16.gmra.mrb[0].mxu0 %v527
      %v1687 = vpop.f32.mrb[0].mxu0
      %v1688 = vadd.f32 0.0, %v1687
      %v1689 = vpop.f32.mrb[0].mxu0
      %v1690 = vpop.f32.mrb[0].mxu0
      %v1691 = vadd.f32 0.0, %v1690
      %v1692 = vpop.f32.mrb[0].mxu0
      %1693 = vmatprep.mubr.bf16.mxu0 0
      %1694 = vmatmul.mubr.bf16.gmra.mrb[0].mxu0 %v530
      %v1695 = vpop.f32.mrb[0].mxu0
      %v1696 = vadd.f32 0.0, %v1695
      %v1697 = vpop.f32.mrb[0].mxu0
      %v1698 = vpop.f32.mrb[0].mxu0
      %v1699 = vadd.f32 0.0, %v1698
      %v1700 = vpop.f32.mrb[0].mxu0
      %1701 = vmatprep.mubr.bf16.mxu0 0
      %1702 = vmatmul.mubr.bf16.gmra.mrb[0].mxu0 %v533
      %v1703 = vpop.f32.mrb[0].mxu0
      %v1704 = vadd.f32 0.0, %v1703
      %v1705 = vpop.f32.mrb[0].mxu0
      %v1706 = vpop.f32.mrb[0].mxu0
      %v1707 = vadd.f32 0.0, %v1706
      %v1708 = vpop.f32.mrb[0].mxu0
      %1709 = vmatprep.mubr.bf16.mxu0 0
      %1710 = vmatmul.mubr.bf16.gmra.mrb[0].mxu0 %v536
      %v1711 = vpop.f32.mrb[0].mxu0
      %v1712 = vadd.f32 0.0, %v1711
      %v1713 = vpop.f32.mrb[0].mxu0
      %v1714 = vpop.f32.mrb[0].mxu0
      %v1715 = vadd.f32 0.0, %v1714
      %v1716 = vpop.f32.mrb[0].mxu0
      %1717 = vmatprep.mubr.bf16.mxu0 0
      %1718 = vmatmul.mubr.bf16.gmra.mrb[0].mxu0 %v539
      %v1719 = vpop.f32.mrb[0].mxu0
      %v1720 = vadd.f32 0.0, %v1719
      %v1721 = vpop.f32.mrb[0].mxu0
      %v1722 = vpop.f32.mrb[0].mxu0
      %v1723 = vadd.f32 0.0, %v1722
      %v1724 = vpop.f32.mrb[0].mxu0
      %1725 = vmatprep.mubr.bf16.mxu0 0
      %1726 = vmatmul.mubr.bf16.gmra.mrb[0].mxu0 %v542
      %v1727 = vpop.f32.mrb[0].mxu0
      %v1728 = vadd.f32 0.0, %v1727
      %v1729 = vpop.f32.mrb[0].mxu0
      %v1730 = vpop.f32.mrb[0].mxu0
      %v1731 = vadd.f32 0.0, %v1730
      %v1732 = vpop.f32.mrb[0].mxu0
      %1733 = vmatprep.mubr.bf16.mxu0 0
      %1734 = vmatmul.mubr.bf16.gmra.mrb[0].mxu0 %v545
      %v1735 = vpop.f32.mrb[0].mxu0
      %v1736 = vadd.f32 0.0, %v1735
      %v1737 = vpop.f32.mrb[0].mxu0
      %v1738 = vpop.f32.mrb[0].mxu0
      %v1739 = vadd.f32 0.0, %v1738
      %v1740 = vpop.f32.mrb[0].mxu0
      %1741 = vmatprep.mubr.bf16.mxu0 0
      %1742 = vmatmul.mubr.bf16.gmra.mrb[0].mxu0 %v548
      %v1743 = vpop.f32.mrb[0].mxu0
      %v1744 = vpop.f32.mrb[0].mxu0
      %v1745 = vpop.f32.mrb[0].mxu0
      %v1746 = vpop.f32.mrb[0].mxu0
      %1747 = vdwg.mxu0
      %v1760 = vunpack.c.l.b16 %v1592
      %v1761 = vunpack.c.l.b16 %v1593
      %v1762 = vunpack.c.l.b16 %v1594
      %v1763 = vunpack.c.l.b16 %v1595
      %v1764 = vunpack.c.l.b16 %v1596
      %v1765 = vunpack.c.l.b16 %v1597
      %v1766 = vunpack.c.l.b16 %v1598
      %v1767 = vunpack.c.l.b16 %v1599
      %v1768 = vunpack.c.l.b16 %v1600
      %v1769 = vunpack.c.l.b16 %v1601
      %v1770 = vunpack.c.l.b16 %v1602
      %v1771 = vunpack.c.l.b16 %v1603
      %v1772 = vpack.c.b16 %v1761, %v1760
      %v1773 = vpack.c.b16 %v1763, %v1762
      %v1774 = vpack.c.b16 %v1765, %v1764
      %v1775 = vpack.c.b16 %v1767, %v1766
      %v1776 = vpack.c.b16 %v1769, %v1768
      %v1777 = vpack.c.b16 %v1771, %v1770
      %1784 = vmatprep.subr.bf16.mxu0 0
      %1785 = vmatpush1.bf16.msra.mxu0 %v1772
      %1786 = vmatprep.subr.bf16.mxu0 0
      %1787 = vmatpush1.bf16.msra.mxu0 %v1773
      %1788 = vmatprep.subr.bf16.mxu0 0
      %1789 = vmatpush1.bf16.msra.mxu0 %v1774
      %1790 = vmatprep.subr.bf16.mxu0 0
      %1791 = vmatpush1.bf16.msra.mxu0 %v1775
      %1792 = vmatprep.subr.bf16.mxu0 0
      %1793 = vmatpush1.bf16.msra.mxu0 %v1776
      %1794 = vmatprep.subr.bf16.mxu0 0
      %1795 = vmatpush1.bf16.msra.mxu0 %v1777
      %1796 = vmatprep.subr.bf16.mxu0 0
      %1797 = vmatpush1.bf16.msra.mxu0 0
      %1798 = vmatprep.subr.bf16.mxu0 0
      %1799 = vmatpush1.bf16.msra.mxu0 0
      %1800 = vmatprep.subr.bf16.mxu0 0
      %1801 = vmatpush1.bf16.msra.mxu0 0
      %1802 = vmatprep.subr.bf16.mxu0 0
      %1803 = vmatpush1.bf16.msra.mxu0 0
      %1804 = vmatprep.subr.bf16.mxu0 0
      %1805 = vmatpush1.bf16.msra.mxu0 0
      %1806 = vmatprep.subr.bf16.mxu0 0
      %1807 = vmatpush1.bf16.msra.mxu0 0
      %1808 = vmatprep.subr.bf16.mxu0 0
      %1809 = vmatpush1.bf16.msra.mxu0 0
      %1810 = vmatprep.subr.bf16.mxu0 0
      %1811 = vmatpush1.bf16.msra.mxu0 0
      %1812 = vmatprep.subr.bf16.mxu0 0
      %1813 = vmatpush1.bf16.msra.mxu0 0
      %1814 = vmatprep.subr.bf16.mxu0 0
      %1815 = vmatpush1.bf16.msra.mxu0 0
      %1816 = vmatprep.mubr.bf16.mxu0 0
      %1817 = vmatmul.mubr.bf16.gmra.mrb[0].mxu0 %v722
      %v1818 = vpop.f32.mrb[0].mxu0
      %v1819 = vadd.f32 %v1688, %v1818
      %v1820 = vpop.f32.mrb[0].mxu0
      %v1821 = vpop.f32.mrb[0].mxu0
      %v1822 = vadd.f32 %v1691, %v1821
      %v1823 = vpop.f32.mrb[0].mxu0
      %1824 = vmatprep.mubr.bf16.mxu0 0
      %1825 = vmatmul.mubr.bf16.gmra.mrb[0].mxu0 %v725
      %v1826 = vpop.f32.mrb[0].mxu0
      %v1827 = vadd.f32 %v1696, %v1826
      %v1828 = vpop.f32.mrb[0].mxu0
      %v1829 = vpop.f32.mrb[0].mxu0
      %v1830 = vadd.f32 %v1699, %v1829
      %v1831 = vpop.f32.mrb[0].mxu0
      %1832 = vmatprep.mubr.bf16.mxu0 0
      %1833 = vmatmul.mubr.bf16.gmra.mrb[0].mxu0 %v728
      %v1834 = vpop.f32.mrb[0].mxu0
      %v1835 = vadd.f32 %v1704, %v1834
      %v1836 = vpop.f32.mrb[0].mxu0
      %v1837 = vpop.f32.mrb[0].mxu0
      %v1838 = vadd.f32 %v1707, %v1837
      %v1839 = vpop.f32.mrb[0].mxu0
      %1840 = vmatprep.mubr.bf16.mxu0 0
      %1841 = vmatmul.mubr.bf16.gmra.mrb[0].mxu0 %v731
      %v1842 = vpop.f32.mrb[0].mxu0
      %v1843 = vadd.f32 %v1712, %v1842
      %v1844 = vpop.f32.mrb[0].mxu0
      %v1845 = vpop.f32.mrb[0].mxu0
      %v1846 = vadd.f32 %v1715, %v1845
      %v1847 = vpop.f32.mrb[0].mxu0
      %1848 = vmatprep.mubr.bf16.mxu0 0
      %1849 = vmatmul.mubr.bf16.gmra.mrb[0].mxu0 %v734
      %v1850 = vpop.f32.mrb[0].mxu0
      %v1851 = vadd.f32 %v1720, %v1850
      %v1852 = vpop.f32.mrb[0].mxu0
      %v1853 = vpop.f32.mrb[0].mxu0
      %v1854 = vadd.f32 %v1723, %v1853
      %v1855 = vpop.f32.mrb[0].mxu0
      %1856 = vmatprep.mubr.bf16.mxu0 0
      %1857 = vmatmul.mubr.bf16.gmra.mrb[0].mxu0 %v737
      %v1858 = vpop.f32.mrb[0].mxu0
      %v1859 = vadd.f32 %v1728, %v1858
      %v1860 = vpop.f32.mrb[0].mxu0
      %v1861 = vpop.f32.mrb[0].mxu0
      %v1862 = vadd.f32 %v1731, %v1861
      %v1863 = vpop.f32.mrb[0].mxu0
      %1864 = vmatprep.mubr.bf16.mxu0 0
      %1865 = vmatmul.mubr.bf16.gmra.mrb[0].mxu0 %v740
      %v1866 = vpop.f32.mrb[0].mxu0
      %v1867 = vadd.f32 %v1736, %v1866
      %v1868 = vpop.f32.mrb[0].mxu0
      %v1869 = vpop.f32.mrb[0].mxu0
      %v1870 = vadd.f32 %v1739, %v1869
      %v1871 = vpop.f32.mrb[0].mxu0
      %1872 = vmatprep.mubr.bf16.mxu0 0
      %1873 = vmatmul.mubr.bf16.gmra.mrb[0].mxu0 %v743
      %v1874 = vpop.f32.mrb[0].mxu0
      %v1875 = vpop.f32.mrb[0].mxu0
      %v1876 = vpop.f32.mrb[0].mxu0
      %v1877 = vpop.f32.mrb[0].mxu0
      %1878 = vdwg.mxu0
      %s1879 = scalar_lea.vmem %s1, 336
      %v1880 = vld [vmem:[%s1879] sm:$0xf]
      %v1881 = vld [vmem:[%s1879 + $0x4] sm:$0xf]
      %v1882 = vld [vmem:[%s1879 + $0x8] sm:$0xf]
      %v1883 = vld [vmem:[%s1879 + $0xc] sm:$0xf]
      %v1884 = vld [vmem:[%s1879 + $0x10] sm:$0xf]
      %v1885 = vld [vmem:[%s1879 + $0x14] sm:$0xf]
      %v1886 = vld [vmem:[%s1879 + $0x18] sm:$0xf]
      %v1887 = vld [vmem:[%s1879 + $0x1c] sm:$0xf]
      %v1888 = vld [vmem:[%s1879 + $0x20] sm:$0xf]
      %v1889 = vld [vmem:[%s1879 + $0x24] sm:$0xf]
      %v1890 = vld [vmem:[%s1879 + $0x28] sm:$0xf]
      %v1891 = vld [vmem:[%s1879 + $0x2c] sm:$0xf]
      %v1904 = vunpack.c.l.b16 %v1880
      %v1905 = vunpack.c.l.b16 %v1881
      %v1906 = vunpack.c.l.b16 %v1882
      %v1907 = vunpack.c.l.b16 %v1883
      %v1908 = vunpack.c.l.b16 %v1884
      %v1909 = vunpack.c.l.b16 %v1885
      %v1910 = vunpack.c.l.b16 %v1886
      %v1911 = vunpack.c.l.b16 %v1887
      %v1912 = vunpack.c.l.b16 %v1888
      %v1913 = vunpack.c.l.b16 %v1889
      %v1914 = vunpack.c.l.b16 %v1890
      %v1915 = vunpack.c.l.b16 %v1891
      %v1916 = vpack.c.b16 %v1905, %v1904
      %v1917 = vpack.c.b16 %v1907, %v1906
      %v1918 = vpack.c.b16 %v1909, %v1908
      %v1919 = vpack.c.b16 %v1911, %v1910
      %v1920 = vpack.c.b16 %v1913, %v1912
      %v1921 = vpack.c.b16 %v1915, %v1914
      %1928 = vmatprep.subr.bf16.mxu0 0
      %1929 = vmatpush1.bf16.msra.mxu0 %v1916
      %1930 = vmatprep.subr.bf16.mxu0 0
      %1931 = vmatpush1.bf16.msra.mxu0 %v1917
      %1932 = vmatprep.subr.bf16.mxu0 0
      %1933 = vmatpush1.bf16.msra.mxu0 %v1918
      %1934 = vmatprep.subr.bf16.mxu0 0
      %1935 = vmatpush1.bf16.msra.mxu0 %v1919
      %1936 = vmatprep.subr.bf16.mxu0 0
      %1937 = vmatpush1.bf16.msra.mxu0 %v1920
      %1938 = vmatprep.subr.bf16.mxu0 0
      %1939 = vmatpush1.bf16.msra.mxu0 %v1921
      %1940 = vmatprep.subr.bf16.mxu0 0
      %1941 = vmatpush1.bf16.msra.mxu0 0
      %1942 = vmatprep.subr.bf16.mxu0 0
      %1943 = vmatpush1.bf16.msra.mxu0 0
      %1944 = vmatprep.subr.bf16.mxu0 0
      %1945 = vmatpush1.bf16.msra.mxu0 0
      %1946 = vmatprep.subr.bf16.mxu0 0
      %1947 = vmatpush1.bf16.msra.mxu0 0
      %1948 = vmatprep.subr.bf16.mxu0 0
      %1949 = vmatpush1.bf16.msra.mxu0 0
      %1950 = vmatprep.subr.bf16.mxu0 0
      %1951 = vmatpush1.bf16.msra.mxu0 0
      %1952 = vmatprep.subr.bf16.mxu0 0
      %1953 = vmatpush1.bf16.msra.mxu0 0
      %1954 = vmatprep.subr.bf16.mxu0 0
      %1955 = vmatpush1.bf16.msra.mxu0 0
      %1956 = vmatprep.subr.bf16.mxu0 0
      %1957 = vmatpush1.bf16.msra.mxu0 0
      %1958 = vmatprep.subr.bf16.mxu0 0
      %1959 = vmatpush1.bf16.msra.mxu0 0
      %1960 = vmatprep.mubr.bf16.mxu0 0
      %1961 = vmatmul.mubr.bf16.gmra.mrb[0].mxu0 %v947
      %v1962 = vpop.f32.mrb[0].mxu0
      %v1963 = vadd.f32 0.0, %v1962
      %v1964 = vpop.f32.mrb[0].mxu0
      %v1965 = vpop.f32.mrb[0].mxu0
      %v1966 = vadd.f32 0.0, %v1965
      %v1967 = vpop.f32.mrb[0].mxu0
      %1968 = vmatprep.mubr.bf16.mxu0 0
      %1969 = vmatmul.mubr.bf16.gmra.mrb[0].mxu0 %v950
      %v1970 = vpop.f32.mrb[0].mxu0
      %v1971 = vadd.f32 0.0, %v1970
      %v1972 = vpop.f32.mrb[0].mxu0
      %v1973 = vpop.f32.mrb[0].mxu0
      %v1974 = vadd.f32 0.0, %v1973
      %v1975 = vpop.f32.mrb[0].mxu0
      %1976 = vmatprep.mubr.bf16.mxu0 0
      %1977 = vmatmul.mubr.bf16.gmra.mrb[0].mxu0 %v953
      %v1978 = vpop.f32.mrb[0].mxu0
      %v1979 = vadd.f32 0.0, %v1978
      %v1980 = vpop.f32.mrb[0].mxu0
      %v1981 = vpop.f32.mrb[0].mxu0
      %v1982 = vadd.f32 0.0, %v1981
      %v1983 = vpop.f32.mrb[0].mxu0
      %1984 = vmatprep.mubr.bf16.mxu0 0
      %1985 = vmatmul.mubr.bf16.gmra.mrb[0].mxu0 %v956
      %v1986 = vpop.f32.mrb[0].mxu0
      %v1987 = vadd.f32 0.0, %v1986
      %v1988 = vpop.f32.mrb[0].mxu0
      %v1989 = vpop.f32.mrb[0].mxu0
      %v1990 = vadd.f32 0.0, %v1989
      %v1991 = vpop.f32.mrb[0].mxu0
      %1992 = vmatprep.mubr.bf16.mxu0 0
      %1993 = vmatmul.mubr.bf16.gmra.mrb[0].mxu0 %v959
      %v1994 = vpop.f32.mrb[0].mxu0
      %v1995 = vadd.f32 0.0, %v1994
      %v1996 = vpop.f32.mrb[0].mxu0
      %v1997 = vpop.f32.mrb[0].mxu0
      %v1998 = vadd.f32 0.0, %v1997
      %v1999 = vpop.f32.mrb[0].mxu0
      %2000 = vmatprep.mubr.bf16.mxu0 0
      %2001 = vmatmul.mubr.bf16.gmra.mrb[0].mxu0 %v962
      %v2002 = vpop.f32.mrb[0].mxu0
      %v2003 = vadd.f32 0.0, %v2002
      %v2004 = vpop.f32.mrb[0].mxu0
      %v2005 = vpop.f32.mrb[0].mxu0
      %v2006 = vadd.f32 0.0, %v2005
      %v2007 = vpop.f32.mrb[0].mxu0
      %2008 = vmatprep.mubr.bf16.mxu0 0
      %2009 = vmatmul.mubr.bf16.gmra.mrb[0].mxu0 %v965
      %v2010 = vpop.f32.mrb[0].mxu0
      %v2011 = vadd.f32 0.0, %v2010
      %v2012 = vpop.f32.mrb[0].mxu0
      %v2013 = vpop.f32.mrb[0].mxu0
      %v2014 = vadd.f32 0.0, %v2013
      %v2015 = vpop.f32.mrb[0].mxu0
      %2016 = vmatprep.mubr.bf16.mxu0 0
      %2017 = vmatmul.mubr.bf16.gmra.mrb[0].mxu0 %v968
      %v2018 = vpop.f32.mrb[0].mxu0
      %v2019 = vpop.f32.mrb[0].mxu0
      %v2020 = vpop.f32.mrb[0].mxu0
      %v2021 = vpop.f32.mrb[0].mxu0
      %2022 = vdwg.mxu0
      %v2023 = vadd.f32 %v1819, %v1963
      %v2024 = vadd.f32 %v1822, %v1966
      %v2025 = vadd.f32 %v1827, %v1971
      %v2026 = vadd.f32 %v1830, %v1974
      %v2027 = vadd.f32 %v1835, %v1979
      %v2028 = vadd.f32 %v1838, %v1982
      %v2029 = vadd.f32 %v1843, %v1987
      %v2030 = vadd.f32 %v1846, %v1990
      %v2031 = vadd.f32 %v1851, %v1995
      %v2032 = vadd.f32 %v1854, %v1998
      %v2033 = vadd.f32 %v1859, %v2003
      %v2034 = vadd.f32 %v1862, %v2006
      %v2035 = vadd.f32 %v1867, %v2011
      %v2036 = vadd.f32 %v1870, %v2014
      %s2037 = scalar_lea.vmem %s1, 384
      %v2038 = vld [vmem:[%s2037] sm:$0xf]
      %v2039 = vld [vmem:[%s2037 + $0x4] sm:$0xf]
      %v2040 = vld [vmem:[%s2037 + $0x8] sm:$0xf]
      %v2041 = vld [vmem:[%s2037 + $0xc] sm:$0xf]
      %v2042 = vld [vmem:[%s2037 + $0x10] sm:$0xf]
      %v2043 = vld [vmem:[%s2037 + $0x14] sm:$0xf]
      %v2044 = vld [vmem:[%s2037 + $0x18] sm:$0xf]
      %v2045 = vld [vmem:[%s2037 + $0x1c] sm:$0xf]
      %v2046 = vld [vmem:[%s2037 + $0x20] sm:$0xf]
      %v2047 = vld [vmem:[%s2037 + $0x24] sm:$0xf]
      %v2048 = vld [vmem:[%s2037 + $0x28] sm:$0xf]
      %v2049 = vld [vmem:[%s2037 + $0x2c] sm:$0xf]
      %v2062 = vunpack.c.l.b16 %v2038
      %v2063 = vunpack.c.l.b16 %v2039
      %v2064 = vunpack.c.l.b16 %v2040
      %v2065 = vunpack.c.l.b16 %v2041
      %v2066 = vunpack.c.l.b16 %v2042
      %v2067 = vunpack.c.l.b16 %v2043
      %v2068 = vunpack.c.l.b16 %v2044
      %v2069 = vunpack.c.l.b16 %v2045
      %v2070 = vunpack.c.l.b16 %v2046
      %v2071 = vunpack.c.l.b16 %v2047
      %v2072 = vunpack.c.l.b16 %v2048
      %v2073 = vunpack.c.l.b16 %v2049
      %v2074 = vpack.c.b16 %v2063, %v2062
      %v2075 = vpack.c.b16 %v2065, %v2064
      %v2076 = vpack.c.b16 %v2067, %v2066
      %v2077 = vpack.c.b16 %v2069, %v2068
      %v2078 = vpack.c.b16 %v2071, %v2070
      %v2079 = vpack.c.b16 %v2073, %v2072
      %2086 = vmatprep.subr.bf16.mxu0 0
      %2087 = vmatpush1.bf16.msra.mxu0 %v2074
      %2088 = vmatprep.subr.bf16.mxu0 0
      %2089 = vmatpush1.bf16.msra.mxu0 %v2075
      %2090 = vmatprep.subr.bf16.mxu0 0
      %2091 = vmatpush1.bf16.msra.mxu0 %v2076
      %2092 = vmatprep.subr.bf16.mxu0 0
      %2093 = vmatpush1.bf16.msra.mxu0 %v2077
      %2094 = vmatprep.subr.bf16.mxu0 0
      %2095 = vmatpush1.bf16.msra.mxu0 %v2078
      %2096 = vmatprep.subr.bf16.mxu0 0
      %2097 = vmatpush1.bf16.msra.mxu0 %v2079
      %2098 = vmatprep.subr.bf16.mxu0 0
      %2099 = vmatpush1.bf16.msra.mxu0 0
      %2100 = vmatprep.subr.bf16.mxu0 0
      %2101 = vmatpush1.bf16.msra.mxu0 0
      %2102 = vmatprep.subr.bf16.mxu0 0
      %2103 = vmatpush1.bf16.msra.mxu0 0
      %2104 = vmatprep.subr.bf16.mxu0 0
      %2105 = vmatpush1.bf16.msra.mxu0 0
      %2106 = vmatprep.subr.bf16.mxu0 0
      %2107 = vmatpush1.bf16.msra.mxu0 0
      %2108 = vmatprep.subr.bf16.mxu0 0
      %2109 = vmatpush1.bf16.msra.mxu0 0
      %2110 = vmatprep.subr.bf16.mxu0 0
      %2111 = vmatpush1.bf16.msra.mxu0 0
      %2112 = vmatprep.subr.bf16.mxu0 0
      %2113 = vmatpush1.bf16.msra.mxu0 0
      %2114 = vmatprep.subr.bf16.mxu0 0
      %2115 = vmatpush1.bf16.msra.mxu0 0
      %2116 = vmatprep.subr.bf16.mxu0 0
      %2117 = vmatpush1.bf16.msra.mxu0 0
      %2118 = vmatprep.mubr.bf16.mxu0 0
      %2119 = vmatmul.mubr.bf16.gmra.mrb[0].mxu0 %v1186
      %v2120 = vpop.f32.mrb[0].mxu0
      %v2121 = vadd.f32 0.0, %v2120
      %v2122 = vpop.f32.mrb[0].mxu0
      %v2123 = vpop.f32.mrb[0].mxu0
      %v2124 = vadd.f32 0.0, %v2123
      %v2125 = vpop.f32.mrb[0].mxu0
      %2126 = vmatprep.mubr.bf16.mxu0 0
      %2127 = vmatmul.mubr.bf16.gmra.mrb[0].mxu0 %v1189
      %v2128 = vpop.f32.mrb[0].mxu0
      %v2129 = vadd.f32 0.0, %v2128
      %v2130 = vpop.f32.mrb[0].mxu0
      %v2131 = vpop.f32.mrb[0].mxu0
      %v2132 = vadd.f32 0.0, %v2131
      %v2133 = vpop.f32.mrb[0].mxu0
      %2134 = vmatprep.mubr.bf16.mxu0 0
      %2135 = vmatmul.mubr.bf16.gmra.mrb[0].mxu0 %v1192
      %v2136 = vpop.f32.mrb[0].mxu0
      %v2137 = vadd.f32 0.0, %v2136
      %v2138 = vpop.f32.mrb[0].mxu0
      %v2139 = vpop.f32.mrb[0].mxu0
      %v2140 = vadd.f32 0.0, %v2139
      %v2141 = vpop.f32.mrb[0].mxu0
      %2142 = vmatprep.mubr.bf16.mxu0 0
      %2143 = vmatmul.mubr.bf16.gmra.mrb[0].mxu0 %v1195
      %v2144 = vpop.f32.mrb[0].mxu0
      %v2145 = vadd.f32 0.0, %v2144
      %v2146 = vpop.f32.mrb[0].mxu0
      %v2147 = vpop.f32.mrb[0].mxu0
      %v2148 = vadd.f32 0.0, %v2147
      %v2149 = vpop.f32.mrb[0].mxu0
      %2150 = vmatprep.mubr.bf16.mxu0 0
      %2151 = vmatmul.mubr.bf16.gmra.mrb[0].mxu0 %v1198
      %v2152 = vpop.f32.mrb[0].mxu0
      %v2153 = vadd.f32 0.0, %v2152
      %v2154 = vpop.f32.mrb[0].mxu0
      %v2155 = vpop.f32.mrb[0].mxu0
      %v2156 = vadd.f32 0.0, %v2155
      %v2157 = vpop.f32.mrb[0].mxu0
      %2158 = vmatprep.mubr.bf16.mxu0 0
      %2159 = vmatmul.mubr.bf16.gmra.mrb[0].mxu0 %v1201
      %v2160 = vpop.f32.mrb[0].mxu0
      %v2161 = vadd.f32 0.0, %v2160
      %v2162 = vpop.f32.mrb[0].mxu0
      %v2163 = vpop.f32.mrb[0].mxu0
      %v2164 = vadd.f32 0.0, %v2163
      %v2165 = vpop.f32.mrb[0].mxu0
      %2166 = vmatprep.mubr.bf16.mxu0 0
      %2167 = vmatmul.mubr.bf16.gmra.mrb[0].mxu0 %v1204
      %v2168 = vpop.f32.mrb[0].mxu0
      %v2169 = vadd.f32 0.0, %v2168
      %v2170 = vpop.f32.mrb[0].mxu0
      %v2171 = vpop.f32.mrb[0].mxu0
      %v2172 = vadd.f32 0.0, %v2171
      %v2173 = vpop.f32.mrb[0].mxu0
      %2174 = vmatprep.mubr.bf16.mxu0 0
      %2175 = vmatmul.mubr.bf16.gmra.mrb[0].mxu0 %v1207
      %v2176 = vpop.f32.mrb[0].mxu0
      %v2177 = vpop.f32.mrb[0].mxu0
      %v2178 = vpop.f32.mrb[0].mxu0
      %v2179 = vpop.f32.mrb[0].mxu0
      %2180 = vdwg.mxu0
      %v2181 = vadd.f32 %v2023, %v2121
      %v2182 = vadd.f32 %v2024, %v2124
      %v2183 = vadd.f32 %v2025, %v2129
      %v2184 = vadd.f32 %v2026, %v2132
      %v2185 = vadd.f32 %v2027, %v2137
      %v2186 = vadd.f32 %v2028, %v2140
      %v2187 = vadd.f32 %v2029, %v2145
      %v2188 = vadd.f32 %v2030, %v2148
      %v2189 = vadd.f32 %v2031, %v2153
      %v2190 = vadd.f32 %v2032, %v2156
      %v2191 = vadd.f32 %v2033, %v2161
      %v2192 = vadd.f32 %v2034, %v2164
      %v2193 = vadd.f32 %v2035, %v2169
      %v2194 = vadd.f32 %v2036, %v2172
      %s2195 = scalar_lea.vmem %s1, 432
      %v2196 = vld [vmem:[%s2195] sm:$0xf]
      %v2197 = vld [vmem:[%s2195 + $0x4] sm:$0xf]
      %v2198 = vld [vmem:[%s2195 + $0x8] sm:$0xf]
      %v2199 = vld [vmem:[%s2195 + $0xc] sm:$0xf]
      %v2200 = vld [vmem:[%s2195 + $0x10] sm:$0xf]
      %v2201 = vld [vmem:[%s2195 + $0x14] sm:$0xf]
      %v2202 = vld [vmem:[%s2195 + $0x18] sm:$0xf]
      %v2203 = vld [vmem:[%s2195 + $0x1c] sm:$0xf]
      %v2204 = vld [vmem:[%s2195 + $0x20] sm:$0xf]
      %v2205 = vld [vmem:[%s2195 + $0x24] sm:$0xf]
      %v2206 = vld [vmem:[%s2195 + $0x28] sm:$0xf]
      %v2207 = vld [vmem:[%s2195 + $0x2c] sm:$0xf]
      %v2220 = vunpack.c.l.b16 %v2196
      %v2221 = vunpack.c.l.b16 %v2197
      %v2222 = vunpack.c.l.b16 %v2198
      %v2223 = vunpack.c.l.b16 %v2199
      %v2224 = vunpack.c.l.b16 %v2200
      %v2225 = vunpack.c.l.b16 %v2201
      %v2226 = vunpack.c.l.b16 %v2202
      %v2227 = vunpack.c.l.b16 %v2203
      %v2228 = vunpack.c.l.b16 %v2204
      %v2229 = vunpack.c.l.b16 %v2205
      %v2230 = vunpack.c.l.b16 %v2206
      %v2231 = vunpack.c.l.b16 %v2207
      %v2232 = vpack.c.b16 %v2221, %v2220
      %v2233 = vpack.c.b16 %v2223, %v2222
      %v2234 = vpack.c.b16 %v2225, %v2224
      %v2235 = vpack.c.b16 %v2227, %v2226
      %v2236 = vpack.c.b16 %v2229, %v2228
      %v2237 = vpack.c.b16 %v2231, %v2230
      %2244 = vmatprep.subr.bf16.mxu0 0
      %2245 = vmatpush1.bf16.msra.mxu0 %v2232
      %2246 = vmatprep.subr.bf16.mxu0 0
      %2247 = vmatpush1.bf16.msra.mxu0 %v2233
      %2248 = vmatprep.subr.bf16.mxu0 0
      %2249 = vmatpush1.bf16.msra.mxu0 %v2234
      %2250 = vmatprep.subr.bf16.mxu0 0
      %2251 = vmatpush1.bf16.msra.mxu0 %v2235
      %2252 = vmatprep.subr.bf16.mxu0 0
      %2253 = vmatpush1.bf16.msra.mxu0 %v2236
      %2254 = vmatprep.subr.bf16.mxu0 0
      %2255 = vmatpush1.bf16.msra.mxu0 %v2237
      %2256 = vmatprep.subr.bf16.mxu0 0
      %2257 = vmatpush1.bf16.msra.mxu0 0
      %2258 = vmatprep.subr.bf16.mxu0 0
      %2259 = vmatpush1.bf16.msra.mxu0 0
      %2260 = vmatprep.subr.bf16.mxu0 0
      %2261 = vmatpush1.bf16.msra.mxu0 0
      %2262 = vmatprep.subr.bf16.mxu0 0
      %2263 = vmatpush1.bf16.msra.mxu0 0
      %2264 = vmatprep.subr.bf16.mxu0 0
      %2265 = vmatpush1.bf16.msra.mxu0 0
      %2266 = vmatprep.subr.bf16.mxu0 0
      %2267 = vmatpush1.bf16.msra.mxu0 0
      %2268 = vmatprep.subr.bf16.mxu0 0
      %2269 = vmatpush1.bf16.msra.mxu0 0
      %2270 = vmatprep.subr.bf16.mxu0 0
      %2271 = vmatpush1.bf16.msra.mxu0 0
      %2272 = vmatprep.subr.bf16.mxu0 0
      %2273 = vmatpush1.bf16.msra.mxu0 0
      %2274 = vmatprep.subr.bf16.mxu0 0
      %2275 = vmatpush1.bf16.msra.mxu0 0
      %2276 = vmatprep.mubr.bf16.mxu0 0
      %2277 = vmatmul.mubr.bf16.gmra.mrb[0].mxu0 %v1425
      %v2278 = vpop.f32.mrb[0].mxu0
      %v2279 = vadd.f32 0.0, %v2278
      %v2280 = vpop.f32.mrb[0].mxu0
      %v2281 = vpop.f32.mrb[0].mxu0
      %v2282 = vadd.f32 0.0, %v2281
      %v2283 = vpop.f32.mrb[0].mxu0
      %2284 = vmatprep.mubr.bf16.mxu0 0
      %2285 = vmatmul.mubr.bf16.gmra.mrb[0].mxu0 %v1428
      %v2286 = vpop.f32.mrb[0].mxu0
      %v2287 = vadd.f32 0.0, %v2286
      %v2288 = vpop.f32.mrb[0].mxu0
      %v2289 = vpop.f32.mrb[0].mxu0
      %v2290 = vadd.f32 0.0, %v2289
      %v2291 = vpop.f32.mrb[0].mxu0
      %2292 = vmatprep.mubr.bf16.mxu0 0
      %2293 = vmatmul.mubr.bf16.gmra.mrb[0].mxu0 %v1431
      %v2294 = vpop.f32.mrb[0].mxu0
      %v2295 = vadd.f32 0.0, %v2294
      %v2296 = vpop.f32.mrb[0].mxu0
      %v2297 = vpop.f32.mrb[0].mxu0
      %v2298 = vadd.f32 0.0, %v2297
      %v2299 = vpop.f32.mrb[0].mxu0
      %2300 = vmatprep.mubr.bf16.mxu0 0
      %2301 = vmatmul.mubr.bf16.gmra.mrb[0].mxu0 %v1434
      %v2302 = vpop.f32.mrb[0].mxu0
      %v2303 = vadd.f32 0.0, %v2302
      %v2304 = vpop.f32.mrb[0].mxu0
      %v2305 = vpop.f32.mrb[0].mxu0
      %v2306 = vadd.f32 0.0, %v2305
      %v2307 = vpop.f32.mrb[0].mxu0
      %2308 = vmatprep.mubr.bf16.mxu0 0
      %2309 = vmatmul.mubr.bf16.gmra.mrb[0].mxu0 %v1437
      %v2310 = vpop.f32.mrb[0].mxu0
      %v2311 = vadd.f32 0.0, %v2310
      %v2312 = vpop.f32.mrb[0].mxu0
      %v2313 = vpop.f32.mrb[0].mxu0
      %v2314 = vadd.f32 0.0, %v2313
      %v2315 = vpop.f32.mrb[0].mxu0
      %2316 = vmatprep.mubr.bf16.mxu0 0
      %2317 = vmatmul.mubr.bf16.gmra.mrb[0].mxu0 %v1440
      %v2318 = vpop.f32.mrb[0].mxu0
      %v2319 = vadd.f32 0.0, %v2318
      %v2320 = vpop.f32.mrb[0].mxu0
      %v2321 = vpop.f32.mrb[0].mxu0
      %v2322 = vadd.f32 0.0, %v2321
      %v2323 = vpop.f32.mrb[0].mxu0
      %2324 = vmatprep.mubr.bf16.mxu0 0
      %2325 = vmatmul.mubr.bf16.gmra.mrb[0].mxu0 %v1443
      %v2326 = vpop.f32.mrb[0].mxu0
      %v2327 = vadd.f32 0.0, %v2326
      %v2328 = vpop.f32.mrb[0].mxu0
      %v2329 = vpop.f32.mrb[0].mxu0
      %v2330 = vadd.f32 0.0, %v2329
      %v2331 = vpop.f32.mrb[0].mxu0
      %2332 = vmatprep.mubr.bf16.mxu0 0
      %2333 = vmatmul.mubr.bf16.gmra.mrb[0].mxu0 %v1446
      %v2334 = vpop.f32.mrb[0].mxu0
      %v2335 = vpop.f32.mrb[0].mxu0
      %v2336 = vpop.f32.mrb[0].mxu0
      %v2337 = vpop.f32.mrb[0].mxu0
      %2338 = vdwg.mxu0
      %v2339 = vadd.f32 %v2181, %v2279
      %v2340 = vadd.f32 %v2182, %v2282
      %v2341 = vadd.f32 %v2183, %v2287
      %v2342 = vadd.f32 %v2184, %v2290
      %v2343 = vadd.f32 %v2185, %v2295
      %v2344 = vadd.f32 %v2186, %v2298
      %v2345 = vadd.f32 %v2187, %v2303
      %v2346 = vadd.f32 %v2188, %v2306
      %v2347 = vadd.f32 %v2189, %v2311
      %v2348 = vadd.f32 %v2190, %v2314
      %v2349 = vadd.f32 %v2191, %v2319
      %v2350 = vadd.f32 %v2192, %v2322
      %v2351 = vadd.f32 %v2193, %v2327
      %v2352 = vadd.f32 %v2194, %v2330
      %v2353 = vadd.f32 %v2339, %v1561
      %v2354 = vadd.f32 %v2340, %v1561
      %v2355 = vadd.f32 %v2341, %v1561
      %v2356 = vadd.f32 %v2342, %v1561
      %v2357 = vadd.f32 %v2343, %v1561
      %v2358 = vadd.f32 %v2344, %v1561
      %v2359 = vadd.f32 %v2345, %v1561
      %v2360 = vadd.f32 %v2346, %v1561
      %v2361 = vadd.f32 %v2347, %v1561
      %v2362 = vadd.f32 %v2348, %v1561
      %v2363 = vadd.f32 %v2349, %v1561
      %v2364 = vadd.f32 %v2350, %v1561
      %v2365 = vadd.f32 %v2351, %v1561
      %v2366 = vadd.f32 %v2352, %v1561
      %v2367 = vmax.f32 %v2353, 0.0
      %v2368 = vmax.f32 %v2354, 0.0
      %v2369 = vmax.f32 %v2355, 0.0
      %v2370 = vmax.f32 %v2356, 0.0
      %v2371 = vmax.f32 %v2357, 0.0
      %v2372 = vmax.f32 %v2358, 0.0
      %v2373 = vmax.f32 %v2359, 0.0
      %v2374 = vmax.f32 %v2360, 0.0
      %v2375 = vmax.f32 %v2361, 0.0
      %v2376 = vmax.f32 %v2362, 0.0
      %v2377 = vmax.f32 %v2363, 0.0
      %v2378 = vmax.f32 %v2364, 0.0
      %v2379 = vmax.f32 %v2365, 0.0
      %v2380 = vmax.f32 %v2366, 0.0
      %2381 = vmatprep.subr.bf16.mxu0 0
      %2382 = vmatpush1.bf16.msra.mxu0 %v513
      %2383 = vmatprep.subr.bf16.mxu0 0
      %2384 = vmatpush1.bf16.msra.mxu0 %v514
      %2385 = vmatprep.subr.bf16.mxu0 0
      %2386 = vmatpush1.bf16.msra.mxu0 %v515
      %2387 = vmatprep.subr.bf16.mxu0 0
      %2388 = vmatpush1.bf16.msra.mxu0 %v516
      %2389 = vmatprep.subr.bf16.mxu0 0
      %2390 = vmatpush1.bf16.msra.mxu0 %v517
      %2391 = vmatprep.subr.bf16.mxu0 0
      %2392 = vmatpush1.bf16.msra.mxu0 %v518
      %2393 = vmatprep.subr.bf16.mxu0 0
      %2394 = vmatpush1.bf16.msra.mxu0 0
      %2395 = vmatprep.subr.bf16.mxu0 0
      %2396 = vmatpush1.bf16.msra.mxu0 0
      %2397 = vmatprep.subr.bf16.mxu0 0
      %2398 = vmatpush1.bf16.msra.mxu0 0
      %2399 = vmatprep.subr.bf16.mxu0 0
      %2400 = vmatpush1.bf16.msra.mxu0 0
      %2401 = vmatprep.subr.bf16.mxu0 0
      %2402 = vmatpush1.bf16.msra.mxu0 0
      %2403 = vmatprep.subr.bf16.mxu0 0
      %2404 = vmatpush1.bf16.msra.mxu0 0
      %2405 = vmatprep.subr.bf16.mxu0 0
      %2406 = vmatpush1.bf16.msra.mxu0 0
      %2407 = vmatprep.subr.bf16.mxu0 0
      %2408 = vmatpush1.bf16.msra.mxu0 0
      %2409 = vmatprep.subr.bf16.mxu0 0
      %2410 = vmatpush1.bf16.msra.mxu0 0
      %2411 = vmatprep.subr.bf16.mxu0 0
      %2412 = vmatpush1.bf16.msra.mxu0 0
      %2413 = vmatprep.mubr.bf16.mxu0 0
      %2414 = vmatmul.mubr.bf16.gmra.mrb[0].mxu0 %v947
      %v2415 = vpop.f32.mrb[0].mxu0
      %v2416 = vadd.f32 0.0, %v2415
      %v2417 = vpop.f32.mrb[0].mxu0
      %v2418 = vpop.f32.mrb[0].mxu0
      %v2419 = vadd.f32 0.0, %v2418
      %v2420 = vpop.f32.mrb[0].mxu0
      %2421 = vmatprep.mubr.bf16.mxu0 0
      %2422 = vmatmul.mubr.bf16.gmra.mrb[0].mxu0 %v950
      %v2423 = vpop.f32.mrb[0].mxu0
      %v2424 = vadd.f32 0.0, %v2423
      %v2425 = vpop.f32.mrb[0].mxu0
      %v2426 = vpop.f32.mrb[0].mxu0
      %v2427 = vadd.f32 0.0, %v2426
      %v2428 = vpop.f32.mrb[0].mxu0
      %2429 = vmatprep.mubr.bf16.mxu0 0
      %2430 = vmatmul.mubr.bf16.gmra.mrb[0].mxu0 %v953
      %v2431 = vpop.f32.mrb[0].mxu0
      %v2432 = vadd.f32 0.0, %v2431
      %v2433 = vpop.f32.mrb[0].mxu0
      %v2434 = vpop.f32.mrb[0].mxu0
      %v2435 = vadd.f32 0.0, %v2434
      %v2436 = vpop.f32.mrb[0].mxu0
      %2437 = vmatprep.mubr.bf16.mxu0 0
      %2438 = vmatmul.mubr.bf16.gmra.mrb[0].mxu0 %v956
      %v2439 = vpop.f32.mrb[0].mxu0
      %v2440 = vadd.f32 0.0, %v2439
      %v2441 = vpop.f32.mrb[0].mxu0
      %v2442 = vpop.f32.mrb[0].mxu0
      %v2443 = vadd.f32 0.0, %v2442
      %v2444 = vpop.f32.mrb[0].mxu0
      %2445 = vmatprep.mubr.bf16.mxu0 0
      %2446 = vmatmul.mubr.bf16.gmra.mrb[0].mxu0 %v959
      %v2447 = vpop.f32.mrb[0].mxu0
      %v2448 = vadd.f32 0.0, %v2447
      %v2449 = vpop.f32.mrb[0].mxu0
      %v2450 = vpop.f32.mrb[0].mxu0
      %v2451 = vadd.f32 0.0, %v2450
      %v2452 = vpop.f32.mrb[0].mxu0
      %2453 = vmatprep.mubr.bf16.mxu0 0
      %2454 = vmatmul.mubr.bf16.gmra.mrb[0].mxu0 %v962
      %v2455 = vpop.f32.mrb[0].mxu0
      %v2456 = vadd.f32 0.0, %v2455
      %v2457 = vpop.f32.mrb[0].mxu0
      %v2458 = vpop.f32.mrb[0].mxu0
      %v2459 = vadd.f32 0.0, %v2458
      %v2460 = vpop.f32.mrb[0].mxu0
      %2461 = vmatprep.mubr.bf16.mxu0 0
      %2462 = vmatmul.mubr.bf16.gmra.mrb[0].mxu0 %v965
      %v2463 = vpop.f32.mrb[0].mxu0
      %v2464 = vadd.f32 0.0, %v2463
      %v2465 = vpop.f32.mrb[0].mxu0
      %v2466 = vpop.f32.mrb[0].mxu0
      %v2467 = vadd.f32 0.0, %v2466
      %v2468 = vpop.f32.mrb[0].mxu0
      %2469 = vmatprep.mubr.bf16.mxu0 0
      %2470 = vmatmul.mubr.bf16.gmra.mrb[0].mxu0 %v968
      %v2471 = vpop.f32.mrb[0].mxu0
      %v2472 = vpop.f32.mrb[0].mxu0
      %v2473 = vpop.f32.mrb[0].mxu0
      %v2474 = vpop.f32.mrb[0].mxu0
      %2475 = vdwg.mxu0
      %2476 = vmatprep.subr.bf16.mxu0 0
      %2477 = vmatpush1.bf16.msra.mxu0 %v709
      %2478 = vmatprep.subr.bf16.mxu0 0
      %2479 = vmatpush1.bf16.msra.mxu0 %v710
      %2480 = vmatprep.subr.bf16.mxu0 0
      %2481 = vmatpush1.bf16.msra.mxu0 %v711
      %2482 = vmatprep.subr.bf16.mxu0 0
      %2483 = vmatpush1.bf16.msra.mxu0 %v712
      %2484 = vmatprep.subr.bf16.mxu0 0
      %2485 = vmatpush1.bf16.msra.mxu0 %v713
      %2486 = vmatprep.subr.bf16.mxu0 0
      %2487 = vmatpush1.bf16.msra.mxu0 %v714
      %2488 = vmatprep.subr.bf16.mxu0 0
      %2489 = vmatpush1.bf16.msra.mxu0 0
      %2490 = vmatprep.subr.bf16.mxu0 0
      %2491 = vmatpush1.bf16.msra.mxu0 0
      %2492 = vmatprep.subr.bf16.mxu0 0
      %2493 = vmatpush1.bf16.msra.mxu0 0
      %2494 = vmatprep.subr.bf16.mxu0 0
      %2495 = vmatpush1.bf16.msra.mxu0 0
      %2496 = vmatprep.subr.bf16.mxu0 0
      %2497 = vmatpush1.bf16.msra.mxu0 0
      %2498 = vmatprep.subr.bf16.mxu0 0
      %2499 = vmatpush1.bf16.msra.mxu0 0
      %2500 = vmatprep.subr.bf16.mxu0 0
      %2501 = vmatpush1.bf16.msra.mxu0 0
      %2502 = vmatprep.subr.bf16.mxu0 0
      %2503 = vmatpush1.bf16.msra.mxu0 0
      %2504 = vmatprep.subr.bf16.mxu0 0
      %2505 = vmatpush1.bf16.msra.mxu0 0
      %2506 = vmatprep.subr.bf16.mxu0 0
      %2507 = vmatpush1.bf16.msra.mxu0 0
      %2508 = vmatprep.mubr.bf16.mxu0 0
      %2509 = vmatmul.mubr.bf16.gmra.mrb[0].mxu0 %v527
      %v2510 = vpop.f32.mrb[0].mxu0
      %v2511 = vadd.f32 %v2416, %v2510
      %v2512 = vpop.f32.mrb[0].mxu0
      %v2513 = vpop.f32.mrb[0].mxu0
      %v2514 = vadd.f32 %v2419, %v2513
      %v2515 = vpop.f32.mrb[0].mxu0
      %2516 = vmatprep.mubr.bf16.mxu0 0
      %2517 = vmatmul.mubr.bf16.gmra.mrb[0].mxu0 %v530
      %v2518 = vpop.f32.mrb[0].mxu0
      %v2519 = vadd.f32 %v2424, %v2518
      %v2520 = vpop.f32.mrb[0].mxu0
      %v2521 = vpop.f32.mrb[0].mxu0
      %v2522 = vadd.f32 %v2427, %v2521
      %v2523 = vpop.f32.mrb[0].mxu0
      %2524 = vmatprep.mubr.bf16.mxu0 0
      %2525 = vmatmul.mubr.bf16.gmra.mrb[0].mxu0 %v533
      %v2526 = vpop.f32.mrb[0].mxu0
      %v2527 = vadd.f32 %v2432, %v2526
      %v2528 = vpop.f32.mrb[0].mxu0
      %v2529 = vpop.f32.mrb[0].mxu0
      %v2530 = vadd.f32 %v2435, %v2529
      %v2531 = vpop.f32.mrb[0].mxu0
      %2532 = vmatprep.mubr.bf16.mxu0 0
      %2533 = vmatmul.mubr.bf16.gmra.mrb[0].mxu0 %v536
      %v2534 = vpop.f32.mrb[0].mxu0
      %v2535 = vadd.f32 %v2440, %v2534
      %v2536 = vpop.f32.mrb[0].mxu0
      %v2537 = vpop.f32.mrb[0].mxu0
      %v2538 = vadd.f32 %v2443, %v2537
      %v2539 = vpop.f32.mrb[0].mxu0
      %2540 = vmatprep.mubr.bf16.mxu0 0
      %2541 = vmatmul.mubr.bf16.gmra.mrb[0].mxu0 %v539
      %v2542 = vpop.f32.mrb[0].mxu0
      %v2543 = vadd.f32 %v2448, %v2542
      %v2544 = vpop.f32.mrb[0].mxu0
      %v2545 = vpop.f32.mrb[0].mxu0
      %v2546 = vadd.f32 %v2451, %v2545
      %v2547 = vpop.f32.mrb[0].mxu0
      %2548 = vmatprep.mubr.bf16.mxu0 0
      %2549 = vmatmul.mubr.bf16.gmra.mrb[0].mxu0 %v542
      %v2550 = vpop.f32.mrb[0].mxu0
      %v2551 = vadd.f32 %v2456, %v2550
      %v2552 = vpop.f32.mrb[0].mxu0
      %v2553 = vpop.f32.mrb[0].mxu0
      %v2554 = vadd.f32 %v2459, %v2553
      %v2555 = vpop.f32.mrb[0].mxu0
      %2556 = vmatprep.mubr.bf16.mxu0 0
      %2557 = vmatmul.mubr.bf16.gmra.mrb[0].mxu0 %v545
      %v2558 = vpop.f32.mrb[0].mxu0
      %v2559 = vadd.f32 %v2464, %v2558
      %v2560 = vpop.f32.mrb[0].mxu0
      %v2561 = vpop.f32.mrb[0].mxu0
      %v2562 = vadd.f32 %v2467, %v2561
      %v2563 = vpop.f32.mrb[0].mxu0
      %2564 = vmatprep.mubr.bf16.mxu0 0
      %2565 = vmatmul.mubr.bf16.gmra.mrb[0].mxu0 %v548
      %v2566 = vpop.f32.mrb[0].mxu0
      %v2567 = vpop.f32.mrb[0].mxu0
      %v2568 = vpop.f32.mrb[0].mxu0
      %v2569 = vpop.f32.mrb[0].mxu0
      %2570 = vdwg.mxu0
      %2571 = vmatprep.subr.bf16.mxu0 0
      %2572 = vmatpush1.bf16.msra.mxu0 %v934
      %2573 = vmatprep.subr.bf16.mxu0 0
      %2574 = vmatpush1.bf16.msra.mxu0 %v935
      %2575 = vmatprep.subr.bf16.mxu0 0
      %2576 = vmatpush1.bf16.msra.mxu0 %v936
      %2577 = vmatprep.subr.bf16.mxu0 0
      %2578 = vmatpush1.bf16.msra.mxu0 %v937
      %2579 = vmatprep.subr.bf16.mxu0 0
      %2580 = vmatpush1.bf16.msra.mxu0 %v938
      %2581 = vmatprep.subr.bf16.mxu0 0
      %2582 = vmatpush1.bf16.msra.mxu0 %v939
      %2583 = vmatprep.subr.bf16.mxu0 0
      %2584 = vmatpush1.bf16.msra.mxu0 0
      %2585 = vmatprep.subr.bf16.mxu0 0
      %2586 = vmatpush1.bf16.msra.mxu0 0
      %2587 = vmatprep.subr.bf16.mxu0 0
      %2588 = vmatpush1.bf16.msra.mxu0 0
      %2589 = vmatprep.subr.bf16.mxu0 0
      %2590 = vmatpush1.bf16.msra.mxu0 0
      %2591 = vmatprep.subr.bf16.mxu0 0
      %2592 = vmatpush1.bf16.msra.mxu0 0
      %2593 = vmatprep.subr.bf16.mxu0 0
      %2594 = vmatpush1.bf16.msra.mxu0 0
      %2595 = vmatprep.subr.bf16.mxu0 0
      %2596 = vmatpush1.bf16.msra.mxu0 0
      %2597 = vmatprep.subr.bf16.mxu0 0
      %2598 = vmatpush1.bf16.msra.mxu0 0
      %2599 = vmatprep.subr.bf16.mxu0 0
      %2600 = vmatpush1.bf16.msra.mxu0 0
      %2601 = vmatprep.subr.bf16.mxu0 0
      %2602 = vmatpush1.bf16.msra.mxu0 0
      %2603 = vmatprep.mubr.bf16.mxu0 0
      %2604 = vmatmul.mubr.bf16.gmra.mrb[0].mxu0 %v1186
      %v2605 = vpop.f32.mrb[0].mxu0
      %v2606 = vadd.f32 0.0, %v2605
      %v2607 = vpop.f32.mrb[0].mxu0
      %v2608 = vpop.f32.mrb[0].mxu0
      %v2609 = vadd.f32 0.0, %v2608
      %v2610 = vpop.f32.mrb[0].mxu0
      %2611 = vmatprep.mubr.bf16.mxu0 0
      %2612 = vmatmul.mubr.bf16.gmra.mrb[0].mxu0 %v1189
      %v2613 = vpop.f32.mrb[0].mxu0
      %v2614 = vadd.f32 0.0, %v2613
      %v2615 = vpop.f32.mrb[0].mxu0
      %v2616 = vpop.f32.mrb[0].mxu0
      %v2617 = vadd.f32 0.0, %v2616
      %v2618 = vpop.f32.mrb[0].mxu0
      %2619 = vmatprep.mubr.bf16.mxu0 0
      %2620 = vmatmul.mubr.bf16.gmra.mrb[0].mxu0 %v1192
      %v2621 = vpop.f32.mrb[0].mxu0
      %v2622 = vadd.f32 0.0, %v2621
      %v2623 = vpop.f32.mrb[0].mxu0
      %v2624 = vpop.f32.mrb[0].mxu0
      %v2625 = vadd.f32 0.0, %v2624
      %v2626 = vpop.f32.mrb[0].mxu0
      %2627 = vmatprep.mubr.bf16.mxu0 0
      %2628 = vmatmul.mubr.bf16.gmra.mrb[0].mxu0 %v1195
      %v2629 = vpop.f32.mrb[0].mxu0
      %v2630 = vadd.f32 0.0, %v2629
      %v2631 = vpop.f32.mrb[0].mxu0
      %v2632 = vpop.f32.mrb[0].mxu0
      %v2633 = vadd.f32 0.0, %v2632
      %v2634 = vpop.f32.mrb[0].mxu0
      %2635 = vmatprep.mubr.bf16.mxu0 0
      %2636 = vmatmul.mubr.bf16.gmra.mrb[0].mxu0 %v1198
      %v2637 = vpop.f32.mrb[0].mxu0
      %v2638 = vadd.f32 0.0, %v2637
      %v2639 = vpop.f32.mrb[0].mxu0
      %v2640 = vpop.f32.mrb[0].mxu0
      %v2641 = vadd.f32 0.0, %v2640
      %v2642 = vpop.f32.mrb[0].mxu0
      %2643 = vmatprep.mubr.bf16.mxu0 0
      %2644 = vmatmul.mubr.bf16.gmra.mrb[0].mxu0 %v1201
      %v2645 = vpop.f32.mrb[0].mxu0
      %v2646 = vadd.f32 0.0, %v2645
      %v2647 = vpop.f32.mrb[0].mxu0
      %v2648 = vpop.f32.mrb[0].mxu0
      %v2649 = vadd.f32 0.0, %v2648
      %v2650 = vpop.f32.mrb[0].mxu0
      %2651 = vmatprep.mubr.bf16.mxu0 0
      %2652 = vmatmul.mubr.bf16.gmra.mrb[0].mxu0 %v1204
      %v2653 = vpop.f32.mrb[0].mxu0
      %v2654 = vadd.f32 0.0, %v2653
      %v2655 = vpop.f32.mrb[0].mxu0
      %v2656 = vpop.f32.mrb[0].mxu0
      %v2657 = vadd.f32 0.0, %v2656
      %v2658 = vpop.f32.mrb[0].mxu0
      %2659 = vmatprep.mubr.bf16.mxu0 0
      %2660 = vmatmul.mubr.bf16.gmra.mrb[0].mxu0 %v1207
      %v2661 = vpop.f32.mrb[0].mxu0
      %v2662 = vpop.f32.mrb[0].mxu0
      %v2663 = vpop.f32.mrb[0].mxu0
      %v2664 = vpop.f32.mrb[0].mxu0
      %2665 = vdwg.mxu0
      %v2666 = vadd.f32 %v2511, %v2606
      %v2667 = vadd.f32 %v2514, %v2609
      %v2668 = vadd.f32 %v2519, %v2614
      %v2669 = vadd.f32 %v2522, %v2617
      %v2670 = vadd.f32 %v2527, %v2622
      %v2671 = vadd.f32 %v2530, %v2625
      %v2672 = vadd.f32 %v2535, %v2630
      %v2673 = vadd.f32 %v2538, %v2633
      %v2674 = vadd.f32 %v2543, %v2638
      %v2675 = vadd.f32 %v2546, %v2641
      %v2676 = vadd.f32 %v2551, %v2646
      %v2677 = vadd.f32 %v2554, %v2649
      %v2678 = vadd.f32 %v2559, %v2654
      %v2679 = vadd.f32 %v2562, %v2657
      %2680 = vmatprep.subr.bf16.mxu0 0
      %2681 = vmatpush1.bf16.msra.mxu0 %v1173
      %2682 = vmatprep.subr.bf16.mxu0 0
      %2683 = vmatpush1.bf16.msra.mxu0 %v1174
      %2684 = vmatprep.subr.bf16.mxu0 0
      %2685 = vmatpush1.bf16.msra.mxu0 %v1175
      %2686 = vmatprep.subr.bf16.mxu0 0
      %2687 = vmatpush1.bf16.msra.mxu0 %v1176
      %2688 = vmatprep.subr.bf16.mxu0 0
      %2689 = vmatpush1.bf16.msra.mxu0 %v1177
      %2690 = vmatprep.subr.bf16.mxu0 0
      %2691 = vmatpush1.bf16.msra.mxu0 %v1178
      %2692 = vmatprep.subr.bf16.mxu0 0
      %2693 = vmatpush1.bf16.msra.mxu0 0
      %2694 = vmatprep.subr.bf16.mxu0 0
      %2695 = vmatpush1.bf16.msra.mxu0 0
      %2696 = vmatprep.subr.bf16.mxu0 0
      %2697 = vmatpush1.bf16.msra.mxu0 0
      %2698 = vmatprep.subr.bf16.mxu0 0
      %2699 = vmatpush1.bf16.msra.mxu0 0
      %2700 = vmatprep.subr.bf16.mxu0 0
      %2701 = vmatpush1.bf16.msra.mxu0 0
      %2702 = vmatprep.subr.bf16.mxu0 0
      %2703 = vmatpush1.bf16.msra.mxu0 0
      %2704 = vmatprep.subr.bf16.mxu0 0
      %2705 = vmatpush1.bf16.msra.mxu0 0
      %2706 = vmatprep.subr.bf16.mxu0 0
      %2707 = vmatpush1.bf16.msra.mxu0 0
      %2708 = vmatprep.subr.bf16.mxu0 0
      %2709 = vmatpush1.bf16.msra.mxu0 0
      %2710 = vmatprep.subr.bf16.mxu0 0
      %2711 = vmatpush1.bf16.msra.mxu0 0
      %2712 = vmatprep.mubr.bf16.mxu0 0
      %2713 = vmatmul.mubr.bf16.gmra.mrb[0].mxu0 %v1425
      %v2714 = vpop.f32.mrb[0].mxu0
      %v2715 = vadd.f32 0.0, %v2714
      %v2716 = vpop.f32.mrb[0].mxu0
      %v2717 = vpop.f32.mrb[0].mxu0
      %v2718 = vadd.f32 0.0, %v2717
      %v2719 = vpop.f32.mrb[0].mxu0
      %2720 = vmatprep.mubr.bf16.mxu0 0
      %2721 = vmatmul.mubr.bf16.gmra.mrb[0].mxu0 %v1428
      %v2722 = vpop.f32.mrb[0].mxu0
      %v2723 = vadd.f32 0.0, %v2722
      %v2724 = vpop.f32.mrb[0].mxu0
      %v2725 = vpop.f32.mrb[0].mxu0
      %v2726 = vadd.f32 0.0, %v2725
      %v2727 = vpop.f32.mrb[0].mxu0
      %2728 = vmatprep.mubr.bf16.mxu0 0
      %2729 = vmatmul.mubr.bf16.gmra.mrb[0].mxu0 %v1431
      %v2730 = vpop.f32.mrb[0].mxu0
      %v2731 = vadd.f32 0.0, %v2730
      %v2732 = vpop.f32.mrb[0].mxu0
      %v2733 = vpop.f32.mrb[0].mxu0
      %v2734 = vadd.f32 0.0, %v2733
      %v2735 = vpop.f32.mrb[0].mxu0
      %2736 = vmatprep.mubr.bf16.mxu0 0
      %2737 = vmatmul.mubr.bf16.gmra.mrb[0].mxu0 %v1434
      %v2738 = vpop.f32.mrb[0].mxu0
      %v2739 = vadd.f32 0.0, %v2738
      %v2740 = vpop.f32.mrb[0].mxu0
      %v2741 = vpop.f32.mrb[0].mxu0
      %v2742 = vadd.f32 0.0, %v2741
      %v2743 = vpop.f32.mrb[0].mxu0
      %2744 = vmatprep.mubr.bf16.mxu0 0
      %2745 = vmatmul.mubr.bf16.gmra.mrb[0].mxu0 %v1437
      %v2746 = vpop.f32.mrb[0].mxu0
      %v2747 = vadd.f32 0.0, %v2746
      %v2748 = vpop.f32.mrb[0].mxu0
      %v2749 = vpop.f32.mrb[0].mxu0
      %v2750 = vadd.f32 0.0, %v2749
      %v2751 = vpop.f32.mrb[0].mxu0
      %2752 = vmatprep.mubr.bf16.mxu0 0
      %2753 = vmatmul.mubr.bf16.gmra.mrb[0].mxu0 %v1440
      %v2754 = vpop.f32.mrb[0].mxu0
      %v2755 = vadd.f32 0.0, %v2754
      %v2756 = vpop.f32.mrb[0].mxu0
      %v2757 = vpop.f32.mrb[0].mxu0
      %v2758 = vadd.f32 0.0, %v2757
      %v2759 = vpop.f32.mrb[0].mxu0
      %2760 = vmatprep.mubr.bf16.mxu0 0
      %2761 = vmatmul.mubr.bf16.gmra.mrb[0].mxu0 %v1443
      %v2762 = vpop.f32.mrb[0].mxu0
      %v2763 = vadd.f32 0.0, %v2762
      %v2764 = vpop.f32.mrb[0].mxu0
      %v2765 = vpop.f32.mrb[0].mxu0
      %v2766 = vadd.f32 0.0, %v2765
      %v2767 = vpop.f32.mrb[0].mxu0
      %2768 = vmatprep.mubr.bf16.mxu0 0
      %2769 = vmatmul.mubr.bf16.gmra.mrb[0].mxu0 %v1446
      %v2770 = vpop.f32.mrb[0].mxu0
      %v2771 = vpop.f32.mrb[0].mxu0
      %v2772 = vpop.f32.mrb[0].mxu0
      %v2773 = vpop.f32.mrb[0].mxu0
      %2774 = vdwg.mxu0
      %v2775 = vadd.f32 %v2666, %v2715
      %v2776 = vadd.f32 %v2667, %v2718
      %v2777 = vadd.f32 %v2668, %v2723
      %v2778 = vadd.f32 %v2669, %v2726
      %v2779 = vadd.f32 %v2670, %v2731
      %v2780 = vadd.f32 %v2671, %v2734
      %v2781 = vadd.f32 %v2672, %v2739
      %v2782 = vadd.f32 %v2673, %v2742
      %v2783 = vadd.f32 %v2674, %v2747
      %v2784 = vadd.f32 %v2675, %v2750
      %v2785 = vadd.f32 %v2676, %v2755
      %v2786 = vadd.f32 %v2677, %v2758
      %v2787 = vadd.f32 %v2678, %v2763
      %v2788 = vadd.f32 %v2679, %v2766
      %s2789 = scalar_lea.vmem %s381, 192
      %v2790 = vld [vmem:[%s2789] sm:$0xf]
      %v2791 = vld [vmem:[%s2789 + $0x4] sm:$0xf]
      %v2792 = vld [vmem:[%s2789 + $0x8] sm:$0xf]
      %v2793 = vld [vmem:[%s2789 + $0xc] sm:$0xf]
      %v2794 = vld [vmem:[%s2789 + $0x10] sm:$0xf]
      %v2795 = vld [vmem:[%s2789 + $0x14] sm:$0xf]
      %v2796 = vld [vmem:[%s2789 + $0x18] sm:$0xf]
      %v2797 = vld [vmem:[%s2789 + $0x1c] sm:$0xf]
      %v2798 = vld [vmem:[%s2789 + $0x20] sm:$0xf]
      %v2799 = vld [vmem:[%s2789 + $0x24] sm:$0xf]
      %v2800 = vld [vmem:[%s2789 + $0x28] sm:$0xf]
      %v2801 = vld [vmem:[%s2789 + $0x2c] sm:$0xf]
      %v2802 = vld [vmem:[%s2789 + $0x30] sm:$0xf]
      %v2803 = vld [vmem:[%s2789 + $0x34] sm:$0xf]
      %v2804 = vld [vmem:[%s2789 + $0x38] sm:$0xf]
      %v2805 = vld [vmem:[%s2789 + $0x3c] sm:$0xf]
      %v2822 = vunpack.c.l.b16 %v2790
      %v2823 = vunpack.c.l.b16 %v2791
      %v2824 = vunpack.c.l.b16 %v2792
      %v2825 = vunpack.c.l.b16 %v2793
      %v2826 = vunpack.c.l.b16 %v2794
      %v2827 = vunpack.c.l.b16 %v2795
      %v2828 = vunpack.c.l.b16 %v2796
      %v2829 = vunpack.c.l.b16 %v2797
      %v2830 = vunpack.c.l.b16 %v2798
      %v2831 = vunpack.c.l.b16 %v2799
      %v2832 = vunpack.c.l.b16 %v2800
      %v2833 = vunpack.c.l.b16 %v2801
      %v2834 = vunpack.c.l.b16 %v2802
      %v2835 = vunpack.c.l.b16 %v2803
      %v2836 = vunpack.c.l.b16 %v2804
      %v2837 = vunpack.c.l.b16 %v2805
      %v2838 = vpack.c.b16 %v2823, %v2822
      %v2839 = vpack.c.b16 %v2825, %v2824
      %v2840 = vpack.c.b16 %v2827, %v2826
      %v2841 = vpack.c.b16 %v2829, %v2828
      %v2842 = vpack.c.b16 %v2831, %v2830
      %v2843 = vpack.c.b16 %v2833, %v2832
      %v2844 = vpack.c.b16 %v2835, %v2834
      %v2845 = vpack.c.b16 %v2837, %v2836
      %v2847 = vsel %vm525, %v2838, 0
      %v2850 = vsel %vm525, %v2839, 0
      %v2853 = vsel %vm525, %v2840, 0
      %v2856 = vsel %vm525, %v2841, 0
      %v2859 = vsel %vm525, %v2842, 0
      %v2862 = vsel %vm525, %v2843, 0
      %v2865 = vsel %vm525, %v2844, 0
      %v2868 = vsel %vm525, %v2845, 0
      %2870 = vmatprep.subr.bf16.mxu0 0
      %2871 = vmatpush1.bf16.msra.mxu0 %v1412
      %2872 = vmatprep.subr.bf16.mxu0 0
      %2873 = vmatpush1.bf16.msra.mxu0 %v1413
      %2874 = vmatprep.subr.bf16.mxu0 0
      %2875 = vmatpush1.bf16.msra.mxu0 %v1414
      %2876 = vmatprep.subr.bf16.mxu0 0
      %2877 = vmatpush1.bf16.msra.mxu0 %v1415
      %2878 = vmatprep.subr.bf16.mxu0 0
      %2879 = vmatpush1.bf16.msra.mxu0 %v1416
      %2880 = vmatprep.subr.bf16.mxu0 0
      %2881 = vmatpush1.bf16.msra.mxu0 %v1417
      %2882 = vmatprep.subr.bf16.mxu0 0
      %2883 = vmatpush1.bf16.msra.mxu0 0
      %2884 = vmatprep.subr.bf16.mxu0 0
      %2885 = vmatpush1.bf16.msra.mxu0 0
      %2886 = vmatprep.subr.bf16.mxu0 0
      %2887 = vmatpush1.bf16.msra.mxu0 0
      %2888 = vmatprep.subr.bf16.mxu0 0
      %2889 = vmatpush1.bf16.msra.mxu0 0
      %2890 = vmatprep.subr.bf16.mxu0 0
      %2891 = vmatpush1.bf16.msra.mxu0 0
      %2892 = vmatprep.subr.bf16.mxu0 0
      %2893 = vmatpush1.bf16.msra.mxu0 0
      %2894 = vmatprep.subr.bf16.mxu0 0
      %2895 = vmatpush1.bf16.msra.mxu0 0
      %2896 = vmatprep.subr.bf16.mxu0 0
      %2897 = vmatpush1.bf16.msra.mxu0 0
      %2898 = vmatprep.subr.bf16.mxu0 0
      %2899 = vmatpush1.bf16.msra.mxu0 0
      %2900 = vmatprep.subr.bf16.mxu0 0
      %2901 = vmatpush1.bf16.msra.mxu0 0
      %2902 = vmatprep.mubr.bf16.mxu0 0
      %2903 = vmatmul.mubr.bf16.gmra.mrb[0].mxu0 %v2847
      %v2904 = vpop.f32.mrb[0].mxu0
      %v2905 = vadd.f32 0.0, %v2904
      %v2906 = vpop.f32.mrb[0].mxu0
      %v2907 = vpop.f32.mrb[0].mxu0
      %v2908 = vadd.f32 0.0, %v2907
      %v2909 = vpop.f32.mrb[0].mxu0
      %2910 = vmatprep.mubr.bf16.mxu0 0
      %2911 = vmatmul.mubr.bf16.gmra.mrb[0].mxu0 %v2850
      %v2912 = vpop.f32.mrb[0].mxu0
      %v2913 = vadd.f32 0.0, %v2912
      %v2914 = vpop.f32.mrb[0].mxu0
      %v2915 = vpop.f32.mrb[0].mxu0
      %v2916 = vadd.f32 0.0, %v2915
      %v2917 = vpop.f32.mrb[0].mxu0
      %2918 = vmatprep.mubr.bf16.mxu0 0
      %2919 = vmatmul.mubr.bf16.gmra.mrb[0].mxu0 %v2853
      %v2920 = vpop.f32.mrb[0].mxu0
      %v2921 = vadd.f32 0.0, %v2920
      %v2922 = vpop.f32.mrb[0].mxu0
      %v2923 = vpop.f32.mrb[0].mxu0
      %v2924 = vadd.f32 0.0, %v2923
      %v2925 = vpop.f32.mrb[0].mxu0
      %2926 = vmatprep.mubr.bf16.mxu0 0
      %2927 = vmatmul.mubr.bf16.gmra.mrb[0].mxu0 %v2856
      %v2928 = vpop.f32.mrb[0].mxu0
      %v2929 = vadd.f32 0.0, %v2928
      %v2930 = vpop.f32.mrb[0].mxu0
      %v2931 = vpop.f32.mrb[0].mxu0
      %v2932 = vadd.f32 0.0, %v2931
      %v2933 = vpop.f32.mrb[0].mxu0
      %2934 = vmatprep.mubr.bf16.mxu0 0
      %2935 = vmatmul.mubr.bf16.gmra.mrb[0].mxu0 %v2859
      %v2936 = vpop.f32.mrb[0].mxu0
      %v2937 = vadd.f32 0.0, %v2936
      %v2938 = vpop.f32.mrb[0].mxu0
      %v2939 = vpop.f32.mrb[0].mxu0
      %v2940 = vadd.f32 0.0, %v2939
      %v2941 = vpop.f32.mrb[0].mxu0
      %2942 = vmatprep.mubr.bf16.mxu0 0
      %2943 = vmatmul.mubr.bf16.gmra.mrb[0].mxu0 %v2862
      %v2944 = vpop.f32.mrb[0].mxu0
      %v2945 = vadd.f32 0.0, %v2944
      %v2946 = vpop.f32.mrb[0].mxu0
      %v2947 = vpop.f32.mrb[0].mxu0
      %v2948 = vadd.f32 0.0, %v2947
      %v2949 = vpop.f32.mrb[0].mxu0
      %2950 = vmatprep.mubr.bf16.mxu0 0
      %2951 = vmatmul.mubr.bf16.gmra.mrb[0].mxu0 %v2865
      %v2952 = vpop.f32.mrb[0].mxu0
      %v2953 = vadd.f32 0.0, %v2952
      %v2954 = vpop.f32.mrb[0].mxu0
      %v2955 = vpop.f32.mrb[0].mxu0
      %v2956 = vadd.f32 0.0, %v2955
      %v2957 = vpop.f32.mrb[0].mxu0
      %2958 = vmatprep.mubr.bf16.mxu0 0
      %2959 = vmatmul.mubr.bf16.gmra.mrb[0].mxu0 %v2868
      %v2960 = vpop.f32.mrb[0].mxu0
      %v2961 = vpop.f32.mrb[0].mxu0
      %v2962 = vpop.f32.mrb[0].mxu0
      %v2963 = vpop.f32.mrb[0].mxu0
      %2964 = vdwg.mxu0
      %v2965 = vadd.f32 %v2775, %v2905
      %v2966 = vadd.f32 %v2776, %v2908
      %v2967 = vadd.f32 %v2777, %v2913
      %v2968 = vadd.f32 %v2778, %v2916
      %v2969 = vadd.f32 %v2779, %v2921
      %v2970 = vadd.f32 %v2780, %v2924
      %v2971 = vadd.f32 %v2781, %v2929
      %v2972 = vadd.f32 %v2782, %v2932
      %v2973 = vadd.f32 %v2783, %v2937
      %v2974 = vadd.f32 %v2784, %v2940
      %v2975 = vadd.f32 %v2785, %v2945
      %v2976 = vadd.f32 %v2786, %v2948
      %v2977 = vadd.f32 %v2787, %v2953
      %v2978 = vadd.f32 %v2788, %v2956
      %v2979 = vadd.f32 %v2965, %v1561
      %v2980 = vadd.f32 %v2966, %v1561
      %v2981 = vadd.f32 %v2967, %v1561
      %v2982 = vadd.f32 %v2968, %v1561
      %v2983 = vadd.f32 %v2969, %v1561
      %v2984 = vadd.f32 %v2970, %v1561
      %v2985 = vadd.f32 %v2971, %v1561
      %v2986 = vadd.f32 %v2972, %v1561
      %v2987 = vadd.f32 %v2973, %v1561
      %v2988 = vadd.f32 %v2974, %v1561
      %v2989 = vadd.f32 %v2975, %v1561
      %v2990 = vadd.f32 %v2976, %v1561
      %v2991 = vadd.f32 %v2977, %v1561
      %v2992 = vadd.f32 %v2978, %v1561
      %v2993 = vmax.f32 %v2979, 0.0
      %v2994 = vmax.f32 %v2980, 0.0
      %v2995 = vmax.f32 %v2981, 0.0
      %v2996 = vmax.f32 %v2982, 0.0
      %v2997 = vmax.f32 %v2983, 0.0
      %v2998 = vmax.f32 %v2984, 0.0
      %v2999 = vmax.f32 %v2985, 0.0
      %v3000 = vmax.f32 %v2986, 0.0
      %v3001 = vmax.f32 %v2987, 0.0
      %v3002 = vmax.f32 %v2988, 0.0
      %v3003 = vmax.f32 %v2989, 0.0
      %v3004 = vmax.f32 %v2990, 0.0
      %v3005 = vmax.f32 %v2991, 0.0
      %v3006 = vmax.f32 %v2992, 0.0
      %3007 = vmatprep.subr.bf16.mxu0 0
      %3008 = vmatpush1.bf16.msra.mxu0 %v1641
      %3009 = vmatprep.subr.bf16.mxu0 0
      %3010 = vmatpush1.bf16.msra.mxu0 %v1642
      %3011 = vmatprep.subr.bf16.mxu0 0
      %3012 = vmatpush1.bf16.msra.mxu0 %v1643
      %3013 = vmatprep.subr.bf16.mxu0 0
      %3014 = vmatpush1.bf16.msra.mxu0 %v1644
      %3015 = vmatprep.subr.bf16.mxu0 0
      %3016 = vmatpush1.bf16.msra.mxu0 %v1645
      %3017 = vmatprep.subr.bf16.mxu0 0
      %3018 = vmatpush1.bf16.msra.mxu0 %v1646
      %3019 = vmatprep.subr.bf16.mxu0 0
      %3020 = vmatpush1.bf16.msra.mxu0 0
      %3021 = vmatprep.subr.bf16.mxu0 0
      %3022 = vmatpush1.bf16.msra.mxu0 0
      %3023 = vmatprep.subr.bf16.mxu0 0
      %3024 = vmatpush1.bf16.msra.mxu0 0
      %3025 = vmatprep.subr.bf16.mxu0 0
      %3026 = vmatpush1.bf16.msra.mxu0 0
      %3027 = vmatprep.subr.bf16.mxu0 0
      %3028 = vmatpush1.bf16.msra.mxu0 0
      %3029 = vmatprep.subr.bf16.mxu0 0
      %3030 = vmatpush1.bf16.msra.mxu0 0
      %3031 = vmatprep.subr.bf16.mxu0 0
      %3032 = vmatpush1.bf16.msra.mxu0 0
      %3033 = vmatprep.subr.bf16.mxu0 0
      %3034 = vmatpush1.bf16.msra.mxu0 0
      %3035 = vmatprep.subr.bf16.mxu0 0
      %3036 = vmatpush1.bf16.msra.mxu0 0
      %3037 = vmatprep.subr.bf16.mxu0 0
      %3038 = vmatpush1.bf16.msra.mxu0 0
      %3039 = vmatprep.mubr.bf16.mxu0 0
      %3040 = vmatmul.mubr.bf16.gmra.mrb[0].mxu0 %v947
      %v3041 = vpop.f32.mrb[0].mxu0
      %v3042 = vadd.f32 0.0, %v3041
      %v3043 = vpop.f32.mrb[0].mxu0
      %v3044 = vpop.f32.mrb[0].mxu0
      %v3045 = vadd.f32 0.0, %v3044
      %v3046 = vpop.f32.mrb[0].mxu0
      %3047 = vmatprep.mubr.bf16.mxu0 0
      %3048 = vmatmul.mubr.bf16.gmra.mrb[0].mxu0 %v950
      %v3049 = vpop.f32.mrb[0].mxu0
      %v3050 = vadd.f32 0.0, %v3049
      %v3051 = vpop.f32.mrb[0].mxu0
      %v3052 = vpop.f32.mrb[0].mxu0
      %v3053 = vadd.f32 0.0, %v3052
      %v3054 = vpop.f32.mrb[0].mxu0
      %3055 = vmatprep.mubr.bf16.mxu0 0
      %3056 = vmatmul.mubr.bf16.gmra.mrb[0].mxu0 %v953
      %v3057 = vpop.f32.mrb[0].mxu0
      %v3058 = vadd.f32 0.0, %v3057
      %v3059 = vpop.f32.mrb[0].mxu0
      %v3060 = vpop.f32.mrb[0].mxu0
      %v3061 = vadd.f32 0.0, %v3060
      %v3062 = vpop.f32.mrb[0].mxu0
      %3063 = vmatprep.mubr.bf16.mxu0 0
      %3064 = vmatmul.mubr.bf16.gmra.mrb[0].mxu0 %v956
      %v3065 = vpop.f32.mrb[0].mxu0
      %v3066 = vadd.f32 0.0, %v3065
      %v3067 = vpop.f32.mrb[0].mxu0
      %v3068 = vpop.f32.mrb[0].mxu0
      %v3069 = vadd.f32 0.0, %v3068
      %v3070 = vpop.f32.mrb[0].mxu0
      %3071 = vmatprep.mubr.bf16.mxu0 0
      %3072 = vmatmul.mubr.bf16.gmra.mrb[0].mxu0 %v959
      %v3073 = vpop.f32.mrb[0].mxu0
      %v3074 = vadd.f32 0.0, %v3073
      %v3075 = vpop.f32.mrb[0].mxu0
      %v3076 = vpop.f32.mrb[0].mxu0
      %v3077 = vadd.f32 0.0, %v3076
      %v3078 = vpop.f32.mrb[0].mxu0
      %3079 = vmatprep.mubr.bf16.mxu0 0
      %3080 = vmatmul.mubr.bf16.gmra.mrb[0].mxu0 %v962
      %v3081 = vpop.f32.mrb[0].mxu0
      %v3082 = vadd.f32 0.0, %v3081
      %v3083 = vpop.f32.mrb[0].mxu0
      %v3084 = vpop.f32.mrb[0].mxu0
      %v3085 = vadd.f32 0.0, %v3084
      %v3086 = vpop.f32.mrb[0].mxu0
      %3087 = vmatprep.mubr.bf16.mxu0 0
      %3088 = vmatmul.mubr.bf16.gmra.mrb[0].mxu0 %v965
      %v3089 = vpop.f32.mrb[0].mxu0
      %v3090 = vadd.f32 0.0, %v3089
      %v3091 = vpop.f32.mrb[0].mxu0
      %v3092 = vpop.f32.mrb[0].mxu0
      %v3093 = vadd.f32 0.0, %v3092
      %v3094 = vpop.f32.mrb[0].mxu0
      %3095 = vmatprep.mubr.bf16.mxu0 0
      %3096 = vmatmul.mubr.bf16.gmra.mrb[0].mxu0 %v968
      %v3097 = vpop.f32.mrb[0].mxu0
      %v3098 = vpop.f32.mrb[0].mxu0
      %v3099 = vpop.f32.mrb[0].mxu0
      %v3100 = vpop.f32.mrb[0].mxu0
      %3101 = vdwg.mxu0
      %3102 = vmatprep.subr.bf16.mxu0 0
      %3103 = vmatpush1.bf16.msra.mxu0 %v1772
      %3104 = vmatprep.subr.bf16.mxu0 0
      %3105 = vmatpush1.bf16.msra.mxu0 %v1773
      %3106 = vmatprep.subr.bf16.mxu0 0
      %3107 = vmatpush1.bf16.msra.mxu0 %v1774
      %3108 = vmatprep.subr.bf16.mxu0 0
      %3109 = vmatpush1.bf16.msra.mxu0 %v1775
      %3110 = vmatprep.subr.bf16.mxu0 0
      %3111 = vmatpush1.bf16.msra.mxu0 %v1776
      %3112 = vmatprep.subr.bf16.mxu0 0
      %3113 = vmatpush1.bf16.msra.mxu0 %v1777
      %3114 = vmatprep.subr.bf16.mxu0 0
      %3115 = vmatpush1.bf16.msra.mxu0 0
      %3116 = vmatprep.subr.bf16.mxu0 0
      %3117 = vmatpush1.bf16.msra.mxu0 0
      %3118 = vmatprep.subr.bf16.mxu0 0
      %3119 = vmatpush1.bf16.msra.mxu0 0
      %3120 = vmatprep.subr.bf16.mxu0 0
      %3121 = vmatpush1.bf16.msra.mxu0 0
      %3122 = vmatprep.subr.bf16.mxu0 0
      %3123 = vmatpush1.bf16.msra.mxu0 0
      %3124 = vmatprep.subr.bf16.mxu0 0
      %3125 = vmatpush1.bf16.msra.mxu0 0
      %3126 = vmatprep.subr.bf16.mxu0 0
      %3127 = vmatpush1.bf16.msra.mxu0 0
      %3128 = vmatprep.subr.bf16.mxu0 0
      %3129 = vmatpush1.bf16.msra.mxu0 0
      %3130 = vmatprep.subr.bf16.mxu0 0
      %3131 = vmatpush1.bf16.msra.mxu0 0
      %3132 = vmatprep.subr.bf16.mxu0 0
      %3133 = vmatpush1.bf16.msra.mxu0 0
      %3134 = vmatprep.mubr.bf16.mxu0 0
      %3135 = vmatmul.mubr.bf16.gmra.mrb[0].mxu0 %v527
      %v3136 = vpop.f32.mrb[0].mxu0
      %v3137 = vadd.f32 %v3042, %v3136
      %v3138 = vpop.f32.mrb[0].mxu0
      %v3139 = vpop.f32.mrb[0].mxu0
      %v3140 = vadd.f32 %v3045, %v3139
      %v3141 = vpop.f32.mrb[0].mxu0
      %3142 = vmatprep.mubr.bf16.mxu0 0
      %3143 = vmatmul.mubr.bf16.gmra.mrb[0].mxu0 %v530
      %v3144 = vpop.f32.mrb[0].mxu0
      %v3145 = vadd.f32 %v3050, %v3144
      %v3146 = vpop.f32.mrb[0].mxu0
      %v3147 = vpop.f32.mrb[0].mxu0
      %v3148 = vadd.f32 %v3053, %v3147
      %v3149 = vpop.f32.mrb[0].mxu0
      %3150 = vmatprep.mubr.bf16.mxu0 0
      %3151 = vmatmul.mubr.bf16.gmra.mrb[0].mxu0 %v533
      %v3152 = vpop.f32.mrb[0].mxu0
      %v3153 = vadd.f32 %v3058, %v3152
      %v3154 = vpop.f32.mrb[0].mxu0
      %v3155 = vpop.f32.mrb[0].mxu0
      %v3156 = vadd.f32 %v3061, %v3155
      %v3157 = vpop.f32.mrb[0].mxu0
      %3158 = vmatprep.mubr.bf16.mxu0 0
      %3159 = vmatmul.mubr.bf16.gmra.mrb[0].mxu0 %v536
      %v3160 = vpop.f32.mrb[0].mxu0
      %v3161 = vadd.f32 %v3066, %v3160
      %v3162 = vpop.f32.mrb[0].mxu0
      %v3163 = vpop.f32.mrb[0].mxu0
      %v3164 = vadd.f32 %v3069, %v3163
      %v3165 = vpop.f32.mrb[0].mxu0
      %3166 = vmatprep.mubr.bf16.mxu0 0
      %3167 = vmatmul.mubr.bf16.gmra.mrb[0].mxu0 %v539
      %v3168 = vpop.f32.mrb[0].mxu0
      %v3169 = vadd.f32 %v3074, %v3168
      %v3170 = vpop.f32.mrb[0].mxu0
      %v3171 = vpop.f32.mrb[0].mxu0
      %v3172 = vadd.f32 %v3077, %v3171
      %v3173 = vpop.f32.mrb[0].mxu0
      %3174 = vmatprep.mubr.bf16.mxu0 0
      %3175 = vmatmul.mubr.bf16.gmra.mrb[0].mxu0 %v542
      %v3176 = vpop.f32.mrb[0].mxu0
      %v3177 = vadd.f32 %v3082, %v3176
      %v3178 = vpop.f32.mrb[0].mxu0
      %v3179 = vpop.f32.mrb[0].mxu0
      %v3180 = vadd.f32 %v3085, %v3179
      %v3181 = vpop.f32.mrb[0].mxu0
      %3182 = vmatprep.mubr.bf16.mxu0 0
      %3183 = vmatmul.mubr.bf16.gmra.mrb[0].mxu0 %v545
      %v3184 = vpop.f32.mrb[0].mxu0
      %v3185 = vadd.f32 %v3090, %v3184
      %v3186 = vpop.f32.mrb[0].mxu0
      %v3187 = vpop.f32.mrb[0].mxu0
      %v3188 = vadd.f32 %v3093, %v3187
      %v3189 = vpop.f32.mrb[0].mxu0
      %3190 = vmatprep.mubr.bf16.mxu0 0
      %3191 = vmatmul.mubr.bf16.gmra.mrb[0].mxu0 %v548
      %v3192 = vpop.f32.mrb[0].mxu0
      %v3193 = vpop.f32.mrb[0].mxu0
      %v3194 = vpop.f32.mrb[0].mxu0
      %v3195 = vpop.f32.mrb[0].mxu0
      %3196 = vdwg.mxu0
      %3197 = vmatprep.subr.bf16.mxu0 0
      %3198 = vmatpush1.bf16.msra.mxu0 %v1916
      %3199 = vmatprep.subr.bf16.mxu0 0
      %3200 = vmatpush1.bf16.msra.mxu0 %v1917
      %3201 = vmatprep.subr.bf16.mxu0 0
      %3202 = vmatpush1.bf16.msra.mxu0 %v1918
      %3203 = vmatprep.subr.bf16.mxu0 0
      %3204 = vmatpush1.bf16.msra.mxu0 %v1919
      %3205 = vmatprep.subr.bf16.mxu0 0
      %3206 = vmatpush1.bf16.msra.mxu0 %v1920
      %3207 = vmatprep.subr.bf16.mxu0 0
      %3208 = vmatpush1.bf16.msra.mxu0 %v1921
      %3209 = vmatprep.subr.bf16.mxu0 0
      %3210 = vmatpush1.bf16.msra.mxu0 0
      %3211 = vmatprep.subr.bf16.mxu0 0
      %3212 = vmatpush1.bf16.msra.mxu0 0
      %3213 = vmatprep.subr.bf16.mxu0 0
      %3214 = vmatpush1.bf16.msra.mxu0 0
      %3215 = vmatprep.subr.bf16.mxu0 0
      %3216 = vmatpush1.bf16.msra.mxu0 0
      %3217 = vmatprep.subr.bf16.mxu0 0
      %3218 = vmatpush1.bf16.msra.mxu0 0
      %3219 = vmatprep.subr.bf16.mxu0 0
      %3220 = vmatpush1.bf16.msra.mxu0 0
      %3221 = vmatprep.subr.bf16.mxu0 0
      %3222 = vmatpush1.bf16.msra.mxu0 0
      %3223 = vmatprep.subr.bf16.mxu0 0
      %3224 = vmatpush1.bf16.msra.mxu0 0
      %3225 = vmatprep.subr.bf16.mxu0 0
      %3226 = vmatpush1.bf16.msra.mxu0 0
      %3227 = vmatprep.subr.bf16.mxu0 0
      %3228 = vmatpush1.bf16.msra.mxu0 0
      %3229 = vmatprep.mubr.bf16.mxu0 0
      %3230 = vmatmul.mubr.bf16.gmra.mrb[0].mxu0 %v1186
      %v3231 = vpop.f32.mrb[0].mxu0
      %v3232 = vadd.f32 0.0, %v3231
      %v3233 = vpop.f32.mrb[0].mxu0
      %v3234 = vpop.f32.mrb[0].mxu0
      %v3235 = vadd.f32 0.0, %v3234
      %v3236 = vpop.f32.mrb[0].mxu0
      %3237 = vmatprep.mubr.bf16.mxu0 0
      %3238 = vmatmul.mubr.bf16.gmra.mrb[0].mxu0 %v1189
      %v3239 = vpop.f32.mrb[0].mxu0
      %v3240 = vadd.f32 0.0, %v3239
      %v3241 = vpop.f32.mrb[0].mxu0
      %v3242 = vpop.f32.mrb[0].mxu0
      %v3243 = vadd.f32 0.0, %v3242
      %v3244 = vpop.f32.mrb[0].mxu0
      %3245 = vmatprep.mubr.bf16.mxu0 0
      %3246 = vmatmul.mubr.bf16.gmra.mrb[0].mxu0 %v1192
      %v3247 = vpop.f32.mrb[0].mxu0
      %v3248 = vadd.f32 0.0, %v3247
      %v3249 = vpop.f32.mrb[0].mxu0
      %v3250 = vpop.f32.mrb[0].mxu0
      %v3251 = vadd.f32 0.0, %v3250
      %v3252 = vpop.f32.mrb[0].mxu0
      %3253 = vmatprep.mubr.bf16.mxu0 0
      %3254 = vmatmul.mubr.bf16.gmra.mrb[0].mxu0 %v1195
      %v3255 = vpop.f32.mrb[0].mxu0
      %v3256 = vadd.f32 0.0, %v3255
      %v3257 = vpop.f32.mrb[0].mxu0
      %v3258 = vpop.f32.mrb[0].mxu0
      %v3259 = vadd.f32 0.0, %v3258
      %v3260 = vpop.f32.mrb[0].mxu0
      %3261 = vmatprep.mubr.bf16.mxu0 0
      %3262 = vmatmul.mubr.bf16.gmra.mrb[0].mxu0 %v1198
      %v3263 = vpop.f32.mrb[0].mxu0
      %v3264 = vadd.f32 0.0, %v3263
      %v3265 = vpop.f32.mrb[0].mxu0
      %v3266 = vpop.f32.mrb[0].mxu0
      %v3267 = vadd.f32 0.0, %v3266
      %v3268 = vpop.f32.mrb[0].mxu0
      %3269 = vmatprep.mubr.bf16.mxu0 0
      %3270 = vmatmul.mubr.bf16.gmra.mrb[0].mxu0 %v1201
      %v3271 = vpop.f32.mrb[0].mxu0
      %v3272 = vadd.f32 0.0, %v3271
      %v3273 = vpop.f32.mrb[0].mxu0
      %v3274 = vpop.f32.mrb[0].mxu0
      %v3275 = vadd.f32 0.0, %v3274
      %v3276 = vpop.f32.mrb[0].mxu0
      %3277 = vmatprep.mubr.bf16.mxu0 0
      %3278 = vmatmul.mubr.bf16.gmra.mrb[0].mxu0 %v1204
      %v3279 = vpop.f32.mrb[0].mxu0
      %v3280 = vadd.f32 0.0, %v3279
      %v3281 = vpop.f32.mrb[0].mxu0
      %v3282 = vpop.f32.mrb[0].mxu0
      %v3283 = vadd.f32 0.0, %v3282
      %v3284 = vpop.f32.mrb[0].mxu0
      %3285 = vmatprep.mubr.bf16.mxu0 0
      %3286 = vmatmul.mubr.bf16.gmra.mrb[0].mxu0 %v1207
      %v3287 = vpop.f32.mrb[0].mxu0
      %v3288 = vpop.f32.mrb[0].mxu0
      %v3289 = vpop.f32.mrb[0].mxu0
      %v3290 = vpop.f32.mrb[0].mxu0
      %3291 = vdwg.mxu0
      %v3292 = vadd.f32 %v3137, %v3232
      %v3293 = vadd.f32 %v3140, %v3235
      %v3294 = vadd.f32 %v3145, %v3240
      %v3295 = vadd.f32 %v3148, %v3243
      %v3296 = vadd.f32 %v3153, %v3248
      %v3297 = vadd.f32 %v3156, %v3251
      %v3298 = vadd.f32 %v3161, %v3256
      %v3299 = vadd.f32 %v3164, %v3259
      %v3300 = vadd.f32 %v3169, %v3264
      %v3301 = vadd.f32 %v3172, %v3267
      %v3302 = vadd.f32 %v3177, %v3272
      %v3303 = vadd.f32 %v3180, %v3275
      %v3304 = vadd.f32 %v3185, %v3280
      %v3305 = vadd.f32 %v3188, %v3283
      %3306 = vmatprep.subr.bf16.mxu0 0
      %3307 = vmatpush1.bf16.msra.mxu0 %v2074
      %3308 = vmatprep.subr.bf16.mxu0 0
      %3309 = vmatpush1.bf16.msra.mxu0 %v2075
      %3310 = vmatprep.subr.bf16.mxu0 0
      %3311 = vmatpush1.bf16.msra.mxu0 %v2076
      %3312 = vmatprep.subr.bf16.mxu0 0
      %3313 = vmatpush1.bf16.msra.mxu0 %v2077
      %3314 = vmatprep.subr.bf16.mxu0 0
      %3315 = vmatpush1.bf16.msra.mxu0 %v2078
      %3316 = vmatprep.subr.bf16.mxu0 0
      %3317 = vmatpush1.bf16.msra.mxu0 %v2079
      %3318 = vmatprep.subr.bf16.mxu0 0
      %3319 = vmatpush1.bf16.msra.mxu0 0
      %3320 = vmatprep.subr.bf16.mxu0 0
      %3321 = vmatpush1.bf16.msra.mxu0 0
      %3322 = vmatprep.subr.bf16.mxu0 0
      %3323 = vmatpush1.bf16.msra.mxu0 0
      %3324 = vmatprep.subr.bf16.mxu0 0
      %3325 = vmatpush1.bf16.msra.mxu0 0
      %3326 = vmatprep.subr.bf16.mxu0 0
      %3327 = vmatpush1.bf16.msra.mxu0 0
      %3328 = vmatprep.subr.bf16.mxu0 0
      %3329 = vmatpush1.bf16.msra.mxu0 0
      %3330 = vmatprep.subr.bf16.mxu0 0
      %3331 = vmatpush1.bf16.msra.mxu0 0
      %3332 = vmatprep.subr.bf16.mxu0 0
      %3333 = vmatpush1.bf16.msra.mxu0 0
      %3334 = vmatprep.subr.bf16.mxu0 0
      %3335 = vmatpush1.bf16.msra.mxu0 0
      %3336 = vmatprep.subr.bf16.mxu0 0
      %3337 = vmatpush1.bf16.msra.mxu0 0
      %3338 = vmatprep.mubr.bf16.mxu0 0
      %3339 = vmatmul.mubr.bf16.gmra.mrb[0].mxu0 %v1425
      %v3340 = vpop.f32.mrb[0].mxu0
      %v3341 = vadd.f32 0.0, %v3340
      %v3342 = vpop.f32.mrb[0].mxu0
      %v3343 = vpop.f32.mrb[0].mxu0
      %v3344 = vadd.f32 0.0, %v3343
      %v3345 = vpop.f32.mrb[0].mxu0
      %3346 = vmatprep.mubr.bf16.mxu0 0
      %3347 = vmatmul.mubr.bf16.gmra.mrb[0].mxu0 %v1428
      %v3348 = vpop.f32.mrb[0].mxu0
      %v3349 = vadd.f32 0.0, %v3348
      %v3350 = vpop.f32.mrb[0].mxu0
      %v3351 = vpop.f32.mrb[0].mxu0
      %v3352 = vadd.f32 0.0, %v3351
      %v3353 = vpop.f32.mrb[0].mxu0
      %3354 = vmatprep.mubr.bf16.mxu0 0
      %3355 = vmatmul.mubr.bf16.gmra.mrb[0].mxu0 %v1431
      %v3356 = vpop.f32.mrb[0].mxu0
      %v3357 = vadd.f32 0.0, %v3356
      %v3358 = vpop.f32.mrb[0].mxu0
      %v3359 = vpop.f32.mrb[0].mxu0
      %v3360 = vadd.f32 0.0, %v3359
      %v3361 = vpop.f32.mrb[0].mxu0
      %3362 = vmatprep.mubr.bf16.mxu0 0
      %3363 = vmatmul.mubr.bf16.gmra.mrb[0].mxu0 %v1434
      %v3364 = vpop.f32.mrb[0].mxu0
      %v3365 = vadd.f32 0.0, %v3364
      %v3366 = vpop.f32.mrb[0].mxu0
      %v3367 = vpop.f32.mrb[0].mxu0
      %v3368 = vadd.f32 0.0, %v3367
      %v3369 = vpop.f32.mrb[0].mxu0
      %3370 = vmatprep.mubr.bf16.mxu0 0
      %3371 = vmatmul.mubr.bf16.gmra.mrb[0].mxu0 %v1437
      %v3372 = vpop.f32.mrb[0].mxu0
      %v3373 = vadd.f32 0.0, %v3372
      %v3374 = vpop.f32.mrb[0].mxu0
      %v3375 = vpop.f32.mrb[0].mxu0
      %v3376 = vadd.f32 0.0, %v3375
      %v3377 = vpop.f32.mrb[0].mxu0
      %3378 = vmatprep.mubr.bf16.mxu0 0
      %3379 = vmatmul.mubr.bf16.gmra.mrb[0].mxu0 %v1440
      %v3380 = vpop.f32.mrb[0].mxu0
      %v3381 = vadd.f32 0.0, %v3380
      %v3382 = vpop.f32.mrb[0].mxu0
      %v3383 = vpop.f32.mrb[0].mxu0
      %v3384 = vadd.f32 0.0, %v3383
      %v3385 = vpop.f32.mrb[0].mxu0
      %3386 = vmatprep.mubr.bf16.mxu0 0
      %3387 = vmatmul.mubr.bf16.gmra.mrb[0].mxu0 %v1443
      %v3388 = vpop.f32.mrb[0].mxu0
      %v3389 = vadd.f32 0.0, %v3388
      %v3390 = vpop.f32.mrb[0].mxu0
      %v3391 = vpop.f32.mrb[0].mxu0
      %v3392 = vadd.f32 0.0, %v3391
      %v3393 = vpop.f32.mrb[0].mxu0
      %3394 = vmatprep.mubr.bf16.mxu0 0
      %3395 = vmatmul.mubr.bf16.gmra.mrb[0].mxu0 %v1446
      %v3396 = vpop.f32.mrb[0].mxu0
      %v3397 = vpop.f32.mrb[0].mxu0
      %v3398 = vpop.f32.mrb[0].mxu0
      %v3399 = vpop.f32.mrb[0].mxu0
      %3400 = vdwg.mxu0
      %v3401 = vadd.f32 %v3292, %v3341
      %v3402 = vadd.f32 %v3293, %v3344
      %v3403 = vadd.f32 %v3294, %v3349
      %v3404 = vadd.f32 %v3295, %v3352
      %v3405 = vadd.f32 %v3296, %v3357
      %v3406 = vadd.f32 %v3297, %v3360
      %v3407 = vadd.f32 %v3298, %v3365
      %v3408 = vadd.f32 %v3299, %v3368
      %v3409 = vadd.f32 %v3300, %v3373
      %v3410 = vadd.f32 %v3301, %v3376
      %v3411 = vadd.f32 %v3302, %v3381
      %v3412 = vadd.f32 %v3303, %v3384
      %v3413 = vadd.f32 %v3304, %v3389
      %v3414 = vadd.f32 %v3305, %v3392
      %3415 = vmatprep.subr.bf16.mxu0 0
      %3416 = vmatpush1.bf16.msra.mxu0 %v2232
      %3417 = vmatprep.subr.bf16.mxu0 0
      %3418 = vmatpush1.bf16.msra.mxu0 %v2233
      %3419 = vmatprep.subr.bf16.mxu0 0
      %3420 = vmatpush1.bf16.msra.mxu0 %v2234
      %3421 = vmatprep.subr.bf16.mxu0 0
      %3422 = vmatpush1.bf16.msra.mxu0 %v2235
      %3423 = vmatprep.subr.bf16.mxu0 0
      %3424 = vmatpush1.bf16.msra.mxu0 %v2236
      %3425 = vmatprep.subr.bf16.mxu0 0
      %3426 = vmatpush1.bf16.msra.mxu0 %v2237
      %3427 = vmatprep.subr.bf16.mxu0 0
      %3428 = vmatpush1.bf16.msra.mxu0 0
      %3429 = vmatprep.subr.bf16.mxu0 0
      %3430 = vmatpush1.bf16.msra.mxu0 0
      %3431 = vmatprep.subr.bf16.mxu0 0
      %3432 = vmatpush1.bf16.msra.mxu0 0
      %3433 = vmatprep.subr.bf16.mxu0 0
      %3434 = vmatpush1.bf16.msra.mxu0 0
      %3435 = vmatprep.subr.bf16.mxu0 0
      %3436 = vmatpush1.bf16.msra.mxu0 0
      %3437 = vmatprep.subr.bf16.mxu0 0
      %3438 = vmatpush1.bf16.msra.mxu0 0
      %3439 = vmatprep.subr.bf16.mxu0 0
      %3440 = vmatpush1.bf16.msra.mxu0 0
      %3441 = vmatprep.subr.bf16.mxu0 0
      %3442 = vmatpush1.bf16.msra.mxu0 0
      %3443 = vmatprep.subr.bf16.mxu0 0
      %3444 = vmatpush1.bf16.msra.mxu0 0
      %3445 = vmatprep.subr.bf16.mxu0 0
      %3446 = vmatpush1.bf16.msra.mxu0 0
      %3447 = vmatprep.mubr.bf16.mxu0 0
      %3448 = vmatmul.mubr.bf16.gmra.mrb[0].mxu0 %v2847
      %v3449 = vpop.f32.mrb[0].mxu0
      %v3450 = vadd.f32 0.0, %v3449
      %v3451 = vpop.f32.mrb[0].mxu0
      %v3452 = vpop.f32.mrb[0].mxu0
      %v3453 = vadd.f32 0.0, %v3452
      %v3454 = vpop.f32.mrb[0].mxu0
      %3455 = vmatprep.mubr.bf16.mxu0 0
      %3456 = vmatmul.mubr.bf16.gmra.mrb[0].mxu0 %v2850
      %v3457 = vpop.f32.mrb[0].mxu0
      %v3458 = vadd.f32 0.0, %v3457
      %v3459 = vpop.f32.mrb[0].mxu0
      %v3460 = vpop.f32.mrb[0].mxu0
      %v3461 = vadd.f32 0.0, %v3460
      %v3462 = vpop.f32.mrb[0].mxu0
      %3463 = vmatprep.mubr.bf16.mxu0 0
      %3464 = vmatmul.mubr.bf16.gmra.mrb[0].mxu0 %v2853
      %v3465 = vpop.f32.mrb[0].mxu0
      %v3466 = vadd.f32 0.0, %v3465
      %v3467 = vpop.f32.mrb[0].mxu0
      %v3468 = vpop.f32.mrb[0].mxu0
      %v3469 = vadd.f32 0.0, %v3468
      %v3470 = vpop.f32.mrb[0].mxu0
      %3471 = vmatprep.mubr.bf16.mxu0 0
      %3472 = vmatmul.mubr.bf16.gmra.mrb[0].mxu0 %v2856
      %v3473 = vpop.f32.mrb[0].mxu0
      %v3474 = vadd.f32 0.0, %v3473
      %v3475 = vpop.f32.mrb[0].mxu0
      %v3476 = vpop.f32.mrb[0].mxu0
      %v3477 = vadd.f32 0.0, %v3476
      %v3478 = vpop.f32.mrb[0].mxu0
      %3479 = vmatprep.mubr.bf16.mxu0 0
      %3480 = vmatmul.mubr.bf16.gmra.mrb[0].mxu0 %v2859
      %v3481 = vpop.f32.mrb[0].mxu0
      %v3482 = vadd.f32 0.0, %v3481
      %v3483 = vpop.f32.mrb[0].mxu0
      %v3484 = vpop.f32.mrb[0].mxu0
      %v3485 = vadd.f32 0.0, %v3484
      %v3486 = vpop.f32.mrb[0].mxu0
      %3487 = vmatprep.mubr.bf16.mxu0 0
      %3488 = vmatmul.mubr.bf16.gmra.mrb[0].mxu0 %v2862
      %v3489 = vpop.f32.mrb[0].mxu0
      %v3490 = vadd.f32 0.0, %v3489
      %v3491 = vpop.f32.mrb[0].mxu0
      %v3492 = vpop.f32.mrb[0].mxu0
      %v3493 = vadd.f32 0.0, %v3492
      %v3494 = vpop.f32.mrb[0].mxu0
      %3495 = vmatprep.mubr.bf16.mxu0 0
      %3496 = vmatmul.mubr.bf16.gmra.mrb[0].mxu0 %v2865
      %v3497 = vpop.f32.mrb[0].mxu0
      %v3498 = vadd.f32 0.0, %v3497
      %v3499 = vpop.f32.mrb[0].mxu0
      %v3500 = vpop.f32.mrb[0].mxu0
      %v3501 = vadd.f32 0.0, %v3500
      %v3502 = vpop.f32.mrb[0].mxu0
      %3503 = vmatprep.mubr.bf16.mxu0 0
      %3504 = vmatmul.mubr.bf16.gmra.mrb[0].mxu0 %v2868
      %v3505 = vpop.f32.mrb[0].mxu0
      %v3506 = vpop.f32.mrb[0].mxu0
      %v3507 = vpop.f32.mrb[0].mxu0
      %v3508 = vpop.f32.mrb[0].mxu0
      %3509 = vdwg.mxu0
      %v3510 = vadd.f32 %v3401, %v3450
      %v3511 = vadd.f32 %v3402, %v3453
      %v3512 = vadd.f32 %v3403, %v3458
      %v3513 = vadd.f32 %v3404, %v3461
      %v3514 = vadd.f32 %v3405, %v3466
      %v3515 = vadd.f32 %v3406, %v3469
      %v3516 = vadd.f32 %v3407, %v3474
      %v3517 = vadd.f32 %v3408, %v3477
      %v3518 = vadd.f32 %v3409, %v3482
      %v3519 = vadd.f32 %v3410, %v3485
      %v3520 = vadd.f32 %v3411, %v3490
      %v3521 = vadd.f32 %v3412, %v3493
      %v3522 = vadd.f32 %v3413, %v3498
      %v3523 = vadd.f32 %v3414, %v3501
      %v3524 = vadd.f32 %v3510, %v1561
      %v3525 = vadd.f32 %v3511, %v1561
      %v3526 = vadd.f32 %v3512, %v1561
      %v3527 = vadd.f32 %v3513, %v1561
      %v3528 = vadd.f32 %v3514, %v1561
      %v3529 = vadd.f32 %v3515, %v1561
      %v3530 = vadd.f32 %v3516, %v1561
      %v3531 = vadd.f32 %v3517, %v1561
      %v3532 = vadd.f32 %v3518, %v1561
      %v3533 = vadd.f32 %v3519, %v1561
      %v3534 = vadd.f32 %v3520, %v1561
      %v3535 = vadd.f32 %v3521, %v1561
      %v3536 = vadd.f32 %v3522, %v1561
      %v3537 = vadd.f32 %v3523, %v1561
      %v3538 = vmax.f32 %v3524, 0.0
      %v3539 = vmax.f32 %v3525, 0.0
      %v3540 = vmax.f32 %v3526, 0.0
      %v3541 = vmax.f32 %v3527, 0.0
      %v3542 = vmax.f32 %v3528, 0.0
      %v3543 = vmax.f32 %v3529, 0.0
      %v3544 = vmax.f32 %v3530, 0.0
      %v3545 = vmax.f32 %v3531, 0.0
      %v3546 = vmax.f32 %v3532, 0.0
      %v3547 = vmax.f32 %v3533, 0.0
      %v3548 = vmax.f32 %v3534, 0.0
      %v3549 = vmax.f32 %v3535, 0.0
      %v3550 = vmax.f32 %v3536, 0.0
      %v3551 = vmax.f32 %v3537, 0.0
      %3552 = vmatprep.subr.bf16.mxu0 0
      %3553 = vmatpush1.bf16.msra.mxu0 %v513
      %3554 = vmatprep.subr.bf16.mxu0 0
      %3555 = vmatpush1.bf16.msra.mxu0 %v514
      %3556 = vmatprep.subr.bf16.mxu0 0
      %3557 = vmatpush1.bf16.msra.mxu0 %v515
      %3558 = vmatprep.subr.bf16.mxu0 0
      %3559 = vmatpush1.bf16.msra.mxu0 %v516
      %3560 = vmatprep.subr.bf16.mxu0 0
      %3561 = vmatpush1.bf16.msra.mxu0 %v517
      %3562 = vmatprep.subr.bf16.mxu0 0
      %3563 = vmatpush1.bf16.msra.mxu0 %v518
      %3564 = vmatprep.subr.bf16.mxu0 0
      %3565 = vmatpush1.bf16.msra.mxu0 0
      %3566 = vmatprep.subr.bf16.mxu0 0
      %3567 = vmatpush1.bf16.msra.mxu0 0
      %3568 = vmatprep.subr.bf16.mxu0 0
      %3569 = vmatpush1.bf16.msra.mxu0 0
      %3570 = vmatprep.subr.bf16.mxu0 0
      %3571 = vmatpush1.bf16.msra.mxu0 0
      %3572 = vmatprep.subr.bf16.mxu0 0
      %3573 = vmatpush1.bf16.msra.mxu0 0
      %3574 = vmatprep.subr.bf16.mxu0 0
      %3575 = vmatpush1.bf16.msra.mxu0 0
      %3576 = vmatprep.subr.bf16.mxu0 0
      %3577 = vmatpush1.bf16.msra.mxu0 0
      %3578 = vmatprep.subr.bf16.mxu0 0
      %3579 = vmatpush1.bf16.msra.mxu0 0
      %3580 = vmatprep.subr.bf16.mxu0 0
      %3581 = vmatpush1.bf16.msra.mxu0 0
      %3582 = vmatprep.subr.bf16.mxu0 0
      %3583 = vmatpush1.bf16.msra.mxu0 0
      %3584 = vmatprep.mubr.bf16.mxu0 0
      %3585 = vmatmul.mubr.bf16.gmra.mrb[0].mxu0 %v1186
      %v3586 = vpop.f32.mrb[0].mxu0
      %v3587 = vadd.f32 0.0, %v3586
      %v3588 = vpop.f32.mrb[0].mxu0
      %v3589 = vpop.f32.mrb[0].mxu0
      %v3590 = vadd.f32 0.0, %v3589
      %v3591 = vpop.f32.mrb[0].mxu0
      %3592 = vmatprep.mubr.bf16.mxu0 0
      %3593 = vmatmul.mubr.bf16.gmra.mrb[0].mxu0 %v1189
      %v3594 = vpop.f32.mrb[0].mxu0
      %v3595 = vadd.f32 0.0, %v3594
      %v3596 = vpop.f32.mrb[0].mxu0
      %v3597 = vpop.f32.mrb[0].mxu0
      %v3598 = vadd.f32 0.0, %v3597
      %v3599 = vpop.f32.mrb[0].mxu0
      %3600 = vmatprep.mubr.bf16.mxu0 0
      %3601 = vmatmul.mubr.bf16.gmra.mrb[0].mxu0 %v1192
      %v3602 = vpop.f32.mrb[0].mxu0
      %v3603 = vadd.f32 0.0, %v3602
      %v3604 = vpop.f32.mrb[0].mxu0
      %v3605 = vpop.f32.mrb[0].mxu0
      %v3606 = vadd.f32 0.0, %v3605
      %v3607 = vpop.f32.mrb[0].mxu0
      %3608 = vmatprep.mubr.bf16.mxu0 0
      %3609 = vmatmul.mubr.bf16.gmra.mrb[0].mxu0 %v1195
      %v3610 = vpop.f32.mrb[0].mxu0
      %v3611 = vadd.f32 0.0, %v3610
      %v3612 = vpop.f32.mrb[0].mxu0
      %v3613 = vpop.f32.mrb[0].mxu0
      %v3614 = vadd.f32 0.0, %v3613
      %v3615 = vpop.f32.mrb[0].mxu0
      %3616 = vmatprep.mubr.bf16.mxu0 0
      %3617 = vmatmul.mubr.bf16.gmra.mrb[0].mxu0 %v1198
      %v3618 = vpop.f32.mrb[0].mxu0
      %v3619 = vadd.f32 0.0, %v3618
      %v3620 = vpop.f32.mrb[0].mxu0
      %v3621 = vpop.f32.mrb[0].mxu0
      %v3622 = vadd.f32 0.0, %v3621
      %v3623 = vpop.f32.mrb[0].mxu0
      %3624 = vmatprep.mubr.bf16.mxu0 0
      %3625 = vmatmul.mubr.bf16.gmra.mrb[0].mxu0 %v1201
      %v3626 = vpop.f32.mrb[0].mxu0
      %v3627 = vadd.f32 0.0, %v3626
      %v3628 = vpop.f32.mrb[0].mxu0
      %v3629 = vpop.f32.mrb[0].mxu0
      %v3630 = vadd.f32 0.0, %v3629
      %v3631 = vpop.f32.mrb[0].mxu0
      %3632 = vmatprep.mubr.bf16.mxu0 0
      %3633 = vmatmul.mubr.bf16.gmra.mrb[0].mxu0 %v1204
      %v3634 = vpop.f32.mrb[0].mxu0
      %v3635 = vadd.f32 0.0, %v3634
      %v3636 = vpop.f32.mrb[0].mxu0
      %v3637 = vpop.f32.mrb[0].mxu0
      %v3638 = vadd.f32 0.0, %v3637
      %v3639 = vpop.f32.mrb[0].mxu0
      %3640 = vmatprep.mubr.bf16.mxu0 0
      %3641 = vmatmul.mubr.bf16.gmra.mrb[0].mxu0 %v1207
      %v3642 = vpop.f32.mrb[0].mxu0
      %v3643 = vpop.f32.mrb[0].mxu0
      %v3644 = vpop.f32.mrb[0].mxu0
      %v3645 = vpop.f32.mrb[0].mxu0
      %3646 = vdwg.mxu0
      %3647 = vmatprep.subr.bf16.mxu0 0
      %3648 = vmatpush1.bf16.msra.mxu0 %v709
      %3649 = vmatprep.subr.bf16.mxu0 0
      %3650 = vmatpush1.bf16.msra.mxu0 %v710
      %3651 = vmatprep.subr.bf16.mxu0 0
      %3652 = vmatpush1.bf16.msra.mxu0 %v711
      %3653 = vmatprep.subr.bf16.mxu0 0
      %3654 = vmatpush1.bf16.msra.mxu0 %v712
      %3655 = vmatprep.subr.bf16.mxu0 0
      %3656 = vmatpush1.bf16.msra.mxu0 %v713
      %3657 = vmatprep.subr.bf16.mxu0 0
      %3658 = vmatpush1.bf16.msra.mxu0 %v714
      %3659 = vmatprep.subr.bf16.mxu0 0
      %3660 = vmatpush1.bf16.msra.mxu0 0
      %3661 = vmatprep.subr.bf16.mxu0 0
      %3662 = vmatpush1.bf16.msra.mxu0 0
      %3663 = vmatprep.subr.bf16.mxu0 0
      %3664 = vmatpush1.bf16.msra.mxu0 0
      %3665 = vmatprep.subr.bf16.mxu0 0
      %3666 = vmatpush1.bf16.msra.mxu0 0
      %3667 = vmatprep.subr.bf16.mxu0 0
      %3668 = vmatpush1.bf16.msra.mxu0 0
      %3669 = vmatprep.subr.bf16.mxu0 0
      %3670 = vmatpush1.bf16.msra.mxu0 0
      %3671 = vmatprep.subr.bf16.mxu0 0
      %3672 = vmatpush1.bf16.msra.mxu0 0
      %3673 = vmatprep.subr.bf16.mxu0 0
      %3674 = vmatpush1.bf16.msra.mxu0 0
      %3675 = vmatprep.subr.bf16.mxu0 0
      %3676 = vmatpush1.bf16.msra.mxu0 0
      %3677 = vmatprep.subr.bf16.mxu0 0
      %3678 = vmatpush1.bf16.msra.mxu0 0
      %3679 = vmatprep.mubr.bf16.mxu0 0
      %3680 = vmatmul.mubr.bf16.gmra.mrb[0].mxu0 %v947
      %v3681 = vpop.f32.mrb[0].mxu0
      %v3682 = vadd.f32 %v3587, %v3681
      %v3683 = vpop.f32.mrb[0].mxu0
      %v3684 = vpop.f32.mrb[0].mxu0
      %v3685 = vadd.f32 %v3590, %v3684
      %v3686 = vpop.f32.mrb[0].mxu0
      %3687 = vmatprep.mubr.bf16.mxu0 0
      %3688 = vmatmul.mubr.bf16.gmra.mrb[0].mxu0 %v950
      %v3689 = vpop.f32.mrb[0].mxu0
      %v3690 = vadd.f32 %v3595, %v3689
      %v3691 = vpop.f32.mrb[0].mxu0
      %v3692 = vpop.f32.mrb[0].mxu0
      %v3693 = vadd.f32 %v3598, %v3692
      %v3694 = vpop.f32.mrb[0].mxu0
      %3695 = vmatprep.mubr.bf16.mxu0 0
      %3696 = vmatmul.mubr.bf16.gmra.mrb[0].mxu0 %v953
      %v3697 = vpop.f32.mrb[0].mxu0
      %v3698 = vadd.f32 %v3603, %v3697
      %v3699 = vpop.f32.mrb[0].mxu0
      %v3700 = vpop.f32.mrb[0].mxu0
      %v3701 = vadd.f32 %v3606, %v3700
      %v3702 = vpop.f32.mrb[0].mxu0
      %3703 = vmatprep.mubr.bf16.mxu0 0
      %3704 = vmatmul.mubr.bf16.gmra.mrb[0].mxu0 %v956
      %v3705 = vpop.f32.mrb[0].mxu0
      %v3706 = vadd.f32 %v3611, %v3705
      %v3707 = vpop.f32.mrb[0].mxu0
      %v3708 = vpop.f32.mrb[0].mxu0
      %v3709 = vadd.f32 %v3614, %v3708
      %v3710 = vpop.f32.mrb[0].mxu0
      %3711 = vmatprep.mubr.bf16.mxu0 0
      %3712 = vmatmul.mubr.bf16.gmra.mrb[0].mxu0 %v959
      %v3713 = vpop.f32.mrb[0].mxu0
      %v3714 = vadd.f32 %v3619, %v3713
      %v3715 = vpop.f32.mrb[0].mxu0
      %v3716 = vpop.f32.mrb[0].mxu0
      %v3717 = vadd.f32 %v3622, %v3716
      %v3718 = vpop.f32.mrb[0].mxu0
      %3719 = vmatprep.mubr.bf16.mxu0 0
      %3720 = vmatmul.mubr.bf16.gmra.mrb[0].mxu0 %v962
      %v3721 = vpop.f32.mrb[0].mxu0
      %v3722 = vadd.f32 %v3627, %v3721
      %v3723 = vpop.f32.mrb[0].mxu0
      %v3724 = vpop.f32.mrb[0].mxu0
      %v3725 = vadd.f32 %v3630, %v3724
      %v3726 = vpop.f32.mrb[0].mxu0
      %3727 = vmatprep.mubr.bf16.mxu0 0
      %3728 = vmatmul.mubr.bf16.gmra.mrb[0].mxu0 %v965
      %v3729 = vpop.f32.mrb[0].mxu0
      %v3730 = vadd.f32 %v3635, %v3729
      %v3731 = vpop.f32.mrb[0].mxu0
      %v3732 = vpop.f32.mrb[0].mxu0
      %v3733 = vadd.f32 %v3638, %v3732
      %v3734 = vpop.f32.mrb[0].mxu0
      %3735 = vmatprep.mubr.bf16.mxu0 0
      %3736 = vmatmul.mubr.bf16.gmra.mrb[0].mxu0 %v968
      %v3737 = vpop.f32.mrb[0].mxu0
      %v3738 = vpop.f32.mrb[0].mxu0
      %v3739 = vpop.f32.mrb[0].mxu0
      %v3740 = vpop.f32.mrb[0].mxu0
      %3741 = vdwg.mxu0
      %3742 = vmatprep.subr.bf16.mxu0 0
      %3743 = vmatpush1.bf16.msra.mxu0 %v934
      %3744 = vmatprep.subr.bf16.mxu0 0
      %3745 = vmatpush1.bf16.msra.mxu0 %v935
      %3746 = vmatprep.subr.bf16.mxu0 0
      %3747 = vmatpush1.bf16.msra.mxu0 %v936
      %3748 = vmatprep.subr.bf16.mxu0 0
      %3749 = vmatpush1.bf16.msra.mxu0 %v937
      %3750 = vmatprep.subr.bf16.mxu0 0
      %3751 = vmatpush1.bf16.msra.mxu0 %v938
      %3752 = vmatprep.subr.bf16.mxu0 0
      %3753 = vmatpush1.bf16.msra.mxu0 %v939
      %3754 = vmatprep.subr.bf16.mxu0 0
      %3755 = vmatpush1.bf16.msra.mxu0 0
      %3756 = vmatprep.subr.bf16.mxu0 0
      %3757 = vmatpush1.bf16.msra.mxu0 0
      %3758 = vmatprep.subr.bf16.mxu0 0
      %3759 = vmatpush1.bf16.msra.mxu0 0
      %3760 = vmatprep.subr.bf16.mxu0 0
      %3761 = vmatpush1.bf16.msra.mxu0 0
      %3762 = vmatprep.subr.bf16.mxu0 0
      %3763 = vmatpush1.bf16.msra.mxu0 0
      %3764 = vmatprep.subr.bf16.mxu0 0
      %3765 = vmatpush1.bf16.msra.mxu0 0
      %3766 = vmatprep.subr.bf16.mxu0 0
      %3767 = vmatpush1.bf16.msra.mxu0 0
      %3768 = vmatprep.subr.bf16.mxu0 0
      %3769 = vmatpush1.bf16.msra.mxu0 0
      %3770 = vmatprep.subr.bf16.mxu0 0
      %3771 = vmatpush1.bf16.msra.mxu0 0
      %3772 = vmatprep.subr.bf16.mxu0 0
      %3773 = vmatpush1.bf16.msra.mxu0 0
      %3774 = vmatprep.mubr.bf16.mxu0 0
      %3775 = vmatmul.mubr.bf16.gmra.mrb[0].mxu0 %v1425
      %v3776 = vpop.f32.mrb[0].mxu0
      %v3777 = vadd.f32 0.0, %v3776
      %v3778 = vpop.f32.mrb[0].mxu0
      %v3779 = vpop.f32.mrb[0].mxu0
      %v3780 = vadd.f32 0.0, %v3779
      %v3781 = vpop.f32.mrb[0].mxu0
      %3782 = vmatprep.mubr.bf16.mxu0 0
      %3783 = vmatmul.mubr.bf16.gmra.mrb[0].mxu0 %v1428
      %v3784 = vpop.f32.mrb[0].mxu0
      %v3785 = vadd.f32 0.0, %v3784
      %v3786 = vpop.f32.mrb[0].mxu0
      %v3787 = vpop.f32.mrb[0].mxu0
      %v3788 = vadd.f32 0.0, %v3787
      %v3789 = vpop.f32.mrb[0].mxu0
      %3790 = vmatprep.mubr.bf16.mxu0 0
      %3791 = vmatmul.mubr.bf16.gmra.mrb[0].mxu0 %v1431
      %v3792 = vpop.f32.mrb[0].mxu0
      %v3793 = vadd.f32 0.0, %v3792
      %v3794 = vpop.f32.mrb[0].mxu0
      %v3795 = vpop.f32.mrb[0].mxu0
      %v3796 = vadd.f32 0.0, %v3795
      %v3797 = vpop.f32.mrb[0].mxu0
      %3798 = vmatprep.mubr.bf16.mxu0 0
      %3799 = vmatmul.mubr.bf16.gmra.mrb[0].mxu0 %v1434
      %v3800 = vpop.f32.mrb[0].mxu0
      %v3801 = vadd.f32 0.0, %v3800
      %v3802 = vpop.f32.mrb[0].mxu0
      %v3803 = vpop.f32.mrb[0].mxu0
      %v3804 = vadd.f32 0.0, %v3803
      %v3805 = vpop.f32.mrb[0].mxu0
      %3806 = vmatprep.mubr.bf16.mxu0 0
      %3807 = vmatmul.mubr.bf16.gmra.mrb[0].mxu0 %v1437
      %v3808 = vpop.f32.mrb[0].mxu0
      %v3809 = vadd.f32 0.0, %v3808
      %v3810 = vpop.f32.mrb[0].mxu0
      %v3811 = vpop.f32.mrb[0].mxu0
      %v3812 = vadd.f32 0.0, %v3811
      %v3813 = vpop.f32.mrb[0].mxu0
      %3814 = vmatprep.mubr.bf16.mxu0 0
      %3815 = vmatmul.mubr.bf16.gmra.mrb[0].mxu0 %v1440
      %v3816 = vpop.f32.mrb[0].mxu0
      %v3817 = vadd.f32 0.0, %v3816
      %v3818 = vpop.f32.mrb[0].mxu0
      %v3819 = vpop.f32.mrb[0].mxu0
      %v3820 = vadd.f32 0.0, %v3819
      %v3821 = vpop.f32.mrb[0].mxu0
      %3822 = vmatprep.mubr.bf16.mxu0 0
      %3823 = vmatmul.mubr.bf16.gmra.mrb[0].mxu0 %v1443
      %v3824 = vpop.f32.mrb[0].mxu0
      %v3825 = vadd.f32 0.0, %v3824
      %v3826 = vpop.f32.mrb[0].mxu0
      %v3827 = vpop.f32.mrb[0].mxu0
      %v3828 = vadd.f32 0.0, %v3827
      %v3829 = vpop.f32.mrb[0].mxu0
      %3830 = vmatprep.mubr.bf16.mxu0 0
      %3831 = vmatmul.mubr.bf16.gmra.mrb[0].mxu0 %v1446
      %v3832 = vpop.f32.mrb[0].mxu0
      %v3833 = vpop.f32.mrb[0].mxu0
      %v3834 = vpop.f32.mrb[0].mxu0
      %v3835 = vpop.f32.mrb[0].mxu0
      %3836 = vdwg.mxu0
      %v3837 = vadd.f32 %v3682, %v3777
      %v3838 = vadd.f32 %v3685, %v3780
      %v3839 = vadd.f32 %v3690, %v3785
      %v3840 = vadd.f32 %v3693, %v3788
      %v3841 = vadd.f32 %v3698, %v3793
      %v3842 = vadd.f32 %v3701, %v3796
      %v3843 = vadd.f32 %v3706, %v3801
      %v3844 = vadd.f32 %v3709, %v3804
      %v3845 = vadd.f32 %v3714, %v3809
      %v3846 = vadd.f32 %v3717, %v3812
      %v3847 = vadd.f32 %v3722, %v3817
      %v3848 = vadd.f32 %v3725, %v3820
      %v3849 = vadd.f32 %v3730, %v3825
      %v3850 = vadd.f32 %v3733, %v3828
      %3851 = vmatprep.subr.bf16.mxu0 0
      %3852 = vmatpush1.bf16.msra.mxu0 %v1173
      %3853 = vmatprep.subr.bf16.mxu0 0
      %3854 = vmatpush1.bf16.msra.mxu0 %v1174
      %3855 = vmatprep.subr.bf16.mxu0 0
      %3856 = vmatpush1.bf16.msra.mxu0 %v1175
      %3857 = vmatprep.subr.bf16.mxu0 0
      %3858 = vmatpush1.bf16.msra.mxu0 %v1176
      %3859 = vmatprep.subr.bf16.mxu0 0
      %3860 = vmatpush1.bf16.msra.mxu0 %v1177
      %3861 = vmatprep.subr.bf16.mxu0 0
      %3862 = vmatpush1.bf16.msra.mxu0 %v1178
      %3863 = vmatprep.subr.bf16.mxu0 0
      %3864 = vmatpush1.bf16.msra.mxu0 0
      %3865 = vmatprep.subr.bf16.mxu0 0
      %3866 = vmatpush1.bf16.msra.mxu0 0
      %3867 = vmatprep.subr.bf16.mxu0 0
      %3868 = vmatpush1.bf16.msra.mxu0 0
      %3869 = vmatprep.subr.bf16.mxu0 0
      %3870 = vmatpush1.bf16.msra.mxu0 0
      %3871 = vmatprep.subr.bf16.mxu0 0
      %3872 = vmatpush1.bf16.msra.mxu0 0
      %3873 = vmatprep.subr.bf16.mxu0 0
      %3874 = vmatpush1.bf16.msra.mxu0 0
      %3875 = vmatprep.subr.bf16.mxu0 0
      %3876 = vmatpush1.bf16.msra.mxu0 0
      %3877 = vmatprep.subr.bf16.mxu0 0
      %3878 = vmatpush1.bf16.msra.mxu0 0
      %3879 = vmatprep.subr.bf16.mxu0 0
      %3880 = vmatpush1.bf16.msra.mxu0 0
      %3881 = vmatprep.subr.bf16.mxu0 0
      %3882 = vmatpush1.bf16.msra.mxu0 0
      %3883 = vmatprep.mubr.bf16.mxu0 0
      %3884 = vmatmul.mubr.bf16.gmra.mrb[0].mxu0 %v2847
      %v3885 = vpop.f32.mrb[0].mxu0
      %v3886 = vadd.f32 0.0, %v3885
      %v3887 = vpop.f32.mrb[0].mxu0
      %v3888 = vpop.f32.mrb[0].mxu0
      %v3889 = vadd.f32 0.0, %v3888
      %v3890 = vpop.f32.mrb[0].mxu0
      %3891 = vmatprep.mubr.bf16.mxu0 0
      %3892 = vmatmul.mubr.bf16.gmra.mrb[0].mxu0 %v2850
      %v3893 = vpop.f32.mrb[0].mxu0
      %v3894 = vadd.f32 0.0, %v3893
      %v3895 = vpop.f32.mrb[0].mxu0
      %v3896 = vpop.f32.mrb[0].mxu0
      %v3897 = vadd.f32 0.0, %v3896
      %v3898 = vpop.f32.mrb[0].mxu0
      %3899 = vmatprep.mubr.bf16.mxu0 0
      %3900 = vmatmul.mubr.bf16.gmra.mrb[0].mxu0 %v2853
      %v3901 = vpop.f32.mrb[0].mxu0
      %v3902 = vadd.f32 0.0, %v3901
      %v3903 = vpop.f32.mrb[0].mxu0
      %v3904 = vpop.f32.mrb[0].mxu0
      %v3905 = vadd.f32 0.0, %v3904
      %v3906 = vpop.f32.mrb[0].mxu0
      %3907 = vmatprep.mubr.bf16.mxu0 0
      %3908 = vmatmul.mubr.bf16.gmra.mrb[0].mxu0 %v2856
      %v3909 = vpop.f32.mrb[0].mxu0
      %v3910 = vadd.f32 0.0, %v3909
      %v3911 = vpop.f32.mrb[0].mxu0
      %v3912 = vpop.f32.mrb[0].mxu0
      %v3913 = vadd.f32 0.0, %v3912
      %v3914 = vpop.f32.mrb[0].mxu0
      %3915 = vmatprep.mubr.bf16.mxu0 0
      %3916 = vmatmul.mubr.bf16.gmra.mrb[0].mxu0 %v2859
      %v3917 = vpop.f32.mrb[0].mxu0
      %v3918 = vadd.f32 0.0, %v3917
      %v3919 = vpop.f32.mrb[0].mxu0
      %v3920 = vpop.f32.mrb[0].mxu0
      %v3921 = vadd.f32 0.0, %v3920
      %v3922 = vpop.f32.mrb[0].mxu0
      %3923 = vmatprep.mubr.bf16.mxu0 0
      %3924 = vmatmul.mubr.bf16.gmra.mrb[0].mxu0 %v2862
      %v3925 = vpop.f32.mrb[0].mxu0
      %v3926 = vadd.f32 0.0, %v3925
      %v3927 = vpop.f32.mrb[0].mxu0
      %v3928 = vpop.f32.mrb[0].mxu0
      %v3929 = vadd.f32 0.0, %v3928
      %v3930 = vpop.f32.mrb[0].mxu0
      %3931 = vmatprep.mubr.bf16.mxu0 0
      %3932 = vmatmul.mubr.bf16.gmra.mrb[0].mxu0 %v2865
      %v3933 = vpop.f32.mrb[0].mxu0
      %v3934 = vadd.f32 0.0, %v3933
      %v3935 = vpop.f32.mrb[0].mxu0
      %v3936 = vpop.f32.mrb[0].mxu0
      %v3937 = vadd.f32 0.0, %v3936
      %v3938 = vpop.f32.mrb[0].mxu0
      %3939 = vmatprep.mubr.bf16.mxu0 0
      %3940 = vmatmul.mubr.bf16.gmra.mrb[0].mxu0 %v2868
      %v3941 = vpop.f32.mrb[0].mxu0
      %v3942 = vpop.f32.mrb[0].mxu0
      %v3943 = vpop.f32.mrb[0].mxu0
      %v3944 = vpop.f32.mrb[0].mxu0
      %3945 = vdwg.mxu0
      %v3946 = vadd.f32 %v3837, %v3886
      %v3947 = vadd.f32 %v3838, %v3889
      %v3948 = vadd.f32 %v3839, %v3894
      %v3949 = vadd.f32 %v3840, %v3897
      %v3950 = vadd.f32 %v3841, %v3902
      %v3951 = vadd.f32 %v3842, %v3905
      %v3952 = vadd.f32 %v3843, %v3910
      %v3953 = vadd.f32 %v3844, %v3913
      %v3954 = vadd.f32 %v3845, %v3918
      %v3955 = vadd.f32 %v3846, %v3921
      %v3956 = vadd.f32 %v3847, %v3926
      %v3957 = vadd.f32 %v3848, %v3929
      %v3958 = vadd.f32 %v3849, %v3934
      %v3959 = vadd.f32 %v3850, %v3937
      %s3960 = scalar_lea.vmem %s381, 320
      %v3961 = vld [vmem:[%s3960] sm:$0xf]
      %v3962 = vld [vmem:[%s3960 + $0x4] sm:$0xf]
      %v3963 = vld [vmem:[%s3960 + $0x8] sm:$0xf]
      %v3964 = vld [vmem:[%s3960 + $0xc] sm:$0xf]
      %v3965 = vld [vmem:[%s3960 + $0x10] sm:$0xf]
      %v3966 = vld [vmem:[%s3960 + $0x14] sm:$0xf]
      %v3967 = vld [vmem:[%s3960 + $0x18] sm:$0xf]
      %v3968 = vld [vmem:[%s3960 + $0x1c] sm:$0xf]
      %v3969 = vld [vmem:[%s3960 + $0x20] sm:$0xf]
      %v3970 = vld [vmem:[%s3960 + $0x24] sm:$0xf]
      %v3971 = vld [vmem:[%s3960 + $0x28] sm:$0xf]
      %v3972 = vld [vmem:[%s3960 + $0x2c] sm:$0xf]
      %v3973 = vld [vmem:[%s3960 + $0x30] sm:$0xf]
      %v3974 = vld [vmem:[%s3960 + $0x34] sm:$0xf]
      %v3975 = vld [vmem:[%s3960 + $0x38] sm:$0xf]
      %v3976 = vld [vmem:[%s3960 + $0x3c] sm:$0xf]
      %v3993 = vunpack.c.l.b16 %v3961
      %v3994 = vunpack.c.l.b16 %v3962
      %v3995 = vunpack.c.l.b16 %v3963
      %v3996 = vunpack.c.l.b16 %v3964
      %v3997 = vunpack.c.l.b16 %v3965
      %v3998 = vunpack.c.l.b16 %v3966
      %v3999 = vunpack.c.l.b16 %v3967
      %v4000 = vunpack.c.l.b16 %v3968
      %v4001 = vunpack.c.l.b16 %v3969
      %v4002 = vunpack.c.l.b16 %v3970
      %v4003 = vunpack.c.l.b16 %v3971
      %v4004 = vunpack.c.l.b16 %v3972
      %v4005 = vunpack.c.l.b16 %v3973
      %v4006 = vunpack.c.l.b16 %v3974
      %v4007 = vunpack.c.l.b16 %v3975
      %v4008 = vunpack.c.l.b16 %v3976
      %v4009 = vpack.c.b16 %v3994, %v3993
      %v4010 = vpack.c.b16 %v3996, %v3995
      %v4011 = vpack.c.b16 %v3998, %v3997
      %v4012 = vpack.c.b16 %v4000, %v3999
      %v4013 = vpack.c.b16 %v4002, %v4001
      %v4014 = vpack.c.b16 %v4004, %v4003
      %v4015 = vpack.c.b16 %v4006, %v4005
      %v4016 = vpack.c.b16 %v4008, %v4007
      %v4018 = vsel %vm525, %v4009, 0
      %v4021 = vsel %vm525, %v4010, 0
      %v4024 = vsel %vm525, %v4011, 0
      %v4027 = vsel %vm525, %v4012, 0
      %v4030 = vsel %vm525, %v4013, 0
      %v4033 = vsel %vm525, %v4014, 0
      %v4036 = vsel %vm525, %v4015, 0
      %v4039 = vsel %vm525, %v4016, 0
      %4041 = vmatprep.subr.bf16.mxu0 0
      %4042 = vmatpush1.bf16.msra.mxu0 %v1412
      %4043 = vmatprep.subr.bf16.mxu0 0
      %4044 = vmatpush1.bf16.msra.mxu0 %v1413
      %4045 = vmatprep.subr.bf16.mxu0 0
      %4046 = vmatpush1.bf16.msra.mxu0 %v1414
      %4047 = vmatprep.subr.bf16.mxu0 0
      %4048 = vmatpush1.bf16.msra.mxu0 %v1415
      %4049 = vmatprep.subr.bf16.mxu0 0
      %4050 = vmatpush1.bf16.msra.mxu0 %v1416
      %4051 = vmatprep.subr.bf16.mxu0 0
      %4052 = vmatpush1.bf16.msra.mxu0 %v1417
      %4053 = vmatprep.subr.bf16.mxu0 0
      %4054 = vmatpush1.bf16.msra.mxu0 0
      %4055 = vmatprep.subr.bf16.mxu0 0
      %4056 = vmatpush1.bf16.msra.mxu0 0
      %4057 = vmatprep.subr.bf16.mxu0 0
      %4058 = vmatpush1.bf16.msra.mxu0 0
      %4059 = vmatprep.subr.bf16.mxu0 0
      %4060 = vmatpush1.bf16.msra.mxu0 0
      %4061 = vmatprep.subr.bf16.mxu0 0
      %4062 = vmatpush1.bf16.msra.mxu0 0
      %4063 = vmatprep.subr.bf16.mxu0 0
      %4064 = vmatpush1.bf16.msra.mxu0 0
      %4065 = vmatprep.subr.bf16.mxu0 0
      %4066 = vmatpush1.bf16.msra.mxu0 0
      %4067 = vmatprep.subr.bf16.mxu0 0
      %4068 = vmatpush1.bf16.msra.mxu0 0
      %4069 = vmatprep.subr.bf16.mxu0 0
      %4070 = vmatpush1.bf16.msra.mxu0 0
      %4071 = vmatprep.subr.bf16.mxu0 0
      %4072 = vmatpush1.bf16.msra.mxu0 0
      %4073 = vmatprep.mubr.bf16.mxu0 0
      %4074 = vmatmul.mubr.bf16.gmra.mrb[0].mxu0 %v4018
      %v4075 = vpop.f32.mrb[0].mxu0
      %v4076 = vadd.f32 0.0, %v4075
      %v4077 = vpop.f32.mrb[0].mxu0
      %v4078 = vpop.f32.mrb[0].mxu0
      %v4079 = vadd.f32 0.0, %v4078
      %v4080 = vpop.f32.mrb[0].mxu0
      %4081 = vmatprep.mubr.bf16.mxu0 0
      %4082 = vmatmul.mubr.bf16.gmra.mrb[0].mxu0 %v4021
      %v4083 = vpop.f32.mrb[0].mxu0
      %v4084 = vadd.f32 0.0, %v4083
      %v4085 = vpop.f32.mrb[0].mxu0
      %v4086 = vpop.f32.mrb[0].mxu0
      %v4087 = vadd.f32 0.0, %v4086
      %v4088 = vpop.f32.mrb[0].mxu0
      %4089 = vmatprep.mubr.bf16.mxu0 0
      %4090 = vmatmul.mubr.bf16.gmra.mrb[0].mxu0 %v4024
      %v4091 = vpop.f32.mrb[0].mxu0
      %v4092 = vadd.f32 0.0, %v4091
      %v4093 = vpop.f32.mrb[0].mxu0
      %v4094 = vpop.f32.mrb[0].mxu0
      %v4095 = vadd.f32 0.0, %v4094
      %v4096 = vpop.f32.mrb[0].mxu0
      %4097 = vmatprep.mubr.bf16.mxu0 0
      %4098 = vmatmul.mubr.bf16.gmra.mrb[0].mxu0 %v4027
      %v4099 = vpop.f32.mrb[0].mxu0
      %v4100 = vadd.f32 0.0, %v4099
      %v4101 = vpop.f32.mrb[0].mxu0
      %v4102 = vpop.f32.mrb[0].mxu0
      %v4103 = vadd.f32 0.0, %v4102
      %v4104 = vpop.f32.mrb[0].mxu0
      %4105 = vmatprep.mubr.bf16.mxu0 0
      %4106 = vmatmul.mubr.bf16.gmra.mrb[0].mxu0 %v4030
      %v4107 = vpop.f32.mrb[0].mxu0
      %v4108 = vadd.f32 0.0, %v4107
      %v4109 = vpop.f32.mrb[0].mxu0
      %v4110 = vpop.f32.mrb[0].mxu0
      %v4111 = vadd.f32 0.0, %v4110
      %v4112 = vpop.f32.mrb[0].mxu0
      %4113 = vmatprep.mubr.bf16.mxu0 0
      %4114 = vmatmul.mubr.bf16.gmra.mrb[0].mxu0 %v4033
      %v4115 = vpop.f32.mrb[0].mxu0
      %v4116 = vadd.f32 0.0, %v4115
      %v4117 = vpop.f32.mrb[0].mxu0
      %v4118 = vpop.f32.mrb[0].mxu0
      %v4119 = vadd.f32 0.0, %v4118
      %v4120 = vpop.f32.mrb[0].mxu0
      %4121 = vmatprep.mubr.bf16.mxu0 0
      %4122 = vmatmul.mubr.bf16.gmra.mrb[0].mxu0 %v4036
      %v4123 = vpop.f32.mrb[0].mxu0
      %v4124 = vadd.f32 0.0, %v4123
      %v4125 = vpop.f32.mrb[0].mxu0
      %v4126 = vpop.f32.mrb[0].mxu0
      %v4127 = vadd.f32 0.0, %v4126
      %v4128 = vpop.f32.mrb[0].mxu0
      %4129 = vmatprep.mubr.bf16.mxu0 0
      %4130 = vmatmul.mubr.bf16.gmra.mrb[0].mxu0 %v4039
      %v4131 = vpop.f32.mrb[0].mxu0
      %v4132 = vpop.f32.mrb[0].mxu0
      %v4133 = vpop.f32.mrb[0].mxu0
      %v4134 = vpop.f32.mrb[0].mxu0
      %4135 = vdwg.mxu0
      %v4136 = vadd.f32 %v3946, %v4076
      %v4137 = vadd.f32 %v3947, %v4079
      %v4138 = vadd.f32 %v3948, %v4084
      %v4139 = vadd.f32 %v3949, %v4087
      %v4140 = vadd.f32 %v3950, %v4092
      %v4141 = vadd.f32 %v3951, %v4095
      %v4142 = vadd.f32 %v3952, %v4100
      %v4143 = vadd.f32 %v3953, %v4103
      %v4144 = vadd.f32 %v3954, %v4108
      %v4145 = vadd.f32 %v3955, %v4111
      %v4146 = vadd.f32 %v3956, %v4116
      %v4147 = vadd.f32 %v3957, %v4119
      %v4148 = vadd.f32 %v3958, %v4124
      %v4149 = vadd.f32 %v3959, %v4127
      %v4150 = vadd.f32 %v4136, %v1561
      %v4151 = vadd.f32 %v4137, %v1561
      %v4152 = vadd.f32 %v4138, %v1561
      %v4153 = vadd.f32 %v4139, %v1561
      %v4154 = vadd.f32 %v4140, %v1561
      %v4155 = vadd.f32 %v4141, %v1561
      %v4156 = vadd.f32 %v4142, %v1561
      %v4157 = vadd.f32 %v4143, %v1561
      %v4158 = vadd.f32 %v4144, %v1561
      %v4159 = vadd.f32 %v4145, %v1561
      %v4160 = vadd.f32 %v4146, %v1561
      %v4161 = vadd.f32 %v4147, %v1561
      %v4162 = vadd.f32 %v4148, %v1561
      %v4163 = vadd.f32 %v4149, %v1561
      %v4164 = vmax.f32 %v4150, 0.0
      %v4165 = vmax.f32 %v4151, 0.0
      %v4166 = vmax.f32 %v4152, 0.0
      %v4167 = vmax.f32 %v4153, 0.0
      %v4168 = vmax.f32 %v4154, 0.0
      %v4169 = vmax.f32 %v4155, 0.0
      %v4170 = vmax.f32 %v4156, 0.0
      %v4171 = vmax.f32 %v4157, 0.0
      %v4172 = vmax.f32 %v4158, 0.0
      %v4173 = vmax.f32 %v4159, 0.0
      %v4174 = vmax.f32 %v4160, 0.0
      %v4175 = vmax.f32 %v4161, 0.0
      %v4176 = vmax.f32 %v4162, 0.0
      %v4177 = vmax.f32 %v4163, 0.0
      %4178 = vmatprep.subr.bf16.mxu0 0
      %4179 = vmatpush1.bf16.msra.mxu0 %v1641
      %4180 = vmatprep.subr.bf16.mxu0 0
      %4181 = vmatpush1.bf16.msra.mxu0 %v1642
      %4182 = vmatprep.subr.bf16.mxu0 0
      %4183 = vmatpush1.bf16.msra.mxu0 %v1643
      %4184 = vmatprep.subr.bf16.mxu0 0
      %4185 = vmatpush1.bf16.msra.mxu0 %v1644
      %4186 = vmatprep.subr.bf16.mxu0 0
      %4187 = vmatpush1.bf16.msra.mxu0 %v1645
      %4188 = vmatprep.subr.bf16.mxu0 0
      %4189 = vmatpush1.bf16.msra.mxu0 %v1646
      %4190 = vmatprep.subr.bf16.mxu0 0
      %4191 = vmatpush1.bf16.msra.mxu0 0
      %4192 = vmatprep.subr.bf16.mxu0 0
      %4193 = vmatpush1.bf16.msra.mxu0 0
      %4194 = vmatprep.subr.bf16.mxu0 0
      %4195 = vmatpush1.bf16.msra.mxu0 0
      %4196 = vmatprep.subr.bf16.mxu0 0
      %4197 = vmatpush1.bf16.msra.mxu0 0
      %4198 = vmatprep.subr.bf16.mxu0 0
      %4199 = vmatpush1.bf16.msra.mxu0 0
      %4200 = vmatprep.subr.bf16.mxu0 0
      %4201 = vmatpush1.bf16.msra.mxu0 0
      %4202 = vmatprep.subr.bf16.mxu0 0
      %4203 = vmatpush1.bf16.msra.mxu0 0
      %4204 = vmatprep.subr.bf16.mxu0 0
      %4205 = vmatpush1.bf16.msra.mxu0 0
      %4206 = vmatprep.subr.bf16.mxu0 0
      %4207 = vmatpush1.bf16.msra.mxu0 0
      %4208 = vmatprep.subr.bf16.mxu0 0
      %4209 = vmatpush1.bf16.msra.mxu0 0
      %4210 = vmatprep.mubr.bf16.mxu0 0
      %4211 = vmatmul.mubr.bf16.gmra.mrb[0].mxu0 %v1186
      %v4212 = vpop.f32.mrb[0].mxu0
      %v4213 = vadd.f32 0.0, %v4212
      %v4214 = vpop.f32.mrb[0].mxu0
      %v4215 = vpop.f32.mrb[0].mxu0
      %v4216 = vadd.f32 0.0, %v4215
      %v4217 = vpop.f32.mrb[0].mxu0
      %4218 = vmatprep.mubr.bf16.mxu0 0
      %4219 = vmatmul.mubr.bf16.gmra.mrb[0].mxu0 %v1189
      %v4220 = vpop.f32.mrb[0].mxu0
      %v4221 = vadd.f32 0.0, %v4220
      %v4222 = vpop.f32.mrb[0].mxu0
      %v4223 = vpop.f32.mrb[0].mxu0
      %v4224 = vadd.f32 0.0, %v4223
      %v4225 = vpop.f32.mrb[0].mxu0
      %4226 = vmatprep.mubr.bf16.mxu0 0
      %4227 = vmatmul.mubr.bf16.gmra.mrb[0].mxu0 %v1192
      %v4228 = vpop.f32.mrb[0].mxu0
      %v4229 = vadd.f32 0.0, %v4228
      %v4230 = vpop.f32.mrb[0].mxu0
      %v4231 = vpop.f32.mrb[0].mxu0
      %v4232 = vadd.f32 0.0, %v4231
      %v4233 = vpop.f32.mrb[0].mxu0
      %4234 = vmatprep.mubr.bf16.mxu0 0
      %4235 = vmatmul.mubr.bf16.gmra.mrb[0].mxu0 %v1195
      %v4236 = vpop.f32.mrb[0].mxu0
      %v4237 = vadd.f32 0.0, %v4236
      %v4238 = vpop.f32.mrb[0].mxu0
      %v4239 = vpop.f32.mrb[0].mxu0
      %v4240 = vadd.f32 0.0, %v4239
      %v4241 = vpop.f32.mrb[0].mxu0
      %4242 = vmatprep.mubr.bf16.mxu0 0
      %4243 = vmatmul.mubr.bf16.gmra.mrb[0].mxu0 %v1198
      %v4244 = vpop.f32.mrb[0].mxu0
      %v4245 = vadd.f32 0.0, %v4244
      %v4246 = vpop.f32.mrb[0].mxu0
      %v4247 = vpop.f32.mrb[0].mxu0
      %v4248 = vadd.f32 0.0, %v4247
      %v4249 = vpop.f32.mrb[0].mxu0
      %4250 = vmatprep.mubr.bf16.mxu0 0
      %4251 = vmatmul.mubr.bf16.gmra.mrb[0].mxu0 %v1201
      %v4252 = vpop.f32.mrb[0].mxu0
      %v4253 = vadd.f32 0.0, %v4252
      %v4254 = vpop.f32.mrb[0].mxu0
      %v4255 = vpop.f32.mrb[0].mxu0
      %v4256 = vadd.f32 0.0, %v4255
      %v4257 = vpop.f32.mrb[0].mxu0
      %4258 = vmatprep.mubr.bf16.mxu0 0
      %4259 = vmatmul.mubr.bf16.gmra.mrb[0].mxu0 %v1204
      %v4260 = vpop.f32.mrb[0].mxu0
      %v4261 = vadd.f32 0.0, %v4260
      %v4262 = vpop.f32.mrb[0].mxu0
      %v4263 = vpop.f32.mrb[0].mxu0
      %v4264 = vadd.f32 0.0, %v4263
      %v4265 = vpop.f32.mrb[0].mxu0
      %4266 = vmatprep.mubr.bf16.mxu0 0
      %4267 = vmatmul.mubr.bf16.gmra.mrb[0].mxu0 %v1207
      %v4268 = vpop.f32.mrb[0].mxu0
      %v4269 = vpop.f32.mrb[0].mxu0
      %v4270 = vpop.f32.mrb[0].mxu0
      %v4271 = vpop.f32.mrb[0].mxu0
      %4272 = vdwg.mxu0
      %4273 = vmatprep.subr.bf16.mxu0 0
      %4274 = vmatpush1.bf16.msra.mxu0 %v1772
      %4275 = vmatprep.subr.bf16.mxu0 0
      %4276 = vmatpush1.bf16.msra.mxu0 %v1773
      %4277 = vmatprep.subr.bf16.mxu0 0
      %4278 = vmatpush1.bf16.msra.mxu0 %v1774
      %4279 = vmatprep.subr.bf16.mxu0 0
      %4280 = vmatpush1.bf16.msra.mxu0 %v1775
      %4281 = vmatprep.subr.bf16.mxu0 0
      %4282 = vmatpush1.bf16.msra.mxu0 %v1776
      %4283 = vmatprep.subr.bf16.mxu0 0
      %4284 = vmatpush1.bf16.msra.mxu0 %v1777
      %4285 = vmatprep.subr.bf16.mxu0 0
      %4286 = vmatpush1.bf16.msra.mxu0 0
      %4287 = vmatprep.subr.bf16.mxu0 0
      %4288 = vmatpush1.bf16.msra.mxu0 0
      %4289 = vmatprep.subr.bf16.mxu0 0
      %4290 = vmatpush1.bf16.msra.mxu0 0
      %4291 = vmatprep.subr.bf16.mxu0 0
      %4292 = vmatpush1.bf16.msra.mxu0 0
      %4293 = vmatprep.subr.bf16.mxu0 0
      %4294 = vmatpush1.bf16.msra.mxu0 0
      %4295 = vmatprep.subr.bf16.mxu0 0
      %4296 = vmatpush1.bf16.msra.mxu0 0
      %4297 = vmatprep.subr.bf16.mxu0 0
      %4298 = vmatpush1.bf16.msra.mxu0 0
      %4299 = vmatprep.subr.bf16.mxu0 0
      %4300 = vmatpush1.bf16.msra.mxu0 0
      %4301 = vmatprep.subr.bf16.mxu0 0
      %4302 = vmatpush1.bf16.msra.mxu0 0
      %4303 = vmatprep.subr.bf16.mxu0 0
      %4304 = vmatpush1.bf16.msra.mxu0 0
      %4305 = vmatprep.mubr.bf16.mxu0 0
      %4306 = vmatmul.mubr.bf16.gmra.mrb[0].mxu0 %v947
      %v4307 = vpop.f32.mrb[0].mxu0
      %v4308 = vadd.f32 %v4213, %v4307
      %v4309 = vpop.f32.mrb[0].mxu0
      %v4310 = vpop.f32.mrb[0].mxu0
      %v4311 = vadd.f32 %v4216, %v4310
      %v4312 = vpop.f32.mrb[0].mxu0
      %4313 = vmatprep.mubr.bf16.mxu0 0
      %4314 = vmatmul.mubr.bf16.gmra.mrb[0].mxu0 %v950
      %v4315 = vpop.f32.mrb[0].mxu0
      %v4316 = vadd.f32 %v4221, %v4315
      %v4317 = vpop.f32.mrb[0].mxu0
      %v4318 = vpop.f32.mrb[0].mxu0
      %v4319 = vadd.f32 %v4224, %v4318
      %v4320 = vpop.f32.mrb[0].mxu0
      %4321 = vmatprep.mubr.bf16.mxu0 0
      %4322 = vmatmul.mubr.bf16.gmra.mrb[0].mxu0 %v953
      %v4323 = vpop.f32.mrb[0].mxu0
      %v4324 = vadd.f32 %v4229, %v4323
      %v4325 = vpop.f32.mrb[0].mxu0
      %v4326 = vpop.f32.mrb[0].mxu0
      %v4327 = vadd.f32 %v4232, %v4326
      %v4328 = vpop.f32.mrb[0].mxu0
      %4329 = vmatprep.mubr.bf16.mxu0 0
      %4330 = vmatmul.mubr.bf16.gmra.mrb[0].mxu0 %v956
      %v4331 = vpop.f32.mrb[0].mxu0
      %v4332 = vadd.f32 %v4237, %v4331
      %v4333 = vpop.f32.mrb[0].mxu0
      %v4334 = vpop.f32.mrb[0].mxu0
      %v4335 = vadd.f32 %v4240, %v4334
      %v4336 = vpop.f32.mrb[0].mxu0
      %4337 = vmatprep.mubr.bf16.mxu0 0
      %4338 = vmatmul.mubr.bf16.gmra.mrb[0].mxu0 %v959
      %v4339 = vpop.f32.mrb[0].mxu0
      %v4340 = vadd.f32 %v4245, %v4339
      %v4341 = vpop.f32.mrb[0].mxu0
      %v4342 = vpop.f32.mrb[0].mxu0
      %v4343 = vadd.f32 %v4248, %v4342
      %v4344 = vpop.f32.mrb[0].mxu0
      %4345 = vmatprep.mubr.bf16.mxu0 0
      %4346 = vmatmul.mubr.bf16.gmra.mrb[0].mxu0 %v962
      %v4347 = vpop.f32.mrb[0].mxu0
      %v4348 = vadd.f32 %v4253, %v4347
      %v4349 = vpop.f32.mrb[0].mxu0
      %v4350 = vpop.f32.mrb[0].mxu0
      %v4351 = vadd.f32 %v4256, %v4350
      %v4352 = vpop.f32.mrb[0].mxu0
      %4353 = vmatprep.mubr.bf16.mxu0 0
      %4354 = vmatmul.mubr.bf16.gmra.mrb[0].mxu0 %v965
      %v4355 = vpop.f32.mrb[0].mxu0
      %v4356 = vadd.f32 %v4261, %v4355
      %v4357 = vpop.f32.mrb[0].mxu0
      %v4358 = vpop.f32.mrb[0].mxu0
      %v4359 = vadd.f32 %v4264, %v4358
      %v4360 = vpop.f32.mrb[0].mxu0
      %4361 = vmatprep.mubr.bf16.mxu0 0
      %4362 = vmatmul.mubr.bf16.gmra.mrb[0].mxu0 %v968
      %v4363 = vpop.f32.mrb[0].mxu0
      %v4364 = vpop.f32.mrb[0].mxu0
      %v4365 = vpop.f32.mrb[0].mxu0
      %v4366 = vpop.f32.mrb[0].mxu0
      %4367 = vdwg.mxu0
      %4368 = vmatprep.subr.bf16.mxu0 0
      %4369 = vmatpush1.bf16.msra.mxu0 %v1916
      %4370 = vmatprep.subr.bf16.mxu0 0
      %4371 = vmatpush1.bf16.msra.mxu0 %v1917
      %4372 = vmatprep.subr.bf16.mxu0 0
      %4373 = vmatpush1.bf16.msra.mxu0 %v1918
      %4374 = vmatprep.subr.bf16.mxu0 0
      %4375 = vmatpush1.bf16.msra.mxu0 %v1919
      %4376 = vmatprep.subr.bf16.mxu0 0
      %4377 = vmatpush1.bf16.msra.mxu0 %v1920
      %4378 = vmatprep.subr.bf16.mxu0 0
      %4379 = vmatpush1.bf16.msra.mxu0 %v1921
      %4380 = vmatprep.subr.bf16.mxu0 0
      %4381 = vmatpush1.bf16.msra.mxu0 0
      %4382 = vmatprep.subr.bf16.mxu0 0
      %4383 = vmatpush1.bf16.msra.mxu0 0
      %4384 = vmatprep.subr.bf16.mxu0 0
      %4385 = vmatpush1.bf16.msra.mxu0 0
      %4386 = vmatprep.subr.bf16.mxu0 0
      %4387 = vmatpush1.bf16.msra.mxu0 0
      %4388 = vmatprep.subr.bf16.mxu0 0
      %4389 = vmatpush1.bf16.msra.mxu0 0
      %4390 = vmatprep.subr.bf16.mxu0 0
      %4391 = vmatpush1.bf16.msra.mxu0 0
      %4392 = vmatprep.subr.bf16.mxu0 0
      %4393 = vmatpush1.bf16.msra.mxu0 0
      %4394 = vmatprep.subr.bf16.mxu0 0
      %4395 = vmatpush1.bf16.msra.mxu0 0
      %4396 = vmatprep.subr.bf16.mxu0 0
      %4397 = vmatpush1.bf16.msra.mxu0 0
      %4398 = vmatprep.subr.bf16.mxu0 0
      %4399 = vmatpush1.bf16.msra.mxu0 0
      %4400 = vmatprep.mubr.bf16.mxu0 0
      %4401 = vmatmul.mubr.bf16.gmra.mrb[0].mxu0 %v1425
      %v4402 = vpop.f32.mrb[0].mxu0
      %v4403 = vadd.f32 0.0, %v4402
      %v4404 = vpop.f32.mrb[0].mxu0
      %v4405 = vpop.f32.mrb[0].mxu0
      %v4406 = vadd.f32 0.0, %v4405
      %v4407 = vpop.f32.mrb[0].mxu0
      %4408 = vmatprep.mubr.bf16.mxu0 0
      %4409 = vmatmul.mubr.bf16.gmra.mrb[0].mxu0 %v1428
      %v4410 = vpop.f32.mrb[0].mxu0
      %v4411 = vadd.f32 0.0, %v4410
      %v4412 = vpop.f32.mrb[0].mxu0
      %v4413 = vpop.f32.mrb[0].mxu0
      %v4414 = vadd.f32 0.0, %v4413
      %v4415 = vpop.f32.mrb[0].mxu0
      %4416 = vmatprep.mubr.bf16.mxu0 0
      %4417 = vmatmul.mubr.bf16.gmra.mrb[0].mxu0 %v1431
      %v4418 = vpop.f32.mrb[0].mxu0
      %v4419 = vadd.f32 0.0, %v4418
      %v4420 = vpop.f32.mrb[0].mxu0
      %v4421 = vpop.f32.mrb[0].mxu0
      %v4422 = vadd.f32 0.0, %v4421
      %v4423 = vpop.f32.mrb[0].mxu0
      %4424 = vmatprep.mubr.bf16.mxu0 0
      %4425 = vmatmul.mubr.bf16.gmra.mrb[0].mxu0 %v1434
      %v4426 = vpop.f32.mrb[0].mxu0
      %v4427 = vadd.f32 0.0, %v4426
      %v4428 = vpop.f32.mrb[0].mxu0
      %v4429 = vpop.f32.mrb[0].mxu0
      %v4430 = vadd.f32 0.0, %v4429
      %v4431 = vpop.f32.mrb[0].mxu0
      %4432 = vmatprep.mubr.bf16.mxu0 0
      %4433 = vmatmul.mubr.bf16.gmra.mrb[0].mxu0 %v1437
      %v4434 = vpop.f32.mrb[0].mxu0
      %v4435 = vadd.f32 0.0, %v4434
      %v4436 = vpop.f32.mrb[0].mxu0
      %v4437 = vpop.f32.mrb[0].mxu0
      %v4438 = vadd.f32 0.0, %v4437
      %v4439 = vpop.f32.mrb[0].mxu0
      %4440 = vmatprep.mubr.bf16.mxu0 0
      %4441 = vmatmul.mubr.bf16.gmra.mrb[0].mxu0 %v1440
      %v4442 = vpop.f32.mrb[0].mxu0
      %v4443 = vadd.f32 0.0, %v4442
      %v4444 = vpop.f32.mrb[0].mxu0
      %v4445 = vpop.f32.mrb[0].mxu0
      %v4446 = vadd.f32 0.0, %v4445
      %v4447 = vpop.f32.mrb[0].mxu0
      %4448 = vmatprep.mubr.bf16.mxu0 0
      %4449 = vmatmul.mubr.bf16.gmra.mrb[0].mxu0 %v1443
      %v4450 = vpop.f32.mrb[0].mxu0
      %v4451 = vadd.f32 0.0, %v4450
      %v4452 = vpop.f32.mrb[0].mxu0
      %v4453 = vpop.f32.mrb[0].mxu0
      %v4454 = vadd.f32 0.0, %v4453
      %v4455 = vpop.f32.mrb[0].mxu0
      %4456 = vmatprep.mubr.bf16.mxu0 0
      %4457 = vmatmul.mubr.bf16.gmra.mrb[0].mxu0 %v1446
      %v4458 = vpop.f32.mrb[0].mxu0
      %v4459 = vpop.f32.mrb[0].mxu0
      %v4460 = vpop.f32.mrb[0].mxu0
      %v4461 = vpop.f32.mrb[0].mxu0
      %4462 = vdwg.mxu0
      %v4463 = vadd.f32 %v4308, %v4403
      %v4464 = vadd.f32 %v4311, %v4406
      %v4465 = vadd.f32 %v4316, %v4411
      %v4466 = vadd.f32 %v4319, %v4414
      %v4467 = vadd.f32 %v4324, %v4419
      %v4468 = vadd.f32 %v4327, %v4422
      %v4469 = vadd.f32 %v4332, %v4427
      %v4470 = vadd.f32 %v4335, %v4430
      %v4471 = vadd.f32 %v4340, %v4435
      %v4472 = vadd.f32 %v4343, %v4438
      %v4473 = vadd.f32 %v4348, %v4443
      %v4474 = vadd.f32 %v4351, %v4446
      %v4475 = vadd.f32 %v4356, %v4451
      %v4476 = vadd.f32 %v4359, %v4454
      %4477 = vmatprep.subr.bf16.mxu0 0
      %4478 = vmatpush1.bf16.msra.mxu0 %v2074
      %4479 = vmatprep.subr.bf16.mxu0 0
      %4480 = vmatpush1.bf16.msra.mxu0 %v2075
      %4481 = vmatprep.subr.bf16.mxu0 0
      %4482 = vmatpush1.bf16.msra.mxu0 %v2076
      %4483 = vmatprep.subr.bf16.mxu0 0
      %4484 = vmatpush1.bf16.msra.mxu0 %v2077
      %4485 = vmatprep.subr.bf16.mxu0 0
      %4486 = vmatpush1.bf16.msra.mxu0 %v2078
      %4487 = vmatprep.subr.bf16.mxu0 0
      %4488 = vmatpush1.bf16.msra.mxu0 %v2079
      %4489 = vmatprep.subr.bf16.mxu0 0
      %4490 = vmatpush1.bf16.msra.mxu0 0
      %4491 = vmatprep.subr.bf16.mxu0 0
      %4492 = vmatpush1.bf16.msra.mxu0 0
      %4493 = vmatprep.subr.bf16.mxu0 0
      %4494 = vmatpush1.bf16.msra.mxu0 0
      %4495 = vmatprep.subr.bf16.mxu0 0
      %4496 = vmatpush1.bf16.msra.mxu0 0
      %4497 = vmatprep.subr.bf16.mxu0 0
      %4498 = vmatpush1.bf16.msra.mxu0 0
      %4499 = vmatprep.subr.bf16.mxu0 0
      %4500 = vmatpush1.bf16.msra.mxu0 0
      %4501 = vmatprep.subr.bf16.mxu0 0
      %4502 = vmatpush1.bf16.msra.mxu0 0
      %4503 = vmatprep.subr.bf16.mxu0 0
      %4504 = vmatpush1.bf16.msra.mxu0 0
      %4505 = vmatprep.subr.bf16.mxu0 0
      %4506 = vmatpush1.bf16.msra.mxu0 0
      %4507 = vmatprep.subr.bf16.mxu0 0
      %4508 = vmatpush1.bf16.msra.mxu0 0
      %4509 = vmatprep.mubr.bf16.mxu0 0
      %4510 = vmatmul.mubr.bf16.gmra.mrb[0].mxu0 %v2847
      %v4511 = vpop.f32.mrb[0].mxu0
      %v4512 = vadd.f32 0.0, %v4511
      %v4513 = vpop.f32.mrb[0].mxu0
      %v4514 = vpop.f32.mrb[0].mxu0
      %v4515 = vadd.f32 0.0, %v4514
      %v4516 = vpop.f32.mrb[0].mxu0
      %4517 = vmatprep.mubr.bf16.mxu0 0
      %4518 = vmatmul.mubr.bf16.gmra.mrb[0].mxu0 %v2850
      %v4519 = vpop.f32.mrb[0].mxu0
      %v4520 = vadd.f32 0.0, %v4519
      %v4521 = vpop.f32.mrb[0].mxu0
      %v4522 = vpop.f32.mrb[0].mxu0
      %v4523 = vadd.f32 0.0, %v4522
      %v4524 = vpop.f32.mrb[0].mxu0
      %4525 = vmatprep.mubr.bf16.mxu0 0
      %4526 = vmatmul.mubr.bf16.gmra.mrb[0].mxu0 %v2853
      %v4527 = vpop.f32.mrb[0].mxu0
      %v4528 = vadd.f32 0.0, %v4527
      %v4529 = vpop.f32.mrb[0].mxu0
      %v4530 = vpop.f32.mrb[0].mxu0
      %v4531 = vadd.f32 0.0, %v4530
      %v4532 = vpop.f32.mrb[0].mxu0
      %4533 = vmatprep.mubr.bf16.mxu0 0
      %4534 = vmatmul.mubr.bf16.gmra.mrb[0].mxu0 %v2856
      %v4535 = vpop.f32.mrb[0].mxu0
      %v4536 = vadd.f32 0.0, %v4535
      %v4537 = vpop.f32.mrb[0].mxu0
      %v4538 = vpop.f32.mrb[0].mxu0
      %v4539 = vadd.f32 0.0, %v4538
      %v4540 = vpop.f32.mrb[0].mxu0
      %4541 = vmatprep.mubr.bf16.mxu0 0
      %4542 = vmatmul.mubr.bf16.gmra.mrb[0].mxu0 %v2859
      %v4543 = vpop.f32.mrb[0].mxu0
      %v4544 = vadd.f32 0.0, %v4543
      %v4545 = vpop.f32.mrb[0].mxu0
      %v4546 = vpop.f32.mrb[0].mxu0
      %v4547 = vadd.f32 0.0, %v4546
      %v4548 = vpop.f32.mrb[0].mxu0
      %4549 = vmatprep.mubr.bf16.mxu0 0
      %4550 = vmatmul.mubr.bf16.gmra.mrb[0].mxu0 %v2862
      %v4551 = vpop.f32.mrb[0].mxu0
      %v4552 = vadd.f32 0.0, %v4551
      %v4553 = vpop.f32.mrb[0].mxu0
      %v4554 = vpop.f32.mrb[0].mxu0
      %v4555 = vadd.f32 0.0, %v4554
      %v4556 = vpop.f32.mrb[0].mxu0
      %4557 = vmatprep.mubr.bf16.mxu0 0
      %4558 = vmatmul.mubr.bf16.gmra.mrb[0].mxu0 %v2865
      %v4559 = vpop.f32.mrb[0].mxu0
      %v4560 = vadd.f32 0.0, %v4559
      %v4561 = vpop.f32.mrb[0].mxu0
      %v4562 = vpop.f32.mrb[0].mxu0
      %v4563 = vadd.f32 0.0, %v4562
      %v4564 = vpop.f32.mrb[0].mxu0
      %4565 = vmatprep.mubr.bf16.mxu0 0
      %4566 = vmatmul.mubr.bf16.gmra.mrb[0].mxu0 %v2868
      %v4567 = vpop.f32.mrb[0].mxu0
      %v4568 = vpop.f32.mrb[0].mxu0
      %v4569 = vpop.f32.mrb[0].mxu0
      %v4570 = vpop.f32.mrb[0].mxu0
      %4571 = vdwg.mxu0
      %v4572 = vadd.f32 %v4463, %v4512
      %v4573 = vadd.f32 %v4464, %v4515
      %v4574 = vadd.f32 %v4465, %v4520
      %v4575 = vadd.f32 %v4466, %v4523
      %v4576 = vadd.f32 %v4467, %v4528
      %v4577 = vadd.f32 %v4468, %v4531
      %v4578 = vadd.f32 %v4469, %v4536
      %v4579 = vadd.f32 %v4470, %v4539
      %v4580 = vadd.f32 %v4471, %v4544
      %v4581 = vadd.f32 %v4472, %v4547
      %v4582 = vadd.f32 %v4473, %v4552
      %v4583 = vadd.f32 %v4474, %v4555
      %v4584 = vadd.f32 %v4475, %v4560
      %v4585 = vadd.f32 %v4476, %v4563
      %4586 = vmatprep.subr.bf16.mxu0 0
      %4587 = vmatpush1.bf16.msra.mxu0 %v2232
      %4588 = vmatprep.subr.bf16.mxu0 0
      %4589 = vmatpush1.bf16.msra.mxu0 %v2233
      %4590 = vmatprep.subr.bf16.mxu0 0
      %4591 = vmatpush1.bf16.msra.mxu0 %v2234
      %4592 = vmatprep.subr.bf16.mxu0 0
      %4593 = vmatpush1.bf16.msra.mxu0 %v2235
      %4594 = vmatprep.subr.bf16.mxu0 0
      %4595 = vmatpush1.bf16.msra.mxu0 %v2236
      %4596 = vmatprep.subr.bf16.mxu0 0
      %4597 = vmatpush1.bf16.msra.mxu0 %v2237
      %4598 = vmatprep.subr.bf16.mxu0 0
      %4599 = vmatpush1.bf16.msra.mxu0 0
      %4600 = vmatprep.subr.bf16.mxu0 0
      %4601 = vmatpush1.bf16.msra.mxu0 0
      %4602 = vmatprep.subr.bf16.mxu0 0
      %4603 = vmatpush1.bf16.msra.mxu0 0
      %4604 = vmatprep.subr.bf16.mxu0 0
      %4605 = vmatpush1.bf16.msra.mxu0 0
      %4606 = vmatprep.subr.bf16.mxu0 0
      %4607 = vmatpush1.bf16.msra.mxu0 0
      %4608 = vmatprep.subr.bf16.mxu0 0
      %4609 = vmatpush1.bf16.msra.mxu0 0
      %4610 = vmatprep.subr.bf16.mxu0 0
      %4611 = vmatpush1.bf16.msra.mxu0 0
      %4612 = vmatprep.subr.bf16.mxu0 0
      %4613 = vmatpush1.bf16.msra.mxu0 0
      %4614 = vmatprep.subr.bf16.mxu0 0
      %4615 = vmatpush1.bf16.msra.mxu0 0
      %4616 = vmatprep.subr.bf16.mxu0 0
      %4617 = vmatpush1.bf16.msra.mxu0 0
      %4618 = vmatprep.mubr.bf16.mxu0 0
      %4619 = vmatmul.mubr.bf16.gmra.mrb[0].mxu0 %v4018
      %v4620 = vpop.f32.mrb[0].mxu0
      %v4621 = vadd.f32 0.0, %v4620
      %v4622 = vpop.f32.mrb[0].mxu0
      %v4623 = vpop.f32.mrb[0].mxu0
      %v4624 = vadd.f32 0.0, %v4623
      %v4625 = vpop.f32.mrb[0].mxu0
      %4626 = vmatprep.mubr.bf16.mxu0 0
      %4627 = vmatmul.mubr.bf16.gmra.mrb[0].mxu0 %v4021
      %v4628 = vpop.f32.mrb[0].mxu0
      %v4629 = vadd.f32 0.0, %v4628
      %v4630 = vpop.f32.mrb[0].mxu0
      %v4631 = vpop.f32.mrb[0].mxu0
      %v4632 = vadd.f32 0.0, %v4631
      %v4633 = vpop.f32.mrb[0].mxu0
      %4634 = vmatprep.mubr.bf16.mxu0 0
      %4635 = vmatmul.mubr.bf16.gmra.mrb[0].mxu0 %v4024
      %v4636 = vpop.f32.mrb[0].mxu0
      %v4637 = vadd.f32 0.0, %v4636
      %v4638 = vpop.f32.mrb[0].mxu0
      %v4639 = vpop.f32.mrb[0].mxu0
      %v4640 = vadd.f32 0.0, %v4639
      %v4641 = vpop.f32.mrb[0].mxu0
      %4642 = vmatprep.mubr.bf16.mxu0 0
      %4643 = vmatmul.mubr.bf16.gmra.mrb[0].mxu0 %v4027
      %v4644 = vpop.f32.mrb[0].mxu0
      %v4645 = vadd.f32 0.0, %v4644
      %v4646 = vpop.f32.mrb[0].mxu0
      %v4647 = vpop.f32.mrb[0].mxu0
      %v4648 = vadd.f32 0.0, %v4647
      %v4649 = vpop.f32.mrb[0].mxu0
      %4650 = vmatprep.mubr.bf16.mxu0 0
      %4651 = vmatmul.mubr.bf16.gmra.mrb[0].mxu0 %v4030
      %v4652 = vpop.f32.mrb[0].mxu0
      %v4653 = vadd.f32 0.0, %v4652
      %v4654 = vpop.f32.mrb[0].mxu0
      %v4655 = vpop.f32.mrb[0].mxu0
      %v4656 = vadd.f32 0.0, %v4655
      %v4657 = vpop.f32.mrb[0].mxu0
      %4658 = vmatprep.mubr.bf16.mxu0 0
      %4659 = vmatmul.mubr.bf16.gmra.mrb[0].mxu0 %v4033
      %v4660 = vpop.f32.mrb[0].mxu0
      %v4661 = vadd.f32 0.0, %v4660
      %v4662 = vpop.f32.mrb[0].mxu0
      %v4663 = vpop.f32.mrb[0].mxu0
      %v4664 = vadd.f32 0.0, %v4663
      %v4665 = vpop.f32.mrb[0].mxu0
      %4666 = vmatprep.mubr.bf16.mxu0 0
      %4667 = vmatmul.mubr.bf16.gmra.mrb[0].mxu0 %v4036
      %v4668 = vpop.f32.mrb[0].mxu0
      %v4669 = vadd.f32 0.0, %v4668
      %v4670 = vpop.f32.mrb[0].mxu0
      %v4671 = vpop.f32.mrb[0].mxu0
      %v4672 = vadd.f32 0.0, %v4671
      %v4673 = vpop.f32.mrb[0].mxu0
      %4674 = vmatprep.mubr.bf16.mxu0 0
      %4675 = vmatmul.mubr.bf16.gmra.mrb[0].mxu0 %v4039
      %v4676 = vpop.f32.mrb[0].mxu0
      %v4677 = vpop.f32.mrb[0].mxu0
      %v4678 = vpop.f32.mrb[0].mxu0
      %v4679 = vpop.f32.mrb[0].mxu0
      %4680 = vdwg.mxu0
      %v4681 = vadd.f32 %v4572, %v4621
      %v4682 = vadd.f32 %v4573, %v4624
      %v4683 = vadd.f32 %v4574, %v4629
      %v4684 = vadd.f32 %v4575, %v4632
      %v4685 = vadd.f32 %v4576, %v4637
      %v4686 = vadd.f32 %v4577, %v4640
      %v4687 = vadd.f32 %v4578, %v4645
      %v4688 = vadd.f32 %v4579, %v4648
      %v4689 = vadd.f32 %v4580, %v4653
      %v4690 = vadd.f32 %v4581, %v4656
      %v4691 = vadd.f32 %v4582, %v4661
      %v4692 = vadd.f32 %v4583, %v4664
      %v4693 = vadd.f32 %v4584, %v4669
      %v4694 = vadd.f32 %v4585, %v4672
      %v4695 = vadd.f32 %v4681, %v1561
      %v4696 = vadd.f32 %v4682, %v1561
      %v4697 = vadd.f32 %v4683, %v1561
      %v4698 = vadd.f32 %v4684, %v1561
      %v4699 = vadd.f32 %v4685, %v1561
      %v4700 = vadd.f32 %v4686, %v1561
      %v4701 = vadd.f32 %v4687, %v1561
      %v4702 = vadd.f32 %v4688, %v1561
      %v4703 = vadd.f32 %v4689, %v1561
      %v4704 = vadd.f32 %v4690, %v1561
      %v4705 = vadd.f32 %v4691, %v1561
      %v4706 = vadd.f32 %v4692, %v1561
      %v4707 = vadd.f32 %v4693, %v1561
      %v4708 = vadd.f32 %v4694, %v1561
      %v4709 = vmax.f32 %v4695, 0.0
      %v4710 = vmax.f32 %v4696, 0.0
      %v4711 = vmax.f32 %v4697, 0.0
      %v4712 = vmax.f32 %v4698, 0.0
      %v4713 = vmax.f32 %v4699, 0.0
      %v4714 = vmax.f32 %v4700, 0.0
      %v4715 = vmax.f32 %v4701, 0.0
      %v4716 = vmax.f32 %v4702, 0.0
      %v4717 = vmax.f32 %v4703, 0.0
      %v4718 = vmax.f32 %v4704, 0.0
      %v4719 = vmax.f32 %v4705, 0.0
      %v4720 = vmax.f32 %v4706, 0.0
      %v4721 = vmax.f32 %v4707, 0.0
      %v4722 = vmax.f32 %v4708, 0.0
      %4723 = vmatprep.subr.bf16.mxu0 0
      %4724 = vmatpush1.bf16.msra.mxu0 %v513
      %4725 = vmatprep.subr.bf16.mxu0 0
      %4726 = vmatpush1.bf16.msra.mxu0 %v514
      %4727 = vmatprep.subr.bf16.mxu0 0
      %4728 = vmatpush1.bf16.msra.mxu0 %v515
      %4729 = vmatprep.subr.bf16.mxu0 0
      %4730 = vmatpush1.bf16.msra.mxu0 %v516
      %4731 = vmatprep.subr.bf16.mxu0 0
      %4732 = vmatpush1.bf16.msra.mxu0 %v517
      %4733 = vmatprep.subr.bf16.mxu0 0
      %4734 = vmatpush1.bf16.msra.mxu0 %v518
      %4735 = vmatprep.subr.bf16.mxu0 0
      %4736 = vmatpush1.bf16.msra.mxu0 0
      %4737 = vmatprep.subr.bf16.mxu0 0
      %4738 = vmatpush1.bf16.msra.mxu0 0
      %4739 = vmatprep.subr.bf16.mxu0 0
      %4740 = vmatpush1.bf16.msra.mxu0 0
      %4741 = vmatprep.subr.bf16.mxu0 0
      %4742 = vmatpush1.bf16.msra.mxu0 0
      %4743 = vmatprep.subr.bf16.mxu0 0
      %4744 = vmatpush1.bf16.msra.mxu0 0
      %4745 = vmatprep.subr.bf16.mxu0 0
      %4746 = vmatpush1.bf16.msra.mxu0 0
      %4747 = vmatprep.subr.bf16.mxu0 0
      %4748 = vmatpush1.bf16.msra.mxu0 0
      %4749 = vmatprep.subr.bf16.mxu0 0
      %4750 = vmatpush1.bf16.msra.mxu0 0
      %4751 = vmatprep.subr.bf16.mxu0 0
      %4752 = vmatpush1.bf16.msra.mxu0 0
      %4753 = vmatprep.subr.bf16.mxu0 0
      %4754 = vmatpush1.bf16.msra.mxu0 0
      %4755 = vmatprep.mubr.bf16.mxu0 0
      %4756 = vmatmul.mubr.bf16.gmra.mrb[0].mxu0 %v1425
      %v4757 = vpop.f32.mrb[0].mxu0
      %v4758 = vadd.f32 0.0, %v4757
      %v4759 = vpop.f32.mrb[0].mxu0
      %v4760 = vpop.f32.mrb[0].mxu0
      %v4761 = vadd.f32 0.0, %v4760
      %v4762 = vpop.f32.mrb[0].mxu0
      %4763 = vmatprep.mubr.bf16.mxu0 0
      %4764 = vmatmul.mubr.bf16.gmra.mrb[0].mxu0 %v1428
      %v4765 = vpop.f32.mrb[0].mxu0
      %v4766 = vadd.f32 0.0, %v4765
      %v4767 = vpop.f32.mrb[0].mxu0
      %v4768 = vpop.f32.mrb[0].mxu0
      %v4769 = vadd.f32 0.0, %v4768
      %v4770 = vpop.f32.mrb[0].mxu0
      %4771 = vmatprep.mubr.bf16.mxu0 0
      %4772 = vmatmul.mubr.bf16.gmra.mrb[0].mxu0 %v1431
      %v4773 = vpop.f32.mrb[0].mxu0
      %v4774 = vadd.f32 0.0, %v4773
      %v4775 = vpop.f32.mrb[0].mxu0
      %v4776 = vpop.f32.mrb[0].mxu0
      %v4777 = vadd.f32 0.0, %v4776
      %v4778 = vpop.f32.mrb[0].mxu0
      %4779 = vmatprep.mubr.bf16.mxu0 0
      %4780 = vmatmul.mubr.bf16.gmra.mrb[0].mxu0 %v1434
      %v4781 = vpop.f32.mrb[0].mxu0
      %v4782 = vadd.f32 0.0, %v4781
      %v4783 = vpop.f32.mrb[0].mxu0
      %v4784 = vpop.f32.mrb[0].mxu0
      %v4785 = vadd.f32 0.0, %v4784
      %v4786 = vpop.f32.mrb[0].mxu0
      %4787 = vmatprep.mubr.bf16.mxu0 0
      %4788 = vmatmul.mubr.bf16.gmra.mrb[0].mxu0 %v1437
      %v4789 = vpop.f32.mrb[0].mxu0
      %v4790 = vadd.f32 0.0, %v4789
      %v4791 = vpop.f32.mrb[0].mxu0
      %v4792 = vpop.f32.mrb[0].mxu0
      %v4793 = vadd.f32 0.0, %v4792
      %v4794 = vpop.f32.mrb[0].mxu0
      %4795 = vmatprep.mubr.bf16.mxu0 0
      %4796 = vmatmul.mubr.bf16.gmra.mrb[0].mxu0 %v1440
      %v4797 = vpop.f32.mrb[0].mxu0
      %v4798 = vadd.f32 0.0, %v4797
      %v4799 = vpop.f32.mrb[0].mxu0
      %v4800 = vpop.f32.mrb[0].mxu0
      %v4801 = vadd.f32 0.0, %v4800
      %v4802 = vpop.f32.mrb[0].mxu0
      %4803 = vmatprep.mubr.bf16.mxu0 0
      %4804 = vmatmul.mubr.bf16.gmra.mrb[0].mxu0 %v1443
      %v4805 = vpop.f32.mrb[0].mxu0
      %v4806 = vadd.f32 0.0, %v4805
      %v4807 = vpop.f32.mrb[0].mxu0
      %v4808 = vpop.f32.mrb[0].mxu0
      %v4809 = vadd.f32 0.0, %v4808
      %v4810 = vpop.f32.mrb[0].mxu0
      %4811 = vmatprep.mubr.bf16.mxu0 0
      %4812 = vmatmul.mubr.bf16.gmra.mrb[0].mxu0 %v1446
      %v4813 = vpop.f32.mrb[0].mxu0
      %v4814 = vpop.f32.mrb[0].mxu0
      %v4815 = vpop.f32.mrb[0].mxu0
      %v4816 = vpop.f32.mrb[0].mxu0
      %4817 = vdwg.mxu0
      %4818 = vmatprep.subr.bf16.mxu0 0
      %4819 = vmatpush1.bf16.msra.mxu0 %v709
      %4820 = vmatprep.subr.bf16.mxu0 0
      %4821 = vmatpush1.bf16.msra.mxu0 %v710
      %4822 = vmatprep.subr.bf16.mxu0 0
      %4823 = vmatpush1.bf16.msra.mxu0 %v711
      %4824 = vmatprep.subr.bf16.mxu0 0
      %4825 = vmatpush1.bf16.msra.mxu0 %v712
      %4826 = vmatprep.subr.bf16.mxu0 0
      %4827 = vmatpush1.bf16.msra.mxu0 %v713
      %4828 = vmatprep.subr.bf16.mxu0 0
      %4829 = vmatpush1.bf16.msra.mxu0 %v714
      %4830 = vmatprep.subr.bf16.mxu0 0
      %4831 = vmatpush1.bf16.msra.mxu0 0
      %4832 = vmatprep.subr.bf16.mxu0 0
      %4833 = vmatpush1.bf16.msra.mxu0 0
      %4834 = vmatprep.subr.bf16.mxu0 0
      %4835 = vmatpush1.bf16.msra.mxu0 0
      %4836 = vmatprep.subr.bf16.mxu0 0
      %4837 = vmatpush1.bf16.msra.mxu0 0
      %4838 = vmatprep.subr.bf16.mxu0 0
      %4839 = vmatpush1.bf16.msra.mxu0 0
      %4840 = vmatprep.subr.bf16.mxu0 0
      %4841 = vmatpush1.bf16.msra.mxu0 0
      %4842 = vmatprep.subr.bf16.mxu0 0
      %4843 = vmatpush1.bf16.msra.mxu0 0
      %4844 = vmatprep.subr.bf16.mxu0 0
      %4845 = vmatpush1.bf16.msra.mxu0 0
      %4846 = vmatprep.subr.bf16.mxu0 0
      %4847 = vmatpush1.bf16.msra.mxu0 0
      %4848 = vmatprep.subr.bf16.mxu0 0
      %4849 = vmatpush1.bf16.msra.mxu0 0
      %4850 = vmatprep.mubr.bf16.mxu0 0
      %4851 = vmatmul.mubr.bf16.gmra.mrb[0].mxu0 %v1186
      %v4852 = vpop.f32.mrb[0].mxu0
      %v4853 = vadd.f32 %v4758, %v4852
      %v4854 = vpop.f32.mrb[0].mxu0
      %v4855 = vpop.f32.mrb[0].mxu0
      %v4856 = vadd.f32 %v4761, %v4855
      %v4857 = vpop.f32.mrb[0].mxu0
      %4858 = vmatprep.mubr.bf16.mxu0 0
      %4859 = vmatmul.mubr.bf16.gmra.mrb[0].mxu0 %v1189
      %v4860 = vpop.f32.mrb[0].mxu0
      %v4861 = vadd.f32 %v4766, %v4860
      %v4862 = vpop.f32.mrb[0].mxu0
      %v4863 = vpop.f32.mrb[0].mxu0
      %v4864 = vadd.f32 %v4769, %v4863
      %v4865 = vpop.f32.mrb[0].mxu0
      %4866 = vmatprep.mubr.bf16.mxu0 0
      %4867 = vmatmul.mubr.bf16.gmra.mrb[0].mxu0 %v1192
      %v4868 = vpop.f32.mrb[0].mxu0
      %v4869 = vadd.f32 %v4774, %v4868
      %v4870 = vpop.f32.mrb[0].mxu0
      %v4871 = vpop.f32.mrb[0].mxu0
      %v4872 = vadd.f32 %v4777, %v4871
      %v4873 = vpop.f32.mrb[0].mxu0
      %4874 = vmatprep.mubr.bf16.mxu0 0
      %4875 = vmatmul.mubr.bf16.gmra.mrb[0].mxu0 %v1195
      %v4876 = vpop.f32.mrb[0].mxu0
      %v4877 = vadd.f32 %v4782, %v4876
      %v4878 = vpop.f32.mrb[0].mxu0
      %v4879 = vpop.f32.mrb[0].mxu0
      %v4880 = vadd.f32 %v4785, %v4879
      %v4881 = vpop.f32.mrb[0].mxu0
      %4882 = vmatprep.mubr.bf16.mxu0 0
      %4883 = vmatmul.mubr.bf16.gmra.mrb[0].mxu0 %v1198
      %v4884 = vpop.f32.mrb[0].mxu0
      %v4885 = vadd.f32 %v4790, %v4884
      %v4886 = vpop.f32.mrb[0].mxu0
      %v4887 = vpop.f32.mrb[0].mxu0
      %v4888 = vadd.f32 %v4793, %v4887
      %v4889 = vpop.f32.mrb[0].mxu0
      %4890 = vmatprep.mubr.bf16.mxu0 0
      %4891 = vmatmul.mubr.bf16.gmra.mrb[0].mxu0 %v1201
      %v4892 = vpop.f32.mrb[0].mxu0
      %v4893 = vadd.f32 %v4798, %v4892
      %v4894 = vpop.f32.mrb[0].mxu0
      %v4895 = vpop.f32.mrb[0].mxu0
      %v4896 = vadd.f32 %v4801, %v4895
      %v4897 = vpop.f32.mrb[0].mxu0
      %4898 = vmatprep.mubr.bf16.mxu0 0
      %4899 = vmatmul.mubr.bf16.gmra.mrb[0].mxu0 %v1204
      %v4900 = vpop.f32.mrb[0].mxu0
      %v4901 = vadd.f32 %v4806, %v4900
      %v4902 = vpop.f32.mrb[0].mxu0
      %v4903 = vpop.f32.mrb[0].mxu0
      %v4904 = vadd.f32 %v4809, %v4903
      %v4905 = vpop.f32.mrb[0].mxu0
      %4906 = vmatprep.mubr.bf16.mxu0 0
      %4907 = vmatmul.mubr.bf16.gmra.mrb[0].mxu0 %v1207
      %v4908 = vpop.f32.mrb[0].mxu0
      %v4909 = vpop.f32.mrb[0].mxu0
      %v4910 = vpop.f32.mrb[0].mxu0
      %v4911 = vpop.f32.mrb[0].mxu0
      %4912 = vdwg.mxu0
      %4913 = vmatprep.subr.bf16.mxu0 0
      %4914 = vmatpush1.bf16.msra.mxu0 %v934
      %4915 = vmatprep.subr.bf16.mxu0 0
      %4916 = vmatpush1.bf16.msra.mxu0 %v935
      %4917 = vmatprep.subr.bf16.mxu0 0
      %4918 = vmatpush1.bf16.msra.mxu0 %v936
      %4919 = vmatprep.subr.bf16.mxu0 0
      %4920 = vmatpush1.bf16.msra.mxu0 %v937
      %4921 = vmatprep.subr.bf16.mxu0 0
      %4922 = vmatpush1.bf16.msra.mxu0 %v938
      %4923 = vmatprep.subr.bf16.mxu0 0
      %4924 = vmatpush1.bf16.msra.mxu0 %v939
      %4925 = vmatprep.subr.bf16.mxu0 0
      %4926 = vmatpush1.bf16.msra.mxu0 0
      %4927 = vmatprep.subr.bf16.mxu0 0
      %4928 = vmatpush1.bf16.msra.mxu0 0
      %4929 = vmatprep.subr.bf16.mxu0 0
      %4930 = vmatpush1.bf16.msra.mxu0 0
      %4931 = vmatprep.subr.bf16.mxu0 0
      %4932 = vmatpush1.bf16.msra.mxu0 0
      %4933 = vmatprep.subr.bf16.mxu0 0
      %4934 = vmatpush1.bf16.msra.mxu0 0
      %4935 = vmatprep.subr.bf16.mxu0 0
      %4936 = vmatpush1.bf16.msra.mxu0 0
      %4937 = vmatprep.subr.bf16.mxu0 0
      %4938 = vmatpush1.bf16.msra.mxu0 0
      %4939 = vmatprep.subr.bf16.mxu0 0
      %4940 = vmatpush1.bf16.msra.mxu0 0
      %4941 = vmatprep.subr.bf16.mxu0 0
      %4942 = vmatpush1.bf16.msra.mxu0 0
      %4943 = vmatprep.subr.bf16.mxu0 0
      %4944 = vmatpush1.bf16.msra.mxu0 0
      %4945 = vmatprep.mubr.bf16.mxu0 0
      %4946 = vmatmul.mubr.bf16.gmra.mrb[0].mxu0 %v2847
      %v4947 = vpop.f32.mrb[0].mxu0
      %v4948 = vadd.f32 0.0, %v4947
      %v4949 = vpop.f32.mrb[0].mxu0
      %v4950 = vpop.f32.mrb[0].mxu0
      %v4951 = vadd.f32 0.0, %v4950
      %v4952 = vpop.f32.mrb[0].mxu0
      %4953 = vmatprep.mubr.bf16.mxu0 0
      %4954 = vmatmul.mubr.bf16.gmra.mrb[0].mxu0 %v2850
      %v4955 = vpop.f32.mrb[0].mxu0
      %v4956 = vadd.f32 0.0, %v4955
      %v4957 = vpop.f32.mrb[0].mxu0
      %v4958 = vpop.f32.mrb[0].mxu0
      %v4959 = vadd.f32 0.0, %v4958
      %v4960 = vpop.f32.mrb[0].mxu0
      %4961 = vmatprep.mubr.bf16.mxu0 0
      %4962 = vmatmul.mubr.bf16.gmra.mrb[0].mxu0 %v2853
      %v4963 = vpop.f32.mrb[0].mxu0
      %v4964 = vadd.f32 0.0, %v4963
      %v4965 = vpop.f32.mrb[0].mxu0
      %v4966 = vpop.f32.mrb[0].mxu0
      %v4967 = vadd.f32 0.0, %v4966
      %v4968 = vpop.f32.mrb[0].mxu0
      %4969 = vmatprep.mubr.bf16.mxu0 0
      %4970 = vmatmul.mubr.bf16.gmra.mrb[0].mxu0 %v2856
      %v4971 = vpop.f32.mrb[0].mxu0
      %v4972 = vadd.f32 0.0, %v4971
      %v4973 = vpop.f32.mrb[0].mxu0
      %v4974 = vpop.f32.mrb[0].mxu0
      %v4975 = vadd.f32 0.0, %v4974
      %v4976 = vpop.f32.mrb[0].mxu0
      %4977 = vmatprep.mubr.bf16.mxu0 0
      %4978 = vmatmul.mubr.bf16.gmra.mrb[0].mxu0 %v2859
      %v4979 = vpop.f32.mrb[0].mxu0
      %v4980 = vadd.f32 0.0, %v4979
      %v4981 = vpop.f32.mrb[0].mxu0
      %v4982 = vpop.f32.mrb[0].mxu0
      %v4983 = vadd.f32 0.0, %v4982
      %v4984 = vpop.f32.mrb[0].mxu0
      %4985 = vmatprep.mubr.bf16.mxu0 0
      %4986 = vmatmul.mubr.bf16.gmra.mrb[0].mxu0 %v2862
      %v4987 = vpop.f32.mrb[0].mxu0
      %v4988 = vadd.f32 0.0, %v4987
      %v4989 = vpop.f32.mrb[0].mxu0
      %v4990 = vpop.f32.mrb[0].mxu0
      %v4991 = vadd.f32 0.0, %v4990
      %v4992 = vpop.f32.mrb[0].mxu0
      %4993 = vmatprep.mubr.bf16.mxu0 0
      %4994 = vmatmul.mubr.bf16.gmra.mrb[0].mxu0 %v2865
      %v4995 = vpop.f32.mrb[0].mxu0
      %v4996 = vadd.f32 0.0, %v4995
      %v4997 = vpop.f32.mrb[0].mxu0
      %v4998 = vpop.f32.mrb[0].mxu0
      %v4999 = vadd.f32 0.0, %v4998
      %v5000 = vpop.f32.mrb[0].mxu0
      %5001 = vmatprep.mubr.bf16.mxu0 0
      %5002 = vmatmul.mubr.bf16.gmra.mrb[0].mxu0 %v2868
      %v5003 = vpop.f32.mrb[0].mxu0
      %v5004 = vpop.f32.mrb[0].mxu0
      %v5005 = vpop.f32.mrb[0].mxu0
      %v5006 = vpop.f32.mrb[0].mxu0
      %5007 = vdwg.mxu0
      %v5008 = vadd.f32 %v4853, %v4948
      %v5009 = vadd.f32 %v4856, %v4951
      %v5010 = vadd.f32 %v4861, %v4956
      %v5011 = vadd.f32 %v4864, %v4959
      %v5012 = vadd.f32 %v4869, %v4964
      %v5013 = vadd.f32 %v4872, %v4967
      %v5014 = vadd.f32 %v4877, %v4972
      %v5015 = vadd.f32 %v4880, %v4975
      %v5016 = vadd.f32 %v4885, %v4980
      %v5017 = vadd.f32 %v4888, %v4983
      %v5018 = vadd.f32 %v4893, %v4988
      %v5019 = vadd.f32 %v4896, %v4991
      %v5020 = vadd.f32 %v4901, %v4996
      %v5021 = vadd.f32 %v4904, %v4999
      %5022 = vmatprep.subr.bf16.mxu0 0
      %5023 = vmatpush1.bf16.msra.mxu0 %v1173
      %5024 = vmatprep.subr.bf16.mxu0 0
      %5025 = vmatpush1.bf16.msra.mxu0 %v1174
      %5026 = vmatprep.subr.bf16.mxu0 0
      %5027 = vmatpush1.bf16.msra.mxu0 %v1175
      %5028 = vmatprep.subr.bf16.mxu0 0
      %5029 = vmatpush1.bf16.msra.mxu0 %v1176
      %5030 = vmatprep.subr.bf16.mxu0 0
      %5031 = vmatpush1.bf16.msra.mxu0 %v1177
      %5032 = vmatprep.subr.bf16.mxu0 0
      %5033 = vmatpush1.bf16.msra.mxu0 %v1178
      %5034 = vmatprep.subr.bf16.mxu0 0
      %5035 = vmatpush1.bf16.msra.mxu0 0
      %5036 = vmatprep.subr.bf16.mxu0 0
      %5037 = vmatpush1.bf16.msra.mxu0 0
      %5038 = vmatprep.subr.bf16.mxu0 0
      %5039 = vmatpush1.bf16.msra.mxu0 0
      %5040 = vmatprep.subr.bf16.mxu0 0
      %5041 = vmatpush1.bf16.msra.mxu0 0
      %5042 = vmatprep.subr.bf16.mxu0 0
      %5043 = vmatpush1.bf16.msra.mxu0 0
      %5044 = vmatprep.subr.bf16.mxu0 0
      %5045 = vmatpush1.bf16.msra.mxu0 0
      %5046 = vmatprep.subr.bf16.mxu0 0
      %5047 = vmatpush1.bf16.msra.mxu0 0
      %5048 = vmatprep.subr.bf16.mxu0 0
      %5049 = vmatpush1.bf16.msra.mxu0 0
      %5050 = vmatprep.subr.bf16.mxu0 0
      %5051 = vmatpush1.bf16.msra.mxu0 0
      %5052 = vmatprep.subr.bf16.mxu0 0
      %5053 = vmatpush1.bf16.msra.mxu0 0
      %5054 = vmatprep.mubr.bf16.mxu0 0
      %5055 = vmatmul.mubr.bf16.gmra.mrb[0].mxu0 %v4018
      %v5056 = vpop.f32.mrb[0].mxu0
      %v5057 = vadd.f32 0.0, %v5056
      %v5058 = vpop.f32.mrb[0].mxu0
      %v5059 = vpop.f32.mrb[0].mxu0
      %v5060 = vadd.f32 0.0, %v5059
      %v5061 = vpop.f32.mrb[0].mxu0
      %5062 = vmatprep.mubr.bf16.mxu0 0
      %5063 = vmatmul.mubr.bf16.gmra.mrb[0].mxu0 %v4021
      %v5064 = vpop.f32.mrb[0].mxu0
      %v5065 = vadd.f32 0.0, %v5064
      %v5066 = vpop.f32.mrb[0].mxu0
      %v5067 = vpop.f32.mrb[0].mxu0
      %v5068 = vadd.f32 0.0, %v5067
      %v5069 = vpop.f32.mrb[0].mxu0
      %5070 = vmatprep.mubr.bf16.mxu0 0
      %5071 = vmatmul.mubr.bf16.gmra.mrb[0].mxu0 %v4024
      %v5072 = vpop.f32.mrb[0].mxu0
      %v5073 = vadd.f32 0.0, %v5072
      %v5074 = vpop.f32.mrb[0].mxu0
      %v5075 = vpop.f32.mrb[0].mxu0
      %v5076 = vadd.f32 0.0, %v5075
      %v5077 = vpop.f32.mrb[0].mxu0
      %5078 = vmatprep.mubr.bf16.mxu0 0
      %5079 = vmatmul.mubr.bf16.gmra.mrb[0].mxu0 %v4027
      %v5080 = vpop.f32.mrb[0].mxu0
      %v5081 = vadd.f32 0.0, %v5080
      %v5082 = vpop.f32.mrb[0].mxu0
      %v5083 = vpop.f32.mrb[0].mxu0
      %v5084 = vadd.f32 0.0, %v5083
      %v5085 = vpop.f32.mrb[0].mxu0
      %5086 = vmatprep.mubr.bf16.mxu0 0
      %5087 = vmatmul.mubr.bf16.gmra.mrb[0].mxu0 %v4030
      %v5088 = vpop.f32.mrb[0].mxu0
      %v5089 = vadd.f32 0.0, %v5088
      %v5090 = vpop.f32.mrb[0].mxu0
      %v5091 = vpop.f32.mrb[0].mxu0
      %v5092 = vadd.f32 0.0, %v5091
      %v5093 = vpop.f32.mrb[0].mxu0
      %5094 = vmatprep.mubr.bf16.mxu0 0
      %5095 = vmatmul.mubr.bf16.gmra.mrb[0].mxu0 %v4033
      %v5096 = vpop.f32.mrb[0].mxu0
      %v5097 = vadd.f32 0.0, %v5096
      %v5098 = vpop.f32.mrb[0].mxu0
      %v5099 = vpop.f32.mrb[0].mxu0
      %v5100 = vadd.f32 0.0, %v5099
      %v5101 = vpop.f32.mrb[0].mxu0
      %5102 = vmatprep.mubr.bf16.mxu0 0
      %5103 = vmatmul.mubr.bf16.gmra.mrb[0].mxu0 %v4036
      %v5104 = vpop.f32.mrb[0].mxu0
      %v5105 = vadd.f32 0.0, %v5104
      %v5106 = vpop.f32.mrb[0].mxu0
      %v5107 = vpop.f32.mrb[0].mxu0
      %v5108 = vadd.f32 0.0, %v5107
      %v5109 = vpop.f32.mrb[0].mxu0
      %5110 = vmatprep.mubr.bf16.mxu0 0
      %5111 = vmatmul.mubr.bf16.gmra.mrb[0].mxu0 %v4039
      %v5112 = vpop.f32.mrb[0].mxu0
      %v5113 = vpop.f32.mrb[0].mxu0
      %v5114 = vpop.f32.mrb[0].mxu0
      %v5115 = vpop.f32.mrb[0].mxu0
      %5116 = vdwg.mxu0
      %v5117 = vadd.f32 %v5008, %v5057
      %v5118 = vadd.f32 %v5009, %v5060
      %v5119 = vadd.f32 %v5010, %v5065
      %v5120 = vadd.f32 %v5011, %v5068
      %v5121 = vadd.f32 %v5012, %v5073
      %v5122 = vadd.f32 %v5013, %v5076
      %v5123 = vadd.f32 %v5014, %v5081
      %v5124 = vadd.f32 %v5015, %v5084
      %v5125 = vadd.f32 %v5016, %v5089
      %v5126 = vadd.f32 %v5017, %v5092
      %v5127 = vadd.f32 %v5018, %v5097
      %v5128 = vadd.f32 %v5019, %v5100
      %v5129 = vadd.f32 %v5020, %v5105
      %v5130 = vadd.f32 %v5021, %v5108
      %s5131 = scalar_lea.vmem %s381, 448
      %v5132 = vld [vmem:[%s5131] sm:$0xf]
      %v5133 = vld [vmem:[%s5131 + $0x4] sm:$0xf]
      %v5134 = vld [vmem:[%s5131 + $0x8] sm:$0xf]
      %v5135 = vld [vmem:[%s5131 + $0xc] sm:$0xf]
      %v5136 = vld [vmem:[%s5131 + $0x10] sm:$0xf]
      %v5137 = vld [vmem:[%s5131 + $0x14] sm:$0xf]
      %v5138 = vld [vmem:[%s5131 + $0x18] sm:$0xf]
      %v5139 = vld [vmem:[%s5131 + $0x1c] sm:$0xf]
      %v5140 = vld [vmem:[%s5131 + $0x20] sm:$0xf]
      %v5141 = vld [vmem:[%s5131 + $0x24] sm:$0xf]
      %v5142 = vld [vmem:[%s5131 + $0x28] sm:$0xf]
      %v5143 = vld [vmem:[%s5131 + $0x2c] sm:$0xf]
      %v5144 = vld [vmem:[%s5131 + $0x30] sm:$0xf]
      %v5145 = vld [vmem:[%s5131 + $0x34] sm:$0xf]
      %v5146 = vld [vmem:[%s5131 + $0x38] sm:$0xf]
      %v5147 = vld [vmem:[%s5131 + $0x3c] sm:$0xf]
      %v5164 = vunpack.c.l.b16 %v5132
      %v5165 = vunpack.c.l.b16 %v5133
      %v5166 = vunpack.c.l.b16 %v5134
      %v5167 = vunpack.c.l.b16 %v5135
      %v5168 = vunpack.c.l.b16 %v5136
      %v5169 = vunpack.c.l.b16 %v5137
      %v5170 = vunpack.c.l.b16 %v5138
      %v5171 = vunpack.c.l.b16 %v5139
      %v5172 = vunpack.c.l.b16 %v5140
      %v5173 = vunpack.c.l.b16 %v5141
      %v5174 = vunpack.c.l.b16 %v5142
      %v5175 = vunpack.c.l.b16 %v5143
      %v5176 = vunpack.c.l.b16 %v5144
      %v5177 = vunpack.c.l.b16 %v5145
      %v5178 = vunpack.c.l.b16 %v5146
      %v5179 = vunpack.c.l.b16 %v5147
      %v5180 = vpack.c.b16 %v5165, %v5164
      %v5181 = vpack.c.b16 %v5167, %v5166
      %v5182 = vpack.c.b16 %v5169, %v5168
      %v5183 = vpack.c.b16 %v5171, %v5170
      %v5184 = vpack.c.b16 %v5173, %v5172
      %v5185 = vpack.c.b16 %v5175, %v5174
      %v5186 = vpack.c.b16 %v5177, %v5176
      %v5187 = vpack.c.b16 %v5179, %v5178
      %v5189 = vsel %vm525, %v5180, 0
      %v5192 = vsel %vm525, %v5181, 0
      %v5195 = vsel %vm525, %v5182, 0
      %v5198 = vsel %vm525, %v5183, 0
      %v5201 = vsel %vm525, %v5184, 0
      %v5204 = vsel %vm525, %v5185, 0
      %v5207 = vsel %vm525, %v5186, 0
      %v5210 = vsel %vm525, %v5187, 0
      %5212 = vmatprep.subr.bf16.mxu0 0
      %5213 = vmatpush1.bf16.msra.mxu0 %v1412
      %5214 = vmatprep.subr.bf16.mxu0 0
      %5215 = vmatpush1.bf16.msra.mxu0 %v1413
      %5216 = vmatprep.subr.bf16.mxu0 0
      %5217 = vmatpush1.bf16.msra.mxu0 %v1414
      %5218 = vmatprep.subr.bf16.mxu0 0
      %5219 = vmatpush1.bf16.msra.mxu0 %v1415
      %5220 = vmatprep.subr.bf16.mxu0 0
      %5221 = vmatpush1.bf16.msra.mxu0 %v1416
      %5222 = vmatprep.subr.bf16.mxu0 0
      %5223 = vmatpush1.bf16.msra.mxu0 %v1417
      %5224 = vmatprep.subr.bf16.mxu0 0
      %5225 = vmatpush1.bf16.msra.mxu0 0
      %5226 = vmatprep.subr.bf16.mxu0 0
      %5227 = vmatpush1.bf16.msra.mxu0 0
      %5228 = vmatprep.subr.bf16.mxu0 0
      %5229 = vmatpush1.bf16.msra.mxu0 0
      %5230 = vmatprep.subr.bf16.mxu0 0
      %5231 = vmatpush1.bf16.msra.mxu0 0
      %5232 = vmatprep.subr.bf16.mxu0 0
      %5233 = vmatpush1.bf16.msra.mxu0 0
      %5234 = vmatprep.subr.bf16.mxu0 0
      %5235 = vmatpush1.bf16.msra.mxu0 0
      %5236 = vmatprep.subr.bf16.mxu0 0
      %5237 = vmatpush1.bf16.msra.mxu0 0
      %5238 = vmatprep.subr.bf16.mxu0 0
      %5239 = vmatpush1.bf16.msra.mxu0 0
      %5240 = vmatprep.subr.bf16.mxu0 0
      %5241 = vmatpush1.bf16.msra.mxu0 0
      %5242 = vmatprep.subr.bf16.mxu0 0
      %5243 = vmatpush1.bf16.msra.mxu0 0
      %5244 = vmatprep.mubr.bf16.mxu0 0
      %5245 = vmatmul.mubr.bf16.gmra.mrb[0].mxu0 %v5189
      %v5246 = vpop.f32.mrb[0].mxu0
      %v5247 = vadd.f32 0.0, %v5246
      %v5248 = vpop.f32.mrb[0].mxu0
      %v5249 = vpop.f32.mrb[0].mxu0
      %v5250 = vadd.f32 0.0, %v5249
      %v5251 = vpop.f32.mrb[0].mxu0
      %5252 = vmatprep.mubr.bf16.mxu0 0
      %5253 = vmatmul.mubr.bf16.gmra.mrb[0].mxu0 %v5192
      %v5254 = vpop.f32.mrb[0].mxu0
      %v5255 = vadd.f32 0.0, %v5254
      %v5256 = vpop.f32.mrb[0].mxu0
      %v5257 = vpop.f32.mrb[0].mxu0
      %v5258 = vadd.f32 0.0, %v5257
      %v5259 = vpop.f32.mrb[0].mxu0
      %5260 = vmatprep.mubr.bf16.mxu0 0
      %5261 = vmatmul.mubr.bf16.gmra.mrb[0].mxu0 %v5195
      %v5262 = vpop.f32.mrb[0].mxu0
      %v5263 = vadd.f32 0.0, %v5262
      %v5264 = vpop.f32.mrb[0].mxu0
      %v5265 = vpop.f32.mrb[0].mxu0
      %v5266 = vadd.f32 0.0, %v5265
      %v5267 = vpop.f32.mrb[0].mxu0
      %5268 = vmatprep.mubr.bf16.mxu0 0
      %5269 = vmatmul.mubr.bf16.gmra.mrb[0].mxu0 %v5198
      %v5270 = vpop.f32.mrb[0].mxu0
      %v5271 = vadd.f32 0.0, %v5270
      %v5272 = vpop.f32.mrb[0].mxu0
      %v5273 = vpop.f32.mrb[0].mxu0
      %v5274 = vadd.f32 0.0, %v5273
      %v5275 = vpop.f32.mrb[0].mxu0
      %5276 = vmatprep.mubr.bf16.mxu0 0
      %5277 = vmatmul.mubr.bf16.gmra.mrb[0].mxu0 %v5201
      %v5278 = vpop.f32.mrb[0].mxu0
      %v5279 = vadd.f32 0.0, %v5278
      %v5280 = vpop.f32.mrb[0].mxu0
      %v5281 = vpop.f32.mrb[0].mxu0
      %v5282 = vadd.f32 0.0, %v5281
      %v5283 = vpop.f32.mrb[0].mxu0
      %5284 = vmatprep.mubr.bf16.mxu0 0
      %5285 = vmatmul.mubr.bf16.gmra.mrb[0].mxu0 %v5204
      %v5286 = vpop.f32.mrb[0].mxu0
      %v5287 = vadd.f32 0.0, %v5286
      %v5288 = vpop.f32.mrb[0].mxu0
      %v5289 = vpop.f32.mrb[0].mxu0
      %v5290 = vadd.f32 0.0, %v5289
      %v5291 = vpop.f32.mrb[0].mxu0
      %5292 = vmatprep.mubr.bf16.mxu0 0
      %5293 = vmatmul.mubr.bf16.gmra.mrb[0].mxu0 %v5207
      %v5294 = vpop.f32.mrb[0].mxu0
      %v5295 = vadd.f32 0.0, %v5294
      %v5296 = vpop.f32.mrb[0].mxu0
      %v5297 = vpop.f32.mrb[0].mxu0
      %v5298 = vadd.f32 0.0, %v5297
      %v5299 = vpop.f32.mrb[0].mxu0
      %5300 = vmatprep.mubr.bf16.mxu0 0
      %5301 = vmatmul.mubr.bf16.gmra.mrb[0].mxu0 %v5210
      %v5302 = vpop.f32.mrb[0].mxu0
      %v5303 = vpop.f32.mrb[0].mxu0
      %v5304 = vpop.f32.mrb[0].mxu0
      %v5305 = vpop.f32.mrb[0].mxu0
      %5306 = vdwg.mxu0
      %v5307 = vadd.f32 %v5117, %v5247
      %v5308 = vadd.f32 %v5118, %v5250
      %v5309 = vadd.f32 %v5119, %v5255
      %v5310 = vadd.f32 %v5120, %v5258
      %v5311 = vadd.f32 %v5121, %v5263
      %v5312 = vadd.f32 %v5122, %v5266
      %v5313 = vadd.f32 %v5123, %v5271
      %v5314 = vadd.f32 %v5124, %v5274
      %v5315 = vadd.f32 %v5125, %v5279
      %v5316 = vadd.f32 %v5126, %v5282
      %v5317 = vadd.f32 %v5127, %v5287
      %v5318 = vadd.f32 %v5128, %v5290
      %v5319 = vadd.f32 %v5129, %v5295
      %v5320 = vadd.f32 %v5130, %v5298
      %v5321 = vadd.f32 %v5307, %v1561
      %v5322 = vadd.f32 %v5308, %v1561
      %v5323 = vadd.f32 %v5309, %v1561
      %v5324 = vadd.f32 %v5310, %v1561
      %v5325 = vadd.f32 %v5311, %v1561
      %v5326 = vadd.f32 %v5312, %v1561
      %v5327 = vadd.f32 %v5313, %v1561
      %v5328 = vadd.f32 %v5314, %v1561
      %v5329 = vadd.f32 %v5315, %v1561
      %v5330 = vadd.f32 %v5316, %v1561
      %v5331 = vadd.f32 %v5317, %v1561
      %v5332 = vadd.f32 %v5318, %v1561
      %v5333 = vadd.f32 %v5319, %v1561
      %v5334 = vadd.f32 %v5320, %v1561
      %v5335 = vmax.f32 %v5321, 0.0
      %v5336 = vmax.f32 %v5322, 0.0
      %v5337 = vmax.f32 %v5323, 0.0
      %v5338 = vmax.f32 %v5324, 0.0
      %v5339 = vmax.f32 %v5325, 0.0
      %v5340 = vmax.f32 %v5326, 0.0
      %v5341 = vmax.f32 %v5327, 0.0
      %v5342 = vmax.f32 %v5328, 0.0
      %v5343 = vmax.f32 %v5329, 0.0
      %v5344 = vmax.f32 %v5330, 0.0
      %v5345 = vmax.f32 %v5331, 0.0
      %v5346 = vmax.f32 %v5332, 0.0
      %v5347 = vmax.f32 %v5333, 0.0
      %v5348 = vmax.f32 %v5334, 0.0
      %5349 = vmatprep.subr.bf16.mxu0 0
      %5350 = vmatpush1.bf16.msra.mxu0 %v1641
      %5351 = vmatprep.subr.bf16.mxu0 0
      %5352 = vmatpush1.bf16.msra.mxu0 %v1642
      %5353 = vmatprep.subr.bf16.mxu0 0
      %5354 = vmatpush1.bf16.msra.mxu0 %v1643
      %5355 = vmatprep.subr.bf16.mxu0 0
      %5356 = vmatpush1.bf16.msra.mxu0 %v1644
      %5357 = vmatprep.subr.bf16.mxu0 0
      %5358 = vmatpush1.bf16.msra.mxu0 %v1645
      %5359 = vmatprep.subr.bf16.mxu0 0
      %5360 = vmatpush1.bf16.msra.mxu0 %v1646
      %5361 = vmatprep.subr.bf16.mxu0 0
      %5362 = vmatpush1.bf16.msra.mxu0 0
      %5363 = vmatprep.subr.bf16.mxu0 0
      %5364 = vmatpush1.bf16.msra.mxu0 0
      %5365 = vmatprep.subr.bf16.mxu0 0
      %5366 = vmatpush1.bf16.msra.mxu0 0
      %5367 = vmatprep.subr.bf16.mxu0 0
      %5368 = vmatpush1.bf16.msra.mxu0 0
      %5369 = vmatprep.subr.bf16.mxu0 0
      %5370 = vmatpush1.bf16.msra.mxu0 0
      %5371 = vmatprep.subr.bf16.mxu0 0
      %5372 = vmatpush1.bf16.msra.mxu0 0
      %5373 = vmatprep.subr.bf16.mxu0 0
      %5374 = vmatpush1.bf16.msra.mxu0 0
      %5375 = vmatprep.subr.bf16.mxu0 0
      %5376 = vmatpush1.bf16.msra.mxu0 0
      %5377 = vmatprep.subr.bf16.mxu0 0
      %5378 = vmatpush1.bf16.msra.mxu0 0
      %5379 = vmatprep.subr.bf16.mxu0 0
      %5380 = vmatpush1.bf16.msra.mxu0 0
      %5381 = vmatprep.mubr.bf16.mxu0 0
      %5382 = vmatmul.mubr.bf16.gmra.mrb[0].mxu0 %v1425
      %v5383 = vpop.f32.mrb[0].mxu0
      %v5384 = vadd.f32 0.0, %v5383
      %v5385 = vpop.f32.mrb[0].mxu0
      %v5386 = vpop.f32.mrb[0].mxu0
      %v5387 = vadd.f32 0.0, %v5386
      %v5388 = vpop.f32.mrb[0].mxu0
      %5389 = vmatprep.mubr.bf16.mxu0 0
      %5390 = vmatmul.mubr.bf16.gmra.mrb[0].mxu0 %v1428
      %v5391 = vpop.f32.mrb[0].mxu0
      %v5392 = vadd.f32 0.0, %v5391
      %v5393 = vpop.f32.mrb[0].mxu0
      %v5394 = vpop.f32.mrb[0].mxu0
      %v5395 = vadd.f32 0.0, %v5394
      %v5396 = vpop.f32.mrb[0].mxu0
      %5397 = vmatprep.mubr.bf16.mxu0 0
      %5398 = vmatmul.mubr.bf16.gmra.mrb[0].mxu0 %v1431
      %v5399 = vpop.f32.mrb[0].mxu0
      %v5400 = vadd.f32 0.0, %v5399
      %v5401 = vpop.f32.mrb[0].mxu0
      %v5402 = vpop.f32.mrb[0].mxu0
      %v5403 = vadd.f32 0.0, %v5402
      %v5404 = vpop.f32.mrb[0].mxu0
      %5405 = vmatprep.mubr.bf16.mxu0 0
      %5406 = vmatmul.mubr.bf16.gmra.mrb[0].mxu0 %v1434
      %v5407 = vpop.f32.mrb[0].mxu0
      %v5408 = vadd.f32 0.0, %v5407
      %v5409 = vpop.f32.mrb[0].mxu0
      %v5410 = vpop.f32.mrb[0].mxu0
      %v5411 = vadd.f32 0.0, %v5410
      %v5412 = vpop.f32.mrb[0].mxu0
      %5413 = vmatprep.mubr.bf16.mxu0 0
      %5414 = vmatmul.mubr.bf16.gmra.mrb[0].mxu0 %v1437
      %v5415 = vpop.f32.mrb[0].mxu0
      %v5416 = vadd.f32 0.0, %v5415
      %v5417 = vpop.f32.mrb[0].mxu0
      %v5418 = vpop.f32.mrb[0].mxu0
      %v5419 = vadd.f32 0.0, %v5418
      %v5420 = vpop.f32.mrb[0].mxu0
      %5421 = vmatprep.mubr.bf16.mxu0 0
      %5422 = vmatmul.mubr.bf16.gmra.mrb[0].mxu0 %v1440
      %v5423 = vpop.f32.mrb[0].mxu0
      %v5424 = vadd.f32 0.0, %v5423
      %v5425 = vpop.f32.mrb[0].mxu0
      %v5426 = vpop.f32.mrb[0].mxu0
      %v5427 = vadd.f32 0.0, %v5426
      %v5428 = vpop.f32.mrb[0].mxu0
      %5429 = vmatprep.mubr.bf16.mxu0 0
      %5430 = vmatmul.mubr.bf16.gmra.mrb[0].mxu0 %v1443
      %v5431 = vpop.f32.mrb[0].mxu0
      %v5432 = vadd.f32 0.0, %v5431
      %v5433 = vpop.f32.mrb[0].mxu0
      %v5434 = vpop.f32.mrb[0].mxu0
      %v5435 = vadd.f32 0.0, %v5434
      %v5436 = vpop.f32.mrb[0].mxu0
      %5437 = vmatprep.mubr.bf16.mxu0 0
      %5438 = vmatmul.mubr.bf16.gmra.mrb[0].mxu0 %v1446
      %v5439 = vpop.f32.mrb[0].mxu0
      %v5440 = vpop.f32.mrb[0].mxu0
      %v5441 = vpop.f32.mrb[0].mxu0
      %v5442 = vpop.f32.mrb[0].mxu0
      %5443 = vdwg.mxu0
      %5444 = vmatprep.subr.bf16.mxu0 0
      %5445 = vmatpush1.bf16.msra.mxu0 %v1772
      %5446 = vmatprep.subr.bf16.mxu0 0
      %5447 = vmatpush1.bf16.msra.mxu0 %v1773
      %5448 = vmatprep.subr.bf16.mxu0 0
      %5449 = vmatpush1.bf16.msra.mxu0 %v1774
      %5450 = vmatprep.subr.bf16.mxu0 0
      %5451 = vmatpush1.bf16.msra.mxu0 %v1775
      %5452 = vmatprep.subr.bf16.mxu0 0
      %5453 = vmatpush1.bf16.msra.mxu0 %v1776
      %5454 = vmatprep.subr.bf16.mxu0 0
      %5455 = vmatpush1.bf16.msra.mxu0 %v1777
      %5456 = vmatprep.subr.bf16.mxu0 0
      %5457 = vmatpush1.bf16.msra.mxu0 0
      %5458 = vmatprep.subr.bf16.mxu0 0
      %5459 = vmatpush1.bf16.msra.mxu0 0
      %5460 = vmatprep.subr.bf16.mxu0 0
      %5461 = vmatpush1.bf16.msra.mxu0 0
      %5462 = vmatprep.subr.bf16.mxu0 0
      %5463 = vmatpush1.bf16.msra.mxu0 0
      %5464 = vmatprep.subr.bf16.mxu0 0
      %5465 = vmatpush1.bf16.msra.mxu0 0
      %5466 = vmatprep.subr.bf16.mxu0 0
      %5467 = vmatpush1.bf16.msra.mxu0 0
      %5468 = vmatprep.subr.bf16.mxu0 0
      %5469 = vmatpush1.bf16.msra.mxu0 0
      %5470 = vmatprep.subr.bf16.mxu0 0
      %5471 = vmatpush1.bf16.msra.mxu0 0
      %5472 = vmatprep.subr.bf16.mxu0 0
      %5473 = vmatpush1.bf16.msra.mxu0 0
      %5474 = vmatprep.subr.bf16.mxu0 0
      %5475 = vmatpush1.bf16.msra.mxu0 0
      %5476 = vmatprep.mubr.bf16.mxu0 0
      %5477 = vmatmul.mubr.bf16.gmra.mrb[0].mxu0 %v1186
      %v5478 = vpop.f32.mrb[0].mxu0
      %v5479 = vadd.f32 %v5384, %v5478
      %v5480 = vpop.f32.mrb[0].mxu0
      %v5481 = vpop.f32.mrb[0].mxu0
      %v5482 = vadd.f32 %v5387, %v5481
      %v5483 = vpop.f32.mrb[0].mxu0
      %5484 = vmatprep.mubr.bf16.mxu0 0
      %5485 = vmatmul.mubr.bf16.gmra.mrb[0].mxu0 %v1189
      %v5486 = vpop.f32.mrb[0].mxu0
      %v5487 = vadd.f32 %v5392, %v5486
      %v5488 = vpop.f32.mrb[0].mxu0
      %v5489 = vpop.f32.mrb[0].mxu0
      %v5490 = vadd.f32 %v5395, %v5489
      %v5491 = vpop.f32.mrb[0].mxu0
      %5492 = vmatprep.mubr.bf16.mxu0 0
      %5493 = vmatmul.mubr.bf16.gmra.mrb[0].mxu0 %v1192
      %v5494 = vpop.f32.mrb[0].mxu0
      %v5495 = vadd.f32 %v5400, %v5494
      %v5496 = vpop.f32.mrb[0].mxu0
      %v5497 = vpop.f32.mrb[0].mxu0
      %v5498 = vadd.f32 %v5403, %v5497
      %v5499 = vpop.f32.mrb[0].mxu0
      %5500 = vmatprep.mubr.bf16.mxu0 0
      %5501 = vmatmul.mubr.bf16.gmra.mrb[0].mxu0 %v1195
      %v5502 = vpop.f32.mrb[0].mxu0
      %v5503 = vadd.f32 %v5408, %v5502
      %v5504 = vpop.f32.mrb[0].mxu0
      %v5505 = vpop.f32.mrb[0].mxu0
      %v5506 = vadd.f32 %v5411, %v5505
      %v5507 = vpop.f32.mrb[0].mxu0
      %5508 = vmatprep.mubr.bf16.mxu0 0
      %5509 = vmatmul.mubr.bf16.gmra.mrb[0].mxu0 %v1198
      %v5510 = vpop.f32.mrb[0].mxu0
      %v5511 = vadd.f32 %v5416, %v5510
      %v5512 = vpop.f32.mrb[0].mxu0
      %v5513 = vpop.f32.mrb[0].mxu0
      %v5514 = vadd.f32 %v5419, %v5513
      %v5515 = vpop.f32.mrb[0].mxu0
      %5516 = vmatprep.mubr.bf16.mxu0 0
      %5517 = vmatmul.mubr.bf16.gmra.mrb[0].mxu0 %v1201
      %v5518 = vpop.f32.mrb[0].mxu0
      %v5519 = vadd.f32 %v5424, %v5518
      %v5520 = vpop.f32.mrb[0].mxu0
      %v5521 = vpop.f32.mrb[0].mxu0
      %v5522 = vadd.f32 %v5427, %v5521
      %v5523 = vpop.f32.mrb[0].mxu0
      %5524 = vmatprep.mubr.bf16.mxu0 0
      %5525 = vmatmul.mubr.bf16.gmra.mrb[0].mxu0 %v1204
      %v5526 = vpop.f32.mrb[0].mxu0
      %v5527 = vadd.f32 %v5432, %v5526
      %v5528 = vpop.f32.mrb[0].mxu0
      %v5529 = vpop.f32.mrb[0].mxu0
      %v5530 = vadd.f32 %v5435, %v5529
      %v5531 = vpop.f32.mrb[0].mxu0
      %5532 = vmatprep.mubr.bf16.mxu0 0
      %5533 = vmatmul.mubr.bf16.gmra.mrb[0].mxu0 %v1207
      %v5534 = vpop.f32.mrb[0].mxu0
      %v5535 = vpop.f32.mrb[0].mxu0
      %v5536 = vpop.f32.mrb[0].mxu0
      %v5537 = vpop.f32.mrb[0].mxu0
      %5538 = vdwg.mxu0
      %5539 = vmatprep.subr.bf16.mxu0 0
      %5540 = vmatpush1.bf16.msra.mxu0 %v1916
      %5541 = vmatprep.subr.bf16.mxu0 0
      %5542 = vmatpush1.bf16.msra.mxu0 %v1917
      %5543 = vmatprep.subr.bf16.mxu0 0
      %5544 = vmatpush1.bf16.msra.mxu0 %v1918
      %5545 = vmatprep.subr.bf16.mxu0 0
      %5546 = vmatpush1.bf16.msra.mxu0 %v1919
      %5547 = vmatprep.subr.bf16.mxu0 0
      %5548 = vmatpush1.bf16.msra.mxu0 %v1920
      %5549 = vmatprep.subr.bf16.mxu0 0
      %5550 = vmatpush1.bf16.msra.mxu0 %v1921
      %5551 = vmatprep.subr.bf16.mxu0 0
      %5552 = vmatpush1.bf16.msra.mxu0 0
      %5553 = vmatprep.subr.bf16.mxu0 0
      %5554 = vmatpush1.bf16.msra.mxu0 0
      %5555 = vmatprep.subr.bf16.mxu0 0
      %5556 = vmatpush1.bf16.msra.mxu0 0
      %5557 = vmatprep.subr.bf16.mxu0 0
      %5558 = vmatpush1.bf16.msra.mxu0 0
      %5559 = vmatprep.subr.bf16.mxu0 0
      %5560 = vmatpush1.bf16.msra.mxu0 0
      %5561 = vmatprep.subr.bf16.mxu0 0
      %5562 = vmatpush1.bf16.msra.mxu0 0
      %5563 = vmatprep.subr.bf16.mxu0 0
      %5564 = vmatpush1.bf16.msra.mxu0 0
      %5565 = vmatprep.subr.bf16.mxu0 0
      %5566 = vmatpush1.bf16.msra.mxu0 0
      %5567 = vmatprep.subr.bf16.mxu0 0
      %5568 = vmatpush1.bf16.msra.mxu0 0
      %5569 = vmatprep.subr.bf16.mxu0 0
      %5570 = vmatpush1.bf16.msra.mxu0 0
      %5571 = vmatprep.mubr.bf16.mxu0 0
      %5572 = vmatmul.mubr.bf16.gmra.mrb[0].mxu0 %v2847
      %v5573 = vpop.f32.mrb[0].mxu0
      %v5574 = vadd.f32 0.0, %v5573
      %v5575 = vpop.f32.mrb[0].mxu0
      %v5576 = vpop.f32.mrb[0].mxu0
      %v5577 = vadd.f32 0.0, %v5576
      %v5578 = vpop.f32.mrb[0].mxu0
      %5579 = vmatprep.mubr.bf16.mxu0 0
      %5580 = vmatmul.mubr.bf16.gmra.mrb[0].mxu0 %v2850
      %v5581 = vpop.f32.mrb[0].mxu0
      %v5582 = vadd.f32 0.0, %v5581
      %v5583 = vpop.f32.mrb[0].mxu0
      %v5584 = vpop.f32.mrb[0].mxu0
      %v5585 = vadd.f32 0.0, %v5584
      %v5586 = vpop.f32.mrb[0].mxu0
      %5587 = vmatprep.mubr.bf16.mxu0 0
      %5588 = vmatmul.mubr.bf16.gmra.mrb[0].mxu0 %v2853
      %v5589 = vpop.f32.mrb[0].mxu0
      %v5590 = vadd.f32 0.0, %v5589
      %v5591 = vpop.f32.mrb[0].mxu0
      %v5592 = vpop.f32.mrb[0].mxu0
      %v5593 = vadd.f32 0.0, %v5592
      %v5594 = vpop.f32.mrb[0].mxu0
      %5595 = vmatprep.mubr.bf16.mxu0 0
      %5596 = vmatmul.mubr.bf16.gmra.mrb[0].mxu0 %v2856
      %v5597 = vpop.f32.mrb[0].mxu0
      %v5598 = vadd.f32 0.0, %v5597
      %v5599 = vpop.f32.mrb[0].mxu0
      %v5600 = vpop.f32.mrb[0].mxu0
      %v5601 = vadd.f32 0.0, %v5600
      %v5602 = vpop.f32.mrb[0].mxu0
      %5603 = vmatprep.mubr.bf16.mxu0 0
      %5604 = vmatmul.mubr.bf16.gmra.mrb[0].mxu0 %v2859
      %v5605 = vpop.f32.mrb[0].mxu0
      %v5606 = vadd.f32 0.0, %v5605
      %v5607 = vpop.f32.mrb[0].mxu0
      %v5608 = vpop.f32.mrb[0].mxu0
      %v5609 = vadd.f32 0.0, %v5608
      %v5610 = vpop.f32.mrb[0].mxu0
      %5611 = vmatprep.mubr.bf16.mxu0 0
      %5612 = vmatmul.mubr.bf16.gmra.mrb[0].mxu0 %v2862
      %v5613 = vpop.f32.mrb[0].mxu0
      %v5614 = vadd.f32 0.0, %v5613
      %v5615 = vpop.f32.mrb[0].mxu0
      %v5616 = vpop.f32.mrb[0].mxu0
      %v5617 = vadd.f32 0.0, %v5616
      %v5618 = vpop.f32.mrb[0].mxu0
      %5619 = vmatprep.mubr.bf16.mxu0 0
      %5620 = vmatmul.mubr.bf16.gmra.mrb[0].mxu0 %v2865
      %v5621 = vpop.f32.mrb[0].mxu0
      %v5622 = vadd.f32 0.0, %v5621
      %v5623 = vpop.f32.mrb[0].mxu0
      %v5624 = vpop.f32.mrb[0].mxu0
      %v5625 = vadd.f32 0.0, %v5624
      %v5626 = vpop.f32.mrb[0].mxu0
      %5627 = vmatprep.mubr.bf16.mxu0 0
      %5628 = vmatmul.mubr.bf16.gmra.mrb[0].mxu0 %v2868
      %v5629 = vpop.f32.mrb[0].mxu0
      %v5630 = vpop.f32.mrb[0].mxu0
      %v5631 = vpop.f32.mrb[0].mxu0
      %v5632 = vpop.f32.mrb[0].mxu0
      %5633 = vdwg.mxu0
      %v5634 = vadd.f32 %v5479, %v5574
      %v5635 = vadd.f32 %v5482, %v5577
      %v5636 = vadd.f32 %v5487, %v5582
      %v5637 = vadd.f32 %v5490, %v5585
      %v5638 = vadd.f32 %v5495, %v5590
      %v5639 = vadd.f32 %v5498, %v5593
      %v5640 = vadd.f32 %v5503, %v5598
      %v5641 = vadd.f32 %v5506, %v5601
      %v5642 = vadd.f32 %v5511, %v5606
      %v5643 = vadd.f32 %v5514, %v5609
      %v5644 = vadd.f32 %v5519, %v5614
      %v5645 = vadd.f32 %v5522, %v5617
      %v5646 = vadd.f32 %v5527, %v5622
      %v5647 = vadd.f32 %v5530, %v5625
      %5648 = vmatprep.subr.bf16.mxu0 0
      %5649 = vmatpush1.bf16.msra.mxu0 %v2074
      %5650 = vmatprep.subr.bf16.mxu0 0
      %5651 = vmatpush1.bf16.msra.mxu0 %v2075
      %5652 = vmatprep.subr.bf16.mxu0 0
      %5653 = vmatpush1.bf16.msra.mxu0 %v2076
      %5654 = vmatprep.subr.bf16.mxu0 0
      %5655 = vmatpush1.bf16.msra.mxu0 %v2077
      %5656 = vmatprep.subr.bf16.mxu0 0
      %5657 = vmatpush1.bf16.msra.mxu0 %v2078
      %5658 = vmatprep.subr.bf16.mxu0 0
      %5659 = vmatpush1.bf16.msra.mxu0 %v2079
      %5660 = vmatprep.subr.bf16.mxu0 0
      %5661 = vmatpush1.bf16.msra.mxu0 0
      %5662 = vmatprep.subr.bf16.mxu0 0
      %5663 = vmatpush1.bf16.msra.mxu0 0
      %5664 = vmatprep.subr.bf16.mxu0 0
      %5665 = vmatpush1.bf16.msra.mxu0 0
      %5666 = vmatprep.subr.bf16.mxu0 0
      %5667 = vmatpush1.bf16.msra.mxu0 0
      %5668 = vmatprep.subr.bf16.mxu0 0
      %5669 = vmatpush1.bf16.msra.mxu0 0
      %5670 = vmatprep.subr.bf16.mxu0 0
      %5671 = vmatpush1.bf16.msra.mxu0 0
      %5672 = vmatprep.subr.bf16.mxu0 0
      %5673 = vmatpush1.bf16.msra.mxu0 0
      %5674 = vmatprep.subr.bf16.mxu0 0
      %5675 = vmatpush1.bf16.msra.mxu0 0
      %5676 = vmatprep.subr.bf16.mxu0 0
      %5677 = vmatpush1.bf16.msra.mxu0 0
      %5678 = vmatprep.subr.bf16.mxu0 0
      %5679 = vmatpush1.bf16.msra.mxu0 0
      %5680 = vmatprep.mubr.bf16.mxu0 0
      %5681 = vmatmul.mubr.bf16.gmra.mrb[0].mxu0 %v4018
      %v5682 = vpop.f32.mrb[0].mxu0
      %v5683 = vadd.f32 0.0, %v5682
      %v5684 = vpop.f32.mrb[0].mxu0
      %v5685 = vpop.f32.mrb[0].mxu0
      %v5686 = vadd.f32 0.0, %v5685
      %v5687 = vpop.f32.mrb[0].mxu0
      %5688 = vmatprep.mubr.bf16.mxu0 0
      %5689 = vmatmul.mubr.bf16.gmra.mrb[0].mxu0 %v4021
      %v5690 = vpop.f32.mrb[0].mxu0
      %v5691 = vadd.f32 0.0, %v5690
      %v5692 = vpop.f32.mrb[0].mxu0
      %v5693 = vpop.f32.mrb[0].mxu0
      %v5694 = vadd.f32 0.0, %v5693
      %v5695 = vpop.f32.mrb[0].mxu0
      %5696 = vmatprep.mubr.bf16.mxu0 0
      %5697 = vmatmul.mubr.bf16.gmra.mrb[0].mxu0 %v4024
      %v5698 = vpop.f32.mrb[0].mxu0
      %v5699 = vadd.f32 0.0, %v5698
      %v5700 = vpop.f32.mrb[0].mxu0
      %v5701 = vpop.f32.mrb[0].mxu0
      %v5702 = vadd.f32 0.0, %v5701
      %v5703 = vpop.f32.mrb[0].mxu0
      %5704 = vmatprep.mubr.bf16.mxu0 0
      %5705 = vmatmul.mubr.bf16.gmra.mrb[0].mxu0 %v4027
      %v5706 = vpop.f32.mrb[0].mxu0
      %v5707 = vadd.f32 0.0, %v5706
      %v5708 = vpop.f32.mrb[0].mxu0
      %v5709 = vpop.f32.mrb[0].mxu0
      %v5710 = vadd.f32 0.0, %v5709
      %v5711 = vpop.f32.mrb[0].mxu0
      %5712 = vmatprep.mubr.bf16.mxu0 0
      %5713 = vmatmul.mubr.bf16.gmra.mrb[0].mxu0 %v4030
      %v5714 = vpop.f32.mrb[0].mxu0
      %v5715 = vadd.f32 0.0, %v5714
      %v5716 = vpop.f32.mrb[0].mxu0
      %v5717 = vpop.f32.mrb[0].mxu0
      %v5718 = vadd.f32 0.0, %v5717
      %v5719 = vpop.f32.mrb[0].mxu0
      %5720 = vmatprep.mubr.bf16.mxu0 0
      %5721 = vmatmul.mubr.bf16.gmra.mrb[0].mxu0 %v4033
      %v5722 = vpop.f32.mrb[0].mxu0
      %v5723 = vadd.f32 0.0, %v5722
      %v5724 = vpop.f32.mrb[0].mxu0
      %v5725 = vpop.f32.mrb[0].mxu0
      %v5726 = vadd.f32 0.0, %v5725
      %v5727 = vpop.f32.mrb[0].mxu0
      %5728 = vmatprep.mubr.bf16.mxu0 0
      %5729 = vmatmul.mubr.bf16.gmra.mrb[0].mxu0 %v4036
      %v5730 = vpop.f32.mrb[0].mxu0
      %v5731 = vadd.f32 0.0, %v5730
      %v5732 = vpop.f32.mrb[0].mxu0
      %v5733 = vpop.f32.mrb[0].mxu0
      %v5734 = vadd.f32 0.0, %v5733
      %v5735 = vpop.f32.mrb[0].mxu0
      %5736 = vmatprep.mubr.bf16.mxu0 0
      %5737 = vmatmul.mubr.bf16.gmra.mrb[0].mxu0 %v4039
      %v5738 = vpop.f32.mrb[0].mxu0
      %v5739 = vpop.f32.mrb[0].mxu0
      %v5740 = vpop.f32.mrb[0].mxu0
      %v5741 = vpop.f32.mrb[0].mxu0
      %5742 = vdwg.mxu0
      %v5743 = vadd.f32 %v5634, %v5683
      %v5744 = vadd.f32 %v5635, %v5686
      %v5745 = vadd.f32 %v5636, %v5691
      %v5746 = vadd.f32 %v5637, %v5694
      %v5747 = vadd.f32 %v5638, %v5699
      %v5748 = vadd.f32 %v5639, %v5702
      %v5749 = vadd.f32 %v5640, %v5707
      %v5750 = vadd.f32 %v5641, %v5710
      %v5751 = vadd.f32 %v5642, %v5715
      %v5752 = vadd.f32 %v5643, %v5718
      %v5753 = vadd.f32 %v5644, %v5723
      %v5754 = vadd.f32 %v5645, %v5726
      %v5755 = vadd.f32 %v5646, %v5731
      %v5756 = vadd.f32 %v5647, %v5734
      %5757 = vmatprep.subr.bf16.mxu0 0
      %5758 = vmatpush1.bf16.msra.mxu0 %v2232
      %5759 = vmatprep.subr.bf16.mxu0 0
      %5760 = vmatpush1.bf16.msra.mxu0 %v2233
      %5761 = vmatprep.subr.bf16.mxu0 0
      %5762 = vmatpush1.bf16.msra.mxu0 %v2234
      %5763 = vmatprep.subr.bf16.mxu0 0
      %5764 = vmatpush1.bf16.msra.mxu0 %v2235
      %5765 = vmatprep.subr.bf16.mxu0 0
      %5766 = vmatpush1.bf16.msra.mxu0 %v2236
      %5767 = vmatprep.subr.bf16.mxu0 0
      %5768 = vmatpush1.bf16.msra.mxu0 %v2237
      %5769 = vmatprep.subr.bf16.mxu0 0
      %5770 = vmatpush1.bf16.msra.mxu0 0
      %5771 = vmatprep.subr.bf16.mxu0 0
      %5772 = vmatpush1.bf16.msra.mxu0 0
      %5773 = vmatprep.subr.bf16.mxu0 0
      %5774 = vmatpush1.bf16.msra.mxu0 0
      %5775 = vmatprep.subr.bf16.mxu0 0
      %5776 = vmatpush1.bf16.msra.mxu0 0
      %5777 = vmatprep.subr.bf16.mxu0 0
      %5778 = vmatpush1.bf16.msra.mxu0 0
      %5779 = vmatprep.subr.bf16.mxu0 0
      %5780 = vmatpush1.bf16.msra.mxu0 0
      %5781 = vmatprep.subr.bf16.mxu0 0
      %5782 = vmatpush1.bf16.msra.mxu0 0
      %5783 = vmatprep.subr.bf16.mxu0 0
      %5784 = vmatpush1.bf16.msra.mxu0 0
      %5785 = vmatprep.subr.bf16.mxu0 0
      %5786 = vmatpush1.bf16.msra.mxu0 0
      %5787 = vmatprep.subr.bf16.mxu0 0
      %5788 = vmatpush1.bf16.msra.mxu0 0
      %5789 = vmatprep.mubr.bf16.mxu0 0
      %5790 = vmatmul.mubr.bf16.gmra.mrb[0].mxu0 %v5189
      %v5791 = vpop.f32.mrb[0].mxu0
      %v5792 = vadd.f32 0.0, %v5791
      %v5793 = vpop.f32.mrb[0].mxu0
      %v5794 = vpop.f32.mrb[0].mxu0
      %v5795 = vadd.f32 0.0, %v5794
      %v5796 = vpop.f32.mrb[0].mxu0
      %5797 = vmatprep.mubr.bf16.mxu0 0
      %5798 = vmatmul.mubr.bf16.gmra.mrb[0].mxu0 %v5192
      %v5799 = vpop.f32.mrb[0].mxu0
      %v5800 = vadd.f32 0.0, %v5799
      %v5801 = vpop.f32.mrb[0].mxu0
      %v5802 = vpop.f32.mrb[0].mxu0
      %v5803 = vadd.f32 0.0, %v5802
      %v5804 = vpop.f32.mrb[0].mxu0
      %5805 = vmatprep.mubr.bf16.mxu0 0
      %5806 = vmatmul.mubr.bf16.gmra.mrb[0].mxu0 %v5195
      %v5807 = vpop.f32.mrb[0].mxu0
      %v5808 = vadd.f32 0.0, %v5807
      %v5809 = vpop.f32.mrb[0].mxu0
      %v5810 = vpop.f32.mrb[0].mxu0
      %v5811 = vadd.f32 0.0, %v5810
      %v5812 = vpop.f32.mrb[0].mxu0
      %5813 = vmatprep.mubr.bf16.mxu0 0
      %5814 = vmatmul.mubr.bf16.gmra.mrb[0].mxu0 %v5198
      %v5815 = vpop.f32.mrb[0].mxu0
      %v5816 = vadd.f32 0.0, %v5815
      %v5817 = vpop.f32.mrb[0].mxu0
      %v5818 = vpop.f32.mrb[0].mxu0
      %v5819 = vadd.f32 0.0, %v5818
      %v5820 = vpop.f32.mrb[0].mxu0
      %5821 = vmatprep.mubr.bf16.mxu0 0
      %5822 = vmatmul.mubr.bf16.gmra.mrb[0].mxu0 %v5201
      %v5823 = vpop.f32.mrb[0].mxu0
      %v5824 = vadd.f32 0.0, %v5823
      %v5825 = vpop.f32.mrb[0].mxu0
      %v5826 = vpop.f32.mrb[0].mxu0
      %v5827 = vadd.f32 0.0, %v5826
      %v5828 = vpop.f32.mrb[0].mxu0
      %5829 = vmatprep.mubr.bf16.mxu0 0
      %5830 = vmatmul.mubr.bf16.gmra.mrb[0].mxu0 %v5204
      %v5831 = vpop.f32.mrb[0].mxu0
      %v5832 = vadd.f32 0.0, %v5831
      %v5833 = vpop.f32.mrb[0].mxu0
      %v5834 = vpop.f32.mrb[0].mxu0
      %v5835 = vadd.f32 0.0, %v5834
      %v5836 = vpop.f32.mrb[0].mxu0
      %5837 = vmatprep.mubr.bf16.mxu0 0
      %5838 = vmatmul.mubr.bf16.gmra.mrb[0].mxu0 %v5207
      %v5839 = vpop.f32.mrb[0].mxu0
      %v5840 = vadd.f32 0.0, %v5839
      %v5841 = vpop.f32.mrb[0].mxu0
      %v5842 = vpop.f32.mrb[0].mxu0
      %v5843 = vadd.f32 0.0, %v5842
      %v5844 = vpop.f32.mrb[0].mxu0
      %5845 = vmatprep.mubr.bf16.mxu0 0
      %5846 = vmatmul.mubr.bf16.gmra.mrb[0].mxu0 %v5210
      %v5847 = vpop.f32.mrb[0].mxu0
      %v5848 = vpop.f32.mrb[0].mxu0
      %v5849 = vpop.f32.mrb[0].mxu0
      %v5850 = vpop.f32.mrb[0].mxu0
      %5851 = vdwg.mxu0
      %v5852 = vadd.f32 %v5743, %v5792
      %v5853 = vadd.f32 %v5744, %v5795
      %v5854 = vadd.f32 %v5745, %v5800
      %v5855 = vadd.f32 %v5746, %v5803
      %v5856 = vadd.f32 %v5747, %v5808
      %v5857 = vadd.f32 %v5748, %v5811
      %v5858 = vadd.f32 %v5749, %v5816
      %v5859 = vadd.f32 %v5750, %v5819
      %v5860 = vadd.f32 %v5751, %v5824
      %v5861 = vadd.f32 %v5752, %v5827
      %v5862 = vadd.f32 %v5753, %v5832
      %v5863 = vadd.f32 %v5754, %v5835
      %v5864 = vadd.f32 %v5755, %v5840
      %v5865 = vadd.f32 %v5756, %v5843
      %v5866 = vadd.f32 %v5852, %v1561
      %v5867 = vadd.f32 %v5853, %v1561
      %v5868 = vadd.f32 %v5854, %v1561
      %v5869 = vadd.f32 %v5855, %v1561
      %v5870 = vadd.f32 %v5856, %v1561
      %v5871 = vadd.f32 %v5857, %v1561
      %v5872 = vadd.f32 %v5858, %v1561
      %v5873 = vadd.f32 %v5859, %v1561
      %v5874 = vadd.f32 %v5860, %v1561
      %v5875 = vadd.f32 %v5861, %v1561
      %v5876 = vadd.f32 %v5862, %v1561
      %v5877 = vadd.f32 %v5863, %v1561
      %v5878 = vadd.f32 %v5864, %v1561
      %v5879 = vadd.f32 %v5865, %v1561
      %v5880 = vmax.f32 %v5866, 0.0
      %v5881 = vmax.f32 %v5867, 0.0
      %v5882 = vmax.f32 %v5868, 0.0
      %v5883 = vmax.f32 %v5869, 0.0
      %v5884 = vmax.f32 %v5870, 0.0
      %v5885 = vmax.f32 %v5871, 0.0
      %v5886 = vmax.f32 %v5872, 0.0
      %v5887 = vmax.f32 %v5873, 0.0
      %v5888 = vmax.f32 %v5874, 0.0
      %v5889 = vmax.f32 %v5875, 0.0
      %v5890 = vmax.f32 %v5876, 0.0
      %v5891 = vmax.f32 %v5877, 0.0
      %v5892 = vmax.f32 %v5878, 0.0
      %v5893 = vmax.f32 %v5879, 0.0
      %v5894 = vmax.f32 %v1577, %v2367
      %v5895 = vmax.f32 %v1578, %v2368
      %v5896 = vmax.f32 %v1579, %v2369
      %v5897 = vmax.f32 %v1580, %v2370
      %v5898 = vmax.f32 %v1581, %v2371
      %v5899 = vmax.f32 %v1582, %v2372
      %v5900 = vmax.f32 %v1583, %v2373
      %v5901 = vmax.f32 %v1584, %v2374
      %v5902 = vmax.f32 %v1585, %v2375
      %v5903 = vmax.f32 %v1586, %v2376
      %v5904 = vmax.f32 %v1587, %v2377
      %v5905 = vmax.f32 %v1588, %v2378
      %v5906 = vmax.f32 %v1589, %v2379
      %v5907 = vmax.f32 %v1590, %v2380
      %v5908 = vmax.f32 %v2993, %v3538
      %v5909 = vmax.f32 %v2994, %v3539
      %v5910 = vmax.f32 %v2995, %v3540
      %v5911 = vmax.f32 %v2996, %v3541
      %v5912 = vmax.f32 %v2997, %v3542
      %v5913 = vmax.f32 %v2998, %v3543
      %v5914 = vmax.f32 %v2999, %v3544
      %v5915 = vmax.f32 %v3000, %v3545
      %v5916 = vmax.f32 %v3001, %v3546
      %v5917 = vmax.f32 %v3002, %v3547
      %v5918 = vmax.f32 %v3003, %v3548
      %v5919 = vmax.f32 %v3004, %v3549
      %v5920 = vmax.f32 %v3005, %v3550
      %v5921 = vmax.f32 %v3006, %v3551
      %v5922 = vmax.f32 %v5894, %v5908
      %v5923 = vmax.f32 %v5895, %v5909
      %v5924 = vmax.f32 %v5896, %v5910
      %v5925 = vmax.f32 %v5897, %v5911
      %v5926 = vmax.f32 %v5898, %v5912
      %v5927 = vmax.f32 %v5899, %v5913
      %v5928 = vmax.f32 %v5900, %v5914
      %v5929 = vmax.f32 %v5901, %v5915
      %v5930 = vmax.f32 %v5902, %v5916
      %v5931 = vmax.f32 %v5903, %v5917
      %v5932 = vmax.f32 %v5904, %v5918
      %v5933 = vmax.f32 %v5905, %v5919
      %v5934 = vmax.f32 %v5906, %v5920
      %v5935 = vmax.f32 %v5907, %v5921
      %v5936 = vpack.c.bf16 %v5923, %v5922
      %v5937 = vpack.c.bf16 %v5925, %v5924
      %v5938 = vpack.c.bf16 %v5927, %v5926
      %v5939 = vpack.c.bf16 %v5929, %v5928
      %v5940 = vpack.c.bf16 %v5931, %v5930
      %v5941 = vpack.c.bf16 %v5933, %v5932
      %v5942 = vpack.c.bf16 %v5935, %v5934
      %v5943 = vmax.f32 %v4164, %v4709
      %v5944 = vmax.f32 %v4165, %v4710
      %v5945 = vmax.f32 %v4166, %v4711
      %v5946 = vmax.f32 %v4167, %v4712
      %v5947 = vmax.f32 %v4168, %v4713
      %v5948 = vmax.f32 %v4169, %v4714
      %v5949 = vmax.f32 %v4170, %v4715
      %v5950 = vmax.f32 %v4171, %v4716
      %v5951 = vmax.f32 %v4172, %v4717
      %v5952 = vmax.f32 %v4173, %v4718
      %v5953 = vmax.f32 %v4174, %v4719
      %v5954 = vmax.f32 %v4175, %v4720
      %v5955 = vmax.f32 %v4176, %v4721
      %v5956 = vmax.f32 %v4177, %v4722
      %v5957 = vmax.f32 %v5335, %v5880
      %v5958 = vmax.f32 %v5336, %v5881
      %v5959 = vmax.f32 %v5337, %v5882
      %v5960 = vmax.f32 %v5338, %v5883
      %v5961 = vmax.f32 %v5339, %v5884
      %v5962 = vmax.f32 %v5340, %v5885
      %v5963 = vmax.f32 %v5341, %v5886
      %v5964 = vmax.f32 %v5342, %v5887
      %v5965 = vmax.f32 %v5343, %v5888
      %v5966 = vmax.f32 %v5344, %v5889
      %v5967 = vmax.f32 %v5345, %v5890
      %v5968 = vmax.f32 %v5346, %v5891
      %v5969 = vmax.f32 %v5347, %v5892
      %v5970 = vmax.f32 %v5348, %v5893
      %v5971 = vmax.f32 %v5943, %v5957
      %v5972 = vmax.f32 %v5944, %v5958
      %v5973 = vmax.f32 %v5945, %v5959
      %v5974 = vmax.f32 %v5946, %v5960
      %v5975 = vmax.f32 %v5947, %v5961
      %v5976 = vmax.f32 %v5948, %v5962
      %v5977 = vmax.f32 %v5949, %v5963
      %v5978 = vmax.f32 %v5950, %v5964
      %v5979 = vmax.f32 %v5951, %v5965
      %v5980 = vmax.f32 %v5952, %v5966
      %v5981 = vmax.f32 %v5953, %v5967
      %v5982 = vmax.f32 %v5954, %v5968
      %v5983 = vmax.f32 %v5955, %v5969
      %v5984 = vmax.f32 %v5956, %v5970
      %v5985 = vpack.c.bf16 %v5972, %v5971
      %v5986 = vpack.c.bf16 %v5974, %v5973
      %v5987 = vpack.c.bf16 %v5976, %v5975
      %v5988 = vpack.c.bf16 %v5978, %v5977
      %v5989 = vpack.c.bf16 %v5980, %v5979
      %v5990 = vpack.c.bf16 %v5982, %v5981
      %v5991 = vpack.c.bf16 %v5984, %v5983
      %v5992 = vld [vmem:[%s3] sm:$0xf]
      %v5993 = vld [vmem:[%s3 + $0x4] sm:$0xf]
      %v5994 = vld [vmem:[%s3 + $0x8] sm:$0xf]
      %v5995 = vld [vmem:[%s3 + $0xc] sm:$0xf]
      %v5996 = vld [vmem:[%s3 + $0x10] sm:$0xf]
      %v5997 = vld [vmem:[%s3 + $0x14] sm:$0xf]
      %v5998 = vld [vmem:[%s3 + $0x18] sm:$0xf]
      %v5999 = vld [vmem:[%s3 + $0x1c] sm:$0xf]
      %v6000 = vld [vmem:[%s3 + $0x20] sm:$0xf]
      %v6001 = vld [vmem:[%s3 + $0x24] sm:$0xf]
      %v6002 = vld [vmem:[%s3 + $0x28] sm:$0xf]
      %v6003 = vld [vmem:[%s3 + $0x2c] sm:$0xf]
      %v6004 = vld [vmem:[%s3 + $0x30] sm:$0xf]
      %v6005 = vld [vmem:[%s3 + $0x34] sm:$0xf]
      %v6006 = vld [vmem:[%s3 + $0x38] sm:$0xf]
      %v6007 = vld [vmem:[%s3 + $0x3c] sm:$0xf]
      %s6008 = scalar_lea.vmem %s3, 64
      %v6009 = vld [vmem:[%s6008] sm:$0xf]
      %v6010 = vld [vmem:[%s6008 + $0x4] sm:$0xf]
      %v6011 = vld [vmem:[%s6008 + $0x8] sm:$0xf]
      %v6012 = vld [vmem:[%s6008 + $0xc] sm:$0xf]
      %v6013 = vld [vmem:[%s6008 + $0x10] sm:$0xf]
      %v6014 = vld [vmem:[%s6008 + $0x14] sm:$0xf]
      %v6015 = vld [vmem:[%s6008 + $0x18] sm:$0xf]
      %v6016 = vld [vmem:[%s6008 + $0x1c] sm:$0xf]
      %v6017 = vld [vmem:[%s6008 + $0x20] sm:$0xf]
      %v6018 = vld [vmem:[%s6008 + $0x24] sm:$0xf]
      %v6019 = vld [vmem:[%s6008 + $0x28] sm:$0xf]
      %v6020 = vld [vmem:[%s6008 + $0x2c] sm:$0xf]
      %v6021 = vld [vmem:[%s6008 + $0x30] sm:$0xf]
      %v6022 = vld [vmem:[%s6008 + $0x34] sm:$0xf]
      %v6023 = vld [vmem:[%s6008 + $0x38] sm:$0xf]
      %v6024 = vld [vmem:[%s6008 + $0x3c] sm:$0xf]
      %v6041 = vunpack.c.l.b16 %v6009
      %v6042 = vunpack.c.l.b16 %v6010
      %v6043 = vunpack.c.l.b16 %v6011
      %v6044 = vunpack.c.l.b16 %v6012
      %v6045 = vunpack.c.l.b16 %v6013
      %v6046 = vunpack.c.l.b16 %v6014
      %v6047 = vunpack.c.l.b16 %v6015
      %v6048 = vunpack.c.l.b16 %v6016
      %v6049 = vunpack.c.l.b16 %v6017
      %v6050 = vunpack.c.l.b16 %v6018
      %v6051 = vunpack.c.l.b16 %v6019
      %v6052 = vunpack.c.l.b16 %v6020
      %v6053 = vunpack.c.l.b16 %v6021
      %v6054 = vunpack.c.l.b16 %v6022
      %v6055 = vunpack.c.l.b16 %v6023
      %v6056 = vunpack.c.l.b16 %v6024
      %v6057 = vpack.c.b16 %v6042, %v6041
      %v6058 = vpack.c.b16 %v6044, %v6043
      %v6059 = vpack.c.b16 %v6046, %v6045
      %v6060 = vpack.c.b16 %v6048, %v6047
      %v6061 = vpack.c.b16 %v6050, %v6049
      %v6062 = vpack.c.b16 %v6052, %v6051
      %v6063 = vpack.c.b16 %v6054, %v6053
      %v6064 = vpack.c.b16 %v6056, %v6055
      %6073 = vmatprep.subr.bf16.mxu0 0
      %6074 = vmatpush1.bf16.msra.mxu0 %v6057
      %6075 = vmatprep.subr.bf16.mxu0 0
      %6076 = vmatpush1.bf16.msra.mxu0 %v6058
      %6077 = vmatprep.subr.bf16.mxu0 0
      %6078 = vmatpush1.bf16.msra.mxu0 %v6059
      %6079 = vmatprep.subr.bf16.mxu0 0
      %6080 = vmatpush1.bf16.msra.mxu0 %v6060
      %6081 = vmatprep.subr.bf16.mxu0 0
      %6082 = vmatpush1.bf16.msra.mxu0 %v6061
      %6083 = vmatprep.subr.bf16.mxu0 0
      %6084 = vmatpush1.bf16.msra.mxu0 %v6062
      %6085 = vmatprep.subr.bf16.mxu0 0
      %6086 = vmatpush1.bf16.msra.mxu0 %v6063
      %6087 = vmatprep.subr.bf16.mxu0 0
      %6088 = vmatpush1.bf16.msra.mxu0 %v6064
      %6089 = vmatprep.subr.bf16.mxu0 0
      %6090 = vmatpush1.bf16.msra.mxu0 0
      %6091 = vmatprep.subr.bf16.mxu0 0
      %6092 = vmatpush1.bf16.msra.mxu0 0
      %6093 = vmatprep.subr.bf16.mxu0 0
      %6094 = vmatpush1.bf16.msra.mxu0 0
      %6095 = vmatprep.subr.bf16.mxu0 0
      %6096 = vmatpush1.bf16.msra.mxu0 0
      %6097 = vmatprep.subr.bf16.mxu0 0
      %6098 = vmatpush1.bf16.msra.mxu0 0
      %6099 = vmatprep.subr.bf16.mxu0 0
      %6100 = vmatpush1.bf16.msra.mxu0 0
      %6101 = vmatprep.subr.bf16.mxu0 0
      %6102 = vmatpush1.bf16.msra.mxu0 0
      %6103 = vmatprep.subr.bf16.mxu0 0
      %6104 = vmatpush1.bf16.msra.mxu0 0
      %6105 = vmatprep.mubr.bf16.mxu0 0
      %6106 = vmatmul.mubr.bf16.gmra.mrb[0].mxu0 %v5985
      %v6107 = vpop.f32.mrb[0].mxu0
      %v6108 = vadd.f32 0.0, %v6107
      %v6109 = vpop.f32.mrb[0].mxu0
      %v6110 = vpop.f32.mrb[0].mxu0
      %v6111 = vadd.f32 0.0, %v6110
      %v6112 = vpop.f32.mrb[0].mxu0
      %6113 = vmatprep.mubr.bf16.mxu0 0
      %6114 = vmatmul.mubr.bf16.gmra.mrb[0].mxu0 %v5986
      %v6115 = vpop.f32.mrb[0].mxu0
      %v6116 = vadd.f32 0.0, %v6115
      %v6117 = vpop.f32.mrb[0].mxu0
      %v6118 = vpop.f32.mrb[0].mxu0
      %v6119 = vadd.f32 0.0, %v6118
      %v6120 = vpop.f32.mrb[0].mxu0
      %6121 = vmatprep.mubr.bf16.mxu0 0
      %6122 = vmatmul.mubr.bf16.gmra.mrb[0].mxu0 %v5987
      %v6123 = vpop.f32.mrb[0].mxu0
      %v6124 = vadd.f32 0.0, %v6123
      %v6125 = vpop.f32.mrb[0].mxu0
      %v6126 = vpop.f32.mrb[0].mxu0
      %v6127 = vadd.f32 0.0, %v6126
      %v6128 = vpop.f32.mrb[0].mxu0
      %6129 = vmatprep.mubr.bf16.mxu0 0
      %6130 = vmatmul.mubr.bf16.gmra.mrb[0].mxu0 %v5988
      %v6131 = vpop.f32.mrb[0].mxu0
      %v6132 = vadd.f32 0.0, %v6131
      %v6133 = vpop.f32.mrb[0].mxu0
      %v6134 = vpop.f32.mrb[0].mxu0
      %v6135 = vadd.f32 0.0, %v6134
      %v6136 = vpop.f32.mrb[0].mxu0
      %6137 = vmatprep.mubr.bf16.mxu0 0
      %6138 = vmatmul.mubr.bf16.gmra.mrb[0].mxu0 %v5989
      %v6139 = vpop.f32.mrb[0].mxu0
      %v6140 = vadd.f32 0.0, %v6139
      %v6141 = vpop.f32.mrb[0].mxu0
      %v6142 = vpop.f32.mrb[0].mxu0
      %v6143 = vadd.f32 0.0, %v6142
      %v6144 = vpop.f32.mrb[0].mxu0
      %6145 = vdwg.mxu0
      %v6162 = vunpack.c.l.b16 %v5992
      %v6163 = vunpack.c.l.b16 %v5993
      %v6164 = vunpack.c.l.b16 %v5994
      %v6165 = vunpack.c.l.b16 %v5995
      %v6166 = vunpack.c.l.b16 %v5996
      %v6167 = vunpack.c.l.b16 %v5997
      %v6168 = vunpack.c.l.b16 %v5998
      %v6169 = vunpack.c.l.b16 %v5999
      %v6170 = vunpack.c.l.b16 %v6000
      %v6171 = vunpack.c.l.b16 %v6001
      %v6172 = vunpack.c.l.b16 %v6002
      %v6173 = vunpack.c.l.b16 %v6003
      %v6174 = vunpack.c.l.b16 %v6004
      %v6175 = vunpack.c.l.b16 %v6005
      %v6176 = vunpack.c.l.b16 %v6006
      %v6177 = vunpack.c.l.b16 %v6007
      %v6178 = vpack.c.b16 %v6163, %v6162
      %v6179 = vpack.c.b16 %v6165, %v6164
      %v6180 = vpack.c.b16 %v6167, %v6166
      %v6181 = vpack.c.b16 %v6169, %v6168
      %v6182 = vpack.c.b16 %v6171, %v6170
      %v6183 = vpack.c.b16 %v6173, %v6172
      %v6184 = vpack.c.b16 %v6175, %v6174
      %v6185 = vpack.c.b16 %v6177, %v6176
      %6194 = vmatprep.subr.bf16.mxu0 0
      %6195 = vmatpush1.bf16.msra.mxu0 %v6178
      %6196 = vmatprep.subr.bf16.mxu0 0
      %6197 = vmatpush1.bf16.msra.mxu0 %v6179
      %6198 = vmatprep.subr.bf16.mxu0 0
      %6199 = vmatpush1.bf16.msra.mxu0 %v6180
      %6200 = vmatprep.subr.bf16.mxu0 0
      %6201 = vmatpush1.bf16.msra.mxu0 %v6181
      %6202 = vmatprep.subr.bf16.mxu0 0
      %6203 = vmatpush1.bf16.msra.mxu0 %v6182
      %6204 = vmatprep.subr.bf16.mxu0 0
      %6205 = vmatpush1.bf16.msra.mxu0 %v6183
      %6206 = vmatprep.subr.bf16.mxu0 0
      %6207 = vmatpush1.bf16.msra.mxu0 %v6184
      %6208 = vmatprep.subr.bf16.mxu0 0
      %6209 = vmatpush1.bf16.msra.mxu0 %v6185
      %6210 = vmatprep.subr.bf16.mxu0 0
      %6211 = vmatpush1.bf16.msra.mxu0 0
      %6212 = vmatprep.subr.bf16.mxu0 0
      %6213 = vmatpush1.bf16.msra.mxu0 0
      %6214 = vmatprep.subr.bf16.mxu0 0
      %6215 = vmatpush1.bf16.msra.mxu0 0
      %6216 = vmatprep.subr.bf16.mxu0 0
      %6217 = vmatpush1.bf16.msra.mxu0 0
      %6218 = vmatprep.subr.bf16.mxu0 0
      %6219 = vmatpush1.bf16.msra.mxu0 0
      %6220 = vmatprep.subr.bf16.mxu0 0
      %6221 = vmatpush1.bf16.msra.mxu0 0
      %6222 = vmatprep.subr.bf16.mxu0 0
      %6223 = vmatpush1.bf16.msra.mxu0 0
      %6224 = vmatprep.subr.bf16.mxu0 0
      %6225 = vmatpush1.bf16.msra.mxu0 0
      %6226 = vmatprep.mubr.bf16.mxu0 0
      %6227 = vmatmul.mubr.bf16.gmra.mrb[0].mxu0 %v5936
      %v6228 = vpop.f32.mrb[0].mxu0
      %v6229 = vadd.f32 %v6108, %v6228
      %v6230 = vpop.f32.mrb[0].mxu0
      %v6231 = vpop.f32.mrb[0].mxu0
      %v6232 = vadd.f32 %v6111, %v6231
      %v6233 = vpop.f32.mrb[0].mxu0
      %6234 = vmatprep.mubr.bf16.mxu0 0
      %6235 = vmatmul.mubr.bf16.gmra.mrb[0].mxu0 %v5937
      %v6236 = vpop.f32.mrb[0].mxu0
      %v6237 = vadd.f32 %v6116, %v6236
      %v6238 = vpop.f32.mrb[0].mxu0
      %v6239 = vpop.f32.mrb[0].mxu0
      %v6240 = vadd.f32 %v6119, %v6239
      %v6241 = vpop.f32.mrb[0].mxu0
      %6242 = vmatprep.mubr.bf16.mxu0 0
      %6243 = vmatmul.mubr.bf16.gmra.mrb[0].mxu0 %v5938
      %v6244 = vpop.f32.mrb[0].mxu0
      %v6245 = vadd.f32 %v6124, %v6244
      %v6246 = vpop.f32.mrb[0].mxu0
      %v6247 = vpop.f32.mrb[0].mxu0
      %v6248 = vadd.f32 %v6127, %v6247
      %v6249 = vpop.f32.mrb[0].mxu0
      %6250 = vmatprep.mubr.bf16.mxu0 0
      %6251 = vmatmul.mubr.bf16.gmra.mrb[0].mxu0 %v5939
      %v6252 = vpop.f32.mrb[0].mxu0
      %v6253 = vadd.f32 %v6132, %v6252
      %v6254 = vpop.f32.mrb[0].mxu0
      %v6255 = vpop.f32.mrb[0].mxu0
      %v6256 = vadd.f32 %v6135, %v6255
      %v6257 = vpop.f32.mrb[0].mxu0
      %6258 = vmatprep.mubr.bf16.mxu0 0
      %6259 = vmatmul.mubr.bf16.gmra.mrb[0].mxu0 %v5940
      %v6260 = vpop.f32.mrb[0].mxu0
      %v6261 = vadd.f32 %v6140, %v6260
      %v6262 = vpop.f32.mrb[0].mxu0
      %v6263 = vpop.f32.mrb[0].mxu0
      %v6264 = vadd.f32 %v6143, %v6263
      %v6265 = vpop.f32.mrb[0].mxu0
      %6266 = vdwg.mxu0
      %s6267 = scalar_lea.vmem %s3, 128
      %v6268 = vld [vmem:[%s6267] sm:$0xf]
      %v6269 = vld [vmem:[%s6267 + $0x4] sm:$0xf]
      %v6270 = vld [vmem:[%s6267 + $0x8] sm:$0xf]
      %v6271 = vld [vmem:[%s6267 + $0xc] sm:$0xf]
      %v6272 = vld [vmem:[%s6267 + $0x10] sm:$0xf]
      %v6273 = vld [vmem:[%s6267 + $0x14] sm:$0xf]
      %v6274 = vld [vmem:[%s6267 + $0x18] sm:$0xf]
      %v6275 = vld [vmem:[%s6267 + $0x1c] sm:$0xf]
      %v6276 = vld [vmem:[%s6267 + $0x20] sm:$0xf]
      %v6277 = vld [vmem:[%s6267 + $0x24] sm:$0xf]
      %v6278 = vld [vmem:[%s6267 + $0x28] sm:$0xf]
      %v6279 = vld [vmem:[%s6267 + $0x2c] sm:$0xf]
      %v6280 = vld [vmem:[%s6267 + $0x30] sm:$0xf]
      %v6281 = vld [vmem:[%s6267 + $0x34] sm:$0xf]
      %v6282 = vld [vmem:[%s6267 + $0x38] sm:$0xf]
      %v6283 = vld [vmem:[%s6267 + $0x3c] sm:$0xf]
      %v6300 = vunpack.c.l.b16 %v6268
      %v6301 = vunpack.c.l.b16 %v6269
      %v6302 = vunpack.c.l.b16 %v6270
      %v6303 = vunpack.c.l.b16 %v6271
      %v6304 = vunpack.c.l.b16 %v6272
      %v6305 = vunpack.c.l.b16 %v6273
      %v6306 = vunpack.c.l.b16 %v6274
      %v6307 = vunpack.c.l.b16 %v6275
      %v6308 = vunpack.c.l.b16 %v6276
      %v6309 = vunpack.c.l.b16 %v6277
      %v6310 = vunpack.c.l.b16 %v6278
      %v6311 = vunpack.c.l.b16 %v6279
      %v6312 = vunpack.c.l.b16 %v6280
      %v6313 = vunpack.c.l.b16 %v6281
      %v6314 = vunpack.c.l.b16 %v6282
      %v6315 = vunpack.c.l.b16 %v6283
      %v6316 = vpack.c.b16 %v6301, %v6300
      %v6317 = vpack.c.b16 %v6303, %v6302
      %v6318 = vpack.c.b16 %v6305, %v6304
      %v6319 = vpack.c.b16 %v6307, %v6306
      %v6320 = vpack.c.b16 %v6309, %v6308
      %v6321 = vpack.c.b16 %v6311, %v6310
      %v6322 = vpack.c.b16 %v6313, %v6312
      %v6323 = vpack.c.b16 %v6315, %v6314
      %6332 = vmatprep.subr.bf16.mxu0 0
      %6333 = vmatpush1.bf16.msra.mxu0 %v6316
      %6334 = vmatprep.subr.bf16.mxu0 0
      %6335 = vmatpush1.bf16.msra.mxu0 %v6317
      %6336 = vmatprep.subr.bf16.mxu0 0
      %6337 = vmatpush1.bf16.msra.mxu0 %v6318
      %6338 = vmatprep.subr.bf16.mxu0 0
      %6339 = vmatpush1.bf16.msra.mxu0 %v6319
      %6340 = vmatprep.subr.bf16.mxu0 0
      %6341 = vmatpush1.bf16.msra.mxu0 %v6320
      %6342 = vmatprep.subr.bf16.mxu0 0
      %6343 = vmatpush1.bf16.msra.mxu0 %v6321
      %6344 = vmatprep.subr.bf16.mxu0 0
      %6345 = vmatpush1.bf16.msra.mxu0 %v6322
      %6346 = vmatprep.subr.bf16.mxu0 0
      %6347 = vmatpush1.bf16.msra.mxu0 %v6323
      %6348 = vmatprep.subr.bf16.mxu0 0
      %6349 = vmatpush1.bf16.msra.mxu0 0
      %6350 = vmatprep.subr.bf16.mxu0 0
      %6351 = vmatpush1.bf16.msra.mxu0 0
      %6352 = vmatprep.subr.bf16.mxu0 0
      %6353 = vmatpush1.bf16.msra.mxu0 0
      %6354 = vmatprep.subr.bf16.mxu0 0
      %6355 = vmatpush1.bf16.msra.mxu0 0
      %6356 = vmatprep.subr.bf16.mxu0 0
      %6357 = vmatpush1.bf16.msra.mxu0 0
      %6358 = vmatprep.subr.bf16.mxu0 0
      %6359 = vmatpush1.bf16.msra.mxu0 0
      %6360 = vmatprep.subr.bf16.mxu0 0
      %6361 = vmatpush1.bf16.msra.mxu0 0
      %6362 = vmatprep.subr.bf16.mxu0 0
      %6363 = vmatpush1.bf16.msra.mxu0 0
      %6364 = vmatprep.mubr.bf16.mxu0 0
      %6365 = vmatmul.mubr.bf16.gmra.mrb[0].mxu0 %v5937
      %v6366 = vpop.f32.mrb[0].mxu0
      %v6367 = vadd.f32 0.0, %v6366
      %v6368 = vpop.f32.mrb[0].mxu0
      %v6369 = vpop.f32.mrb[0].mxu0
      %v6370 = vadd.f32 0.0, %v6369
      %v6371 = vpop.f32.mrb[0].mxu0
      %6372 = vmatprep.mubr.bf16.mxu0 0
      %6373 = vmatmul.mubr.bf16.gmra.mrb[0].mxu0 %v5938
      %v6374 = vpop.f32.mrb[0].mxu0
      %v6375 = vadd.f32 0.0, %v6374
      %v6376 = vpop.f32.mrb[0].mxu0
      %v6377 = vpop.f32.mrb[0].mxu0
      %v6378 = vadd.f32 0.0, %v6377
      %v6379 = vpop.f32.mrb[0].mxu0
      %6380 = vmatprep.mubr.bf16.mxu0 0
      %6381 = vmatmul.mubr.bf16.gmra.mrb[0].mxu0 %v5939
      %v6382 = vpop.f32.mrb[0].mxu0
      %v6383 = vadd.f32 0.0, %v6382
      %v6384 = vpop.f32.mrb[0].mxu0
      %v6385 = vpop.f32.mrb[0].mxu0
      %v6386 = vadd.f32 0.0, %v6385
      %v6387 = vpop.f32.mrb[0].mxu0
      %6388 = vmatprep.mubr.bf16.mxu0 0
      %6389 = vmatmul.mubr.bf16.gmra.mrb[0].mxu0 %v5940
      %v6390 = vpop.f32.mrb[0].mxu0
      %v6391 = vadd.f32 0.0, %v6390
      %v6392 = vpop.f32.mrb[0].mxu0
      %v6393 = vpop.f32.mrb[0].mxu0
      %v6394 = vadd.f32 0.0, %v6393
      %v6395 = vpop.f32.mrb[0].mxu0
      %6396 = vmatprep.mubr.bf16.mxu0 0
      %6397 = vmatmul.mubr.bf16.gmra.mrb[0].mxu0 %v5941
      %v6398 = vpop.f32.mrb[0].mxu0
      %v6399 = vadd.f32 0.0, %v6398
      %v6400 = vpop.f32.mrb[0].mxu0
      %v6401 = vpop.f32.mrb[0].mxu0
      %v6402 = vadd.f32 0.0, %v6401
      %v6403 = vpop.f32.mrb[0].mxu0
      %6404 = vdwg.mxu0
      %v6405 = vadd.f32 %v6229, %v6367
      %v6406 = vadd.f32 %v6232, %v6370
      %v6407 = vadd.f32 %v6237, %v6375
      %v6408 = vadd.f32 %v6240, %v6378
      %v6409 = vadd.f32 %v6245, %v6383
      %v6410 = vadd.f32 %v6248, %v6386
      %v6411 = vadd.f32 %v6253, %v6391
      %v6412 = vadd.f32 %v6256, %v6394
      %v6413 = vadd.f32 %v6261, %v6399
      %v6414 = vadd.f32 %v6264, %v6402
      %s6415 = scalar_lea.vmem %s3, 192
      %v6416 = vld [vmem:[%s6415] sm:$0xf]
      %v6417 = vld [vmem:[%s6415 + $0x4] sm:$0xf]
      %v6418 = vld [vmem:[%s6415 + $0x8] sm:$0xf]
      %v6419 = vld [vmem:[%s6415 + $0xc] sm:$0xf]
      %v6420 = vld [vmem:[%s6415 + $0x10] sm:$0xf]
      %v6421 = vld [vmem:[%s6415 + $0x14] sm:$0xf]
      %v6422 = vld [vmem:[%s6415 + $0x18] sm:$0xf]
      %v6423 = vld [vmem:[%s6415 + $0x1c] sm:$0xf]
      %v6424 = vld [vmem:[%s6415 + $0x20] sm:$0xf]
      %v6425 = vld [vmem:[%s6415 + $0x24] sm:$0xf]
      %v6426 = vld [vmem:[%s6415 + $0x28] sm:$0xf]
      %v6427 = vld [vmem:[%s6415 + $0x2c] sm:$0xf]
      %v6428 = vld [vmem:[%s6415 + $0x30] sm:$0xf]
      %v6429 = vld [vmem:[%s6415 + $0x34] sm:$0xf]
      %v6430 = vld [vmem:[%s6415 + $0x38] sm:$0xf]
      %v6431 = vld [vmem:[%s6415 + $0x3c] sm:$0xf]
      %v6448 = vunpack.c.l.b16 %v6416
      %v6449 = vunpack.c.l.b16 %v6417
      %v6450 = vunpack.c.l.b16 %v6418
      %v6451 = vunpack.c.l.b16 %v6419
      %v6452 = vunpack.c.l.b16 %v6420
      %v6453 = vunpack.c.l.b16 %v6421
      %v6454 = vunpack.c.l.b16 %v6422
      %v6455 = vunpack.c.l.b16 %v6423
      %v6456 = vunpack.c.l.b16 %v6424
      %v6457 = vunpack.c.l.b16 %v6425
      %v6458 = vunpack.c.l.b16 %v6426
      %v6459 = vunpack.c.l.b16 %v6427
      %v6460 = vunpack.c.l.b16 %v6428
      %v6461 = vunpack.c.l.b16 %v6429
      %v6462 = vunpack.c.l.b16 %v6430
      %v6463 = vunpack.c.l.b16 %v6431
      %v6464 = vpack.c.b16 %v6449, %v6448
      %v6465 = vpack.c.b16 %v6451, %v6450
      %v6466 = vpack.c.b16 %v6453, %v6452
      %v6467 = vpack.c.b16 %v6455, %v6454
      %v6468 = vpack.c.b16 %v6457, %v6456
      %v6469 = vpack.c.b16 %v6459, %v6458
      %v6470 = vpack.c.b16 %v6461, %v6460
      %v6471 = vpack.c.b16 %v6463, %v6462
      %6480 = vmatprep.subr.bf16.mxu0 0
      %6481 = vmatpush1.bf16.msra.mxu0 %v6464
      %6482 = vmatprep.subr.bf16.mxu0 0
      %6483 = vmatpush1.bf16.msra.mxu0 %v6465
      %6484 = vmatprep.subr.bf16.mxu0 0
      %6485 = vmatpush1.bf16.msra.mxu0 %v6466
      %6486 = vmatprep.subr.bf16.mxu0 0
      %6487 = vmatpush1.bf16.msra.mxu0 %v6467
      %6488 = vmatprep.subr.bf16.mxu0 0
      %6489 = vmatpush1.bf16.msra.mxu0 %v6468
      %6490 = vmatprep.subr.bf16.mxu0 0
      %6491 = vmatpush1.bf16.msra.mxu0 %v6469
      %6492 = vmatprep.subr.bf16.mxu0 0
      %6493 = vmatpush1.bf16.msra.mxu0 %v6470
      %6494 = vmatprep.subr.bf16.mxu0 0
      %6495 = vmatpush1.bf16.msra.mxu0 %v6471
      %6496 = vmatprep.subr.bf16.mxu0 0
      %6497 = vmatpush1.bf16.msra.mxu0 0
      %6498 = vmatprep.subr.bf16.mxu0 0
      %6499 = vmatpush1.bf16.msra.mxu0 0
      %6500 = vmatprep.subr.bf16.mxu0 0
      %6501 = vmatpush1.bf16.msra.mxu0 0
      %6502 = vmatprep.subr.bf16.mxu0 0
      %6503 = vmatpush1.bf16.msra.mxu0 0
      %6504 = vmatprep.subr.bf16.mxu0 0
      %6505 = vmatpush1.bf16.msra.mxu0 0
      %6506 = vmatprep.subr.bf16.mxu0 0
      %6507 = vmatpush1.bf16.msra.mxu0 0
      %6508 = vmatprep.subr.bf16.mxu0 0
      %6509 = vmatpush1.bf16.msra.mxu0 0
      %6510 = vmatprep.subr.bf16.mxu0 0
      %6511 = vmatpush1.bf16.msra.mxu0 0
      %6512 = vmatprep.mubr.bf16.mxu0 0
      %6513 = vmatmul.mubr.bf16.gmra.mrb[0].mxu0 %v5986
      %v6514 = vpop.f32.mrb[0].mxu0
      %v6515 = vadd.f32 0.0, %v6514
      %v6516 = vpop.f32.mrb[0].mxu0
      %v6517 = vpop.f32.mrb[0].mxu0
      %v6518 = vadd.f32 0.0, %v6517
      %v6519 = vpop.f32.mrb[0].mxu0
      %6520 = vmatprep.mubr.bf16.mxu0 0
      %6521 = vmatmul.mubr.bf16.gmra.mrb[0].mxu0 %v5987
      %v6522 = vpop.f32.mrb[0].mxu0
      %v6523 = vadd.f32 0.0, %v6522
      %v6524 = vpop.f32.mrb[0].mxu0
      %v6525 = vpop.f32.mrb[0].mxu0
      %v6526 = vadd.f32 0.0, %v6525
      %v6527 = vpop.f32.mrb[0].mxu0
      %6528 = vmatprep.mubr.bf16.mxu0 0
      %6529 = vmatmul.mubr.bf16.gmra.mrb[0].mxu0 %v5988
      %v6530 = vpop.f32.mrb[0].mxu0
      %v6531 = vadd.f32 0.0, %v6530
      %v6532 = vpop.f32.mrb[0].mxu0
      %v6533 = vpop.f32.mrb[0].mxu0
      %v6534 = vadd.f32 0.0, %v6533
      %v6535 = vpop.f32.mrb[0].mxu0
      %6536 = vmatprep.mubr.bf16.mxu0 0
      %6537 = vmatmul.mubr.bf16.gmra.mrb[0].mxu0 %v5989
      %v6538 = vpop.f32.mrb[0].mxu0
      %v6539 = vadd.f32 0.0, %v6538
      %v6540 = vpop.f32.mrb[0].mxu0
      %v6541 = vpop.f32.mrb[0].mxu0
      %v6542 = vadd.f32 0.0, %v6541
      %v6543 = vpop.f32.mrb[0].mxu0
      %6544 = vmatprep.mubr.bf16.mxu0 0
      %6545 = vmatmul.mubr.bf16.gmra.mrb[0].mxu0 %v5990
      %v6546 = vpop.f32.mrb[0].mxu0
      %v6547 = vadd.f32 0.0, %v6546
      %v6548 = vpop.f32.mrb[0].mxu0
      %v6549 = vpop.f32.mrb[0].mxu0
      %v6550 = vadd.f32 0.0, %v6549
      %v6551 = vpop.f32.mrb[0].mxu0
      %6552 = vdwg.mxu0
      %v6553 = vadd.f32 %v6405, %v6515
      %v6554 = vadd.f32 %v6406, %v6518
      %v6555 = vadd.f32 %v6407, %v6523
      %v6556 = vadd.f32 %v6408, %v6526
      %v6557 = vadd.f32 %v6409, %v6531
      %v6558 = vadd.f32 %v6410, %v6534
      %v6559 = vadd.f32 %v6411, %v6539
      %v6560 = vadd.f32 %v6412, %v6542
      %v6561 = vadd.f32 %v6413, %v6547
      %v6562 = vadd.f32 %v6414, %v6550
      %s6563 = scalar_lea.vmem %s3, 256
      %v6564 = vld [vmem:[%s6563] sm:$0xf]
      %v6565 = vld [vmem:[%s6563 + $0x4] sm:$0xf]
      %v6566 = vld [vmem:[%s6563 + $0x8] sm:$0xf]
      %v6567 = vld [vmem:[%s6563 + $0xc] sm:$0xf]
      %v6568 = vld [vmem:[%s6563 + $0x10] sm:$0xf]
      %v6569 = vld [vmem:[%s6563 + $0x14] sm:$0xf]
      %v6570 = vld [vmem:[%s6563 + $0x18] sm:$0xf]
      %v6571 = vld [vmem:[%s6563 + $0x1c] sm:$0xf]
      %v6572 = vld [vmem:[%s6563 + $0x20] sm:$0xf]
      %v6573 = vld [vmem:[%s6563 + $0x24] sm:$0xf]
      %v6574 = vld [vmem:[%s6563 + $0x28] sm:$0xf]
      %v6575 = vld [vmem:[%s6563 + $0x2c] sm:$0xf]
      %v6576 = vld [vmem:[%s6563 + $0x30] sm:$0xf]
      %v6577 = vld [vmem:[%s6563 + $0x34] sm:$0xf]
      %v6578 = vld [vmem:[%s6563 + $0x38] sm:$0xf]
      %v6579 = vld [vmem:[%s6563 + $0x3c] sm:$0xf]
      %v6596 = vunpack.c.l.b16 %v6564
      %v6597 = vunpack.c.l.b16 %v6565
      %v6598 = vunpack.c.l.b16 %v6566
      %v6599 = vunpack.c.l.b16 %v6567
      %v6600 = vunpack.c.l.b16 %v6568
      %v6601 = vunpack.c.l.b16 %v6569
      %v6602 = vunpack.c.l.b16 %v6570
      %v6603 = vunpack.c.l.b16 %v6571
      %v6604 = vunpack.c.l.b16 %v6572
      %v6605 = vunpack.c.l.b16 %v6573
      %v6606 = vunpack.c.l.b16 %v6574
      %v6607 = vunpack.c.l.b16 %v6575
      %v6608 = vunpack.c.l.b16 %v6576
      %v6609 = vunpack.c.l.b16 %v6577
      %v6610 = vunpack.c.l.b16 %v6578
      %v6611 = vunpack.c.l.b16 %v6579
      %v6612 = vpack.c.b16 %v6597, %v6596
      %v6613 = vpack.c.b16 %v6599, %v6598
      %v6614 = vpack.c.b16 %v6601, %v6600
      %v6615 = vpack.c.b16 %v6603, %v6602
      %v6616 = vpack.c.b16 %v6605, %v6604
      %v6617 = vpack.c.b16 %v6607, %v6606
      %v6618 = vpack.c.b16 %v6609, %v6608
      %v6619 = vpack.c.b16 %v6611, %v6610
      %6628 = vmatprep.subr.bf16.mxu0 0
      %6629 = vmatpush1.bf16.msra.mxu0 %v6612
      %6630 = vmatprep.subr.bf16.mxu0 0
      %6631 = vmatpush1.bf16.msra.mxu0 %v6613
      %6632 = vmatprep.subr.bf16.mxu0 0
      %6633 = vmatpush1.bf16.msra.mxu0 %v6614
      %6634 = vmatprep.subr.bf16.mxu0 0
      %6635 = vmatpush1.bf16.msra.mxu0 %v6615
      %6636 = vmatprep.subr.bf16.mxu0 0
      %6637 = vmatpush1.bf16.msra.mxu0 %v6616
      %6638 = vmatprep.subr.bf16.mxu0 0
      %6639 = vmatpush1.bf16.msra.mxu0 %v6617
      %6640 = vmatprep.subr.bf16.mxu0 0
      %6641 = vmatpush1.bf16.msra.mxu0 %v6618
      %6642 = vmatprep.subr.bf16.mxu0 0
      %6643 = vmatpush1.bf16.msra.mxu0 %v6619
      %6644 = vmatprep.subr.bf16.mxu0 0
      %6645 = vmatpush1.bf16.msra.mxu0 0
      %6646 = vmatprep.subr.bf16.mxu0 0
      %6647 = vmatpush1.bf16.msra.mxu0 0
      %6648 = vmatprep.subr.bf16.mxu0 0
      %6649 = vmatpush1.bf16.msra.mxu0 0
      %6650 = vmatprep.subr.bf16.mxu0 0
      %6651 = vmatpush1.bf16.msra.mxu0 0
      %6652 = vmatprep.subr.bf16.mxu0 0
      %6653 = vmatpush1.bf16.msra.mxu0 0
      %6654 = vmatprep.subr.bf16.mxu0 0
      %6655 = vmatpush1.bf16.msra.mxu0 0
      %6656 = vmatprep.subr.bf16.mxu0 0
      %6657 = vmatpush1.bf16.msra.mxu0 0
      %6658 = vmatprep.subr.bf16.mxu0 0
      %6659 = vmatpush1.bf16.msra.mxu0 0
      %6660 = vmatprep.mubr.bf16.mxu0 0
      %6661 = vmatmul.mubr.bf16.gmra.mrb[0].mxu0 %v5938
      %v6662 = vpop.f32.mrb[0].mxu0
      %v6663 = vadd.f32 0.0, %v6662
      %v6664 = vpop.f32.mrb[0].mxu0
      %v6665 = vpop.f32.mrb[0].mxu0
      %v6666 = vadd.f32 0.0, %v6665
      %v6667 = vpop.f32.mrb[0].mxu0
      %6668 = vmatprep.mubr.bf16.mxu0 0
      %6669 = vmatmul.mubr.bf16.gmra.mrb[0].mxu0 %v5939
      %v6670 = vpop.f32.mrb[0].mxu0
      %v6671 = vadd.f32 0.0, %v6670
      %v6672 = vpop.f32.mrb[0].mxu0
      %v6673 = vpop.f32.mrb[0].mxu0
      %v6674 = vadd.f32 0.0, %v6673
      %v6675 = vpop.f32.mrb[0].mxu0
      %6676 = vmatprep.mubr.bf16.mxu0 0
      %6677 = vmatmul.mubr.bf16.gmra.mrb[0].mxu0 %v5940
      %v6678 = vpop.f32.mrb[0].mxu0
      %v6679 = vadd.f32 0.0, %v6678
      %v6680 = vpop.f32.mrb[0].mxu0
      %v6681 = vpop.f32.mrb[0].mxu0
      %v6682 = vadd.f32 0.0, %v6681
      %v6683 = vpop.f32.mrb[0].mxu0
      %6684 = vmatprep.mubr.bf16.mxu0 0
      %6685 = vmatmul.mubr.bf16.gmra.mrb[0].mxu0 %v5941
      %v6686 = vpop.f32.mrb[0].mxu0
      %v6687 = vadd.f32 0.0, %v6686
      %v6688 = vpop.f32.mrb[0].mxu0
      %v6689 = vpop.f32.mrb[0].mxu0
      %v6690 = vadd.f32 0.0, %v6689
      %v6691 = vpop.f32.mrb[0].mxu0
      %6692 = vmatprep.mubr.bf16.mxu0 0
      %6693 = vmatmul.mubr.bf16.gmra.mrb[0].mxu0 %v5942
      %v6694 = vpop.f32.mrb[0].mxu0
      %v6695 = vadd.f32 0.0, %v6694
      %v6696 = vpop.f32.mrb[0].mxu0
      %v6697 = vpop.f32.mrb[0].mxu0
      %v6698 = vadd.f32 0.0, %v6697
      %v6699 = vpop.f32.mrb[0].mxu0
      %6700 = vdwg.mxu0
      %v6701 = vadd.f32 %v6553, %v6663
      %v6702 = vadd.f32 %v6554, %v6666
      %v6703 = vadd.f32 %v6555, %v6671
      %v6704 = vadd.f32 %v6556, %v6674
      %v6705 = vadd.f32 %v6557, %v6679
      %v6706 = vadd.f32 %v6558, %v6682
      %v6707 = vadd.f32 %v6559, %v6687
      %v6708 = vadd.f32 %v6560, %v6690
      %v6709 = vadd.f32 %v6561, %v6695
      %v6710 = vadd.f32 %v6562, %v6698
      %v6712 = vlaneseq
      %v6713 = vshrl.u32 %v6712, 7
      %v6714 = vsub.s32 0, %v6713
      %v6715 = vrot.slane %v390, %v6714
      %v6717 = vadd.f32 %v6701, %v6715
      %v6718 = vadd.f32 %v6702, %v6715
      %v6719 = vadd.f32 %v6703, %v6715
      %v6720 = vadd.f32 %v6704, %v6715
      %v6721 = vadd.f32 %v6705, %v6715
      %v6722 = vadd.f32 %v6706, %v6715
      %v6723 = vadd.f32 %v6707, %v6715
      %v6724 = vadd.f32 %v6708, %v6715
      %v6725 = vadd.f32 %v6709, %v6715
      %v6726 = vadd.f32 %v6710, %v6715
      %v6727 = vmax.f32 %v6717, 0.0
      %v6728 = vmax.f32 %v6718, 0.0
      %v6729 = vmax.f32 %v6719, 0.0
      %v6730 = vmax.f32 %v6720, 0.0
      %v6731 = vmax.f32 %v6721, 0.0
      %v6732 = vmax.f32 %v6722, 0.0
      %v6733 = vmax.f32 %v6723, 0.0
      %v6734 = vmax.f32 %v6724, 0.0
      %v6735 = vmax.f32 %v6725, 0.0
      %v6736 = vmax.f32 %v6726, 0.0
      %s6737 = scalar_lea.vmem %s3, 320
      %v6738 = vld [vmem:[%s6737] sm:$0xf]
      %v6739 = vld [vmem:[%s6737 + $0x4] sm:$0xf]
      %v6740 = vld [vmem:[%s6737 + $0x8] sm:$0xf]
      %v6741 = vld [vmem:[%s6737 + $0xc] sm:$0xf]
      %v6742 = vld [vmem:[%s6737 + $0x10] sm:$0xf]
      %v6743 = vld [vmem:[%s6737 + $0x14] sm:$0xf]
      %v6744 = vld [vmem:[%s6737 + $0x18] sm:$0xf]
      %v6745 = vld [vmem:[%s6737 + $0x1c] sm:$0xf]
      %v6746 = vld [vmem:[%s6737 + $0x20] sm:$0xf]
      %v6747 = vld [vmem:[%s6737 + $0x24] sm:$0xf]
      %v6748 = vld [vmem:[%s6737 + $0x28] sm:$0xf]
      %v6749 = vld [vmem:[%s6737 + $0x2c] sm:$0xf]
      %v6750 = vld [vmem:[%s6737 + $0x30] sm:$0xf]
      %v6751 = vld [vmem:[%s6737 + $0x34] sm:$0xf]
      %v6752 = vld [vmem:[%s6737 + $0x38] sm:$0xf]
      %v6753 = vld [vmem:[%s6737 + $0x3c] sm:$0xf]
      %s6754 = scalar_lea.vmem %s3, 384
      %v6755 = vld [vmem:[%s6754] sm:$0xf]
      %v6756 = vld [vmem:[%s6754 + $0x4] sm:$0xf]
      %v6757 = vld [vmem:[%s6754 + $0x8] sm:$0xf]
      %v6758 = vld [vmem:[%s6754 + $0xc] sm:$0xf]
      %v6759 = vld [vmem:[%s6754 + $0x10] sm:$0xf]
      %v6760 = vld [vmem:[%s6754 + $0x14] sm:$0xf]
      %v6761 = vld [vmem:[%s6754 + $0x18] sm:$0xf]
      %v6762 = vld [vmem:[%s6754 + $0x1c] sm:$0xf]
      %v6763 = vld [vmem:[%s6754 + $0x20] sm:$0xf]
      %v6764 = vld [vmem:[%s6754 + $0x24] sm:$0xf]
      %v6765 = vld [vmem:[%s6754 + $0x28] sm:$0xf]
      %v6766 = vld [vmem:[%s6754 + $0x2c] sm:$0xf]
      %v6767 = vld [vmem:[%s6754 + $0x30] sm:$0xf]
      %v6768 = vld [vmem:[%s6754 + $0x34] sm:$0xf]
      %v6769 = vld [vmem:[%s6754 + $0x38] sm:$0xf]
      %v6770 = vld [vmem:[%s6754 + $0x3c] sm:$0xf]
      %v6787 = vunpack.c.l.b16 %v6755
      %v6788 = vunpack.c.l.b16 %v6756
      %v6789 = vunpack.c.l.b16 %v6757
      %v6790 = vunpack.c.l.b16 %v6758
      %v6791 = vunpack.c.l.b16 %v6759
      %v6792 = vunpack.c.l.b16 %v6760
      %v6793 = vunpack.c.l.b16 %v6761
      %v6794 = vunpack.c.l.b16 %v6762
      %v6795 = vunpack.c.l.b16 %v6763
      %v6796 = vunpack.c.l.b16 %v6764
      %v6797 = vunpack.c.l.b16 %v6765
      %v6798 = vunpack.c.l.b16 %v6766
      %v6799 = vunpack.c.l.b16 %v6767
      %v6800 = vunpack.c.l.b16 %v6768
      %v6801 = vunpack.c.l.b16 %v6769
      %v6802 = vunpack.c.l.b16 %v6770
      %v6803 = vpack.c.b16 %v6788, %v6787
      %v6804 = vpack.c.b16 %v6790, %v6789
      %v6805 = vpack.c.b16 %v6792, %v6791
      %v6806 = vpack.c.b16 %v6794, %v6793
      %v6807 = vpack.c.b16 %v6796, %v6795
      %v6808 = vpack.c.b16 %v6798, %v6797
      %v6809 = vpack.c.b16 %v6800, %v6799
      %v6810 = vpack.c.b16 %v6802, %v6801
      %6819 = vmatprep.subr.bf16.mxu0 0
      %6820 = vmatpush1.bf16.msra.mxu0 %v6803
      %6821 = vmatprep.subr.bf16.mxu0 0
      %6822 = vmatpush1.bf16.msra.mxu0 %v6804
      %6823 = vmatprep.subr.bf16.mxu0 0
      %6824 = vmatpush1.bf16.msra.mxu0 %v6805
      %6825 = vmatprep.subr.bf16.mxu0 0
      %6826 = vmatpush1.bf16.msra.mxu0 %v6806
      %6827 = vmatprep.subr.bf16.mxu0 0
      %6828 = vmatpush1.bf16.msra.mxu0 %v6807
      %6829 = vmatprep.subr.bf16.mxu0 0
      %6830 = vmatpush1.bf16.msra.mxu0 %v6808
      %6831 = vmatprep.subr.bf16.mxu0 0
      %6832 = vmatpush1.bf16.msra.mxu0 %v6809
      %6833 = vmatprep.subr.bf16.mxu0 0
      %6834 = vmatpush1.bf16.msra.mxu0 %v6810
      %6835 = vmatprep.subr.bf16.mxu0 0
      %6836 = vmatpush1.bf16.msra.mxu0 0
      %6837 = vmatprep.subr.bf16.mxu0 0
      %6838 = vmatpush1.bf16.msra.mxu0 0
      %6839 = vmatprep.subr.bf16.mxu0 0
      %6840 = vmatpush1.bf16.msra.mxu0 0
      %6841 = vmatprep.subr.bf16.mxu0 0
      %6842 = vmatpush1.bf16.msra.mxu0 0
      %6843 = vmatprep.subr.bf16.mxu0 0
      %6844 = vmatpush1.bf16.msra.mxu0 0
      %6845 = vmatprep.subr.bf16.mxu0 0
      %6846 = vmatpush1.bf16.msra.mxu0 0
      %6847 = vmatprep.subr.bf16.mxu0 0
      %6848 = vmatpush1.bf16.msra.mxu0 0
      %6849 = vmatprep.subr.bf16.mxu0 0
      %6850 = vmatpush1.bf16.msra.mxu0 0
      %6851 = vmatprep.mubr.bf16.mxu0 0
      %6852 = vmatmul.mubr.bf16.gmra.mrb[0].mxu0 %v5985
      %v6853 = vpop.f32.mrb[0].mxu0
      %v6854 = vadd.f32 0.0, %v6853
      %v6855 = vpop.f32.mrb[0].mxu0
      %v6856 = vpop.f32.mrb[0].mxu0
      %v6857 = vadd.f32 0.0, %v6856
      %v6858 = vpop.f32.mrb[0].mxu0
      %6859 = vmatprep.mubr.bf16.mxu0 0
      %6860 = vmatmul.mubr.bf16.gmra.mrb[0].mxu0 %v5986
      %v6861 = vpop.f32.mrb[0].mxu0
      %v6862 = vadd.f32 0.0, %v6861
      %v6863 = vpop.f32.mrb[0].mxu0
      %v6864 = vpop.f32.mrb[0].mxu0
      %v6865 = vadd.f32 0.0, %v6864
      %v6866 = vpop.f32.mrb[0].mxu0
      %6867 = vmatprep.mubr.bf16.mxu0 0
      %6868 = vmatmul.mubr.bf16.gmra.mrb[0].mxu0 %v5987
      %v6869 = vpop.f32.mrb[0].mxu0
      %v6870 = vadd.f32 0.0, %v6869
      %v6871 = vpop.f32.mrb[0].mxu0
      %v6872 = vpop.f32.mrb[0].mxu0
      %v6873 = vadd.f32 0.0, %v6872
      %v6874 = vpop.f32.mrb[0].mxu0
      %6875 = vmatprep.mubr.bf16.mxu0 0
      %6876 = vmatmul.mubr.bf16.gmra.mrb[0].mxu0 %v5988
      %v6877 = vpop.f32.mrb[0].mxu0
      %v6878 = vadd.f32 0.0, %v6877
      %v6879 = vpop.f32.mrb[0].mxu0
      %v6880 = vpop.f32.mrb[0].mxu0
      %v6881 = vadd.f32 0.0, %v6880
      %v6882 = vpop.f32.mrb[0].mxu0
      %6883 = vmatprep.mubr.bf16.mxu0 0
      %6884 = vmatmul.mubr.bf16.gmra.mrb[0].mxu0 %v5989
      %v6885 = vpop.f32.mrb[0].mxu0
      %v6886 = vadd.f32 0.0, %v6885
      %v6887 = vpop.f32.mrb[0].mxu0
      %v6888 = vpop.f32.mrb[0].mxu0
      %v6889 = vadd.f32 0.0, %v6888
      %v6890 = vpop.f32.mrb[0].mxu0
      %6891 = vdwg.mxu0
      %v6908 = vunpack.c.l.b16 %v6738
      %v6909 = vunpack.c.l.b16 %v6739
      %v6910 = vunpack.c.l.b16 %v6740
      %v6911 = vunpack.c.l.b16 %v6741
      %v6912 = vunpack.c.l.b16 %v6742
      %v6913 = vunpack.c.l.b16 %v6743
      %v6914 = vunpack.c.l.b16 %v6744
      %v6915 = vunpack.c.l.b16 %v6745
      %v6916 = vunpack.c.l.b16 %v6746
      %v6917 = vunpack.c.l.b16 %v6747
      %v6918 = vunpack.c.l.b16 %v6748
      %v6919 = vunpack.c.l.b16 %v6749
      %v6920 = vunpack.c.l.b16 %v6750
      %v6921 = vunpack.c.l.b16 %v6751
      %v6922 = vunpack.c.l.b16 %v6752
      %v6923 = vunpack.c.l.b16 %v6753
      %v6924 = vpack.c.b16 %v6909, %v6908
      %v6925 = vpack.c.b16 %v6911, %v6910
      %v6926 = vpack.c.b16 %v6913, %v6912
      %v6927 = vpack.c.b16 %v6915, %v6914
      %v6928 = vpack.c.b16 %v6917, %v6916
      %v6929 = vpack.c.b16 %v6919, %v6918
      %v6930 = vpack.c.b16 %v6921, %v6920
      %v6931 = vpack.c.b16 %v6923, %v6922
      %6940 = vmatprep.subr.bf16.mxu0 0
      %6941 = vmatpush1.bf16.msra.mxu0 %v6924
      %6942 = vmatprep.subr.bf16.mxu0 0
      %6943 = vmatpush1.bf16.msra.mxu0 %v6925
      %6944 = vmatprep.subr.bf16.mxu0 0
      %6945 = vmatpush1.bf16.msra.mxu0 %v6926
      %6946 = vmatprep.subr.bf16.mxu0 0
      %6947 = vmatpush1.bf16.msra.mxu0 %v6927
      %6948 = vmatprep.subr.bf16.mxu0 0
      %6949 = vmatpush1.bf16.msra.mxu0 %v6928
      %6950 = vmatprep.subr.bf16.mxu0 0
      %6951 = vmatpush1.bf16.msra.mxu0 %v6929
      %6952 = vmatprep.subr.bf16.mxu0 0
      %6953 = vmatpush1.bf16.msra.mxu0 %v6930
      %6954 = vmatprep.subr.bf16.mxu0 0
      %6955 = vmatpush1.bf16.msra.mxu0 %v6931
      %6956 = vmatprep.subr.bf16.mxu0 0
      %6957 = vmatpush1.bf16.msra.mxu0 0
      %6958 = vmatprep.subr.bf16.mxu0 0
      %6959 = vmatpush1.bf16.msra.mxu0 0
      %6960 = vmatprep.subr.bf16.mxu0 0
      %6961 = vmatpush1.bf16.msra.mxu0 0
      %6962 = vmatprep.subr.bf16.mxu0 0
      %6963 = vmatpush1.bf16.msra.mxu0 0
      %6964 = vmatprep.subr.bf16.mxu0 0
      %6965 = vmatpush1.bf16.msra.mxu0 0
      %6966 = vmatprep.subr.bf16.mxu0 0
      %6967 = vmatpush1.bf16.msra.mxu0 0
      %6968 = vmatprep.subr.bf16.mxu0 0
      %6969 = vmatpush1.bf16.msra.mxu0 0
      %6970 = vmatprep.subr.bf16.mxu0 0
      %6971 = vmatpush1.bf16.msra.mxu0 0
      %6972 = vmatprep.mubr.bf16.mxu0 0
      %6973 = vmatmul.mubr.bf16.gmra.mrb[0].mxu0 %v5936
      %v6974 = vpop.f32.mrb[0].mxu0
      %v6975 = vadd.f32 %v6854, %v6974
      %v6976 = vpop.f32.mrb[0].mxu0
      %v6977 = vpop.f32.mrb[0].mxu0
      %v6978 = vadd.f32 %v6857, %v6977
      %v6979 = vpop.f32.mrb[0].mxu0
      %6980 = vmatprep.mubr.bf16.mxu0 0
      %6981 = vmatmul.mubr.bf16.gmra.mrb[0].mxu0 %v5937
      %v6982 = vpop.f32.mrb[0].mxu0
      %v6983 = vadd.f32 %v6862, %v6982
      %v6984 = vpop.f32.mrb[0].mxu0
      %v6985 = vpop.f32.mrb[0].mxu0
      %v6986 = vadd.f32 %v6865, %v6985
      %v6987 = vpop.f32.mrb[0].mxu0
      %6988 = vmatprep.mubr.bf16.mxu0 0
      %6989 = vmatmul.mubr.bf16.gmra.mrb[0].mxu0 %v5938
      %v6990 = vpop.f32.mrb[0].mxu0
      %v6991 = vadd.f32 %v6870, %v6990
      %v6992 = vpop.f32.mrb[0].mxu0
      %v6993 = vpop.f32.mrb[0].mxu0
      %v6994 = vadd.f32 %v6873, %v6993
      %v6995 = vpop.f32.mrb[0].mxu0
      %6996 = vmatprep.mubr.bf16.mxu0 0
      %6997 = vmatmul.mubr.bf16.gmra.mrb[0].mxu0 %v5939
      %v6998 = vpop.f32.mrb[0].mxu0
      %v6999 = vadd.f32 %v6878, %v6998
      %v7000 = vpop.f32.mrb[0].mxu0
      %v7001 = vpop.f32.mrb[0].mxu0
      %v7002 = vadd.f32 %v6881, %v7001
      %v7003 = vpop.f32.mrb[0].mxu0
      %7004 = vmatprep.mubr.bf16.mxu0 0
      %7005 = vmatmul.mubr.bf16.gmra.mrb[0].mxu0 %v5940
      %v7006 = vpop.f32.mrb[0].mxu0
      %v7007 = vadd.f32 %v6886, %v7006
      %v7008 = vpop.f32.mrb[0].mxu0
      %v7009 = vpop.f32.mrb[0].mxu0
      %v7010 = vadd.f32 %v6889, %v7009
      %v7011 = vpop.f32.mrb[0].mxu0
      %7012 = vdwg.mxu0
      %s7013 = scalar_lea.vmem %s3, 448
      %v7014 = vld [vmem:[%s7013] sm:$0xf]
      %v7015 = vld [vmem:[%s7013 + $0x4] sm:$0xf]
      %v7016 = vld [vmem:[%s7013 + $0x8] sm:$0xf]
      %v7017 = vld [vmem:[%s7013 + $0xc] sm:$0xf]
      %v7018 = vld [vmem:[%s7013 + $0x10] sm:$0xf]
      %v7019 = vld [vmem:[%s7013 + $0x14] sm:$0xf]
      %v7020 = vld [vmem:[%s7013 + $0x18] sm:$0xf]
      %v7021 = vld [vmem:[%s7013 + $0x1c] sm:$0xf]
      %v7022 = vld [vmem:[%s7013 + $0x20] sm:$0xf]
      %v7023 = vld [vmem:[%s7013 + $0x24] sm:$0xf]
      %v7024 = vld [vmem:[%s7013 + $0x28] sm:$0xf]
      %v7025 = vld [vmem:[%s7013 + $0x2c] sm:$0xf]
      %v7026 = vld [vmem:[%s7013 + $0x30] sm:$0xf]
      %v7027 = vld [vmem:[%s7013 + $0x34] sm:$0xf]
      %v7028 = vld [vmem:[%s7013 + $0x38] sm:$0xf]
      %v7029 = vld [vmem:[%s7013 + $0x3c] sm:$0xf]
      %v7046 = vunpack.c.l.b16 %v7014
      %v7047 = vunpack.c.l.b16 %v7015
      %v7048 = vunpack.c.l.b16 %v7016
      %v7049 = vunpack.c.l.b16 %v7017
      %v7050 = vunpack.c.l.b16 %v7018
      %v7051 = vunpack.c.l.b16 %v7019
      %v7052 = vunpack.c.l.b16 %v7020
      %v7053 = vunpack.c.l.b16 %v7021
      %v7054 = vunpack.c.l.b16 %v7022
      %v7055 = vunpack.c.l.b16 %v7023
      %v7056 = vunpack.c.l.b16 %v7024
      %v7057 = vunpack.c.l.b16 %v7025
      %v7058 = vunpack.c.l.b16 %v7026
      %v7059 = vunpack.c.l.b16 %v7027
      %v7060 = vunpack.c.l.b16 %v7028
      %v7061 = vunpack.c.l.b16 %v7029
      %v7062 = vpack.c.b16 %v7047, %v7046
      %v7063 = vpack.c.b16 %v7049, %v7048
      %v7064 = vpack.c.b16 %v7051, %v7050
      %v7065 = vpack.c.b16 %v7053, %v7052
      %v7066 = vpack.c.b16 %v7055, %v7054
      %v7067 = vpack.c.b16 %v7057, %v7056
      %v7068 = vpack.c.b16 %v7059, %v7058
      %v7069 = vpack.c.b16 %v7061, %v7060
      %7078 = vmatprep.subr.bf16.mxu0 0
      %7079 = vmatpush1.bf16.msra.mxu0 %v7062
      %7080 = vmatprep.subr.bf16.mxu0 0
      %7081 = vmatpush1.bf16.msra.mxu0 %v7063
      %7082 = vmatprep.subr.bf16.mxu0 0
      %7083 = vmatpush1.bf16.msra.mxu0 %v7064
      %7084 = vmatprep.subr.bf16.mxu0 0
      %7085 = vmatpush1.bf16.msra.mxu0 %v7065
      %7086 = vmatprep.subr.bf16.mxu0 0
      %7087 = vmatpush1.bf16.msra.mxu0 %v7066
      %7088 = vmatprep.subr.bf16.mxu0 0
      %7089 = vmatpush1.bf16.msra.mxu0 %v7067
      %7090 = vmatprep.subr.bf16.mxu0 0
      %7091 = vmatpush1.bf16.msra.mxu0 %v7068
      %7092 = vmatprep.subr.bf16.mxu0 0
      %7093 = vmatpush1.bf16.msra.mxu0 %v7069
      %7094 = vmatprep.subr.bf16.mxu0 0
      %7095 = vmatpush1.bf16.msra.mxu0 0
      %7096 = vmatprep.subr.bf16.mxu0 0
      %7097 = vmatpush1.bf16.msra.mxu0 0
      %7098 = vmatprep.subr.bf16.mxu0 0
      %7099 = vmatpush1.bf16.msra.mxu0 0
      %7100 = vmatprep.subr.bf16.mxu0 0
      %7101 = vmatpush1.bf16.msra.mxu0 0
      %7102 = vmatprep.subr.bf16.mxu0 0
      %7103 = vmatpush1.bf16.msra.mxu0 0
      %7104 = vmatprep.subr.bf16.mxu0 0
      %7105 = vmatpush1.bf16.msra.mxu0 0
      %7106 = vmatprep.subr.bf16.mxu0 0
      %7107 = vmatpush1.bf16.msra.mxu0 0
      %7108 = vmatprep.subr.bf16.mxu0 0
      %7109 = vmatpush1.bf16.msra.mxu0 0
      %7110 = vmatprep.mubr.bf16.mxu0 0
      %7111 = vmatmul.mubr.bf16.gmra.mrb[0].mxu0 %v5937
      %v7112 = vpop.f32.mrb[0].mxu0
      %v7113 = vadd.f32 0.0, %v7112
      %v7114 = vpop.f32.mrb[0].mxu0
      %v7115 = vpop.f32.mrb[0].mxu0
      %v7116 = vadd.f32 0.0, %v7115
      %v7117 = vpop.f32.mrb[0].mxu0
      %7118 = vmatprep.mubr.bf16.mxu0 0
      %7119 = vmatmul.mubr.bf16.gmra.mrb[0].mxu0 %v5938
      %v7120 = vpop.f32.mrb[0].mxu0
      %v7121 = vadd.f32 0.0, %v7120
      %v7122 = vpop.f32.mrb[0].mxu0
      %v7123 = vpop.f32.mrb[0].mxu0
      %v7124 = vadd.f32 0.0, %v7123
      %v7125 = vpop.f32.mrb[0].mxu0
      %7126 = vmatprep.mubr.bf16.mxu0 0
      %7127 = vmatmul.mubr.bf16.gmra.mrb[0].mxu0 %v5939
      %v7128 = vpop.f32.mrb[0].mxu0
      %v7129 = vadd.f32 0.0, %v7128
      %v7130 = vpop.f32.mrb[0].mxu0
      %v7131 = vpop.f32.mrb[0].mxu0
      %v7132 = vadd.f32 0.0, %v7131
      %v7133 = vpop.f32.mrb[0].mxu0
      %7134 = vmatprep.mubr.bf16.mxu0 0
      %7135 = vmatmul.mubr.bf16.gmra.mrb[0].mxu0 %v5940
      %v7136 = vpop.f32.mrb[0].mxu0
      %v7137 = vadd.f32 0.0, %v7136
      %v7138 = vpop.f32.mrb[0].mxu0
      %v7139 = vpop.f32.mrb[0].mxu0
      %v7140 = vadd.f32 0.0, %v7139
      %v7141 = vpop.f32.mrb[0].mxu0
      %7142 = vmatprep.mubr.bf16.mxu0 0
      %7143 = vmatmul.mubr.bf16.gmra.mrb[0].mxu0 %v5941
      %v7144 = vpop.f32.mrb[0].mxu0
      %v7145 = vadd.f32 0.0, %v7144
      %v7146 = vpop.f32.mrb[0].mxu0
      %v7147 = vpop.f32.mrb[0].mxu0
      %v7148 = vadd.f32 0.0, %v7147
      %v7149 = vpop.f32.mrb[0].mxu0
      %7150 = vdwg.mxu0
      %v7151 = vadd.f32 %v6975, %v7113
      %v7152 = vadd.f32 %v6978, %v7116
      %v7153 = vadd.f32 %v6983, %v7121
      %v7154 = vadd.f32 %v6986, %v7124
      %v7155 = vadd.f32 %v6991, %v7129
      %v7156 = vadd.f32 %v6994, %v7132
      %v7157 = vadd.f32 %v6999, %v7137
      %v7158 = vadd.f32 %v7002, %v7140
      %v7159 = vadd.f32 %v7007, %v7145
      %v7160 = vadd.f32 %v7010, %v7148
      %s7161 = scalar_lea.vmem %s3, 512
      %v7162 = vld [vmem:[%s7161] sm:$0xf]
      %v7163 = vld [vmem:[%s7161 + $0x4] sm:$0xf]
      %v7164 = vld [vmem:[%s7161 + $0x8] sm:$0xf]
      %v7165 = vld [vmem:[%s7161 + $0xc] sm:$0xf]
      %v7166 = vld [vmem:[%s7161 + $0x10] sm:$0xf]
      %v7167 = vld [vmem:[%s7161 + $0x14] sm:$0xf]
      %v7168 = vld [vmem:[%s7161 + $0x18] sm:$0xf]
      %v7169 = vld [vmem:[%s7161 + $0x1c] sm:$0xf]
      %v7170 = vld [vmem:[%s7161 + $0x20] sm:$0xf]
      %v7171 = vld [vmem:[%s7161 + $0x24] sm:$0xf]
      %v7172 = vld [vmem:[%s7161 + $0x28] sm:$0xf]
      %v7173 = vld [vmem:[%s7161 + $0x2c] sm:$0xf]
      %v7174 = vld [vmem:[%s7161 + $0x30] sm:$0xf]
      %v7175 = vld [vmem:[%s7161 + $0x34] sm:$0xf]
      %v7176 = vld [vmem:[%s7161 + $0x38] sm:$0xf]
      %v7177 = vld [vmem:[%s7161 + $0x3c] sm:$0xf]
      %v7194 = vunpack.c.l.b16 %v7162
      %v7195 = vunpack.c.l.b16 %v7163
      %v7196 = vunpack.c.l.b16 %v7164
      %v7197 = vunpack.c.l.b16 %v7165
      %v7198 = vunpack.c.l.b16 %v7166
      %v7199 = vunpack.c.l.b16 %v7167
      %v7200 = vunpack.c.l.b16 %v7168
      %v7201 = vunpack.c.l.b16 %v7169
      %v7202 = vunpack.c.l.b16 %v7170
      %v7203 = vunpack.c.l.b16 %v7171
      %v7204 = vunpack.c.l.b16 %v7172
      %v7205 = vunpack.c.l.b16 %v7173
      %v7206 = vunpack.c.l.b16 %v7174
      %v7207 = vunpack.c.l.b16 %v7175
      %v7208 = vunpack.c.l.b16 %v7176
      %v7209 = vunpack.c.l.b16 %v7177
      %v7210 = vpack.c.b16 %v7195, %v7194
      %v7211 = vpack.c.b16 %v7197, %v7196
      %v7212 = vpack.c.b16 %v7199, %v7198
      %v7213 = vpack.c.b16 %v7201, %v7200
      %v7214 = vpack.c.b16 %v7203, %v7202
      %v7215 = vpack.c.b16 %v7205, %v7204
      %v7216 = vpack.c.b16 %v7207, %v7206
      %v7217 = vpack.c.b16 %v7209, %v7208
      %7226 = vmatprep.subr.bf16.mxu0 0
      %7227 = vmatpush1.bf16.msra.mxu0 %v7210
      %7228 = vmatprep.subr.bf16.mxu0 0
      %7229 = vmatpush1.bf16.msra.mxu0 %v7211
      %7230 = vmatprep.subr.bf16.mxu0 0
      %7231 = vmatpush1.bf16.msra.mxu0 %v7212
      %7232 = vmatprep.subr.bf16.mxu0 0
      %7233 = vmatpush1.bf16.msra.mxu0 %v7213
      %7234 = vmatprep.subr.bf16.mxu0 0
      %7235 = vmatpush1.bf16.msra.mxu0 %v7214
      %7236 = vmatprep.subr.bf16.mxu0 0
      %7237 = vmatpush1.bf16.msra.mxu0 %v7215
      %7238 = vmatprep.subr.bf16.mxu0 0
      %7239 = vmatpush1.bf16.msra.mxu0 %v7216
      %7240 = vmatprep.subr.bf16.mxu0 0
      %7241 = vmatpush1.bf16.msra.mxu0 %v7217
      %7242 = vmatprep.subr.bf16.mxu0 0
      %7243 = vmatpush1.bf16.msra.mxu0 0
      %7244 = vmatprep.subr.bf16.mxu0 0
      %7245 = vmatpush1.bf16.msra.mxu0 0
      %7246 = vmatprep.subr.bf16.mxu0 0
      %7247 = vmatpush1.bf16.msra.mxu0 0
      %7248 = vmatprep.subr.bf16.mxu0 0
      %7249 = vmatpush1.bf16.msra.mxu0 0
      %7250 = vmatprep.subr.bf16.mxu0 0
      %7251 = vmatpush1.bf16.msra.mxu0 0
      %7252 = vmatprep.subr.bf16.mxu0 0
      %7253 = vmatpush1.bf16.msra.mxu0 0
      %7254 = vmatprep.subr.bf16.mxu0 0
      %7255 = vmatpush1.bf16.msra.mxu0 0
      %7256 = vmatprep.subr.bf16.mxu0 0
      %7257 = vmatpush1.bf16.msra.mxu0 0
      %7258 = vmatprep.mubr.bf16.mxu0 0
      %7259 = vmatmul.mubr.bf16.gmra.mrb[0].mxu0 %v5986
      %v7260 = vpop.f32.mrb[0].mxu0
      %v7261 = vadd.f32 0.0, %v7260
      %v7262 = vpop.f32.mrb[0].mxu0
      %v7263 = vpop.f32.mrb[0].mxu0
      %v7264 = vadd.f32 0.0, %v7263
      %v7265 = vpop.f32.mrb[0].mxu0
      %7266 = vmatprep.mubr.bf16.mxu0 0
      %7267 = vmatmul.mubr.bf16.gmra.mrb[0].mxu0 %v5987
      %v7268 = vpop.f32.mrb[0].mxu0
      %v7269 = vadd.f32 0.0, %v7268
      %v7270 = vpop.f32.mrb[0].mxu0
      %v7271 = vpop.f32.mrb[0].mxu0
      %v7272 = vadd.f32 0.0, %v7271
      %v7273 = vpop.f32.mrb[0].mxu0
      %7274 = vmatprep.mubr.bf16.mxu0 0
      %7275 = vmatmul.mubr.bf16.gmra.mrb[0].mxu0 %v5988
      %v7276 = vpop.f32.mrb[0].mxu0
      %v7277 = vadd.f32 0.0, %v7276
      %v7278 = vpop.f32.mrb[0].mxu0
      %v7279 = vpop.f32.mrb[0].mxu0
      %v7280 = vadd.f32 0.0, %v7279
      %v7281 = vpop.f32.mrb[0].mxu0
      %7282 = vmatprep.mubr.bf16.mxu0 0
      %7283 = vmatmul.mubr.bf16.gmra.mrb[0].mxu0 %v5989
      %v7284 = vpop.f32.mrb[0].mxu0
      %v7285 = vadd.f32 0.0, %v7284
      %v7286 = vpop.f32.mrb[0].mxu0
      %v7287 = vpop.f32.mrb[0].mxu0
      %v7288 = vadd.f32 0.0, %v7287
      %v7289 = vpop.f32.mrb[0].mxu0
      %7290 = vmatprep.mubr.bf16.mxu0 0
      %7291 = vmatmul.mubr.bf16.gmra.mrb[0].mxu0 %v5990
      %v7292 = vpop.f32.mrb[0].mxu0
      %v7293 = vadd.f32 0.0, %v7292
      %v7294 = vpop.f32.mrb[0].mxu0
      %v7295 = vpop.f32.mrb[0].mxu0
      %v7296 = vadd.f32 0.0, %v7295
      %v7297 = vpop.f32.mrb[0].mxu0
      %7298 = vdwg.mxu0
      %v7299 = vadd.f32 %v7151, %v7261
      %v7300 = vadd.f32 %v7152, %v7264
      %v7301 = vadd.f32 %v7153, %v7269
      %v7302 = vadd.f32 %v7154, %v7272
      %v7303 = vadd.f32 %v7155, %v7277
      %v7304 = vadd.f32 %v7156, %v7280
      %v7305 = vadd.f32 %v7157, %v7285
      %v7306 = vadd.f32 %v7158, %v7288
      %v7307 = vadd.f32 %v7159, %v7293
      %v7308 = vadd.f32 %v7160, %v7296
      %s7309 = scalar_lea.vmem %s3, 576
      %v7310 = vld [vmem:[%s7309] sm:$0xf]
      %v7311 = vld [vmem:[%s7309 + $0x4] sm:$0xf]
      %v7312 = vld [vmem:[%s7309 + $0x8] sm:$0xf]
      %v7313 = vld [vmem:[%s7309 + $0xc] sm:$0xf]
      %v7314 = vld [vmem:[%s7309 + $0x10] sm:$0xf]
      %v7315 = vld [vmem:[%s7309 + $0x14] sm:$0xf]
      %v7316 = vld [vmem:[%s7309 + $0x18] sm:$0xf]
      %v7317 = vld [vmem:[%s7309 + $0x1c] sm:$0xf]
      %v7318 = vld [vmem:[%s7309 + $0x20] sm:$0xf]
      %v7319 = vld [vmem:[%s7309 + $0x24] sm:$0xf]
      %v7320 = vld [vmem:[%s7309 + $0x28] sm:$0xf]
      %v7321 = vld [vmem:[%s7309 + $0x2c] sm:$0xf]
      %v7322 = vld [vmem:[%s7309 + $0x30] sm:$0xf]
      %v7323 = vld [vmem:[%s7309 + $0x34] sm:$0xf]
      %v7324 = vld [vmem:[%s7309 + $0x38] sm:$0xf]
      %v7325 = vld [vmem:[%s7309 + $0x3c] sm:$0xf]
      %v7342 = vunpack.c.l.b16 %v7310
      %v7343 = vunpack.c.l.b16 %v7311
      %v7344 = vunpack.c.l.b16 %v7312
      %v7345 = vunpack.c.l.b16 %v7313
      %v7346 = vunpack.c.l.b16 %v7314
      %v7347 = vunpack.c.l.b16 %v7315
      %v7348 = vunpack.c.l.b16 %v7316
      %v7349 = vunpack.c.l.b16 %v7317
      %v7350 = vunpack.c.l.b16 %v7318
      %v7351 = vunpack.c.l.b16 %v7319
      %v7352 = vunpack.c.l.b16 %v7320
      %v7353 = vunpack.c.l.b16 %v7321
      %v7354 = vunpack.c.l.b16 %v7322
      %v7355 = vunpack.c.l.b16 %v7323
      %v7356 = vunpack.c.l.b16 %v7324
      %v7357 = vunpack.c.l.b16 %v7325
      %v7358 = vpack.c.b16 %v7343, %v7342
      %v7359 = vpack.c.b16 %v7345, %v7344
      %v7360 = vpack.c.b16 %v7347, %v7346
      %v7361 = vpack.c.b16 %v7349, %v7348
      %v7362 = vpack.c.b16 %v7351, %v7350
      %v7363 = vpack.c.b16 %v7353, %v7352
      %v7364 = vpack.c.b16 %v7355, %v7354
      %v7365 = vpack.c.b16 %v7357, %v7356
      %7374 = vmatprep.subr.bf16.mxu0 0
      %7375 = vmatpush1.bf16.msra.mxu0 %v7358
      %7376 = vmatprep.subr.bf16.mxu0 0
      %7377 = vmatpush1.bf16.msra.mxu0 %v7359
      %7378 = vmatprep.subr.bf16.mxu0 0
      %7379 = vmatpush1.bf16.msra.mxu0 %v7360
      %7380 = vmatprep.subr.bf16.mxu0 0
      %7381 = vmatpush1.bf16.msra.mxu0 %v7361
      %7382 = vmatprep.subr.bf16.mxu0 0
      %7383 = vmatpush1.bf16.msra.mxu0 %v7362
      %7384 = vmatprep.subr.bf16.mxu0 0
      %7385 = vmatpush1.bf16.msra.mxu0 %v7363
      %7386 = vmatprep.subr.bf16.mxu0 0
      %7387 = vmatpush1.bf16.msra.mxu0 %v7364
      %7388 = vmatprep.subr.bf16.mxu0 0
      %7389 = vmatpush1.bf16.msra.mxu0 %v7365
      %7390 = vmatprep.subr.bf16.mxu0 0
      %7391 = vmatpush1.bf16.msra.mxu0 0
      %7392 = vmatprep.subr.bf16.mxu0 0
      %7393 = vmatpush1.bf16.msra.mxu0 0
      %7394 = vmatprep.subr.bf16.mxu0 0
      %7395 = vmatpush1.bf16.msra.mxu0 0
      %7396 = vmatprep.subr.bf16.mxu0 0
      %7397 = vmatpush1.bf16.msra.mxu0 0
      %7398 = vmatprep.subr.bf16.mxu0 0
      %7399 = vmatpush1.bf16.msra.mxu0 0
      %7400 = vmatprep.subr.bf16.mxu0 0
      %7401 = vmatpush1.bf16.msra.mxu0 0
      %7402 = vmatprep.subr.bf16.mxu0 0
      %7403 = vmatpush1.bf16.msra.mxu0 0
      %7404 = vmatprep.subr.bf16.mxu0 0
      %7405 = vmatpush1.bf16.msra.mxu0 0
      %7406 = vmatprep.mubr.bf16.mxu0 0
      %7407 = vmatmul.mubr.bf16.gmra.mrb[0].mxu0 %v5938
      %v7408 = vpop.f32.mrb[0].mxu0
      %v7409 = vadd.f32 0.0, %v7408
      %v7410 = vpop.f32.mrb[0].mxu0
      %v7411 = vpop.f32.mrb[0].mxu0
      %v7412 = vadd.f32 0.0, %v7411
      %v7413 = vpop.f32.mrb[0].mxu0
      %7414 = vmatprep.mubr.bf16.mxu0 0
      %7415 = vmatmul.mubr.bf16.gmra.mrb[0].mxu0 %v5939
      %v7416 = vpop.f32.mrb[0].mxu0
      %v7417 = vadd.f32 0.0, %v7416
      %v7418 = vpop.f32.mrb[0].mxu0
      %v7419 = vpop.f32.mrb[0].mxu0
      %v7420 = vadd.f32 0.0, %v7419
      %v7421 = vpop.f32.mrb[0].mxu0
      %7422 = vmatprep.mubr.bf16.mxu0 0
      %7423 = vmatmul.mubr.bf16.gmra.mrb[0].mxu0 %v5940
      %v7424 = vpop.f32.mrb[0].mxu0
      %v7425 = vadd.f32 0.0, %v7424
      %v7426 = vpop.f32.mrb[0].mxu0
      %v7427 = vpop.f32.mrb[0].mxu0
      %v7428 = vadd.f32 0.0, %v7427
      %v7429 = vpop.f32.mrb[0].mxu0
      %7430 = vmatprep.mubr.bf16.mxu0 0
      %7431 = vmatmul.mubr.bf16.gmra.mrb[0].mxu0 %v5941
      %v7432 = vpop.f32.mrb[0].mxu0
      %v7433 = vadd.f32 0.0, %v7432
      %v7434 = vpop.f32.mrb[0].mxu0
      %v7435 = vpop.f32.mrb[0].mxu0
      %v7436 = vadd.f32 0.0, %v7435
      %v7437 = vpop.f32.mrb[0].mxu0
      %7438 = vmatprep.mubr.bf16.mxu0 0
      %7439 = vmatmul.mubr.bf16.gmra.mrb[0].mxu0 %v5942
      %v7440 = vpop.f32.mrb[0].mxu0
      %v7441 = vadd.f32 0.0, %v7440
      %v7442 = vpop.f32.mrb[0].mxu0
      %v7443 = vpop.f32.mrb[0].mxu0
      %v7444 = vadd.f32 0.0, %v7443
      %v7445 = vpop.f32.mrb[0].mxu0
      %7446 = vdwg.mxu0
      %v7447 = vadd.f32 %v7299, %v7409
      %v7448 = vadd.f32 %v7300, %v7412
      %v7449 = vadd.f32 %v7301, %v7417
      %v7450 = vadd.f32 %v7302, %v7420
      %v7451 = vadd.f32 %v7303, %v7425
      %v7452 = vadd.f32 %v7304, %v7428
      %v7453 = vadd.f32 %v7305, %v7433
      %v7454 = vadd.f32 %v7306, %v7436
      %v7455 = vadd.f32 %v7307, %v7441
      %v7456 = vadd.f32 %v7308, %v7444
      %v7457 = vadd.f32 %v7447, %v6715
      %v7458 = vadd.f32 %v7448, %v6715
      %v7459 = vadd.f32 %v7449, %v6715
      %v7460 = vadd.f32 %v7450, %v6715
      %v7461 = vadd.f32 %v7451, %v6715
      %v7462 = vadd.f32 %v7452, %v6715
      %v7463 = vadd.f32 %v7453, %v6715
      %v7464 = vadd.f32 %v7454, %v6715
      %v7465 = vadd.f32 %v7455, %v6715
      %v7466 = vadd.f32 %v7456, %v6715
      %v7467 = vmax.f32 %v7457, 0.0
      %v7468 = vmax.f32 %v7458, 0.0
      %v7469 = vmax.f32 %v7459, 0.0
      %v7470 = vmax.f32 %v7460, 0.0
      %v7471 = vmax.f32 %v7461, 0.0
      %v7472 = vmax.f32 %v7462, 0.0
      %v7473 = vmax.f32 %v7463, 0.0
      %v7474 = vmax.f32 %v7464, 0.0
      %v7475 = vmax.f32 %v7465, 0.0
      %v7476 = vmax.f32 %v7466, 0.0
      %7477 = vmatprep.subr.bf16.mxu0 0
      %7478 = vmatpush1.bf16.msra.mxu0 %v6057
      %7479 = vmatprep.subr.bf16.mxu0 0
      %7480 = vmatpush1.bf16.msra.mxu0 %v6058
      %7481 = vmatprep.subr.bf16.mxu0 0
      %7482 = vmatpush1.bf16.msra.mxu0 %v6059
      %7483 = vmatprep.subr.bf16.mxu0 0
      %7484 = vmatpush1.bf16.msra.mxu0 %v6060
      %7485 = vmatprep.subr.bf16.mxu0 0
      %7486 = vmatpush1.bf16.msra.mxu0 %v6061
      %7487 = vmatprep.subr.bf16.mxu0 0
      %7488 = vmatpush1.bf16.msra.mxu0 %v6062
      %7489 = vmatprep.subr.bf16.mxu0 0
      %7490 = vmatpush1.bf16.msra.mxu0 %v6063
      %7491 = vmatprep.subr.bf16.mxu0 0
      %7492 = vmatpush1.bf16.msra.mxu0 %v6064
      %7493 = vmatprep.subr.bf16.mxu0 0
      %7494 = vmatpush1.bf16.msra.mxu0 0
      %7495 = vmatprep.subr.bf16.mxu0 0
      %7496 = vmatpush1.bf16.msra.mxu0 0
      %7497 = vmatprep.subr.bf16.mxu0 0
      %7498 = vmatpush1.bf16.msra.mxu0 0
      %7499 = vmatprep.subr.bf16.mxu0 0
      %7500 = vmatpush1.bf16.msra.mxu0 0
      %7501 = vmatprep.subr.bf16.mxu0 0
      %7502 = vmatpush1.bf16.msra.mxu0 0
      %7503 = vmatprep.subr.bf16.mxu0 0
      %7504 = vmatpush1.bf16.msra.mxu0 0
      %7505 = vmatprep.subr.bf16.mxu0 0
      %7506 = vmatpush1.bf16.msra.mxu0 0
      %7507 = vmatprep.subr.bf16.mxu0 0
      %7508 = vmatpush1.bf16.msra.mxu0 0
      %7509 = vmatprep.mubr.bf16.mxu0 0
      %7510 = vmatmul.mubr.bf16.gmra.mrb[0].mxu0 %v5937
      %v7511 = vpop.f32.mrb[0].mxu0
      %v7512 = vadd.f32 0.0, %v7511
      %v7513 = vpop.f32.mrb[0].mxu0
      %v7514 = vpop.f32.mrb[0].mxu0
      %v7515 = vadd.f32 0.0, %v7514
      %v7516 = vpop.f32.mrb[0].mxu0
      %7517 = vmatprep.mubr.bf16.mxu0 0
      %7518 = vmatmul.mubr.bf16.gmra.mrb[0].mxu0 %v5938
      %v7519 = vpop.f32.mrb[0].mxu0
      %v7520 = vadd.f32 0.0, %v7519
      %v7521 = vpop.f32.mrb[0].mxu0
      %v7522 = vpop.f32.mrb[0].mxu0
      %v7523 = vadd.f32 0.0, %v7522
      %v7524 = vpop.f32.mrb[0].mxu0
      %7525 = vmatprep.mubr.bf16.mxu0 0
      %7526 = vmatmul.mubr.bf16.gmra.mrb[0].mxu0 %v5939
      %v7527 = vpop.f32.mrb[0].mxu0
      %v7528 = vadd.f32 0.0, %v7527
      %v7529 = vpop.f32.mrb[0].mxu0
      %v7530 = vpop.f32.mrb[0].mxu0
      %v7531 = vadd.f32 0.0, %v7530
      %v7532 = vpop.f32.mrb[0].mxu0
      %7533 = vmatprep.mubr.bf16.mxu0 0
      %7534 = vmatmul.mubr.bf16.gmra.mrb[0].mxu0 %v5940
      %v7535 = vpop.f32.mrb[0].mxu0
      %v7536 = vadd.f32 0.0, %v7535
      %v7537 = vpop.f32.mrb[0].mxu0
      %v7538 = vpop.f32.mrb[0].mxu0
      %v7539 = vadd.f32 0.0, %v7538
      %v7540 = vpop.f32.mrb[0].mxu0
      %7541 = vmatprep.mubr.bf16.mxu0 0
      %7542 = vmatmul.mubr.bf16.gmra.mrb[0].mxu0 %v5941
      %v7543 = vpop.f32.mrb[0].mxu0
      %v7544 = vadd.f32 0.0, %v7543
      %v7545 = vpop.f32.mrb[0].mxu0
      %v7546 = vpop.f32.mrb[0].mxu0
      %v7547 = vadd.f32 0.0, %v7546
      %v7548 = vpop.f32.mrb[0].mxu0
      %7549 = vdwg.mxu0
      %7550 = vmatprep.subr.bf16.mxu0 0
      %7551 = vmatpush1.bf16.msra.mxu0 %v6178
      %7552 = vmatprep.subr.bf16.mxu0 0
      %7553 = vmatpush1.bf16.msra.mxu0 %v6179
      %7554 = vmatprep.subr.bf16.mxu0 0
      %7555 = vmatpush1.bf16.msra.mxu0 %v6180
      %7556 = vmatprep.subr.bf16.mxu0 0
      %7557 = vmatpush1.bf16.msra.mxu0 %v6181
      %7558 = vmatprep.subr.bf16.mxu0 0
      %7559 = vmatpush1.bf16.msra.mxu0 %v6182
      %7560 = vmatprep.subr.bf16.mxu0 0
      %7561 = vmatpush1.bf16.msra.mxu0 %v6183
      %7562 = vmatprep.subr.bf16.mxu0 0
      %7563 = vmatpush1.bf16.msra.mxu0 %v6184
      %7564 = vmatprep.subr.bf16.mxu0 0
      %7565 = vmatpush1.bf16.msra.mxu0 %v6185
      %7566 = vmatprep.subr.bf16.mxu0 0
      %7567 = vmatpush1.bf16.msra.mxu0 0
      %7568 = vmatprep.subr.bf16.mxu0 0
      %7569 = vmatpush1.bf16.msra.mxu0 0
      %7570 = vmatprep.subr.bf16.mxu0 0
      %7571 = vmatpush1.bf16.msra.mxu0 0
      %7572 = vmatprep.subr.bf16.mxu0 0
      %7573 = vmatpush1.bf16.msra.mxu0 0
      %7574 = vmatprep.subr.bf16.mxu0 0
      %7575 = vmatpush1.bf16.msra.mxu0 0
      %7576 = vmatprep.subr.bf16.mxu0 0
      %7577 = vmatpush1.bf16.msra.mxu0 0
      %7578 = vmatprep.subr.bf16.mxu0 0
      %7579 = vmatpush1.bf16.msra.mxu0 0
      %7580 = vmatprep.subr.bf16.mxu0 0
      %7581 = vmatpush1.bf16.msra.mxu0 0
      %7582 = vmatprep.mubr.bf16.mxu0 0
      %7583 = vmatmul.mubr.bf16.gmra.mrb[0].mxu0 %v5985
      %v7584 = vpop.f32.mrb[0].mxu0
      %v7585 = vadd.f32 %v7512, %v7584
      %v7586 = vpop.f32.mrb[0].mxu0
      %v7587 = vpop.f32.mrb[0].mxu0
      %v7588 = vadd.f32 %v7515, %v7587
      %v7589 = vpop.f32.mrb[0].mxu0
      %7590 = vmatprep.mubr.bf16.mxu0 0
      %7591 = vmatmul.mubr.bf16.gmra.mrb[0].mxu0 %v5986
      %v7592 = vpop.f32.mrb[0].mxu0
      %v7593 = vadd.f32 %v7520, %v7592
      %v7594 = vpop.f32.mrb[0].mxu0
      %v7595 = vpop.f32.mrb[0].mxu0
      %v7596 = vadd.f32 %v7523, %v7595
      %v7597 = vpop.f32.mrb[0].mxu0
      %7598 = vmatprep.mubr.bf16.mxu0 0
      %7599 = vmatmul.mubr.bf16.gmra.mrb[0].mxu0 %v5987
      %v7600 = vpop.f32.mrb[0].mxu0
      %v7601 = vadd.f32 %v7528, %v7600
      %v7602 = vpop.f32.mrb[0].mxu0
      %v7603 = vpop.f32.mrb[0].mxu0
      %v7604 = vadd.f32 %v7531, %v7603
      %v7605 = vpop.f32.mrb[0].mxu0
      %7606 = vmatprep.mubr.bf16.mxu0 0
      %7607 = vmatmul.mubr.bf16.gmra.mrb[0].mxu0 %v5988
      %v7608 = vpop.f32.mrb[0].mxu0
      %v7609 = vadd.f32 %v7536, %v7608
      %v7610 = vpop.f32.mrb[0].mxu0
      %v7611 = vpop.f32.mrb[0].mxu0
      %v7612 = vadd.f32 %v7539, %v7611
      %v7613 = vpop.f32.mrb[0].mxu0
      %7614 = vmatprep.mubr.bf16.mxu0 0
      %7615 = vmatmul.mubr.bf16.gmra.mrb[0].mxu0 %v5989
      %v7616 = vpop.f32.mrb[0].mxu0
      %v7617 = vadd.f32 %v7544, %v7616
      %v7618 = vpop.f32.mrb[0].mxu0
      %v7619 = vpop.f32.mrb[0].mxu0
      %v7620 = vadd.f32 %v7547, %v7619
      %v7621 = vpop.f32.mrb[0].mxu0
      %7622 = vdwg.mxu0
      %7623 = vmatprep.subr.bf16.mxu0 0
      %7624 = vmatpush1.bf16.msra.mxu0 %v6316
      %7625 = vmatprep.subr.bf16.mxu0 0
      %7626 = vmatpush1.bf16.msra.mxu0 %v6317
      %7627 = vmatprep.subr.bf16.mxu0 0
      %7628 = vmatpush1.bf16.msra.mxu0 %v6318
      %7629 = vmatprep.subr.bf16.mxu0 0
      %7630 = vmatpush1.bf16.msra.mxu0 %v6319
      %7631 = vmatprep.subr.bf16.mxu0 0
      %7632 = vmatpush1.bf16.msra.mxu0 %v6320
      %7633 = vmatprep.subr.bf16.mxu0 0
      %7634 = vmatpush1.bf16.msra.mxu0 %v6321
      %7635 = vmatprep.subr.bf16.mxu0 0
      %7636 = vmatpush1.bf16.msra.mxu0 %v6322
      %7637 = vmatprep.subr.bf16.mxu0 0
      %7638 = vmatpush1.bf16.msra.mxu0 %v6323
      %7639 = vmatprep.subr.bf16.mxu0 0
      %7640 = vmatpush1.bf16.msra.mxu0 0
      %7641 = vmatprep.subr.bf16.mxu0 0
      %7642 = vmatpush1.bf16.msra.mxu0 0
      %7643 = vmatprep.subr.bf16.mxu0 0
      %7644 = vmatpush1.bf16.msra.mxu0 0
      %7645 = vmatprep.subr.bf16.mxu0 0
      %7646 = vmatpush1.bf16.msra.mxu0 0
      %7647 = vmatprep.subr.bf16.mxu0 0
      %7648 = vmatpush1.bf16.msra.mxu0 0
      %7649 = vmatprep.subr.bf16.mxu0 0
      %7650 = vmatpush1.bf16.msra.mxu0 0
      %7651 = vmatprep.subr.bf16.mxu0 0
      %7652 = vmatpush1.bf16.msra.mxu0 0
      %7653 = vmatprep.subr.bf16.mxu0 0
      %7654 = vmatpush1.bf16.msra.mxu0 0
      %7655 = vmatprep.mubr.bf16.mxu0 0
      %7656 = vmatmul.mubr.bf16.gmra.mrb[0].mxu0 %v5986
      %v7657 = vpop.f32.mrb[0].mxu0
      %v7658 = vadd.f32 0.0, %v7657
      %v7659 = vpop.f32.mrb[0].mxu0
      %v7660 = vpop.f32.mrb[0].mxu0
      %v7661 = vadd.f32 0.0, %v7660
      %v7662 = vpop.f32.mrb[0].mxu0
      %7663 = vmatprep.mubr.bf16.mxu0 0
      %7664 = vmatmul.mubr.bf16.gmra.mrb[0].mxu0 %v5987
      %v7665 = vpop.f32.mrb[0].mxu0
      %v7666 = vadd.f32 0.0, %v7665
      %v7667 = vpop.f32.mrb[0].mxu0
      %v7668 = vpop.f32.mrb[0].mxu0
      %v7669 = vadd.f32 0.0, %v7668
      %v7670 = vpop.f32.mrb[0].mxu0
      %7671 = vmatprep.mubr.bf16.mxu0 0
      %7672 = vmatmul.mubr.bf16.gmra.mrb[0].mxu0 %v5988
      %v7673 = vpop.f32.mrb[0].mxu0
      %v7674 = vadd.f32 0.0, %v7673
      %v7675 = vpop.f32.mrb[0].mxu0
      %v7676 = vpop.f32.mrb[0].mxu0
      %v7677 = vadd.f32 0.0, %v7676
      %v7678 = vpop.f32.mrb[0].mxu0
      %7679 = vmatprep.mubr.bf16.mxu0 0
      %7680 = vmatmul.mubr.bf16.gmra.mrb[0].mxu0 %v5989
      %v7681 = vpop.f32.mrb[0].mxu0
      %v7682 = vadd.f32 0.0, %v7681
      %v7683 = vpop.f32.mrb[0].mxu0
      %v7684 = vpop.f32.mrb[0].mxu0
      %v7685 = vadd.f32 0.0, %v7684
      %v7686 = vpop.f32.mrb[0].mxu0
      %7687 = vmatprep.mubr.bf16.mxu0 0
      %7688 = vmatmul.mubr.bf16.gmra.mrb[0].mxu0 %v5990
      %v7689 = vpop.f32.mrb[0].mxu0
      %v7690 = vadd.f32 0.0, %v7689
      %v7691 = vpop.f32.mrb[0].mxu0
      %v7692 = vpop.f32.mrb[0].mxu0
      %v7693 = vadd.f32 0.0, %v7692
      %v7694 = vpop.f32.mrb[0].mxu0
      %7695 = vdwg.mxu0
      %v7696 = vadd.f32 %v7585, %v7658
      %v7697 = vadd.f32 %v7588, %v7661
      %v7698 = vadd.f32 %v7593, %v7666
      %v7699 = vadd.f32 %v7596, %v7669
      %v7700 = vadd.f32 %v7601, %v7674
      %v7701 = vadd.f32 %v7604, %v7677
      %v7702 = vadd.f32 %v7609, %v7682
      %v7703 = vadd.f32 %v7612, %v7685
      %v7704 = vadd.f32 %v7617, %v7690
      %v7705 = vadd.f32 %v7620, %v7693
      %7706 = vmatprep.subr.bf16.mxu0 0
      %7707 = vmatpush1.bf16.msra.mxu0 %v6464
      %7708 = vmatprep.subr.bf16.mxu0 0
      %7709 = vmatpush1.bf16.msra.mxu0 %v6465
      %7710 = vmatprep.subr.bf16.mxu0 0
      %7711 = vmatpush1.bf16.msra.mxu0 %v6466
      %7712 = vmatprep.subr.bf16.mxu0 0
      %7713 = vmatpush1.bf16.msra.mxu0 %v6467
      %7714 = vmatprep.subr.bf16.mxu0 0
      %7715 = vmatpush1.bf16.msra.mxu0 %v6468
      %7716 = vmatprep.subr.bf16.mxu0 0
      %7717 = vmatpush1.bf16.msra.mxu0 %v6469
      %7718 = vmatprep.subr.bf16.mxu0 0
      %7719 = vmatpush1.bf16.msra.mxu0 %v6470
      %7720 = vmatprep.subr.bf16.mxu0 0
      %7721 = vmatpush1.bf16.msra.mxu0 %v6471
      %7722 = vmatprep.subr.bf16.mxu0 0
      %7723 = vmatpush1.bf16.msra.mxu0 0
      %7724 = vmatprep.subr.bf16.mxu0 0
      %7725 = vmatpush1.bf16.msra.mxu0 0
      %7726 = vmatprep.subr.bf16.mxu0 0
      %7727 = vmatpush1.bf16.msra.mxu0 0
      %7728 = vmatprep.subr.bf16.mxu0 0
      %7729 = vmatpush1.bf16.msra.mxu0 0
      %7730 = vmatprep.subr.bf16.mxu0 0
      %7731 = vmatpush1.bf16.msra.mxu0 0
      %7732 = vmatprep.subr.bf16.mxu0 0
      %7733 = vmatpush1.bf16.msra.mxu0 0
      %7734 = vmatprep.subr.bf16.mxu0 0
      %7735 = vmatpush1.bf16.msra.mxu0 0
      %7736 = vmatprep.subr.bf16.mxu0 0
      %7737 = vmatpush1.bf16.msra.mxu0 0
      %7738 = vmatprep.mubr.bf16.mxu0 0
      %7739 = vmatmul.mubr.bf16.gmra.mrb[0].mxu0 %v5938
      %v7740 = vpop.f32.mrb[0].mxu0
      %v7741 = vadd.f32 0.0, %v7740
      %v7742 = vpop.f32.mrb[0].mxu0
      %v7743 = vpop.f32.mrb[0].mxu0
      %v7744 = vadd.f32 0.0, %v7743
      %v7745 = vpop.f32.mrb[0].mxu0
      %7746 = vmatprep.mubr.bf16.mxu0 0
      %7747 = vmatmul.mubr.bf16.gmra.mrb[0].mxu0 %v5939
      %v7748 = vpop.f32.mrb[0].mxu0
      %v7749 = vadd.f32 0.0, %v7748
      %v7750 = vpop.f32.mrb[0].mxu0
      %v7751 = vpop.f32.mrb[0].mxu0
      %v7752 = vadd.f32 0.0, %v7751
      %v7753 = vpop.f32.mrb[0].mxu0
      %7754 = vmatprep.mubr.bf16.mxu0 0
      %7755 = vmatmul.mubr.bf16.gmra.mrb[0].mxu0 %v5940
      %v7756 = vpop.f32.mrb[0].mxu0
      %v7757 = vadd.f32 0.0, %v7756
      %v7758 = vpop.f32.mrb[0].mxu0
      %v7759 = vpop.f32.mrb[0].mxu0
      %v7760 = vadd.f32 0.0, %v7759
      %v7761 = vpop.f32.mrb[0].mxu0
      %7762 = vmatprep.mubr.bf16.mxu0 0
      %7763 = vmatmul.mubr.bf16.gmra.mrb[0].mxu0 %v5941
      %v7764 = vpop.f32.mrb[0].mxu0
      %v7765 = vadd.f32 0.0, %v7764
      %v7766 = vpop.f32.mrb[0].mxu0
      %v7767 = vpop.f32.mrb[0].mxu0
      %v7768 = vadd.f32 0.0, %v7767
      %v7769 = vpop.f32.mrb[0].mxu0
      %7770 = vmatprep.mubr.bf16.mxu0 0
      %7771 = vmatmul.mubr.bf16.gmra.mrb[0].mxu0 %v5942
      %v7772 = vpop.f32.mrb[0].mxu0
      %v7773 = vadd.f32 0.0, %v7772
      %v7774 = vpop.f32.mrb[0].mxu0
      %v7775 = vpop.f32.mrb[0].mxu0
      %v7776 = vadd.f32 0.0, %v7775
      %v7777 = vpop.f32.mrb[0].mxu0
      %7778 = vdwg.mxu0
      %v7779 = vadd.f32 %v7696, %v7741
      %v7780 = vadd.f32 %v7697, %v7744
      %v7781 = vadd.f32 %v7698, %v7749
      %v7782 = vadd.f32 %v7699, %v7752
      %v7783 = vadd.f32 %v7700, %v7757
      %v7784 = vadd.f32 %v7701, %v7760
      %v7785 = vadd.f32 %v7702, %v7765
      %v7786 = vadd.f32 %v7703, %v7768
      %v7787 = vadd.f32 %v7704, %v7773
      %v7788 = vadd.f32 %v7705, %v7776
      %7789 = vmatprep.subr.bf16.mxu0 0
      %7790 = vmatpush1.bf16.msra.mxu0 %v6612
      %7791 = vmatprep.subr.bf16.mxu0 0
      %7792 = vmatpush1.bf16.msra.mxu0 %v6613
      %7793 = vmatprep.subr.bf16.mxu0 0
      %7794 = vmatpush1.bf16.msra.mxu0 %v6614
      %7795 = vmatprep.subr.bf16.mxu0 0
      %7796 = vmatpush1.bf16.msra.mxu0 %v6615
      %7797 = vmatprep.subr.bf16.mxu0 0
      %7798 = vmatpush1.bf16.msra.mxu0 %v6616
      %7799 = vmatprep.subr.bf16.mxu0 0
      %7800 = vmatpush1.bf16.msra.mxu0 %v6617
      %7801 = vmatprep.subr.bf16.mxu0 0
      %7802 = vmatpush1.bf16.msra.mxu0 %v6618
      %7803 = vmatprep.subr.bf16.mxu0 0
      %7804 = vmatpush1.bf16.msra.mxu0 %v6619
      %7805 = vmatprep.subr.bf16.mxu0 0
      %7806 = vmatpush1.bf16.msra.mxu0 0
      %7807 = vmatprep.subr.bf16.mxu0 0
      %7808 = vmatpush1.bf16.msra.mxu0 0
      %7809 = vmatprep.subr.bf16.mxu0 0
      %7810 = vmatpush1.bf16.msra.mxu0 0
      %7811 = vmatprep.subr.bf16.mxu0 0
      %7812 = vmatpush1.bf16.msra.mxu0 0
      %7813 = vmatprep.subr.bf16.mxu0 0
      %7814 = vmatpush1.bf16.msra.mxu0 0
      %7815 = vmatprep.subr.bf16.mxu0 0
      %7816 = vmatpush1.bf16.msra.mxu0 0
      %7817 = vmatprep.subr.bf16.mxu0 0
      %7818 = vmatpush1.bf16.msra.mxu0 0
      %7819 = vmatprep.subr.bf16.mxu0 0
      %7820 = vmatpush1.bf16.msra.mxu0 0
      %7821 = vmatprep.mubr.bf16.mxu0 0
      %7822 = vmatmul.mubr.bf16.gmra.mrb[0].mxu0 %v5987
      %v7823 = vpop.f32.mrb[0].mxu0
      %v7824 = vadd.f32 0.0, %v7823
      %v7825 = vpop.f32.mrb[0].mxu0
      %v7826 = vpop.f32.mrb[0].mxu0
      %v7827 = vadd.f32 0.0, %v7826
      %v7828 = vpop.f32.mrb[0].mxu0
      %7829 = vmatprep.mubr.bf16.mxu0 0
      %7830 = vmatmul.mubr.bf16.gmra.mrb[0].mxu0 %v5988
      %v7831 = vpop.f32.mrb[0].mxu0
      %v7832 = vadd.f32 0.0, %v7831
      %v7833 = vpop.f32.mrb[0].mxu0
      %v7834 = vpop.f32.mrb[0].mxu0
      %v7835 = vadd.f32 0.0, %v7834
      %v7836 = vpop.f32.mrb[0].mxu0
      %7837 = vmatprep.mubr.bf16.mxu0 0
      %7838 = vmatmul.mubr.bf16.gmra.mrb[0].mxu0 %v5989
      %v7839 = vpop.f32.mrb[0].mxu0
      %v7840 = vadd.f32 0.0, %v7839
      %v7841 = vpop.f32.mrb[0].mxu0
      %v7842 = vpop.f32.mrb[0].mxu0
      %v7843 = vadd.f32 0.0, %v7842
      %v7844 = vpop.f32.mrb[0].mxu0
      %7845 = vmatprep.mubr.bf16.mxu0 0
      %7846 = vmatmul.mubr.bf16.gmra.mrb[0].mxu0 %v5990
      %v7847 = vpop.f32.mrb[0].mxu0
      %v7848 = vadd.f32 0.0, %v7847
      %v7849 = vpop.f32.mrb[0].mxu0
      %v7850 = vpop.f32.mrb[0].mxu0
      %v7851 = vadd.f32 0.0, %v7850
      %v7852 = vpop.f32.mrb[0].mxu0
      %7853 = vmatprep.mubr.bf16.mxu0 0
      %7854 = vmatmul.mubr.bf16.gmra.mrb[0].mxu0 %v5991
      %v7855 = vpop.f32.mrb[0].mxu0
      %v7856 = vadd.f32 0.0, %v7855
      %v7857 = vpop.f32.mrb[0].mxu0
      %v7858 = vpop.f32.mrb[0].mxu0
      %v7859 = vadd.f32 0.0, %v7858
      %v7860 = vpop.f32.mrb[0].mxu0
      %7861 = vdwg.mxu0
      %v7862 = vadd.f32 %v7779, %v7824
      %v7863 = vadd.f32 %v7780, %v7827
      %v7864 = vadd.f32 %v7781, %v7832
      %v7865 = vadd.f32 %v7782, %v7835
      %v7866 = vadd.f32 %v7783, %v7840
      %v7867 = vadd.f32 %v7784, %v7843
      %v7868 = vadd.f32 %v7785, %v7848
      %v7869 = vadd.f32 %v7786, %v7851
      %v7870 = vadd.f32 %v7787, %v7856
      %v7871 = vadd.f32 %v7788, %v7859
      %v7872 = vadd.f32 %v7862, %v6715
      %v7873 = vadd.f32 %v7863, %v6715
      %v7874 = vadd.f32 %v7864, %v6715
      %v7875 = vadd.f32 %v7865, %v6715
      %v7876 = vadd.f32 %v7866, %v6715
      %v7877 = vadd.f32 %v7867, %v6715
      %v7878 = vadd.f32 %v7868, %v6715
      %v7879 = vadd.f32 %v7869, %v6715
      %v7880 = vadd.f32 %v7870, %v6715
      %v7881 = vadd.f32 %v7871, %v6715
      %v7882 = vmax.f32 %v7872, 0.0
      %v7883 = vmax.f32 %v7873, 0.0
      %v7884 = vmax.f32 %v7874, 0.0
      %v7885 = vmax.f32 %v7875, 0.0
      %v7886 = vmax.f32 %v7876, 0.0
      %v7887 = vmax.f32 %v7877, 0.0
      %v7888 = vmax.f32 %v7878, 0.0
      %v7889 = vmax.f32 %v7879, 0.0
      %v7890 = vmax.f32 %v7880, 0.0
      %v7891 = vmax.f32 %v7881, 0.0
      %7892 = vmatprep.subr.bf16.mxu0 0
      %7893 = vmatpush1.bf16.msra.mxu0 %v6803
      %7894 = vmatprep.subr.bf16.mxu0 0
      %7895 = vmatpush1.bf16.msra.mxu0 %v6804
      %7896 = vmatprep.subr.bf16.mxu0 0
      %7897 = vmatpush1.bf16.msra.mxu0 %v6805
      %7898 = vmatprep.subr.bf16.mxu0 0
      %7899 = vmatpush1.bf16.msra.mxu0 %v6806
      %7900 = vmatprep.subr.bf16.mxu0 0
      %7901 = vmatpush1.bf16.msra.mxu0 %v6807
      %7902 = vmatprep.subr.bf16.mxu0 0
      %7903 = vmatpush1.bf16.msra.mxu0 %v6808
      %7904 = vmatprep.subr.bf16.mxu0 0
      %7905 = vmatpush1.bf16.msra.mxu0 %v6809
      %7906 = vmatprep.subr.bf16.mxu0 0
      %7907 = vmatpush1.bf16.msra.mxu0 %v6810
      %7908 = vmatprep.subr.bf16.mxu0 0
      %7909 = vmatpush1.bf16.msra.mxu0 0
      %7910 = vmatprep.subr.bf16.mxu0 0
      %7911 = vmatpush1.bf16.msra.mxu0 0
      %7912 = vmatprep.subr.bf16.mxu0 0
      %7913 = vmatpush1.bf16.msra.mxu0 0
      %7914 = vmatprep.subr.bf16.mxu0 0
      %7915 = vmatpush1.bf16.msra.mxu0 0
      %7916 = vmatprep.subr.bf16.mxu0 0
      %7917 = vmatpush1.bf16.msra.mxu0 0
      %7918 = vmatprep.subr.bf16.mxu0 0
      %7919 = vmatpush1.bf16.msra.mxu0 0
      %7920 = vmatprep.subr.bf16.mxu0 0
      %7921 = vmatpush1.bf16.msra.mxu0 0
      %7922 = vmatprep.subr.bf16.mxu0 0
      %7923 = vmatpush1.bf16.msra.mxu0 0
      %7924 = vmatprep.mubr.bf16.mxu0 0
      %7925 = vmatmul.mubr.bf16.gmra.mrb[0].mxu0 %v5937
      %v7926 = vpop.f32.mrb[0].mxu0
      %v7927 = vadd.f32 0.0, %v7926
      %v7928 = vpop.f32.mrb[0].mxu0
      %v7929 = vpop.f32.mrb[0].mxu0
      %v7930 = vadd.f32 0.0, %v7929
      %v7931 = vpop.f32.mrb[0].mxu0
      %7932 = vmatprep.mubr.bf16.mxu0 0
      %7933 = vmatmul.mubr.bf16.gmra.mrb[0].mxu0 %v5938
      %v7934 = vpop.f32.mrb[0].mxu0
      %v7935 = vadd.f32 0.0, %v7934
      %v7936 = vpop.f32.mrb[0].mxu0
      %v7937 = vpop.f32.mrb[0].mxu0
      %v7938 = vadd.f32 0.0, %v7937
      %v7939 = vpop.f32.mrb[0].mxu0
      %7940 = vmatprep.mubr.bf16.mxu0 0
      %7941 = vmatmul.mubr.bf16.gmra.mrb[0].mxu0 %v5939
      %v7942 = vpop.f32.mrb[0].mxu0
      %v7943 = vadd.f32 0.0, %v7942
      %v7944 = vpop.f32.mrb[0].mxu0
      %v7945 = vpop.f32.mrb[0].mxu0
      %v7946 = vadd.f32 0.0, %v7945
      %v7947 = vpop.f32.mrb[0].mxu0
      %7948 = vmatprep.mubr.bf16.mxu0 0
      %7949 = vmatmul.mubr.bf16.gmra.mrb[0].mxu0 %v5940
      %v7950 = vpop.f32.mrb[0].mxu0
      %v7951 = vadd.f32 0.0, %v7950
      %v7952 = vpop.f32.mrb[0].mxu0
      %v7953 = vpop.f32.mrb[0].mxu0
      %v7954 = vadd.f32 0.0, %v7953
      %v7955 = vpop.f32.mrb[0].mxu0
      %7956 = vmatprep.mubr.bf16.mxu0 0
      %7957 = vmatmul.mubr.bf16.gmra.mrb[0].mxu0 %v5941
      %v7958 = vpop.f32.mrb[0].mxu0
      %v7959 = vadd.f32 0.0, %v7958
      %v7960 = vpop.f32.mrb[0].mxu0
      %v7961 = vpop.f32.mrb[0].mxu0
      %v7962 = vadd.f32 0.0, %v7961
      %v7963 = vpop.f32.mrb[0].mxu0
      %7964 = vdwg.mxu0
      %7965 = vmatprep.subr.bf16.mxu0 0
      %7966 = vmatpush1.bf16.msra.mxu0 %v6924
      %7967 = vmatprep.subr.bf16.mxu0 0
      %7968 = vmatpush1.bf16.msra.mxu0 %v6925
      %7969 = vmatprep.subr.bf16.mxu0 0
      %7970 = vmatpush1.bf16.msra.mxu0 %v6926
      %7971 = vmatprep.subr.bf16.mxu0 0
      %7972 = vmatpush1.bf16.msra.mxu0 %v6927
      %7973 = vmatprep.subr.bf16.mxu0 0
      %7974 = vmatpush1.bf16.msra.mxu0 %v6928
      %7975 = vmatprep.subr.bf16.mxu0 0
      %7976 = vmatpush1.bf16.msra.mxu0 %v6929
      %7977 = vmatprep.subr.bf16.mxu0 0
      %7978 = vmatpush1.bf16.msra.mxu0 %v6930
      %7979 = vmatprep.subr.bf16.mxu0 0
      %7980 = vmatpush1.bf16.msra.mxu0 %v6931
      %7981 = vmatprep.subr.bf16.mxu0 0
      %7982 = vmatpush1.bf16.msra.mxu0 0
      %7983 = vmatprep.subr.bf16.mxu0 0
      %7984 = vmatpush1.bf16.msra.mxu0 0
      %7985 = vmatprep.subr.bf16.mxu0 0
      %7986 = vmatpush1.bf16.msra.mxu0 0
      %7987 = vmatprep.subr.bf16.mxu0 0
      %7988 = vmatpush1.bf16.msra.mxu0 0
      %7989 = vmatprep.subr.bf16.mxu0 0
      %7990 = vmatpush1.bf16.msra.mxu0 0
      %7991 = vmatprep.subr.bf16.mxu0 0
      %7992 = vmatpush1.bf16.msra.mxu0 0
      %7993 = vmatprep.subr.bf16.mxu0 0
      %7994 = vmatpush1.bf16.msra.mxu0 0
      %7995 = vmatprep.subr.bf16.mxu0 0
      %7996 = vmatpush1.bf16.msra.mxu0 0
      %7997 = vmatprep.mubr.bf16.mxu0 0
      %7998 = vmatmul.mubr.bf16.gmra.mrb[0].mxu0 %v5985
      %v7999 = vpop.f32.mrb[0].mxu0
      %v8000 = vadd.f32 %v7927, %v7999
      %v8001 = vpop.f32.mrb[0].mxu0
      %v8002 = vpop.f32.mrb[0].mxu0
      %v8003 = vadd.f32 %v7930, %v8002
      %v8004 = vpop.f32.mrb[0].mxu0
      %8005 = vmatprep.mubr.bf16.mxu0 0
      %8006 = vmatmul.mubr.bf16.gmra.mrb[0].mxu0 %v5986
      %v8007 = vpop.f32.mrb[0].mxu0
      %v8008 = vadd.f32 %v7935, %v8007
      %v8009 = vpop.f32.mrb[0].mxu0
      %v8010 = vpop.f32.mrb[0].mxu0
      %v8011 = vadd.f32 %v7938, %v8010
      %v8012 = vpop.f32.mrb[0].mxu0
      %8013 = vmatprep.mubr.bf16.mxu0 0
      %8014 = vmatmul.mubr.bf16.gmra.mrb[0].mxu0 %v5987
      %v8015 = vpop.f32.mrb[0].mxu0
      %v8016 = vadd.f32 %v7943, %v8015
      %v8017 = vpop.f32.mrb[0].mxu0
      %v8018 = vpop.f32.mrb[0].mxu0
      %v8019 = vadd.f32 %v7946, %v8018
      %v8020 = vpop.f32.mrb[0].mxu0
      %8021 = vmatprep.mubr.bf16.mxu0 0
      %8022 = vmatmul.mubr.bf16.gmra.mrb[0].mxu0 %v5988
      %v8023 = vpop.f32.mrb[0].mxu0
      %v8024 = vadd.f32 %v7951, %v8023
      %v8025 = vpop.f32.mrb[0].mxu0
      %v8026 = vpop.f32.mrb[0].mxu0
      %v8027 = vadd.f32 %v7954, %v8026
      %v8028 = vpop.f32.mrb[0].mxu0
      %8029 = vmatprep.mubr.bf16.mxu0 0
      %8030 = vmatmul.mubr.bf16.gmra.mrb[0].mxu0 %v5989
      %v8031 = vpop.f32.mrb[0].mxu0
      %v8032 = vadd.f32 %v7959, %v8031
      %v8033 = vpop.f32.mrb[0].mxu0
      %v8034 = vpop.f32.mrb[0].mxu0
      %v8035 = vadd.f32 %v7962, %v8034
      %v8036 = vpop.f32.mrb[0].mxu0
      %8037 = vdwg.mxu0
      %8038 = vmatprep.subr.bf16.mxu0 0
      %8039 = vmatpush1.bf16.msra.mxu0 %v7062
      %8040 = vmatprep.subr.bf16.mxu0 0
      %8041 = vmatpush1.bf16.msra.mxu0 %v7063
      %8042 = vmatprep.subr.bf16.mxu0 0
      %8043 = vmatpush1.bf16.msra.mxu0 %v7064
      %8044 = vmatprep.subr.bf16.mxu0 0
      %8045 = vmatpush1.bf16.msra.mxu0 %v7065
      %8046 = vmatprep.subr.bf16.mxu0 0
      %8047 = vmatpush1.bf16.msra.mxu0 %v7066
      %8048 = vmatprep.subr.bf16.mxu0 0
      %8049 = vmatpush1.bf16.msra.mxu0 %v7067
      %8050 = vmatprep.subr.bf16.mxu0 0
      %8051 = vmatpush1.bf16.msra.mxu0 %v7068
      %8052 = vmatprep.subr.bf16.mxu0 0
      %8053 = vmatpush1.bf16.msra.mxu0 %v7069
      %8054 = vmatprep.subr.bf16.mxu0 0
      %8055 = vmatpush1.bf16.msra.mxu0 0
      %8056 = vmatprep.subr.bf16.mxu0 0
      %8057 = vmatpush1.bf16.msra.mxu0 0
      %8058 = vmatprep.subr.bf16.mxu0 0
      %8059 = vmatpush1.bf16.msra.mxu0 0
      %8060 = vmatprep.subr.bf16.mxu0 0
      %8061 = vmatpush1.bf16.msra.mxu0 0
      %8062 = vmatprep.subr.bf16.mxu0 0
      %8063 = vmatpush1.bf16.msra.mxu0 0
      %8064 = vmatprep.subr.bf16.mxu0 0
      %8065 = vmatpush1.bf16.msra.mxu0 0
      %8066 = vmatprep.subr.bf16.mxu0 0
      %8067 = vmatpush1.bf16.msra.mxu0 0
      %8068 = vmatprep.subr.bf16.mxu0 0
      %8069 = vmatpush1.bf16.msra.mxu0 0
      %8070 = vmatprep.mubr.bf16.mxu0 0
      %8071 = vmatmul.mubr.bf16.gmra.mrb[0].mxu0 %v5986
      %v8072 = vpop.f32.mrb[0].mxu0
      %v8073 = vadd.f32 0.0, %v8072
      %v8074 = vpop.f32.mrb[0].mxu0
      %v8075 = vpop.f32.mrb[0].mxu0
      %v8076 = vadd.f32 0.0, %v8075
      %v8077 = vpop.f32.mrb[0].mxu0
      %8078 = vmatprep.mubr.bf16.mxu0 0
      %8079 = vmatmul.mubr.bf16.gmra.mrb[0].mxu0 %v5987
      %v8080 = vpop.f32.mrb[0].mxu0
      %v8081 = vadd.f32 0.0, %v8080
      %v8082 = vpop.f32.mrb[0].mxu0
      %v8083 = vpop.f32.mrb[0].mxu0
      %v8084 = vadd.f32 0.0, %v8083
      %v8085 = vpop.f32.mrb[0].mxu0
      %8086 = vmatprep.mubr.bf16.mxu0 0
      %8087 = vmatmul.mubr.bf16.gmra.mrb[0].mxu0 %v5988
      %v8088 = vpop.f32.mrb[0].mxu0
      %v8089 = vadd.f32 0.0, %v8088
      %v8090 = vpop.f32.mrb[0].mxu0
      %v8091 = vpop.f32.mrb[0].mxu0
      %v8092 = vadd.f32 0.0, %v8091
      %v8093 = vpop.f32.mrb[0].mxu0
      %8094 = vmatprep.mubr.bf16.mxu0 0
      %8095 = vmatmul.mubr.bf16.gmra.mrb[0].mxu0 %v5989
      %v8096 = vpop.f32.mrb[0].mxu0
      %v8097 = vadd.f32 0.0, %v8096
      %v8098 = vpop.f32.mrb[0].mxu0
      %v8099 = vpop.f32.mrb[0].mxu0
      %v8100 = vadd.f32 0.0, %v8099
      %v8101 = vpop.f32.mrb[0].mxu0
      %8102 = vmatprep.mubr.bf16.mxu0 0
      %8103 = vmatmul.mubr.bf16.gmra.mrb[0].mxu0 %v5990
      %v8104 = vpop.f32.mrb[0].mxu0
      %v8105 = vadd.f32 0.0, %v8104
      %v8106 = vpop.f32.mrb[0].mxu0
      %v8107 = vpop.f32.mrb[0].mxu0
      %v8108 = vadd.f32 0.0, %v8107
      %v8109 = vpop.f32.mrb[0].mxu0
      %8110 = vdwg.mxu0
      %v8111 = vadd.f32 %v8000, %v8073
      %v8112 = vadd.f32 %v8003, %v8076
      %v8113 = vadd.f32 %v8008, %v8081
      %v8114 = vadd.f32 %v8011, %v8084
      %v8115 = vadd.f32 %v8016, %v8089
      %v8116 = vadd.f32 %v8019, %v8092
      %v8117 = vadd.f32 %v8024, %v8097
      %v8118 = vadd.f32 %v8027, %v8100
      %v8119 = vadd.f32 %v8032, %v8105
      %v8120 = vadd.f32 %v8035, %v8108
      %8121 = vmatprep.subr.bf16.mxu0 0
      %8122 = vmatpush1.bf16.msra.mxu0 %v7210
      %8123 = vmatprep.subr.bf16.mxu0 0
      %8124 = vmatpush1.bf16.msra.mxu0 %v7211
      %8125 = vmatprep.subr.bf16.mxu0 0
      %8126 = vmatpush1.bf16.msra.mxu0 %v7212
      %8127 = vmatprep.subr.bf16.mxu0 0
      %8128 = vmatpush1.bf16.msra.mxu0 %v7213
      %8129 = vmatprep.subr.bf16.mxu0 0
      %8130 = vmatpush1.bf16.msra.mxu0 %v7214
      %8131 = vmatprep.subr.bf16.mxu0 0
      %8132 = vmatpush1.bf16.msra.mxu0 %v7215
      %8133 = vmatprep.subr.bf16.mxu0 0
      %8134 = vmatpush1.bf16.msra.mxu0 %v7216
      %8135 = vmatprep.subr.bf16.mxu0 0
      %8136 = vmatpush1.bf16.msra.mxu0 %v7217
      %8137 = vmatprep.subr.bf16.mxu0 0
      %8138 = vmatpush1.bf16.msra.mxu0 0
      %8139 = vmatprep.subr.bf16.mxu0 0
      %8140 = vmatpush1.bf16.msra.mxu0 0
      %8141 = vmatprep.subr.bf16.mxu0 0
      %8142 = vmatpush1.bf16.msra.mxu0 0
      %8143 = vmatprep.subr.bf16.mxu0 0
      %8144 = vmatpush1.bf16.msra.mxu0 0
      %8145 = vmatprep.subr.bf16.mxu0 0
      %8146 = vmatpush1.bf16.msra.mxu0 0
      %8147 = vmatprep.subr.bf16.mxu0 0
      %8148 = vmatpush1.bf16.msra.mxu0 0
      %8149 = vmatprep.subr.bf16.mxu0 0
      %8150 = vmatpush1.bf16.msra.mxu0 0
      %8151 = vmatprep.subr.bf16.mxu0 0
      %8152 = vmatpush1.bf16.msra.mxu0 0
      %8153 = vmatprep.mubr.bf16.mxu0 0
      %8154 = vmatmul.mubr.bf16.gmra.mrb[0].mxu0 %v5938
      %v8155 = vpop.f32.mrb[0].mxu0
      %v8156 = vadd.f32 0.0, %v8155
      %v8157 = vpop.f32.mrb[0].mxu0
      %v8158 = vpop.f32.mrb[0].mxu0
      %v8159 = vadd.f32 0.0, %v8158
      %v8160 = vpop.f32.mrb[0].mxu0
      %8161 = vmatprep.mubr.bf16.mxu0 0
      %8162 = vmatmul.mubr.bf16.gmra.mrb[0].mxu0 %v5939
      %v8163 = vpop.f32.mrb[0].mxu0
      %v8164 = vadd.f32 0.0, %v8163
      %v8165 = vpop.f32.mrb[0].mxu0
      %v8166 = vpop.f32.mrb[0].mxu0
      %v8167 = vadd.f32 0.0, %v8166
      %v8168 = vpop.f32.mrb[0].mxu0
      %8169 = vmatprep.mubr.bf16.mxu0 0
      %8170 = vmatmul.mubr.bf16.gmra.mrb[0].mxu0 %v5940
      %v8171 = vpop.f32.mrb[0].mxu0
      %v8172 = vadd.f32 0.0, %v8171
      %v8173 = vpop.f32.mrb[0].mxu0
      %v8174 = vpop.f32.mrb[0].mxu0
      %v8175 = vadd.f32 0.0, %v8174
      %v8176 = vpop.f32.mrb[0].mxu0
      %8177 = vmatprep.mubr.bf16.mxu0 0
      %8178 = vmatmul.mubr.bf16.gmra.mrb[0].mxu0 %v5941
      %v8179 = vpop.f32.mrb[0].mxu0
      %v8180 = vadd.f32 0.0, %v8179
      %v8181 = vpop.f32.mrb[0].mxu0
      %v8182 = vpop.f32.mrb[0].mxu0
      %v8183 = vadd.f32 0.0, %v8182
      %v8184 = vpop.f32.mrb[0].mxu0
      %8185 = vmatprep.mubr.bf16.mxu0 0
      %8186 = vmatmul.mubr.bf16.gmra.mrb[0].mxu0 %v5942
      %v8187 = vpop.f32.mrb[0].mxu0
      %v8188 = vadd.f32 0.0, %v8187
      %v8189 = vpop.f32.mrb[0].mxu0
      %v8190 = vpop.f32.mrb[0].mxu0
      %v8191 = vadd.f32 0.0, %v8190
      %v8192 = vpop.f32.mrb[0].mxu0
      %8193 = vdwg.mxu0
      %v8194 = vadd.f32 %v8111, %v8156
      %v8195 = vadd.f32 %v8112, %v8159
      %v8196 = vadd.f32 %v8113, %v8164
      %v8197 = vadd.f32 %v8114, %v8167
      %v8198 = vadd.f32 %v8115, %v8172
      %v8199 = vadd.f32 %v8116, %v8175
      %v8200 = vadd.f32 %v8117, %v8180
      %v8201 = vadd.f32 %v8118, %v8183
      %v8202 = vadd.f32 %v8119, %v8188
      %v8203 = vadd.f32 %v8120, %v8191
      %8204 = vmatprep.subr.bf16.mxu0 0
      %8205 = vmatpush1.bf16.msra.mxu0 %v7358
      %8206 = vmatprep.subr.bf16.mxu0 0
      %8207 = vmatpush1.bf16.msra.mxu0 %v7359
      %8208 = vmatprep.subr.bf16.mxu0 0
      %8209 = vmatpush1.bf16.msra.mxu0 %v7360
      %8210 = vmatprep.subr.bf16.mxu0 0
      %8211 = vmatpush1.bf16.msra.mxu0 %v7361
      %8212 = vmatprep.subr.bf16.mxu0 0
      %8213 = vmatpush1.bf16.msra.mxu0 %v7362
      %8214 = vmatprep.subr.bf16.mxu0 0
      %8215 = vmatpush1.bf16.msra.mxu0 %v7363
      %8216 = vmatprep.subr.bf16.mxu0 0
      %8217 = vmatpush1.bf16.msra.mxu0 %v7364
      %8218 = vmatprep.subr.bf16.mxu0 0
      %8219 = vmatpush1.bf16.msra.mxu0 %v7365
      %8220 = vmatprep.subr.bf16.mxu0 0
      %8221 = vmatpush1.bf16.msra.mxu0 0
      %8222 = vmatprep.subr.bf16.mxu0 0
      %8223 = vmatpush1.bf16.msra.mxu0 0
      %8224 = vmatprep.subr.bf16.mxu0 0
      %8225 = vmatpush1.bf16.msra.mxu0 0
      %8226 = vmatprep.subr.bf16.mxu0 0
      %8227 = vmatpush1.bf16.msra.mxu0 0
      %8228 = vmatprep.subr.bf16.mxu0 0
      %8229 = vmatpush1.bf16.msra.mxu0 0
      %8230 = vmatprep.subr.bf16.mxu0 0
      %8231 = vmatpush1.bf16.msra.mxu0 0
      %8232 = vmatprep.subr.bf16.mxu0 0
      %8233 = vmatpush1.bf16.msra.mxu0 0
      %8234 = vmatprep.subr.bf16.mxu0 0
      %8235 = vmatpush1.bf16.msra.mxu0 0
      %8236 = vmatprep.mubr.bf16.mxu0 0
      %8237 = vmatmul.mubr.bf16.gmra.mrb[0].mxu0 %v5987
      %v8238 = vpop.f32.mrb[0].mxu0
      %v8239 = vadd.f32 0.0, %v8238
      %v8240 = vpop.f32.mrb[0].mxu0
      %v8241 = vpop.f32.mrb[0].mxu0
      %v8242 = vadd.f32 0.0, %v8241
      %v8243 = vpop.f32.mrb[0].mxu0
      %8244 = vmatprep.mubr.bf16.mxu0 0
      %8245 = vmatmul.mubr.bf16.gmra.mrb[0].mxu0 %v5988
      %v8246 = vpop.f32.mrb[0].mxu0
      %v8247 = vadd.f32 0.0, %v8246
      %v8248 = vpop.f32.mrb[0].mxu0
      %v8249 = vpop.f32.mrb[0].mxu0
      %v8250 = vadd.f32 0.0, %v8249
      %v8251 = vpop.f32.mrb[0].mxu0
      %8252 = vmatprep.mubr.bf16.mxu0 0
      %8253 = vmatmul.mubr.bf16.gmra.mrb[0].mxu0 %v5989
      %v8254 = vpop.f32.mrb[0].mxu0
      %v8255 = vadd.f32 0.0, %v8254
      %v8256 = vpop.f32.mrb[0].mxu0
      %v8257 = vpop.f32.mrb[0].mxu0
      %v8258 = vadd.f32 0.0, %v8257
      %v8259 = vpop.f32.mrb[0].mxu0
      %8260 = vmatprep.mubr.bf16.mxu0 0
      %8261 = vmatmul.mubr.bf16.gmra.mrb[0].mxu0 %v5990
      %v8262 = vpop.f32.mrb[0].mxu0
      %v8263 = vadd.f32 0.0, %v8262
      %v8264 = vpop.f32.mrb[0].mxu0
      %v8265 = vpop.f32.mrb[0].mxu0
      %v8266 = vadd.f32 0.0, %v8265
      %v8267 = vpop.f32.mrb[0].mxu0
      %8268 = vmatprep.mubr.bf16.mxu0 0
      %8269 = vmatmul.mubr.bf16.gmra.mrb[0].mxu0 %v5991
      %v8270 = vpop.f32.mrb[0].mxu0
      %v8271 = vadd.f32 0.0, %v8270
      %v8272 = vpop.f32.mrb[0].mxu0
      %v8273 = vpop.f32.mrb[0].mxu0
      %v8274 = vadd.f32 0.0, %v8273
      %v8275 = vpop.f32.mrb[0].mxu0
      %8276 = vdwg.mxu0
      %v8277 = vadd.f32 %v8194, %v8239
      %v8278 = vadd.f32 %v8195, %v8242
      %v8279 = vadd.f32 %v8196, %v8247
      %v8280 = vadd.f32 %v8197, %v8250
      %v8281 = vadd.f32 %v8198, %v8255
      %v8282 = vadd.f32 %v8199, %v8258
      %v8283 = vadd.f32 %v8200, %v8263
      %v8284 = vadd.f32 %v8201, %v8266
      %v8285 = vadd.f32 %v8202, %v8271
      %v8286 = vadd.f32 %v8203, %v8274
      %v8287 = vadd.f32 %v8277, %v6715
      %v8288 = vadd.f32 %v8278, %v6715
      %v8289 = vadd.f32 %v8279, %v6715
      %v8290 = vadd.f32 %v8280, %v6715
      %v8291 = vadd.f32 %v8281, %v6715
      %v8292 = vadd.f32 %v8282, %v6715
      %v8293 = vadd.f32 %v8283, %v6715
      %v8294 = vadd.f32 %v8284, %v6715
      %v8295 = vadd.f32 %v8285, %v6715
      %v8296 = vadd.f32 %v8286, %v6715
      %v8297 = vmax.f32 %v8287, 0.0
      %v8298 = vmax.f32 %v8288, 0.0
      %v8299 = vmax.f32 %v8289, 0.0
      %v8300 = vmax.f32 %v8290, 0.0
      %v8301 = vmax.f32 %v8291, 0.0
      %v8302 = vmax.f32 %v8292, 0.0
      %v8303 = vmax.f32 %v8293, 0.0
      %v8304 = vmax.f32 %v8294, 0.0
      %v8305 = vmax.f32 %v8295, 0.0
      %v8306 = vmax.f32 %v8296, 0.0
      %v8307 = vmax.f32 %v6727, %v7467
      %v8308 = vmax.f32 %v6728, %v7468
      %v8309 = vmax.f32 %v6729, %v7469
      %v8310 = vmax.f32 %v6730, %v7470
      %v8311 = vmax.f32 %v6731, %v7471
      %v8312 = vmax.f32 %v6732, %v7472
      %v8313 = vmax.f32 %v6733, %v7473
      %v8314 = vmax.f32 %v6734, %v7474
      %v8315 = vmax.f32 %v6735, %v7475
      %v8316 = vmax.f32 %v6736, %v7476
      %v8317 = vmax.f32 %v7882, %v8297
      %v8318 = vmax.f32 %v7883, %v8298
      %v8319 = vmax.f32 %v7884, %v8299
      %v8320 = vmax.f32 %v7885, %v8300
      %v8321 = vmax.f32 %v7886, %v8301
      %v8322 = vmax.f32 %v7887, %v8302
      %v8323 = vmax.f32 %v7888, %v8303
      %v8324 = vmax.f32 %v7889, %v8304
      %v8325 = vmax.f32 %v7890, %v8305
      %v8326 = vmax.f32 %v7891, %v8306
      %v8327 = vmax.f32 %v8307, %v8317
      %v8328 = vmax.f32 %v8308, %v8318
      %v8329 = vmax.f32 %v8309, %v8319
      %v8330 = vmax.f32 %v8310, %v8320
      %v8331 = vmax.f32 %v8311, %v8321
      %v8332 = vmax.f32 %v8312, %v8322
      %v8333 = vmax.f32 %v8313, %v8323
      %v8334 = vmax.f32 %v8314, %v8324
      %v8335 = vmax.f32 %v8315, %v8325
      %v8336 = vmax.f32 %v8316, %v8326
      %v8337 = vpack.c.bf16 %v8328, %v8327
      %v8338 = vpack.c.bf16 %v8330, %v8329
      %v8339 = vpack.c.bf16 %v8332, %v8331
      %v8340 = vpack.c.bf16 %v8334, %v8333
      %v8341 = vpack.c.bf16 %v8336, %v8335
      %v8342 = vld [vmem:[%s5] sm:$0xf]
      %v8343 = vld [vmem:[%s5 + $0x4] sm:$0xf]
      %v8344 = vld [vmem:[%s5 + $0x8] sm:$0xf]
      %v8345 = vld [vmem:[%s5 + $0xc] sm:$0xf]
      %v8346 = vld [vmem:[%s5 + $0x10] sm:$0xf]
      %v8347 = vld [vmem:[%s5 + $0x14] sm:$0xf]
      %v8348 = vld [vmem:[%s5 + $0x18] sm:$0xf]
      %v8349 = vld [vmem:[%s5 + $0x1c] sm:$0xf]
      %v8350 = vld [vmem:[%s5 + $0x20] sm:$0xf]
      %v8351 = vld [vmem:[%s5 + $0x24] sm:$0xf]
      %v8352 = vld [vmem:[%s5 + $0x28] sm:$0xf]
      %v8353 = vld [vmem:[%s5 + $0x2c] sm:$0xf]
      %v8354 = vld [vmem:[%s5 + $0x30] sm:$0xf]
      %v8355 = vld [vmem:[%s5 + $0x34] sm:$0xf]
      %v8356 = vld [vmem:[%s5 + $0x38] sm:$0xf]
      %v8357 = vld [vmem:[%s5 + $0x3c] sm:$0xf]
      %s8358 = scalar_lea.vmem %s5, 64
      %v8359 = vld [vmem:[%s8358] sm:$0xf]
      %v8360 = vld [vmem:[%s8358 + $0x4] sm:$0xf]
      %v8361 = vld [vmem:[%s8358 + $0x8] sm:$0xf]
      %v8362 = vld [vmem:[%s8358 + $0xc] sm:$0xf]
      %v8363 = vld [vmem:[%s8358 + $0x10] sm:$0xf]
      %v8364 = vld [vmem:[%s8358 + $0x14] sm:$0xf]
      %v8365 = vld [vmem:[%s8358 + $0x18] sm:$0xf]
      %v8366 = vld [vmem:[%s8358 + $0x1c] sm:$0xf]
      %v8367 = vld [vmem:[%s8358 + $0x20] sm:$0xf]
      %v8368 = vld [vmem:[%s8358 + $0x24] sm:$0xf]
      %v8369 = vld [vmem:[%s8358 + $0x28] sm:$0xf]
      %v8370 = vld [vmem:[%s8358 + $0x2c] sm:$0xf]
      %v8371 = vld [vmem:[%s8358 + $0x30] sm:$0xf]
      %v8372 = vld [vmem:[%s8358 + $0x34] sm:$0xf]
      %v8373 = vld [vmem:[%s8358 + $0x38] sm:$0xf]
      %v8374 = vld [vmem:[%s8358 + $0x3c] sm:$0xf]
      %v8391 = vunpack.c.l.b16 %v8359
      %v8392 = vunpack.c.l.b16 %v8360
      %v8393 = vunpack.c.l.b16 %v8361
      %v8394 = vunpack.c.l.b16 %v8362
      %v8395 = vunpack.c.l.b16 %v8363
      %v8396 = vunpack.c.l.b16 %v8364
      %v8397 = vunpack.c.l.b16 %v8365
      %v8398 = vunpack.c.l.b16 %v8366
      %v8399 = vunpack.c.l.b16 %v8367
      %v8400 = vunpack.c.l.b16 %v8368
      %v8401 = vunpack.c.l.b16 %v8369
      %v8402 = vunpack.c.l.b16 %v8370
      %v8403 = vunpack.c.l.b16 %v8371
      %v8404 = vunpack.c.l.b16 %v8372
      %v8405 = vunpack.c.l.b16 %v8373
      %v8406 = vunpack.c.l.b16 %v8374
      %v8407 = vpack.c.b16 %v8392, %v8391
      %v8408 = vpack.c.b16 %v8394, %v8393
      %v8409 = vpack.c.b16 %v8396, %v8395
      %v8410 = vpack.c.b16 %v8398, %v8397
      %v8411 = vpack.c.b16 %v8400, %v8399
      %v8412 = vpack.c.b16 %v8402, %v8401
      %v8413 = vpack.c.b16 %v8404, %v8403
      %v8414 = vpack.c.b16 %v8406, %v8405
      %8423 = vmatprep.subr.bf16.mxu0 0
      %8424 = vmatpush1.bf16.msra.mxu0 %v8407
      %8425 = vmatprep.subr.bf16.mxu0 0
      %8426 = vmatpush1.bf16.msra.mxu0 %v8408
      %8427 = vmatprep.subr.bf16.mxu0 0
      %8428 = vmatpush1.bf16.msra.mxu0 %v8409
      %8429 = vmatprep.subr.bf16.mxu0 0
      %8430 = vmatpush1.bf16.msra.mxu0 %v8410
      %8431 = vmatprep.subr.bf16.mxu0 0
      %8432 = vmatpush1.bf16.msra.mxu0 %v8411
      %8433 = vmatprep.subr.bf16.mxu0 0
      %8434 = vmatpush1.bf16.msra.mxu0 %v8412
      %8435 = vmatprep.subr.bf16.mxu0 0
      %8436 = vmatpush1.bf16.msra.mxu0 %v8413
      %8437 = vmatprep.subr.bf16.mxu0 0
      %8438 = vmatpush1.bf16.msra.mxu0 %v8414
      %8439 = vmatprep.subr.bf16.mxu0 0
      %8440 = vmatpush1.bf16.msra.mxu0 0
      %8441 = vmatprep.subr.bf16.mxu0 0
      %8442 = vmatpush1.bf16.msra.mxu0 0
      %8443 = vmatprep.subr.bf16.mxu0 0
      %8444 = vmatpush1.bf16.msra.mxu0 0
      %8445 = vmatprep.subr.bf16.mxu0 0
      %8446 = vmatpush1.bf16.msra.mxu0 0
      %8447 = vmatprep.subr.bf16.mxu0 0
      %8448 = vmatpush1.bf16.msra.mxu0 0
      %8449 = vmatprep.subr.bf16.mxu0 0
      %8450 = vmatpush1.bf16.msra.mxu0 0
      %8451 = vmatprep.subr.bf16.mxu0 0
      %8452 = vmatpush1.bf16.msra.mxu0 0
      %8453 = vmatprep.subr.bf16.mxu0 0
      %8454 = vmatpush1.bf16.msra.mxu0 0
      %8455 = vmatprep.mubr.bf16.mxu0 0
      %8456 = vmatmul.mubr.bf16.gmra.mrb[0].mxu0 %v8338
      %v8457 = vpop.f32.mrb[0].mxu0
      %v8458 = vadd.f32 0.0, %v8457
      %v8459 = vpop.f32.mrb[0].mxu0
      %v8460 = vpop.f32.mrb[0].mxu0
      %v8461 = vadd.f32 0.0, %v8460
      %v8462 = vpop.f32.mrb[0].mxu0
      %8463 = vdwg.mxu0
      %v8480 = vunpack.c.l.b16 %v8342
      %v8481 = vunpack.c.l.b16 %v8343
      %v8482 = vunpack.c.l.b16 %v8344
      %v8483 = vunpack.c.l.b16 %v8345
      %v8484 = vunpack.c.l.b16 %v8346
      %v8485 = vunpack.c.l.b16 %v8347
      %v8486 = vunpack.c.l.b16 %v8348
      %v8487 = vunpack.c.l.b16 %v8349
      %v8488 = vunpack.c.l.b16 %v8350
      %v8489 = vunpack.c.l.b16 %v8351
      %v8490 = vunpack.c.l.b16 %v8352
      %v8491 = vunpack.c.l.b16 %v8353
      %v8492 = vunpack.c.l.b16 %v8354
      %v8493 = vunpack.c.l.b16 %v8355
      %v8494 = vunpack.c.l.b16 %v8356
      %v8495 = vunpack.c.l.b16 %v8357
      %v8496 = vpack.c.b16 %v8481, %v8480
      %v8497 = vpack.c.b16 %v8483, %v8482
      %v8498 = vpack.c.b16 %v8485, %v8484
      %v8499 = vpack.c.b16 %v8487, %v8486
      %v8500 = vpack.c.b16 %v8489, %v8488
      %v8501 = vpack.c.b16 %v8491, %v8490
      %v8502 = vpack.c.b16 %v8493, %v8492
      %v8503 = vpack.c.b16 %v8495, %v8494
      %8512 = vmatprep.subr.bf16.mxu0 0
      %8513 = vmatpush1.bf16.msra.mxu0 %v8496
      %8514 = vmatprep.subr.bf16.mxu0 0
      %8515 = vmatpush1.bf16.msra.mxu0 %v8497
      %8516 = vmatprep.subr.bf16.mxu0 0
      %8517 = vmatpush1.bf16.msra.mxu0 %v8498
      %8518 = vmatprep.subr.bf16.mxu0 0
      %8519 = vmatpush1.bf16.msra.mxu0 %v8499
      %8520 = vmatprep.subr.bf16.mxu0 0
      %8521 = vmatpush1.bf16.msra.mxu0 %v8500
      %8522 = vmatprep.subr.bf16.mxu0 0
      %8523 = vmatpush1.bf16.msra.mxu0 %v8501
      %8524 = vmatprep.subr.bf16.mxu0 0
      %8525 = vmatpush1.bf16.msra.mxu0 %v8502
      %8526 = vmatprep.subr.bf16.mxu0 0
      %8527 = vmatpush1.bf16.msra.mxu0 %v8503
      %8528 = vmatprep.subr.bf16.mxu0 0
      %8529 = vmatpush1.bf16.msra.mxu0 0
      %8530 = vmatprep.subr.bf16.mxu0 0
      %8531 = vmatpush1.bf16.msra.mxu0 0
      %8532 = vmatprep.subr.bf16.mxu0 0
      %8533 = vmatpush1.bf16.msra.mxu0 0
      %8534 = vmatprep.subr.bf16.mxu0 0
      %8535 = vmatpush1.bf16.msra.mxu0 0
      %8536 = vmatprep.subr.bf16.mxu0 0
      %8537 = vmatpush1.bf16.msra.mxu0 0
      %8538 = vmatprep.subr.bf16.mxu0 0
      %8539 = vmatpush1.bf16.msra.mxu0 0
      %8540 = vmatprep.subr.bf16.mxu0 0
      %8541 = vmatpush1.bf16.msra.mxu0 0
      %8542 = vmatprep.subr.bf16.mxu0 0
      %8543 = vmatpush1.bf16.msra.mxu0 0
      %8544 = vmatprep.mubr.bf16.mxu0 0
      %8545 = vmatmul.mubr.bf16.gmra.mrb[0].mxu0 %v8337
      %v8546 = vpop.f32.mrb[0].mxu0
      %v8547 = vadd.f32 %v8458, %v8546
      %v8548 = vpop.f32.mrb[0].mxu0
      %v8549 = vpop.f32.mrb[0].mxu0
      %v8550 = vadd.f32 %v8461, %v8549
      %v8551 = vpop.f32.mrb[0].mxu0
      %8552 = vdwg.mxu0
      %s8553 = scalar_lea.vmem %s5, 128
      %v8554 = vld [vmem:[%s8553] sm:$0xf]
      %v8555 = vld [vmem:[%s8553 + $0x4] sm:$0xf]
      %v8556 = vld [vmem:[%s8553 + $0x8] sm:$0xf]
      %v8557 = vld [vmem:[%s8553 + $0xc] sm:$0xf]
      %v8558 = vld [vmem:[%s8553 + $0x10] sm:$0xf]
      %v8559 = vld [vmem:[%s8553 + $0x14] sm:$0xf]
      %v8560 = vld [vmem:[%s8553 + $0x18] sm:$0xf]
      %v8561 = vld [vmem:[%s8553 + $0x1c] sm:$0xf]
      %v8562 = vld [vmem:[%s8553 + $0x20] sm:$0xf]
      %v8563 = vld [vmem:[%s8553 + $0x24] sm:$0xf]
      %v8564 = vld [vmem:[%s8553 + $0x28] sm:$0xf]
      %v8565 = vld [vmem:[%s8553 + $0x2c] sm:$0xf]
      %v8566 = vld [vmem:[%s8553 + $0x30] sm:$0xf]
      %v8567 = vld [vmem:[%s8553 + $0x34] sm:$0xf]
      %v8568 = vld [vmem:[%s8553 + $0x38] sm:$0xf]
      %v8569 = vld [vmem:[%s8553 + $0x3c] sm:$0xf]
      %v8586 = vunpack.c.l.b16 %v8554
      %v8587 = vunpack.c.l.b16 %v8555
      %v8588 = vunpack.c.l.b16 %v8556
      %v8589 = vunpack.c.l.b16 %v8557
      %v8590 = vunpack.c.l.b16 %v8558
      %v8591 = vunpack.c.l.b16 %v8559
      %v8592 = vunpack.c.l.b16 %v8560
      %v8593 = vunpack.c.l.b16 %v8561
      %v8594 = vunpack.c.l.b16 %v8562
      %v8595 = vunpack.c.l.b16 %v8563
      %v8596 = vunpack.c.l.b16 %v8564
      %v8597 = vunpack.c.l.b16 %v8565
      %v8598 = vunpack.c.l.b16 %v8566
      %v8599 = vunpack.c.l.b16 %v8567
      %v8600 = vunpack.c.l.b16 %v8568
      %v8601 = vunpack.c.l.b16 %v8569
      %v8602 = vpack.c.b16 %v8587, %v8586
      %v8603 = vpack.c.b16 %v8589, %v8588
      %v8604 = vpack.c.b16 %v8591, %v8590
      %v8605 = vpack.c.b16 %v8593, %v8592
      %v8606 = vpack.c.b16 %v8595, %v8594
      %v8607 = vpack.c.b16 %v8597, %v8596
      %v8608 = vpack.c.b16 %v8599, %v8598
      %v8609 = vpack.c.b16 %v8601, %v8600
      %8618 = vmatprep.subr.bf16.mxu0 0
      %8619 = vmatpush1.bf16.msra.mxu0 %v8602
      %8620 = vmatprep.subr.bf16.mxu0 0
      %8621 = vmatpush1.bf16.msra.mxu0 %v8603
      %8622 = vmatprep.subr.bf16.mxu0 0
      %8623 = vmatpush1.bf16.msra.mxu0 %v8604
      %8624 = vmatprep.subr.bf16.mxu0 0
      %8625 = vmatpush1.bf16.msra.mxu0 %v8605
      %8626 = vmatprep.subr.bf16.mxu0 0
      %8627 = vmatpush1.bf16.msra.mxu0 %v8606
      %8628 = vmatprep.subr.bf16.mxu0 0
      %8629 = vmatpush1.bf16.msra.mxu0 %v8607
      %8630 = vmatprep.subr.bf16.mxu0 0
      %8631 = vmatpush1.bf16.msra.mxu0 %v8608
      %8632 = vmatprep.subr.bf16.mxu0 0
      %8633 = vmatpush1.bf16.msra.mxu0 %v8609
      %8634 = vmatprep.subr.bf16.mxu0 0
      %8635 = vmatpush1.bf16.msra.mxu0 0
      %8636 = vmatprep.subr.bf16.mxu0 0
      %8637 = vmatpush1.bf16.msra.mxu0 0
      %8638 = vmatprep.subr.bf16.mxu0 0
      %8639 = vmatpush1.bf16.msra.mxu0 0
      %8640 = vmatprep.subr.bf16.mxu0 0
      %8641 = vmatpush1.bf16.msra.mxu0 0
      %8642 = vmatprep.subr.bf16.mxu0 0
      %8643 = vmatpush1.bf16.msra.mxu0 0
      %8644 = vmatprep.subr.bf16.mxu0 0
      %8645 = vmatpush1.bf16.msra.mxu0 0
      %8646 = vmatprep.subr.bf16.mxu0 0
      %8647 = vmatpush1.bf16.msra.mxu0 0
      %8648 = vmatprep.subr.bf16.mxu0 0
      %8649 = vmatpush1.bf16.msra.mxu0 0
      %8650 = vmatprep.mubr.bf16.mxu0 0
      %8651 = vmatmul.mubr.bf16.gmra.mrb[0].mxu0 %v8339
      %v8652 = vpop.f32.mrb[0].mxu0
      %v8653 = vadd.f32 0.0, %v8652
      %v8654 = vpop.f32.mrb[0].mxu0
      %v8655 = vpop.f32.mrb[0].mxu0
      %v8656 = vadd.f32 0.0, %v8655
      %v8657 = vpop.f32.mrb[0].mxu0
      %8658 = vdwg.mxu0
      %v8659 = vadd.f32 %v8547, %v8653
      %v8660 = vadd.f32 %v8550, %v8656
      %s8661 = scalar_lea.vmem %s5, 192
      %v8662 = vld [vmem:[%s8661] sm:$0xf]
      %v8663 = vld [vmem:[%s8661 + $0x4] sm:$0xf]
      %v8664 = vld [vmem:[%s8661 + $0x8] sm:$0xf]
      %v8665 = vld [vmem:[%s8661 + $0xc] sm:$0xf]
      %v8666 = vld [vmem:[%s8661 + $0x10] sm:$0xf]
      %v8667 = vld [vmem:[%s8661 + $0x14] sm:$0xf]
      %v8668 = vld [vmem:[%s8661 + $0x18] sm:$0xf]
      %v8669 = vld [vmem:[%s8661 + $0x1c] sm:$0xf]
      %v8670 = vld [vmem:[%s8661 + $0x20] sm:$0xf]
      %v8671 = vld [vmem:[%s8661 + $0x24] sm:$0xf]
      %v8672 = vld [vmem:[%s8661 + $0x28] sm:$0xf]
      %v8673 = vld [vmem:[%s8661 + $0x2c] sm:$0xf]
      %v8674 = vld [vmem:[%s8661 + $0x30] sm:$0xf]
      %v8675 = vld [vmem:[%s8661 + $0x34] sm:$0xf]
      %v8676 = vld [vmem:[%s8661 + $0x38] sm:$0xf]
      %v8677 = vld [vmem:[%s8661 + $0x3c] sm:$0xf]
      %v8694 = vunpack.c.l.b16 %v8662
      %v8695 = vunpack.c.l.b16 %v8663
      %v8696 = vunpack.c.l.b16 %v8664
      %v8697 = vunpack.c.l.b16 %v8665
      %v8698 = vunpack.c.l.b16 %v8666
      %v8699 = vunpack.c.l.b16 %v8667
      %v8700 = vunpack.c.l.b16 %v8668
      %v8701 = vunpack.c.l.b16 %v8669
      %v8702 = vunpack.c.l.b16 %v8670
      %v8703 = vunpack.c.l.b16 %v8671
      %v8704 = vunpack.c.l.b16 %v8672
      %v8705 = vunpack.c.l.b16 %v8673
      %v8706 = vunpack.c.l.b16 %v8674
      %v8707 = vunpack.c.l.b16 %v8675
      %v8708 = vunpack.c.l.b16 %v8676
      %v8709 = vunpack.c.l.b16 %v8677
      %v8710 = vpack.c.b16 %v8695, %v8694
      %v8711 = vpack.c.b16 %v8697, %v8696
      %v8712 = vpack.c.b16 %v8699, %v8698
      %v8713 = vpack.c.b16 %v8701, %v8700
      %v8714 = vpack.c.b16 %v8703, %v8702
      %v8715 = vpack.c.b16 %v8705, %v8704
      %v8716 = vpack.c.b16 %v8707, %v8706
      %v8717 = vpack.c.b16 %v8709, %v8708
      %8726 = vmatprep.subr.bf16.mxu0 0
      %8727 = vmatpush1.bf16.msra.mxu0 %v8710
      %8728 = vmatprep.subr.bf16.mxu0 0
      %8729 = vmatpush1.bf16.msra.mxu0 %v8711
      %8730 = vmatprep.subr.bf16.mxu0 0
      %8731 = vmatpush1.bf16.msra.mxu0 %v8712
      %8732 = vmatprep.subr.bf16.mxu0 0
      %8733 = vmatpush1.bf16.msra.mxu0 %v8713
      %8734 = vmatprep.subr.bf16.mxu0 0
      %8735 = vmatpush1.bf16.msra.mxu0 %v8714
      %8736 = vmatprep.subr.bf16.mxu0 0
      %8737 = vmatpush1.bf16.msra.mxu0 %v8715
      %8738 = vmatprep.subr.bf16.mxu0 0
      %8739 = vmatpush1.bf16.msra.mxu0 %v8716
      %8740 = vmatprep.subr.bf16.mxu0 0
      %8741 = vmatpush1.bf16.msra.mxu0 %v8717
      %8742 = vmatprep.subr.bf16.mxu0 0
      %8743 = vmatpush1.bf16.msra.mxu0 0
      %8744 = vmatprep.subr.bf16.mxu0 0
      %8745 = vmatpush1.bf16.msra.mxu0 0
      %8746 = vmatprep.subr.bf16.mxu0 0
      %8747 = vmatpush1.bf16.msra.mxu0 0
      %8748 = vmatprep.subr.bf16.mxu0 0
      %8749 = vmatpush1.bf16.msra.mxu0 0
      %8750 = vmatprep.subr.bf16.mxu0 0
      %8751 = vmatpush1.bf16.msra.mxu0 0
      %8752 = vmatprep.subr.bf16.mxu0 0
      %8753 = vmatpush1.bf16.msra.mxu0 0
      %8754 = vmatprep.subr.bf16.mxu0 0
      %8755 = vmatpush1.bf16.msra.mxu0 0
      %8756 = vmatprep.subr.bf16.mxu0 0
      %8757 = vmatpush1.bf16.msra.mxu0 0
      %8758 = vmatprep.mubr.bf16.mxu0 0
      %8759 = vmatmul.mubr.bf16.gmra.mrb[0].mxu0 %v8340
      %v8760 = vpop.f32.mrb[0].mxu0
      %v8761 = vadd.f32 0.0, %v8760
      %v8762 = vpop.f32.mrb[0].mxu0
      %v8763 = vpop.f32.mrb[0].mxu0
      %v8764 = vadd.f32 0.0, %v8763
      %v8765 = vpop.f32.mrb[0].mxu0
      %8766 = vdwg.mxu0
      %v8767 = vadd.f32 %v8659, %v8761
      %v8768 = vadd.f32 %v8660, %v8764
      %s8769 = scalar_lea.vmem %s5, 256
      %v8770 = vld [vmem:[%s8769] sm:$0xf]
      %v8771 = vld [vmem:[%s8769 + $0x4] sm:$0xf]
      %v8772 = vld [vmem:[%s8769 + $0x8] sm:$0xf]
      %v8773 = vld [vmem:[%s8769 + $0xc] sm:$0xf]
      %v8774 = vld [vmem:[%s8769 + $0x10] sm:$0xf]
      %v8775 = vld [vmem:[%s8769 + $0x14] sm:$0xf]
      %v8776 = vld [vmem:[%s8769 + $0x18] sm:$0xf]
      %v8777 = vld [vmem:[%s8769 + $0x1c] sm:$0xf]
      %v8778 = vld [vmem:[%s8769 + $0x20] sm:$0xf]
      %v8779 = vld [vmem:[%s8769 + $0x24] sm:$0xf]
      %v8780 = vld [vmem:[%s8769 + $0x28] sm:$0xf]
      %v8781 = vld [vmem:[%s8769 + $0x2c] sm:$0xf]
      %v8782 = vld [vmem:[%s8769 + $0x30] sm:$0xf]
      %v8783 = vld [vmem:[%s8769 + $0x34] sm:$0xf]
      %v8784 = vld [vmem:[%s8769 + $0x38] sm:$0xf]
      %v8785 = vld [vmem:[%s8769 + $0x3c] sm:$0xf]
      %v8802 = vunpack.c.l.b16 %v8770
      %v8803 = vunpack.c.l.b16 %v8771
      %v8804 = vunpack.c.l.b16 %v8772
      %v8805 = vunpack.c.l.b16 %v8773
      %v8806 = vunpack.c.l.b16 %v8774
      %v8807 = vunpack.c.l.b16 %v8775
      %v8808 = vunpack.c.l.b16 %v8776
      %v8809 = vunpack.c.l.b16 %v8777
      %v8810 = vunpack.c.l.b16 %v8778
      %v8811 = vunpack.c.l.b16 %v8779
      %v8812 = vunpack.c.l.b16 %v8780
      %v8813 = vunpack.c.l.b16 %v8781
      %v8814 = vunpack.c.l.b16 %v8782
      %v8815 = vunpack.c.l.b16 %v8783
      %v8816 = vunpack.c.l.b16 %v8784
      %v8817 = vunpack.c.l.b16 %v8785
      %v8818 = vpack.c.b16 %v8803, %v8802
      %v8819 = vpack.c.b16 %v8805, %v8804
      %v8820 = vpack.c.b16 %v8807, %v8806
      %v8821 = vpack.c.b16 %v8809, %v8808
      %v8822 = vpack.c.b16 %v8811, %v8810
      %v8823 = vpack.c.b16 %v8813, %v8812
      %v8824 = vpack.c.b16 %v8815, %v8814
      %v8825 = vpack.c.b16 %v8817, %v8816
      %8834 = vmatprep.subr.bf16.mxu0 0
      %8835 = vmatpush1.bf16.msra.mxu0 %v8818
      %8836 = vmatprep.subr.bf16.mxu0 0
      %8837 = vmatpush1.bf16.msra.mxu0 %v8819
      %8838 = vmatprep.subr.bf16.mxu0 0
      %8839 = vmatpush1.bf16.msra.mxu0 %v8820
      %8840 = vmatprep.subr.bf16.mxu0 0
      %8841 = vmatpush1.bf16.msra.mxu0 %v8821
      %8842 = vmatprep.subr.bf16.mxu0 0
      %8843 = vmatpush1.bf16.msra.mxu0 %v8822
      %8844 = vmatprep.subr.bf16.mxu0 0
      %8845 = vmatpush1.bf16.msra.mxu0 %v8823
      %8846 = vmatprep.subr.bf16.mxu0 0
      %8847 = vmatpush1.bf16.msra.mxu0 %v8824
      %8848 = vmatprep.subr.bf16.mxu0 0
      %8849 = vmatpush1.bf16.msra.mxu0 %v8825
      %8850 = vmatprep.subr.bf16.mxu0 0
      %8851 = vmatpush1.bf16.msra.mxu0 0
      %8852 = vmatprep.subr.bf16.mxu0 0
      %8853 = vmatpush1.bf16.msra.mxu0 0
      %8854 = vmatprep.subr.bf16.mxu0 0
      %8855 = vmatpush1.bf16.msra.mxu0 0
      %8856 = vmatprep.subr.bf16.mxu0 0
      %8857 = vmatpush1.bf16.msra.mxu0 0
      %8858 = vmatprep.subr.bf16.mxu0 0
      %8859 = vmatpush1.bf16.msra.mxu0 0
      %8860 = vmatprep.subr.bf16.mxu0 0
      %8861 = vmatpush1.bf16.msra.mxu0 0
      %8862 = vmatprep.subr.bf16.mxu0 0
      %8863 = vmatpush1.bf16.msra.mxu0 0
      %8864 = vmatprep.subr.bf16.mxu0 0
      %8865 = vmatpush1.bf16.msra.mxu0 0
      %8866 = vmatprep.mubr.bf16.mxu0 0
      %8867 = vmatmul.mubr.bf16.gmra.mrb[0].mxu0 %v8341
      %v8868 = vpop.f32.mrb[0].mxu0
      %v8869 = vadd.f32 0.0, %v8868
      %v8870 = vpop.f32.mrb[0].mxu0
      %v8871 = vpop.f32.mrb[0].mxu0
      %v8872 = vadd.f32 0.0, %v8871
      %v8873 = vpop.f32.mrb[0].mxu0
      %8874 = vdwg.mxu0
      %v8875 = vadd.f32 %v8767, %v8869
      %v8876 = vadd.f32 %v8768, %v8872
      %v8877 = vld [vmem:[%s6] sm:$0x1]
      %v8879 = vlaneseq
      %v8880 = vshrl.u32 %v8879, 7
      %v8881 = vsub.s32 0, %v8880
      %v8882 = vrot.slane %v8877, %v8881
      %v8884 = vadd.f32 %v8875, %v8882
      %v8885 = vadd.f32 %v8876, %v8882
      %v8886 = vmax.f32 %v8884, 0.0
      %v8887 = vmax.f32 %v8885, 0.0
      %v8888 = vpack.c.bf16 %v8887, %v8886
      %v8889 = vld [vmem:[%s7] sm:$0xf]
      %v8890 = vld [vmem:[%s7 + $0x4] sm:$0xf]
      %v8891 = vld [vmem:[%s7 + $0x8] sm:$0xf]
      %v8892 = vld [vmem:[%s7 + $0xc] sm:$0xf]
      %v8893 = vld [vmem:[%s7 + $0x10] sm:$0xf]
      %v8894 = vld [vmem:[%s7 + $0x14] sm:$0xf]
      %v8895 = vld [vmem:[%s7 + $0x18] sm:$0xf]
      %v8896 = vld [vmem:[%s7 + $0x1c] sm:$0xf]
      %v8897 = vld [vmem:[%s7 + $0x20] sm:$0xf]
      %v8898 = vld [vmem:[%s7 + $0x24] sm:$0xf]
      %v8899 = vld [vmem:[%s7 + $0x28] sm:$0xf]
      %v8900 = vld [vmem:[%s7 + $0x2c] sm:$0xf]
      %v8901 = vld [vmem:[%s7 + $0x30] sm:$0xf]
      %v8902 = vld [vmem:[%s7 + $0x34] sm:$0xf]
      %v8903 = vld [vmem:[%s7 + $0x38] sm:$0xf]
      %v8904 = vld [vmem:[%s7 + $0x3c] sm:$0xf]
      %v8905 = vld [vmem:[%s8] sm:$0x1]
      %v8907 = vlaneseq
      %v8908 = vshrl.u32 %v8907, 7
      %v8909 = vsub.s32 0, %v8908
      %v8910 = vrot.slane %v8905, %v8909
      %v8928 = vunpack.c.l.b16 %v8889
      %v8929 = vunpack.c.l.b16 %v8890
      %v8930 = vunpack.c.l.b16 %v8891
      %v8931 = vunpack.c.l.b16 %v8892
      %v8932 = vunpack.c.l.b16 %v8893
      %v8933 = vunpack.c.l.b16 %v8894
      %v8934 = vunpack.c.l.b16 %v8895
      %v8935 = vunpack.c.l.b16 %v8896
      %v8936 = vunpack.c.l.b16 %v8897
      %v8937 = vunpack.c.l.b16 %v8898
      %v8938 = vunpack.c.l.b16 %v8899
      %v8939 = vunpack.c.l.b16 %v8900
      %v8940 = vunpack.c.l.b16 %v8901
      %v8941 = vunpack.c.l.b16 %v8902
      %v8942 = vunpack.c.l.b16 %v8903
      %v8943 = vunpack.c.l.b16 %v8904
      %v8944 = vpack.c.b16 %v8929, %v8928
      %v8945 = vpack.c.b16 %v8931, %v8930
      %v8946 = vpack.c.b16 %v8933, %v8932
      %v8947 = vpack.c.b16 %v8935, %v8934
      %v8948 = vpack.c.b16 %v8937, %v8936
      %v8949 = vpack.c.b16 %v8939, %v8938
      %v8950 = vpack.c.b16 %v8941, %v8940
      %v8951 = vpack.c.b16 %v8943, %v8942
      %8960 = vmatprep.subr.bf16.mxu0 0
      %8961 = vmatpush1.bf16.msra.mxu0 %v8944
      %8962 = vmatprep.subr.bf16.mxu0 0
      %8963 = vmatpush1.bf16.msra.mxu0 %v8945
      %8964 = vmatprep.subr.bf16.mxu0 0
      %8965 = vmatpush1.bf16.msra.mxu0 %v8946
      %8966 = vmatprep.subr.bf16.mxu0 0
      %8967 = vmatpush1.bf16.msra.mxu0 %v8947
      %8968 = vmatprep.subr.bf16.mxu0 0
      %8969 = vmatpush1.bf16.msra.mxu0 %v8948
      %8970 = vmatprep.subr.bf16.mxu0 0
      %8971 = vmatpush1.bf16.msra.mxu0 %v8949
      %8972 = vmatprep.subr.bf16.mxu0 0
      %8973 = vmatpush1.bf16.msra.mxu0 %v8950
      %8974 = vmatprep.subr.bf16.mxu0 0
      %8975 = vmatpush1.bf16.msra.mxu0 %v8951
      %8976 = vmatprep.subr.bf16.mxu0 0
      %8977 = vmatpush1.bf16.msra.mxu0 0
      %8978 = vmatprep.subr.bf16.mxu0 0
      %8979 = vmatpush1.bf16.msra.mxu0 0
      %8980 = vmatprep.subr.bf16.mxu0 0
      %8981 = vmatpush1.bf16.msra.mxu0 0
      %8982 = vmatprep.subr.bf16.mxu0 0
      %8983 = vmatpush1.bf16.msra.mxu0 0
      %8984 = vmatprep.subr.bf16.mxu0 0
      %8985 = vmatpush1.bf16.msra.mxu0 0
      %8986 = vmatprep.subr.bf16.mxu0 0
      %8987 = vmatpush1.bf16.msra.mxu0 0
      %8988 = vmatprep.subr.bf16.mxu0 0
      %8989 = vmatpush1.bf16.msra.mxu0 0
      %8990 = vmatprep.subr.bf16.mxu0 0
      %8991 = vmatpush1.bf16.msra.mxu0 0
      %8992 = vmatprep.mubr.bf16.mxu0 0
      %8993 = vmatmul.mubr.bf16.gmra.mrb[0].mxu0 %v8888
      %v8994 = vpop.f32.mrb[0].mxu0
      %v8995 = vadd.f32 %v8910, %v8994
      %v8996 = vpop.f32.mrb[0].mxu0
      %v8997 = vpop.f32.mrb[0].mxu0
      %v8998 = vadd.f32 %v8910, %v8997
      %v8999 = vpop.f32.mrb[0].mxu0
      %9000 = vdwg.mxu0
      %v9001 = vmax.f32 %v8995, 0.0
      %v9002 = vmax.f32 %v8998, 0.0
      %v9003 = vpack.c.bf16 %v9002, %v9001
      %v9004 = vld [vmem:[%s9] sm:$0xf]
      %v9005 = vld [vmem:[%s9 + $0x4] sm:$0xf]
      %v9006 = vld [vmem:[%s9 + $0x8] sm:$0xf]
      %v9007 = vld [vmem:[%s9 + $0xc] sm:$0xf]
      %v9008 = vld [vmem:[%s9 + $0x10] sm:$0xf]
      %v9009 = vld [vmem:[%s9 + $0x14] sm:$0xf]
      %v9010 = vld [vmem:[%s9 + $0x18] sm:$0xf]
      %v9011 = vld [vmem:[%s9 + $0x1c] sm:$0xf]
      %v9012 = vld [vmem:[%s9 + $0x20] sm:$0xf]
      %v9013 = vld [vmem:[%s9 + $0x24] sm:$0xf]
      %v9014 = vld [vmem:[%s9 + $0x28] sm:$0xf]
      %v9015 = vld [vmem:[%s9 + $0x2c] sm:$0xf]
      %v9016 = vld [vmem:[%s9 + $0x30] sm:$0xf]
      %v9017 = vld [vmem:[%s9 + $0x34] sm:$0xf]
      %v9018 = vld [vmem:[%s9 + $0x38] sm:$0xf]
      %v9019 = vld [vmem:[%s9 + $0x3c] sm:$0xf]
      %v9020 = vld [vmem:[%s10] sm:$0x1]
      %v9022 = vlaneseq
      %v9023 = vshrl.u32 %v9022, 7
      %v9024 = vsub.s32 0, %v9023
      %v9025 = vrot.slane %v9020, %v9024
      %v9043 = vunpack.c.l.b16 %v9004
      %v9044 = vunpack.c.l.b16 %v9005
      %v9045 = vunpack.c.l.b16 %v9006
      %v9046 = vunpack.c.l.b16 %v9007
      %v9047 = vunpack.c.l.b16 %v9008
      %v9048 = vunpack.c.l.b16 %v9009
      %v9049 = vunpack.c.l.b16 %v9010
      %v9050 = vunpack.c.l.b16 %v9011
      %v9051 = vunpack.c.l.b16 %v9012
      %v9052 = vunpack.c.l.b16 %v9013
      %v9053 = vunpack.c.l.b16 %v9014
      %v9054 = vunpack.c.l.b16 %v9015
      %v9055 = vunpack.c.l.b16 %v9016
      %v9056 = vunpack.c.l.b16 %v9017
      %v9057 = vunpack.c.l.b16 %v9018
      %v9058 = vunpack.c.l.b16 %v9019
      %v9059 = vpack.c.b16 %v9044, %v9043
      %v9060 = vpack.c.b16 %v9046, %v9045
      %v9061 = vpack.c.b16 %v9048, %v9047
      %v9062 = vpack.c.b16 %v9050, %v9049
      %v9063 = vpack.c.b16 %v9052, %v9051
      %v9064 = vpack.c.b16 %v9054, %v9053
      %v9065 = vpack.c.b16 %v9056, %v9055
      %v9066 = vpack.c.b16 %v9058, %v9057
      %9075 = vmatprep.subr.bf16.mxu0 0
      %9076 = vmatpush1.bf16.msra.mxu0 %v9059
      %9077 = vmatprep.subr.bf16.mxu0 0
      %9078 = vmatpush1.bf16.msra.mxu0 %v9060
      %9079 = vmatprep.subr.bf16.mxu0 0
      %9080 = vmatpush1.bf16.msra.mxu0 %v9061
      %9081 = vmatprep.subr.bf16.mxu0 0
      %9082 = vmatpush1.bf16.msra.mxu0 %v9062
      %9083 = vmatprep.subr.bf16.mxu0 0
      %9084 = vmatpush1.bf16.msra.mxu0 %v9063
      %9085 = vmatprep.subr.bf16.mxu0 0
      %9086 = vmatpush1.bf16.msra.mxu0 %v9064
      %9087 = vmatprep.subr.bf16.mxu0 0
      %9088 = vmatpush1.bf16.msra.mxu0 %v9065
      %9089 = vmatprep.subr.bf16.mxu0 0
      %9090 = vmatpush1.bf16.msra.mxu0 %v9066
      %9091 = vmatprep.subr.bf16.mxu0 0
      %9092 = vmatpush1.bf16.msra.mxu0 0
      %9093 = vmatprep.subr.bf16.mxu0 0
      %9094 = vmatpush1.bf16.msra.mxu0 0
      %9095 = vmatprep.subr.bf16.mxu0 0
      %9096 = vmatpush1.bf16.msra.mxu0 0
      %9097 = vmatprep.subr.bf16.mxu0 0
      %9098 = vmatpush1.bf16.msra.mxu0 0
      %9099 = vmatprep.subr.bf16.mxu0 0
      %9100 = vmatpush1.bf16.msra.mxu0 0
      %9101 = vmatprep.subr.bf16.mxu0 0
      %9102 = vmatpush1.bf16.msra.mxu0 0
      %9103 = vmatprep.subr.bf16.mxu0 0
      %9104 = vmatpush1.bf16.msra.mxu0 0
      %9105 = vmatprep.subr.bf16.mxu0 0
      %9106 = vmatpush1.bf16.msra.mxu0 0
      %9107 = vmatprep.mubr.bf16.mxu0 0
      %9108 = vmatmul.mubr.bf16.gmra.mrb[0].mxu0 %v9003
      %v9109 = vpop.f32.mrb[0].mxu0
      %v9110 = vadd.f32 %v9025, %v9109
      %v9111 = vpop.f32.mrb[0].mxu0
      %v9112 = vpop.f32.mrb[0].mxu0
      %v9113 = vadd.f32 %v9025, %v9112
      %v9114 = vpop.f32.mrb[0].mxu0
      %9115 = vdwg.mxu0
      %9116 = vst [vmem:[%s386] sm:$0xff] %v9110
      %9117 = vst [vmem:[%s386 + $0x8] sm:$0xff] %v9113
      %s9118 = smul.u32 2, %s22
      %p9119 = scmp.lt.s32.totalorder %s9118, 3
      %s9120 = scalar_select %p9119, %s9118, 3
      %s9121 = smul.addr %s9120, 8
      %s9122 = scalar_lea.vmem %s11, %s9121
      // Predicated region
      $region65: #{lenet5_forward.1} parent=63 // pred_check
        %p9123 = pneg %p276
      $region66: #{lenet5_forward.1} parent=63 // pred_check_branch
        %9125 = sbr.rel (%p9123) target = $region68
      $region67: #{lenet5_forward.1} parent=63 // pred_region
        %s9126 = smul.u32 2, %s22
      $region68: #{lenet5_forward.1} parent=63 // pred_fallthru
        _
    $region64: #{lenet5_forward.1} parent=5 // pred_fallthru
      _
    %p9127 = scmp.le.s32.totalorder 2, %s17
    // Predicated region
    $region69: #{lenet5_forward.1} parent=5 // pred_check
      %p9128 = pneg %p9127
    $region70: #{lenet5_forward.1} parent=5 // pred_check_branch
      %9130 = sbr.rel (%p9128) target = $region72
    $region71: #{lenet5_forward.1} parent=5 // pred_region
      %s9131 = ssub.s32 %s17, 2
      // Predicated region
      $region73: #{lenet5_forward.1} parent=71 // pred_check
        %p9132 = pneg %p282
      $region74: #{lenet5_forward.1} parent=71 // pred_check_branch
        %9134 = sbr.rel (%p9132) target = $region76
      $region75: #{lenet5_forward.1} parent=71 // pred_region
        %s9135 = smul.u32 2, %s23
        %p9136 = scmp.lt.s32.totalorder %s9135, 3
        %s9137 = scalar_select %p9136, %s9135, 3
        %s9138 = smul.addr %s9137, 8
        %s9139 = scalar_lea.vmem %s11, %s9138
      $region76: #{lenet5_forward.1} parent=71 // pred_fallthru
        _
    $region72: #{lenet5_forward.1} parent=5 // pred_fallthru
      _
  $region6: #{lenet5_forward.1} parent=0 // loop_footer
    %s21 = sadd.s32 1, %s17
  $region7: #{lenet5_forward.1} parent=0 // loop_footer_branch
    %16 = sbr.rel target = $region3
  $region8: #{lenet5_forward.1} parent=0 // loop_exit
    _

</llo_original>
